<compile_context>
chip_gen: v7x
topology: tpu7x:2x2x1
jax: 0.10.0
libtpu: 0.0.40
codegen_flags: <defaults>
</compile_context>

<pallas_src>
import functools

import jax
import jax.numpy as jnp
from jax.experimental import pallas as pl
from jax.experimental.pallas import tpu as pltpu

NUM_CLASSES = 2
NUM_PROTOTYPE = 10
IN_CHANNELS = 960     # 96 + 192 + 288 + 384 backbone pyramid channels
OUT_CHANNELS = 512


# --------------------------------------------------------------------------
# Fused kernel: pointwise conv + BN + proj_head + feat_norm + l2 + proto + max
#               + mask_norm, over a tile of flattened (b h w) rows.
# --------------------------------------------------------------------------
def fused_head_kernel(x_ref, pw_w_ref, pw_b_ref, bn_s_ref, bn_t_ref,
                      p1_w_ref, p1_b_ref, pbn_s_ref, pbn_t_ref,
                      p2_w_ref, p2_b_ref,
                      ln_w_ref, ln_b_ref,
                      proto_ref, mn_w_ref, mn_b_ref,
                      o_ref, *, num_classes, num_prototype):
    x = x_ref[...]                                          # (tile_n, Cin) bf16

    def mm(a, w_ref):                                       # bf16 MXU, f32 acc
        return jax.lax.dot_general(
            a.astype(jnp.bfloat16), w_ref[...],
            (((1,), (0,)), ((), ())), preferred_element_type=jnp.float32)

    # pointwise 1x1 conv (Cin -> Cout) + folded BatchNorm; Dropout2d(0.1) eval == id
    y = mm(x, pw_w_ref) + pw_b_ref[...]
    y = y * bn_s_ref[...] + bn_t_ref[...]

    # proj_head: 1x1 conv -> BN -> ReLU -> 1x1 conv
    z = mm(y, p1_w_ref) + p1_b_ref[...]
    z = z * pbn_s_ref[...] + pbn_t_ref[...]
    z = jnp.maximum(z, 0.0)
    z = mm(z, p2_w_ref) + p2_b_ref[...]

    # feat_norm: LayerNorm over D (biased variance, eps=1e-5, like PyTorch), f32
    mu = jnp.mean(z, axis=-1, keepdims=True)
    zc = z - mu
    var = jnp.mean(zc * zc, axis=-1, keepdims=True)
    zn = zc * jax.lax.rsqrt(var + 1e-5) * ln_w_ref[...] + ln_b_ref[...]
    # l2_normalize over D
    nrm = jnp.sqrt(jnp.sum(zn * zn, axis=-1, keepdims=True))
    zn = zn / jnp.maximum(nrm, 1e-12)

    # masks = einsum('nd,kmd->nmk'); prototypes pre-flattened to (D, K*M), bf16
    m = mm(zn, proto_ref)                                   # (tile_n, K*M) f32
    # out_seg = max over the prototype axis m (per class k)
    segs = [jnp.max(m[:, k * num_prototype:(k + 1) * num_prototype],
                    axis=-1, keepdims=True) for k in range(num_classes)]
    seg = jnp.concatenate(segs, axis=-1)                    # (tile_n, K)
    # mask_norm: LayerNorm over K
    smu = jnp.mean(seg, axis=-1, keepdims=True)
    sc = seg - smu
    svar = jnp.mean(sc * sc, axis=-1, keepdims=True)
    segn = sc * jax.lax.rsqrt(svar + 1e-5) * mn_w_ref[...] + mn_b_ref[...]
    # lane-dense store: (K, tile_n) slab, rows mapped to the 128-wide lane axis
    o_ref[...] = jnp.transpose(segn)


def _row_tiling(n):
    """Pad row count to a multiple of 128 and pick a lane/sublane-friendly tile."""
    npad = pl.cdiv(n, 128) * 128
    tile = npad                       # single grid step for very small inputs
    for t in (512, 384, 256, 128):    # prefer big tiles but keep >=2 grid steps
        if npad % t == 0 and npad // t >= 2:
            tile = t
            break
    return npad, tile


def fused_cls_proj_proto_head(rows_bf16, p, num_classes, num_prototype):
    """rows_bf16: (Npad, Cin) depthwise-conv output rows (bf16). Returns (K, Npad) f32."""
    Npad, Cin = rows_bf16.shape
    Cout = p['pw_w'].shape[1]
    K, M = num_classes, num_prototype
    _, tile_n = _row_tiling(Npad)

    # bf16 MXU weight operands (f32 accumulation inside the kernel)
    pw_w = p['pw_w'].astype(jnp.bfloat16)
    p1_w = p['p1_w'].astype(jnp.bfloat16)
    p2_w = p['p2_w'].astype(jnp.bfloat16)
    # prototypes.data.copy_(l2_normalize(prototypes)) -> normalized prototype matrix
    protos = p['prototypes']
    protos = protos / jnp.maximum(
        jnp.linalg.norm(protos, axis=-1, keepdims=True), 1e-12)
    proto_t = jnp.transpose(protos.reshape(K * M, Cout)).astype(jnp.bfloat16)

    def const(shape):
        return pl.BlockSpec(shape, lambda i, _n=len(shape): (0,) * _n)
    # TODO(synk): pipeline_mode=pl.Buffered(1) on the constant weight specs would
    #             halve their VMEM footprint; left at the default double-buffering
    #             (ample headroom at tile_n<=512 under the 48 MiB limit below).

    kern = functools.partial(fused_head_kernel, num_classes=K, num_prototype=M)
    return pl.pallas_call(
        kern,
        out_shape=jax.ShapeDtypeStruct((K, Npad), jnp.float32),
        grid=(Npad // tile_n,),
        in_specs=[
            pl.BlockSpec((tile_n, Cin), lambda i: (i, 0)),
            const((Cin, Cout)), const((1, Cout)),
            const((1, Cout)), const((1, Cout)),
            const((Cout, Cout)), const((1, Cout)), const((1, Cout)), const((1, Cout)),
            const((Cout, Cout)), const((1, Cout)),
            const((1, Cout)), const((1, Cout)),
            const((Cout, K * M)), const((1, K)), const((1, K)),
        ],
        out_specs=pl.BlockSpec((K, tile_n), lambda i: (0, i)),
        compiler_params=pltpu.CompilerParams(
            dimension_semantics=("parallel",),
            vmem_limit_bytes=48 * 1024 * 1024),
    )(rows_bf16, pw_w, p['pw_b'], p['bn_s'], p['bn_t'],
      p1_w, p['p1_b'], p['pbn_s'], p['pbn_t'],
      p2_w, p['p2_b'],
      p['ln_w'].reshape(1, Cout), p['ln_b'].reshape(1, Cout),
      proto_t, p['mn_w'].reshape(1, K), p['mn_b'].reshape(1, K))


# --------------------------------------------------------------------------
# Plain-JAX glue: backbone stub, upsample/concat, depthwise 3x3, UpBlock, branches
# --------------------------------------------------------------------------
def conv2d_nhwc(x, w, b, padding):
    y = jax.lax.conv_general_dilated(
        x, w, window_strides=(1, 1), padding=padding,
        dimension_numbers=('NHWC', 'HWIO', 'NHWC'))
    return y + b


def conv_transpose2d_nhwc(x, w, b):
    y = jax.lax.conv_transpose(
        x, w, strides=(2, 2), padding='VALID',
        dimension_numbers=('NHWC', 'HWIO', 'NHWC'))
    return y + b


def depthwise_conv3x3_nhwc(x, w, b):
    # 3x3 depthwise conv (stride 1, pad 1) of DepthwiseSeparableConv; kept in XLA
    # so the Pallas kernel sees only aligned, flattened (rows, Cin) matmul work.
    C = x.shape[-1]
    y = jax.lax.conv_general_dilated(
        x, w.reshape(3, 3, 1, C),
        window_strides=(1, 1), padding=((1, 1), (1, 1)),
        dimension_numbers=('NHWC', 'HWIO', 'NHWC'),
        feature_group_count=C)
    return y + b.reshape(1, 1, 1, C)


def stub_backbone(x_nchw, p):
    # backbone is injected into PretrainPrev; deterministic stub producing a
    # 5-level pyramid x[0..4] with channels (3, 96, 192, 288, 384) -> sum 960.
    x = jnp.transpose(x_nchw, (0, 2, 3, 1))        # NHWC
    feats = [x]
    for stride, w in zip((4, 8, 16, 32), p['bb_w']):
        pooled = jax.lax.reduce_window(
            x, 0.0, jax.lax.add,
            (1, stride, stride, 1), (1, stride, stride, 1), 'VALID')
        pooled = pooled / float(stride * stride)
        feats.append(jnp.einsum('bhwc,cd->bhwd', pooled, w))
    return feats


def pretrain_prev_forward(params, x_nchw):
    xs = stub_backbone(x_nchw, params)
    f1 = xs[1]
    B, H, W, _ = f1.shape

    def up_nearest(f):
        rh, rw = H // f.shape[1], W // f.shape[2]
        return jnp.repeat(jnp.repeat(f, rh, axis=1), rw, axis=2)

    feats = jnp.concatenate(
        [f1, up_nearest(xs[2]), up_nearest(xs[3]), up_nearest(xs[4])], axis=-1)
    Cin = feats.shape[-1]

    # depthwise 3x3 of the DepthwiseSeparableConv (XLA), then flatten to rows
    dw = depthwise_conv3x3_nhwc(feats, params['dw_w'], params['dw_b'])
    N = B * H * W
    rows = dw.reshape(N, Cin).astype(jnp.bfloat16)   # bf16 operand halves input DMA
    Npad, _ = _row_tiling(N)
    if Npad != N:
        rows = jnp.pad(rows, ((0, Npad - N), (0, 0)))

    # fused Pallas kernel: pointwise+BN+proj_head+feat_norm+l2+proto+max+mask_norm
    out_kn = fused_cls_proj_proto_head(rows, params, NUM_CLASSES, NUM_PROTOTYPE)
    out_kn = out_kn[:, :N]                                        # (K, B*H*W)
    out_seg_nchw = out_kn.reshape(NUM_CLASSES, B, H, W).transpose(1, 0, 2, 3)
    out_seg_nhwc = jnp.transpose(out_seg_nchw, (0, 2, 3, 1))

    # transposeConv (UpBlock) + 4 branches: tiny 2-channel convs -> JAX glue
    up = conv_transpose2d_nhwc(out_seg_nhwc, params['up_w'], params['up_b'])
    outs = []
    for br in params['branch']:
        y = conv2d_nhwc(up, br['w1'], br['b1'], ((1, 1), (1, 1)))   # ConvBlock2d
        y = y * br['bn_s'] + br['bn_t']
        y = jnp.maximum(y, 0.0)
        y = conv2d_nhwc(y, br['w2'], br['b2'], ((0, 0), (0, 0)))    # 1x1 conv
        outs.append(jnp.transpose(y, (0, 3, 1, 2)))
    outs.append(out_seg_nchw)
    return outs


# --------------------------------------------------------------------------
# Deterministic parameter init (synthetic — no checkpoint loading)
# --------------------------------------------------------------------------
def init_params(key, cin=IN_CHANNELS, cout=OUT_CHANNELS,
                K=NUM_CLASSES, M=NUM_PROTOTYPE):
    keys = iter(jax.random.split(key, 96))

    def nrm(shape, s=0.02):
        return jax.random.normal(next(keys), shape, jnp.float32) * s

    def folded_bn(c_shape):
        g = 1.0 + nrm(c_shape, 0.01)
        b = nrm(c_shape, 0.01)
        mu = nrm(c_shape, 0.01)
        v = jnp.abs(nrm(c_shape, 0.1)) + 1.0
        s = g / jnp.sqrt(v + 1e-5)
        return s, b - mu * s

    p = {}
    p['bb_w'] = [nrm((3, c), 0.1) for c in (96, 192, 288, 384)]
    # DepthwiseSeparableConv(960 -> 512)
    p['dw_w'] = nrm((3, 3, cin), 0.1)
    p['dw_b'] = nrm((1, cin), 0.01)
    p['pw_w'] = nrm((cin, cout), 0.02)
    p['pw_b'] = nrm((1, cout), 0.01)
    p['bn_s'], p['bn_t'] = folded_bn((1, cout))
    # ProjectionHead2D(512 -> 512): conv1x1 -> BN -> ReLU -> conv1x1
    p['p1_w'] = nrm((cout, cout), 0.02)
    p['p1_b'] = nrm((1, cout), 0.01)
    p['pbn_s'], p['pbn_t'] = folded_bn((1, cout))
    p['p2_w'] = nrm((cout, cout), 0.02)
    p['p2_b'] = nrm((1, cout), 0.01)
    # prototypes: trunc_normal_(std=0.02) approximated by normal*0.02
    p['prototypes'] = nrm((K, M, cout), 0.02)
    # LayerNorms (PyTorch default affine init: ones / zeros)
    p['ln_w'] = jnp.ones((cout,), jnp.float32)
    p['ln_b'] = jnp.zeros((cout,), jnp.float32)
    p['mn_w'] = jnp.ones((K,), jnp.float32)
    p['mn_b'] = jnp.zeros((K,), jnp.float32)
    # UpBlock: ConvTranspose2d(K, K, kernel_size=2, stride=2)
    p['up_w'] = nrm((2, 2, K, K), 0.1)
    p['up_b'] = nrm((1, 1, 1, K), 0.01)
    # 4 branches: ConvBlock2d(K,K) [3x3+BN+ReLU] + Conv2d(K,K,1)
    p['branch'] = []
    for _ in range(4):
        bn_s, bn_t = folded_bn((1, 1, 1, K))
        p['branch'].append({
            'w1': nrm((3, 3, K, K), 0.1), 'b1': nrm((1, 1, 1, K), 0.01),
            'bn_s': bn_s, 'bn_t': bn_t,
            'w2': nrm((1, 1, K, K), 0.1), 'b2': nrm((1, 1, 1, K), 0.01)})
    return p


if __name__ == "__main__":
    key = jax.random.PRNGKey(0)
    kp, kx = jax.random.split(key)
    params = init_params(kp)

    B, H_IN, W_IN = 2, 32, 32          # stride-4 backbone feature => H = W = 8
    x_ = jax.random.normal(kx, (B, 3, H_IN, W_IN), jnp.float32)

    outs = jax.jit(pretrain_prev_forward)(params, x_)
    outs = jax.block_until_ready(outs)

    H, W = H_IN // 4, W_IN // 4
    assert outs[-1].shape == (B, NUM_CLASSES, H, W)          # out_seg
    for o in outs[:4]:                                        # 4 branch outputs
        assert o.shape == (B, NUM_CLASSES, 2 * H, 2 * W)
    assert all(bool(jnp.all(jnp.isfinite(o))) for o in outs)
    print("KERNEL_OK")
</pallas_src>

<mosaic_0001>
module attributes {stable_mosaic.version = 11 : i64} {
  func.func @fused_head_kernel(%arg0: i32, %arg1: memref<128x960xbf16, #tpu.memory_space<vmem>>, %arg2: memref<960x512xbf16, #tpu.memory_space<vmem>>, %arg3: memref<1x512xf32, #tpu.memory_space<vmem>>, %arg4: memref<1x512xf32, #tpu.memory_space<vmem>>, %arg5: memref<1x512xf32, #tpu.memory_space<vmem>>, %arg6: memref<512x512xbf16, #tpu.memory_space<vmem>>, %arg7: memref<1x512xf32, #tpu.memory_space<vmem>>, %arg8: memref<1x512xf32, #tpu.memory_space<vmem>>, %arg9: memref<1x512xf32, #tpu.memory_space<vmem>>, %arg10: memref<512x512xbf16, #tpu.memory_space<vmem>>, %arg11: memref<1x512xf32, #tpu.memory_space<vmem>>, %arg12: memref<1x512xf32, #tpu.memory_space<vmem>>, %arg13: memref<1x512xf32, #tpu.memory_space<vmem>>, %arg14: memref<512x20xbf16, #tpu.memory_space<vmem>>, %arg15: memref<1x2xf32, #tpu.memory_space<vmem>>, %arg16: memref<1x2xf32, #tpu.memory_space<vmem>>, %arg17: memref<2x128xf32, #tpu.memory_space<vmem>>) attributes {dimension_semantics = [#tpu.dimension_semantics<parallel>], iteration_bounds = array<i64: 1>, scalar_prefetch = 0 : i64, scratch_operands = 0 : i64, tpu.core_type = #tpu.core_type<tc>, window_params = [{transform_indices = @transform_0, window_bounds = array<i64: 128, 960>}, {pipeline_mode = #tpu.pipeline_mode<synchronous>, transform_indices = @transform_1, window_bounds = array<i64: 960, 512>}, {pipeline_mode = #tpu.pipeline_mode<synchronous>, transform_indices = @transform_2, window_bounds = array<i64: 1, 512>}, {pipeline_mode = #tpu.pipeline_mode<synchronous>, transform_indices = @transform_3, window_bounds = array<i64: 1, 512>}, {pipeline_mode = #tpu.pipeline_mode<synchronous>, transform_indices = @transform_4, window_bounds = array<i64: 1, 512>}, {pipeline_mode = #tpu.pipeline_mode<synchronous>, transform_indices = @transform_5, window_bounds = array<i64: 512, 512>}, {pipeline_mode = #tpu.pipeline_mode<synchronous>, transform_indices = @transform_6, window_bounds = array<i64: 1, 512>}, {pipeline_mode = #tpu.pipeline_mode<synchronous>, transform_indices = @transform_7, window_bounds = array<i64: 1, 512>}, {pipeline_mode = #tpu.pipeline_mode<synchronous>, transform_indices = @transform_8, window_bounds = array<i64: 1, 512>}, {pipeline_mode = #tpu.pipeline_mode<synchronous>, transform_indices = @transform_9, window_bounds = array<i64: 512, 512>}, {pipeline_mode = #tpu.pipeline_mode<synchronous>, transform_indices = @transform_10, window_bounds = array<i64: 1, 512>}, {pipeline_mode = #tpu.pipeline_mode<synchronous>, transform_indices = @transform_11, window_bounds = array<i64: 1, 512>}, {pipeline_mode = #tpu.pipeline_mode<synchronous>, transform_indices = @transform_12, window_bounds = array<i64: 1, 512>}, {pipeline_mode = #tpu.pipeline_mode<synchronous>, transform_indices = @transform_13, window_bounds = array<i64: 512, 20>}, {pipeline_mode = #tpu.pipeline_mode<synchronous>, transform_indices = @transform_14, window_bounds = array<i64: 1, 2>}, {pipeline_mode = #tpu.pipeline_mode<synchronous>, transform_indices = @transform_15, window_bounds = array<i64: 1, 2>}, {transform_indices = @transform_16, window_bounds = array<i64: 2, 128>}]} {
    %c0 = arith.constant 0 : index
    %c0_0 = arith.constant 0 : index
    %0 = vector.load %arg1[%c0, %c0_0] : memref<128x960xbf16, #tpu.memory_space<vmem>>, vector<128x960xbf16>
    %c0_1 = arith.constant 0 : index
    %c0_2 = arith.constant 0 : index
    %1 = vector.load %arg2[%c0_1, %c0_2] : memref<960x512xbf16, #tpu.memory_space<vmem>>, vector<960x512xbf16>
    %cst = arith.constant dense<0.000000e+00> : vector<128x512xf32>
    %2 = tpu.matmul %0, %1, %cst {dimension_numbers = #tpu.dot_dimension_numbers<[1], [0], [0], [1], [0, 0, 1, 1], [], []>} : vector<128x960xbf16>, vector<960x512xbf16>, vector<128x512xf32> -> vector<128x512xf32>
    %c0_3 = arith.constant 0 : index
    %c0_4 = arith.constant 0 : index
    %3 = vector.load %arg3[%c0_3, %c0_4] : memref<1x512xf32, #tpu.memory_space<vmem>>, vector<1x512xf32>
    %4 = vector.broadcast %3 : vector<1x512xf32> to vector<128x512xf32>
    %5 = arith.addf %2, %4 : vector<128x512xf32>
    %c0_5 = arith.constant 0 : index
    %c0_6 = arith.constant 0 : index
    %6 = vector.load %arg4[%c0_5, %c0_6] : memref<1x512xf32, #tpu.memory_space<vmem>>, vector<1x512xf32>
    %7 = vector.broadcast %6 : vector<1x512xf32> to vector<128x512xf32>
    %8 = arith.mulf %5, %7 : vector<128x512xf32>
    %c0_7 = arith.constant 0 : index
    %c0_8 = arith.constant 0 : index
    %9 = vector.load %arg5[%c0_7, %c0_8] : memref<1x512xf32, #tpu.memory_space<vmem>>, vector<1x512xf32>
    %10 = vector.broadcast %9 : vector<1x512xf32> to vector<128x512xf32>
    %11 = arith.addf %8, %10 : vector<128x512xf32>
    %12 = arith.truncf %11 : vector<128x512xf32> to vector<128x512xbf16>
    %c0_9 = arith.constant 0 : index
    %c0_10 = arith.constant 0 : index
    %13 = vector.load %arg6[%c0_9, %c0_10] : memref<512x512xbf16, #tpu.memory_space<vmem>>, vector<512x512xbf16>
    %cst_11 = arith.constant dense<0.000000e+00> : vector<128x512xf32>
    %14 = tpu.matmul %12, %13, %cst_11 {dimension_numbers = #tpu.dot_dimension_numbers<[1], [0], [0], [1], [0, 0, 1, 1], [], []>} : vector<128x512xbf16>, vector<512x512xbf16>, vector<128x512xf32> -> vector<128x512xf32>
    %c0_12 = arith.constant 0 : index
    %c0_13 = arith.constant 0 : index
    %15 = vector.load %arg7[%c0_12, %c0_13] : memref<1x512xf32, #tpu.memory_space<vmem>>, vector<1x512xf32>
    %16 = vector.broadcast %15 : vector<1x512xf32> to vector<128x512xf32>
    %17 = arith.addf %14, %16 : vector<128x512xf32>
    %c0_14 = arith.constant 0 : index
    %c0_15 = arith.constant 0 : index
    %18 = vector.load %arg8[%c0_14, %c0_15] : memref<1x512xf32, #tpu.memory_space<vmem>>, vector<1x512xf32>
    %19 = vector.broadcast %18 : vector<1x512xf32> to vector<128x512xf32>
    %20 = arith.mulf %17, %19 : vector<128x512xf32>
    %c0_16 = arith.constant 0 : index
    %c0_17 = arith.constant 0 : index
    %21 = vector.load %arg9[%c0_16, %c0_17] : memref<1x512xf32, #tpu.memory_space<vmem>>, vector<1x512xf32>
    %22 = vector.broadcast %21 : vector<1x512xf32> to vector<128x512xf32>
    %23 = arith.addf %20, %22 : vector<128x512xf32>
    %cst_18 = arith.constant 0.000000e+00 : f32
    %24 = vector.broadcast %cst_18 : f32 to vector<128x512xf32>
    %25 = arith.maximumf %23, %24 : vector<128x512xf32>
    %26 = arith.truncf %25 : vector<128x512xf32> to vector<128x512xbf16>
    %c0_19 = arith.constant 0 : index
    %c0_20 = arith.constant 0 : index
    %27 = vector.load %arg10[%c0_19, %c0_20] : memref<512x512xbf16, #tpu.memory_space<vmem>>, vector<512x512xbf16>
    %cst_21 = arith.constant dense<0.000000e+00> : vector<128x512xf32>
    %28 = tpu.matmul %26, %27, %cst_21 {dimension_numbers = #tpu.dot_dimension_numbers<[1], [0], [0], [1], [0, 0, 1, 1], [], []>} : vector<128x512xbf16>, vector<512x512xbf16>, vector<128x512xf32> -> vector<128x512xf32>
    %c0_22 = arith.constant 0 : index
    %c0_23 = arith.constant 0 : index
    %29 = vector.load %arg11[%c0_22, %c0_23] : memref<1x512xf32, #tpu.memory_space<vmem>>, vector<1x512xf32>
    %30 = vector.broadcast %29 : vector<1x512xf32> to vector<128x512xf32>
    %31 = arith.addf %28, %30 : vector<128x512xf32>
    %cst_24 = arith.constant dense<0.000000e+00> : vector<128xf32>
    %32 = vector.multi_reduction <add>, %31, %cst_24 [1] : vector<128x512xf32> to vector<128xf32>
    %33 = vector.shape_cast %32 : vector<128xf32> to vector<128x1xf32>
    %cst_25 = arith.constant 5.120000e+02 : f32
    %34 = vector.broadcast %cst_25 : f32 to vector<128x1xf32>
    %35 = arith.divf %33, %34 : vector<128x1xf32>
    %36 = vector.broadcast %35 : vector<128x1xf32> to vector<128x512xf32>
    %37 = arith.subf %31, %36 : vector<128x512xf32>
    %38 = arith.mulf %37, %37 : vector<128x512xf32>
    %cst_26 = arith.constant dense<0.000000e+00> : vector<128xf32>
    %39 = vector.multi_reduction <add>, %38, %cst_26 [1] : vector<128x512xf32> to vector<128xf32>
    %40 = vector.shape_cast %39 : vector<128xf32> to vector<128x1xf32>
    %cst_27 = arith.constant 5.120000e+02 : f32
    %41 = vector.broadcast %cst_27 : f32 to vector<128x1xf32>
    %42 = arith.divf %40, %41 : vector<128x1xf32>
    %cst_28 = arith.constant 9.99999974E-6 : f32
    %43 = vector.broadcast %cst_28 : f32 to vector<128x1xf32>
    %44 = arith.addf %42, %43 : vector<128x1xf32>
    %45 = math.rsqrt %44 : vector<128x1xf32>
    %46 = vector.broadcast %45 : vector<128x1xf32> to vector<128x512xf32>
    %47 = arith.mulf %37, %46 : vector<128x512xf32>
    %c0_29 = arith.constant 0 : index
    %c0_30 = arith.constant 0 : index
    %48 = vector.load %arg12[%c0_29, %c0_30] : memref<1x512xf32, #tpu.memory_space<vmem>>, vector<1x512xf32>
    %49 = vector.broadcast %48 : vector<1x512xf32> to vector<128x512xf32>
    %50 = arith.mulf %47, %49 : vector<128x512xf32>
    %c0_31 = arith.constant 0 : index
    %c0_32 = arith.constant 0 : index
    %51 = vector.load %arg13[%c0_31, %c0_32] : memref<1x512xf32, #tpu.memory_space<vmem>>, vector<1x512xf32>
    %52 = vector.broadcast %51 : vector<1x512xf32> to vector<128x512xf32>
    %53 = arith.addf %50, %52 : vector<128x512xf32>
    %54 = arith.mulf %53, %53 : vector<128x512xf32>
    %cst_33 = arith.constant dense<0.000000e+00> : vector<128xf32>
    %55 = vector.multi_reduction <add>, %54, %cst_33 [1] : vector<128x512xf32> to vector<128xf32>
    %56 = vector.shape_cast %55 : vector<128xf32> to vector<128x1xf32>
    %57 = math.sqrt %56 : vector<128x1xf32>
    %cst_34 = arith.constant 9.99999996E-13 : f32
    %58 = vector.broadcast %cst_34 : f32 to vector<128x1xf32>
    %59 = arith.maximumf %57, %58 : vector<128x1xf32>
    %60 = vector.broadcast %59 : vector<128x1xf32> to vector<128x512xf32>
    %61 = arith.divf %53, %60 : vector<128x512xf32>
    %62 = arith.truncf %61 : vector<128x512xf32> to vector<128x512xbf16>
    %c0_35 = arith.constant 0 : index
    %c0_36 = arith.constant 0 : index
    %63 = vector.load %arg14[%c0_35, %c0_36] : memref<512x20xbf16, #tpu.memory_space<vmem>>, vector<512x20xbf16>
    %cst_37 = arith.constant dense<0.000000e+00> : vector<128x20xf32>
    %64 = tpu.matmul %62, %63, %cst_37 {dimension_numbers = #tpu.dot_dimension_numbers<[1], [0], [0], [1], [0, 0, 1, 1], [], []>} : vector<128x512xbf16>, vector<512x20xbf16>, vector<128x20xf32> -> vector<128x20xf32>
    %65 = vector.extract_strided_slice %64 {offsets = [0, 0], sizes = [128, 10], strides = [1, 1]} : vector<128x20xf32> to vector<128x10xf32>
    %cst_38 = arith.constant dense<0xFF800000> : vector<128xf32>
    %66 = vector.multi_reduction <maximumf>, %65, %cst_38 [1] : vector<128x10xf32> to vector<128xf32>
    %67 = vector.shape_cast %66 : vector<128xf32> to vector<128x1xf32>
    %68 = vector.extract_strided_slice %64 {offsets = [0, 10], sizes = [128, 10], strides = [1, 1]} : vector<128x20xf32> to vector<128x10xf32>
    %cst_39 = arith.constant dense<0xFF800000> : vector<128xf32>
    %69 = vector.multi_reduction <maximumf>, %68, %cst_39 [1] : vector<128x10xf32> to vector<128xf32>
    %70 = vector.shape_cast %69 : vector<128xf32> to vector<128x1xf32>
    %71 = tpu.concatenate %67, %70 in 1 : vector<128x1xf32>, vector<128x1xf32> -> vector<128x2xf32>
    %cst_40 = arith.constant dense<0.000000e+00> : vector<128xf32>
    %72 = vector.multi_reduction <add>, %71, %cst_40 [1] : vector<128x2xf32> to vector<128xf32>
    %73 = vector.shape_cast %72 : vector<128xf32> to vector<128x1xf32>
    %cst_41 = arith.constant 2.000000e+00 : f32
    %74 = vector.broadcast %cst_41 : f32 to vector<128x1xf32>
    %75 = arith.divf %73, %74 : vector<128x1xf32>
    %76 = vector.broadcast %75 : vector<128x1xf32> to vector<128x2xf32>
    %77 = arith.subf %71, %76 : vector<128x2xf32>
    %78 = arith.mulf %77, %77 : vector<128x2xf32>
    %cst_42 = arith.constant dense<0.000000e+00> : vector<128xf32>
    %79 = vector.multi_reduction <add>, %78, %cst_42 [1] : vector<128x2xf32> to vector<128xf32>
    %80 = vector.shape_cast %79 : vector<128xf32> to vector<128x1xf32>
    %cst_43 = arith.constant 2.000000e+00 : f32
    %81 = vector.broadcast %cst_43 : f32 to vector<128x1xf32>
    %82 = arith.divf %80, %81 : vector<128x1xf32>
    %cst_44 = arith.constant 9.99999974E-6 : f32
    %83 = vector.broadcast %cst_44 : f32 to vector<128x1xf32>
    %84 = arith.addf %82, %83 : vector<128x1xf32>
    %85 = math.rsqrt %84 : vector<128x1xf32>
    %86 = vector.broadcast %85 : vector<128x1xf32> to vector<128x2xf32>
    %87 = arith.mulf %77, %86 : vector<128x2xf32>
    %c0_45 = arith.constant 0 : index
    %c0_46 = arith.constant 0 : index
    %88 = vector.load %arg15[%c0_45, %c0_46] : memref<1x2xf32, #tpu.memory_space<vmem>>, vector<1x2xf32>
    %89 = vector.broadcast %88 : vector<1x2xf32> to vector<128x2xf32>
    %90 = arith.mulf %87, %89 : vector<128x2xf32>
    %c0_47 = arith.constant 0 : index
    %c0_48 = arith.constant 0 : index
    %91 = vector.load %arg16[%c0_47, %c0_48] : memref<1x2xf32, #tpu.memory_space<vmem>>, vector<1x2xf32>
    %92 = vector.broadcast %91 : vector<1x2xf32> to vector<128x2xf32>
    %93 = arith.addf %90, %92 : vector<128x2xf32>
    %94 = tpu.transpose %93, [1, 0] : vector<128x2xf32> -> vector<2x128xf32>
    %c0_49 = arith.constant 0 : index
    %c0_50 = arith.constant 0 : index
    %95 = vector.load %arg17[%c0_49, %c0_50] : memref<2x128xf32, #tpu.memory_space<vmem>>, vector<2x128xf32>
    tpu.vector_store %arg17[%c0_49, %c0_50], %94 {strides = array<i32>} : memref<2x128xf32, #tpu.memory_space<vmem>>, vector<2x128xf32>,
    return
  }
  func.func @transform_0(%arg0: i32) -> (i32, i32) {
    %c0_i32 = arith.constant 0 : i32
    %c0_i32_0 = arith.constant 0 : i32
    return %arg0, %c0_i32 : i32, i32
  }
  func.func @transform_1(%arg0: i32) -> (i32, i32) {
    %c0_i32 = arith.constant 0 : i32
    %c0_i32_0 = arith.constant 0 : i32
    %c0_i32_1 = arith.constant 0 : i32
    return %c0_i32, %c0_i32_0 : i32, i32
  }
  func.func @transform_2(%arg0: i32) -> (i32, i32) {
    %c0_i32 = arith.constant 0 : i32
    %c0_i32_0 = arith.constant 0 : i32
    %c0_i32_1 = arith.constant 0 : i32
    return %c0_i32, %c0_i32_0 : i32, i32
  }
  func.func @transform_3(%arg0: i32) -> (i32, i32) {
    %c0_i32 = arith.constant 0 : i32
    %c0_i32_0 = arith.constant 0 : i32
    %c0_i32_1 = arith.constant 0 : i32
    return %c0_i32, %c0_i32_0 : i32, i32
  }
  func.func @transform_4(%arg0: i32) -> (i32, i32) {
    %c0_i32 = arith.constant 0 : i32
    %c0_i32_0 = arith.constant 0 : i32
    %c0_i32_1 = arith.constant 0 : i32
    return %c0_i32, %c0_i32_0 : i32, i32
  }
  func.func @transform_5(%arg0: i32) -> (i32, i32) {
    %c0_i32 = arith.constant 0 : i32
    %c0_i32_0 = arith.constant 0 : i32
    %c0_i32_1 = arith.constant 0 : i32
    return %c0_i32, %c0_i32_0 : i32, i32
  }
  func.func @transform_6(%arg0: i32) -> (i32, i32) {
    %c0_i32 = arith.constant 0 : i32
    %c0_i32_0 = arith.constant 0 : i32
    %c0_i32_1 = arith.constant 0 : i32
    return %c0_i32, %c0_i32_0 : i32, i32
  }
  func.func @transform_7(%arg0: i32) -> (i32, i32) {
    %c0_i32 = arith.constant 0 : i32
    %c0_i32_0 = arith.constant 0 : i32
    %c0_i32_1 = arith.constant 0 : i32
    return %c0_i32, %c0_i32_0 : i32, i32
  }
  func.func @transform_8(%arg0: i32) -> (i32, i32) {
    %c0_i32 = arith.constant 0 : i32
    %c0_i32_0 = arith.constant 0 : i32
    %c0_i32_1 = arith.constant 0 : i32
    return %c0_i32, %c0_i32_0 : i32, i32
  }
  func.func @transform_9(%arg0: i32) -> (i32, i32) {
    %c0_i32 = arith.constant 0 : i32
    %c0_i32_0 = arith.constant 0 : i32
    %c0_i32_1 = arith.constant 0 : i32
    return %c0_i32, %c0_i32_0 : i32, i32
  }
  func.func @transform_10(%arg0: i32) -> (i32, i32) {
    %c0_i32 = arith.constant 0 : i32
    %c0_i32_0 = arith.constant 0 : i32
    %c0_i32_1 = arith.constant 0 : i32
    return %c0_i32, %c0_i32_0 : i32, i32
  }
  func.func @transform_11(%arg0: i32) -> (i32, i32) {
    %c0_i32 = arith.constant 0 : i32
    %c0_i32_0 = arith.constant 0 : i32
    %c0_i32_1 = arith.constant 0 : i32
    return %c0_i32, %c0_i32_0 : i32, i32
  }
  func.func @transform_12(%arg0: i32) -> (i32, i32) {
    %c0_i32 = arith.constant 0 : i32
    %c0_i32_0 = arith.constant 0 : i32
    %c0_i32_1 = arith.constant 0 : i32
    return %c0_i32, %c0_i32_0 : i32, i32
  }
  func.func @transform_13(%arg0: i32) -> (i32, i32) {
    %c0_i32 = arith.constant 0 : i32
    %c0_i32_0 = arith.constant 0 : i32
    %c0_i32_1 = arith.constant 0 : i32
    return %c0_i32, %c0_i32_0 : i32, i32
  }
  func.func @transform_14(%arg0: i32) -> (i32, i32) {
    %c0_i32 = arith.constant 0 : i32
    %c0_i32_0 = arith.constant 0 : i32
    %c0_i32_1 = arith.constant 0 : i32
    return %c0_i32, %c0_i32_0 : i32, i32
  }
  func.func @transform_15(%arg0: i32) -> (i32, i32) {
    %c0_i32 = arith.constant 0 : i32
    %c0_i32_0 = arith.constant 0 : i32
    %c0_i32_1 = arith.constant 0 : i32
    return %c0_i32, %c0_i32_0 : i32, i32
  }
  func.func @transform_16(%arg0: i32) -> (i32, i32) {
    %c0_i32 = arith.constant 0 : i32
    %c0_i32_0 = arith.constant 0 : i32
    return %c0_i32, %arg0 : i32, i32
  }
}

</mosaic_0001>

<llo_original>
// kernel: pretrain_prev_forward.1
$region0: #{pretrain_prev_forward.1}
  #allocation0 [shape = 'u32[]', space=smem, size = 0x4, offset = 0x4, fixed_abs, tag = 'smem constant byte address 0x4 - core index']
  #allocation1 [shape = 'u32[144,128]{1,0:T(1,128)}', space=vmem, size = 0x12000, scoped, tag = 'internal scratch']
  %s0 = inlined_call_operand.vmem [shape: bf16[128,960], index: 0, kind: input, shape index: {}]
  %s1 = inlined_call_operand.vmem [shape: bf16[960,512], index: 1, kind: input, shape index: {}]
  %s2 = inlined_call_operand.vmem [shape: f32[1,512], index: 2, kind: input, shape index: {}]
  %s3 = inlined_call_operand.vmem [shape: f32[1,512], index: 3, kind: input, shape index: {}]
  %s4 = inlined_call_operand.vmem [shape: f32[1,512], index: 4, kind: input, shape index: {}]
  %s5 = inlined_call_operand.vmem [shape: bf16[512,512], index: 5, kind: input, shape index: {}]
  %s6 = inlined_call_operand.vmem [shape: f32[1,512], index: 6, kind: input, shape index: {}]
  %s7 = inlined_call_operand.vmem [shape: f32[1,512], index: 7, kind: input, shape index: {}]
  %s8 = inlined_call_operand.vmem [shape: f32[1,512], index: 8, kind: input, shape index: {}]
  %s9 = inlined_call_operand.vmem [shape: bf16[512,512], index: 9, kind: input, shape index: {}]
  %s10 = inlined_call_operand.vmem [shape: f32[1,512], index: 10, kind: input, shape index: {}]
  %s11 = inlined_call_operand.vmem [shape: f32[1,512], index: 11, kind: input, shape index: {}]
  %s12 = inlined_call_operand.vmem [shape: f32[1,512], index: 12, kind: input, shape index: {}]
  %s13 = inlined_call_operand.vmem [shape: bf16[512,20], index: 13, kind: input, shape index: {}]
  %s14 = inlined_call_operand.vmem [shape: f32[1,2], index: 14, kind: input, shape index: {}]
  %s15 = inlined_call_operand.vmem [shape: f32[1,2], index: 15, kind: input, shape index: {}]
  %s16 = inlined_call_operand.vmem [shape: f32[2,128], index: 16, kind: output, shape index: {}]
  %s17 = sld [smem:[#allocation0]]
  $region74: #{pretrain_prev_forward.1} parent=0
    _
  %s19 = ssub.s32 1, %s17
  %s20 = scalar_select 0, %s19, %s17
  // Predicated region
  $region2: #{pretrain_prev_forward.1} parent=0 // pred_check
    _
  $region3: #{pretrain_prev_forward.1} parent=0 // pred_check_branch
    %22 = sbr.rel (0) target = $region5
  $region4: #{pretrain_prev_forward.1} parent=0 // pred_region
    _
  $region5: #{pretrain_prev_forward.1} parent=0 // pred_fallthru
    _
  // Predicated region
  $region6: #{pretrain_prev_forward.1} parent=0 // pred_check
    _
  $region7: #{pretrain_prev_forward.1} parent=0 // pred_check_branch
    %24 = sbr.rel (0) target = $region9
  $region8: #{pretrain_prev_forward.1} parent=0 // pred_region
    _
  $region9: #{pretrain_prev_forward.1} parent=0 // pred_fallthru
    _
  // Predicated region
  $region10: #{pretrain_prev_forward.1} parent=0 // pred_check
    _
  $region11: #{pretrain_prev_forward.1} parent=0 // pred_check_branch
    %26 = sbr.rel (0) target = $region13
  $region12: #{pretrain_prev_forward.1} parent=0 // pred_region
    _
  $region13: #{pretrain_prev_forward.1} parent=0 // pred_fallthru
    _
  // Predicated region
  $region14: #{pretrain_prev_forward.1} parent=0 // pred_check
    _
  $region15: #{pretrain_prev_forward.1} parent=0 // pred_check_branch
    %28 = sbr.rel (0) target = $region17
  $region16: #{pretrain_prev_forward.1} parent=0 // pred_region
    _
  $region17: #{pretrain_prev_forward.1} parent=0 // pred_fallthru
    _
  // Predicated region
  $region18: #{pretrain_prev_forward.1} parent=0 // pred_check
    _
  $region19: #{pretrain_prev_forward.1} parent=0 // pred_check_branch
    %30 = sbr.rel (0) target = $region21
  $region20: #{pretrain_prev_forward.1} parent=0 // pred_region
    _
  $region21: #{pretrain_prev_forward.1} parent=0 // pred_fallthru
    _
  // Predicated region
  $region22: #{pretrain_prev_forward.1} parent=0 // pred_check
    _
  $region23: #{pretrain_prev_forward.1} parent=0 // pred_check_branch
    %32 = sbr.rel (0) target = $region25
  $region24: #{pretrain_prev_forward.1} parent=0 // pred_region
    _
  $region25: #{pretrain_prev_forward.1} parent=0 // pred_fallthru
    _
  // Predicated region
  $region26: #{pretrain_prev_forward.1} parent=0 // pred_check
    _
  $region27: #{pretrain_prev_forward.1} parent=0 // pred_check_branch
    %34 = sbr.rel (0) target = $region29
  $region28: #{pretrain_prev_forward.1} parent=0 // pred_region
    _
  $region29: #{pretrain_prev_forward.1} parent=0 // pred_fallthru
    _
  // Predicated region
  $region30: #{pretrain_prev_forward.1} parent=0 // pred_check
    _
  $region31: #{pretrain_prev_forward.1} parent=0 // pred_check_branch
    %36 = sbr.rel (0) target = $region33
  $region32: #{pretrain_prev_forward.1} parent=0 // pred_region
    _
  $region33: #{pretrain_prev_forward.1} parent=0 // pred_fallthru
    _
  // Predicated region
  $region34: #{pretrain_prev_forward.1} parent=0 // pred_check
    _
  $region35: #{pretrain_prev_forward.1} parent=0 // pred_check_branch
    %38 = sbr.rel (0) target = $region37
  $region36: #{pretrain_prev_forward.1} parent=0 // pred_region
    _
  $region37: #{pretrain_prev_forward.1} parent=0 // pred_fallthru
    _
  // Predicated region
  $region38: #{pretrain_prev_forward.1} parent=0 // pred_check
    _
  $region39: #{pretrain_prev_forward.1} parent=0 // pred_check_branch
    %40 = sbr.rel (0) target = $region41
  $region40: #{pretrain_prev_forward.1} parent=0 // pred_region
    _
  $region41: #{pretrain_prev_forward.1} parent=0 // pred_fallthru
    _
  // Predicated region
  $region42: #{pretrain_prev_forward.1} parent=0 // pred_check
    _
  $region43: #{pretrain_prev_forward.1} parent=0 // pred_check_branch
    %42 = sbr.rel (0) target = $region45
  $region44: #{pretrain_prev_forward.1} parent=0 // pred_region
    _
  $region45: #{pretrain_prev_forward.1} parent=0 // pred_fallthru
    _
  // Predicated region
  $region46: #{pretrain_prev_forward.1} parent=0 // pred_check
    _
  $region47: #{pretrain_prev_forward.1} parent=0 // pred_check_branch
    %44 = sbr.rel (0) target = $region49
  $region48: #{pretrain_prev_forward.1} parent=0 // pred_region
    _
  $region49: #{pretrain_prev_forward.1} parent=0 // pred_fallthru
    _
  // Predicated region
  $region50: #{pretrain_prev_forward.1} parent=0 // pred_check
    _
  $region51: #{pretrain_prev_forward.1} parent=0 // pred_check_branch
    %46 = sbr.rel (0) target = $region53
  $region52: #{pretrain_prev_forward.1} parent=0 // pred_region
    _
  $region53: #{pretrain_prev_forward.1} parent=0 // pred_fallthru
    _
  // Predicated region
  $region54: #{pretrain_prev_forward.1} parent=0 // pred_check
    _
  $region55: #{pretrain_prev_forward.1} parent=0 // pred_check_branch
    %48 = sbr.rel (0) target = $region57
  $region56: #{pretrain_prev_forward.1} parent=0 // pred_region
    _
  $region57: #{pretrain_prev_forward.1} parent=0 // pred_fallthru
    _
  // Predicated region
  $region58: #{pretrain_prev_forward.1} parent=0 // pred_check
    _
  $region59: #{pretrain_prev_forward.1} parent=0 // pred_check_branch
    %50 = sbr.rel (0) target = $region61
  $region60: #{pretrain_prev_forward.1} parent=0 // pred_region
    _
  $region61: #{pretrain_prev_forward.1} parent=0 // pred_fallthru
    _
  // Predicated region
  $region62: #{pretrain_prev_forward.1} parent=0 // pred_check
    _
  $region63: #{pretrain_prev_forward.1} parent=0 // pred_check_branch
    %52 = sbr.rel (0) target = $region65
  $region64: #{pretrain_prev_forward.1} parent=0 // pred_region
    _
  $region65: #{pretrain_prev_forward.1} parent=0 // pred_fallthru
    _
  %v54 = vld [vmem:[%s0] sm:$0xff]
  %v55 = vld [vmem:[%s0 + $0x8] sm:$0xff]
  %v56 = vld [vmem:[%s0 + $0x10] sm:$0xff]
  %v57 = vld [vmem:[%s0 + $0x18] sm:$0xff]
  %v58 = vld [vmem:[%s0 + $0x20] sm:$0xff]
  %v59 = vld [vmem:[%s0 + $0x28] sm:$0xff]
  %v60 = vld [vmem:[%s0 + $0x30] sm:$0xff]
  %v61 = vld [vmem:[%s0 + $0x38] sm:$0xff]
  %v62 = vld [vmem:[%s0 + $0x40] sm:$0xff]
  %v63 = vld [vmem:[%s0 + $0x48] sm:$0xff]
  %v64 = vld [vmem:[%s0 + $0x50] sm:$0xff]
  %v65 = vld [vmem:[%s0 + $0x58] sm:$0xff]
  %v66 = vld [vmem:[%s0 + $0x60] sm:$0xff]
  %v67 = vld [vmem:[%s0 + $0x68] sm:$0xff]
  %v68 = vld [vmem:[%s0 + $0x70] sm:$0xff]
  %v69 = vld [vmem:[%s0 + $0x78] sm:$0xff]
  %v70 = vld [vmem:[%s0 + $0x80] sm:$0xff]
  %v71 = vld [vmem:[%s0 + $0x88] sm:$0xff]
  %v72 = vld [vmem:[%s0 + $0x90] sm:$0xff]
  %v73 = vld [vmem:[%s0 + $0x98] sm:$0xff]
  %v74 = vld [vmem:[%s0 + $0xa0] sm:$0xff]
  %v75 = vld [vmem:[%s0 + $0xa8] sm:$0xff]
  %v76 = vld [vmem:[%s0 + $0xb0] sm:$0xff]
  %v77 = vld [vmem:[%s0 + $0xb8] sm:$0xff]
  %v78 = vld [vmem:[%s0 + $0xc0] sm:$0xff]
  %v79 = vld [vmem:[%s0 + $0xc8] sm:$0xff]
  %v80 = vld [vmem:[%s0 + $0xd0] sm:$0xff]
  %v81 = vld [vmem:[%s0 + $0xd8] sm:$0xff]
  %v82 = vld [vmem:[%s0 + $0xe0] sm:$0xff]
  %v83 = vld [vmem:[%s0 + $0xe8] sm:$0xff]
  %v84 = vld [vmem:[%s0 + $0xf0] sm:$0xff]
  %v85 = vld [vmem:[%s0 + $0xf8] sm:$0xff]
  %v86 = vld [vmem:[%s0 + $0x100] sm:$0xff]
  %v87 = vld [vmem:[%s0 + $0x108] sm:$0xff]
  %v88 = vld [vmem:[%s0 + $0x110] sm:$0xff]
  %v89 = vld [vmem:[%s0 + $0x118] sm:$0xff]
  %v90 = vld [vmem:[%s0 + $0x120] sm:$0xff]
  %v91 = vld [vmem:[%s0 + $0x128] sm:$0xff]
  %v92 = vld [vmem:[%s0 + $0x130] sm:$0xff]
  %v93 = vld [vmem:[%s0 + $0x138] sm:$0xff]
  %v94 = vld [vmem:[%s0 + $0x140] sm:$0xff]
  %v95 = vld [vmem:[%s0 + $0x148] sm:$0xff]
  %v96 = vld [vmem:[%s0 + $0x150] sm:$0xff]
  %v97 = vld [vmem:[%s0 + $0x158] sm:$0xff]
  %v98 = vld [vmem:[%s0 + $0x160] sm:$0xff]
  %v99 = vld [vmem:[%s0 + $0x168] sm:$0xff]
  %v100 = vld [vmem:[%s0 + $0x170] sm:$0xff]
  %v101 = vld [vmem:[%s0 + $0x178] sm:$0xff]
  %v102 = vld [vmem:[%s0 + $0x180] sm:$0xff]
  %v103 = vld [vmem:[%s0 + $0x188] sm:$0xff]
  %v104 = vld [vmem:[%s0 + $0x190] sm:$0xff]
  %v105 = vld [vmem:[%s0 + $0x198] sm:$0xff]
  %v106 = vld [vmem:[%s0 + $0x1a0] sm:$0xff]
  %v107 = vld [vmem:[%s0 + $0x1a8] sm:$0xff]
  %v108 = vld [vmem:[%s0 + $0x1b0] sm:$0xff]
  %v109 = vld [vmem:[%s0 + $0x1b8] sm:$0xff]
  %v110 = vld [vmem:[%s0 + $0x1c0] sm:$0xff]
  %v111 = vld [vmem:[%s0 + $0x1c8] sm:$0xff]
  %v112 = vld [vmem:[%s0 + $0x1d0] sm:$0xff]
  %v113 = vld [vmem:[%s0 + $0x1d8] sm:$0xff]
  %v114 = vld [vmem:[%s0 + $0x1e0] sm:$0xff]
  %v115 = vld [vmem:[%s0 + $0x1e8] sm:$0xff]
  %v116 = vld [vmem:[%s0 + $0x1f0] sm:$0xff]
  %v117 = vld [vmem:[%s0 + $0x1f8] sm:$0xff]
  %v118 = vld [vmem:[%s1] sm:$0xff]
  %v119 = vld [vmem:[%s1 + $0x8] sm:$0xff]
  %v120 = vld [vmem:[%s1 + $0x10] sm:$0xff]
  %v121 = vld [vmem:[%s1 + $0x18] sm:$0xff]
  %v122 = vld [vmem:[%s1 + $0x20] sm:$0xff]
  %v123 = vld [vmem:[%s1 + $0x28] sm:$0xff]
  %v124 = vld [vmem:[%s1 + $0x30] sm:$0xff]
  %v125 = vld [vmem:[%s1 + $0x38] sm:$0xff]
  %v126 = vld [vmem:[%s1 + $0x40] sm:$0xff]
  %v127 = vld [vmem:[%s1 + $0x48] sm:$0xff]
  %v128 = vld [vmem:[%s1 + $0x50] sm:$0xff]
  %v129 = vld [vmem:[%s1 + $0x58] sm:$0xff]
  %v130 = vld [vmem:[%s1 + $0x60] sm:$0xff]
  %v131 = vld [vmem:[%s1 + $0x68] sm:$0xff]
  %v132 = vld [vmem:[%s1 + $0x70] sm:$0xff]
  %v133 = vld [vmem:[%s1 + $0x78] sm:$0xff]
  %v134 = vld [vmem:[%s1 + $0x80] sm:$0xff]
  %v135 = vld [vmem:[%s1 + $0x88] sm:$0xff]
  %v136 = vld [vmem:[%s1 + $0x90] sm:$0xff]
  %v137 = vld [vmem:[%s1 + $0x98] sm:$0xff]
  %v138 = vld [vmem:[%s1 + $0xa0] sm:$0xff]
  %v139 = vld [vmem:[%s1 + $0xa8] sm:$0xff]
  %v140 = vld [vmem:[%s1 + $0xb0] sm:$0xff]
  %v141 = vld [vmem:[%s1 + $0xb8] sm:$0xff]
  %v142 = vld [vmem:[%s1 + $0xc0] sm:$0xff]
  %v143 = vld [vmem:[%s1 + $0xc8] sm:$0xff]
  %v144 = vld [vmem:[%s1 + $0xd0] sm:$0xff]
  %v145 = vld [vmem:[%s1 + $0xd8] sm:$0xff]
  %v146 = vld [vmem:[%s1 + $0xe0] sm:$0xff]
  %v147 = vld [vmem:[%s1 + $0xe8] sm:$0xff]
  %v148 = vld [vmem:[%s1 + $0xf0] sm:$0xff]
  %v149 = vld [vmem:[%s1 + $0xf8] sm:$0xff]
  %v150 = vld [vmem:[%s1 + $0x100] sm:$0xff]
  %v151 = vld [vmem:[%s1 + $0x108] sm:$0xff]
  %v152 = vld [vmem:[%s1 + $0x110] sm:$0xff]
  %v153 = vld [vmem:[%s1 + $0x118] sm:$0xff]
  %v154 = vld [vmem:[%s1 + $0x120] sm:$0xff]
  %v155 = vld [vmem:[%s1 + $0x128] sm:$0xff]
  %v156 = vld [vmem:[%s1 + $0x130] sm:$0xff]
  %v157 = vld [vmem:[%s1 + $0x138] sm:$0xff]
  %v158 = vld [vmem:[%s1 + $0x140] sm:$0xff]
  %v159 = vld [vmem:[%s1 + $0x148] sm:$0xff]
  %v160 = vld [vmem:[%s1 + $0x150] sm:$0xff]
  %v161 = vld [vmem:[%s1 + $0x158] sm:$0xff]
  %v162 = vld [vmem:[%s1 + $0x160] sm:$0xff]
  %v163 = vld [vmem:[%s1 + $0x168] sm:$0xff]
  %v164 = vld [vmem:[%s1 + $0x170] sm:$0xff]
  %v165 = vld [vmem:[%s1 + $0x178] sm:$0xff]
  %v166 = vld [vmem:[%s1 + $0x180] sm:$0xff]
  %v167 = vld [vmem:[%s1 + $0x188] sm:$0xff]
  %v168 = vld [vmem:[%s1 + $0x190] sm:$0xff]
  %v169 = vld [vmem:[%s1 + $0x198] sm:$0xff]
  %v170 = vld [vmem:[%s1 + $0x1a0] sm:$0xff]
  %v171 = vld [vmem:[%s1 + $0x1a8] sm:$0xff]
  %v172 = vld [vmem:[%s1 + $0x1b0] sm:$0xff]
  %v173 = vld [vmem:[%s1 + $0x1b8] sm:$0xff]
  %v174 = vld [vmem:[%s1 + $0x1c0] sm:$0xff]
  %v175 = vld [vmem:[%s1 + $0x1c8] sm:$0xff]
  %v176 = vld [vmem:[%s1 + $0x1d0] sm:$0xff]
  %v177 = vld [vmem:[%s1 + $0x1d8] sm:$0xff]
  %v178 = vld [vmem:[%s1 + $0x1e0] sm:$0xff]
  %v179 = vld [vmem:[%s1 + $0x1e8] sm:$0xff]
  %v180 = vld [vmem:[%s1 + $0x1f0] sm:$0xff]
  %v181 = vld [vmem:[%s1 + $0x1f8] sm:$0xff]
  %v182 = vld [vmem:[%s1 + $0x200] sm:$0xff]
  %v183 = vld [vmem:[%s1 + $0x208] sm:$0xff]
  %v184 = vld [vmem:[%s1 + $0x210] sm:$0xff]
  %v185 = vld [vmem:[%s1 + $0x218] sm:$0xff]
  %v186 = vld [vmem:[%s1 + $0x220] sm:$0xff]
  %v187 = vld [vmem:[%s1 + $0x228] sm:$0xff]
  %v188 = vld [vmem:[%s1 + $0x230] sm:$0xff]
  %v189 = vld [vmem:[%s1 + $0x238] sm:$0xff]
  %v190 = vld [vmem:[%s1 + $0x240] sm:$0xff]
  %v191 = vld [vmem:[%s1 + $0x248] sm:$0xff]
  %v192 = vld [vmem:[%s1 + $0x250] sm:$0xff]
  %v193 = vld [vmem:[%s1 + $0x258] sm:$0xff]
  %v194 = vld [vmem:[%s1 + $0x260] sm:$0xff]
  %v195 = vld [vmem:[%s1 + $0x268] sm:$0xff]
  %v196 = vld [vmem:[%s1 + $0x270] sm:$0xff]
  %v197 = vld [vmem:[%s1 + $0x278] sm:$0xff]
  %v198 = vld [vmem:[%s1 + $0x280] sm:$0xff]
  %v199 = vld [vmem:[%s1 + $0x288] sm:$0xff]
  %v200 = vld [vmem:[%s1 + $0x290] sm:$0xff]
  %v201 = vld [vmem:[%s1 + $0x298] sm:$0xff]
  %v202 = vld [vmem:[%s1 + $0x2a0] sm:$0xff]
  %v203 = vld [vmem:[%s1 + $0x2a8] sm:$0xff]
  %v204 = vld [vmem:[%s1 + $0x2b0] sm:$0xff]
  %v205 = vld [vmem:[%s1 + $0x2b8] sm:$0xff]
  %v206 = vld [vmem:[%s1 + $0x2c0] sm:$0xff]
  %v207 = vld [vmem:[%s1 + $0x2c8] sm:$0xff]
  %v208 = vld [vmem:[%s1 + $0x2d0] sm:$0xff]
  %v209 = vld [vmem:[%s1 + $0x2d8] sm:$0xff]
  %v210 = vld [vmem:[%s1 + $0x2e0] sm:$0xff]
  %v211 = vld [vmem:[%s1 + $0x2e8] sm:$0xff]
  %v212 = vld [vmem:[%s1 + $0x2f0] sm:$0xff]
  %v213 = vld [vmem:[%s1 + $0x2f8] sm:$0xff]
  %v214 = vld [vmem:[%s1 + $0x300] sm:$0xff]
  %v215 = vld [vmem:[%s1 + $0x308] sm:$0xff]
  %v216 = vld [vmem:[%s1 + $0x310] sm:$0xff]
  %v217 = vld [vmem:[%s1 + $0x318] sm:$0xff]
  %v218 = vld [vmem:[%s1 + $0x320] sm:$0xff]
  %v219 = vld [vmem:[%s1 + $0x328] sm:$0xff]
  %v220 = vld [vmem:[%s1 + $0x330] sm:$0xff]
  %v221 = vld [vmem:[%s1 + $0x338] sm:$0xff]
  %v222 = vld [vmem:[%s1 + $0x340] sm:$0xff]
  %v223 = vld [vmem:[%s1 + $0x348] sm:$0xff]
  %v224 = vld [vmem:[%s1 + $0x350] sm:$0xff]
  %v225 = vld [vmem:[%s1 + $0x358] sm:$0xff]
  %v226 = vld [vmem:[%s1 + $0x360] sm:$0xff]
  %v227 = vld [vmem:[%s1 + $0x368] sm:$0xff]
  %v228 = vld [vmem:[%s1 + $0x370] sm:$0xff]
  %v229 = vld [vmem:[%s1 + $0x378] sm:$0xff]
  %v230 = vld [vmem:[%s1 + $0x380] sm:$0xff]
  %v231 = vld [vmem:[%s1 + $0x388] sm:$0xff]
  %v232 = vld [vmem:[%s1 + $0x390] sm:$0xff]
  %v233 = vld [vmem:[%s1 + $0x398] sm:$0xff]
  %v234 = vld [vmem:[%s1 + $0x3a0] sm:$0xff]
  %v235 = vld [vmem:[%s1 + $0x3a8] sm:$0xff]
  %v236 = vld [vmem:[%s1 + $0x3b0] sm:$0xff]
  %v237 = vld [vmem:[%s1 + $0x3b8] sm:$0xff]
  %v238 = vld [vmem:[%s1 + $0x3c0] sm:$0xff]
  %v239 = vld [vmem:[%s1 + $0x3c8] sm:$0xff]
  %v240 = vld [vmem:[%s1 + $0x3d0] sm:$0xff]
  %v241 = vld [vmem:[%s1 + $0x3d8] sm:$0xff]
  %v242 = vld [vmem:[%s1 + $0x3e0] sm:$0xff]
  %v243 = vld [vmem:[%s1 + $0x3e8] sm:$0xff]
  %v244 = vld [vmem:[%s1 + $0x3f0] sm:$0xff]
  %v245 = vld [vmem:[%s1 + $0x3f8] sm:$0xff]
  %v246 = vld [vmem:[%s1 + $0x400] sm:$0xff]
  %v247 = vld [vmem:[%s1 + $0x408] sm:$0xff]
  %v248 = vld [vmem:[%s1 + $0x410] sm:$0xff]
  %v249 = vld [vmem:[%s1 + $0x418] sm:$0xff]
  %v250 = vld [vmem:[%s1 + $0x420] sm:$0xff]
  %v251 = vld [vmem:[%s1 + $0x428] sm:$0xff]
  %v252 = vld [vmem:[%s1 + $0x430] sm:$0xff]
  %v253 = vld [vmem:[%s1 + $0x438] sm:$0xff]
  %v254 = vld [vmem:[%s1 + $0x440] sm:$0xff]
  %v255 = vld [vmem:[%s1 + $0x448] sm:$0xff]
  %v256 = vld [vmem:[%s1 + $0x450] sm:$0xff]
  %v257 = vld [vmem:[%s1 + $0x458] sm:$0xff]
  %v258 = vld [vmem:[%s1 + $0x460] sm:$0xff]
  %v259 = vld [vmem:[%s1 + $0x468] sm:$0xff]
  %v260 = vld [vmem:[%s1 + $0x470] sm:$0xff]
  %v261 = vld [vmem:[%s1 + $0x478] sm:$0xff]
  %v262 = vld [vmem:[%s1 + $0x480] sm:$0xff]
  %v263 = vld [vmem:[%s1 + $0x488] sm:$0xff]
  %v264 = vld [vmem:[%s1 + $0x490] sm:$0xff]
  %v265 = vld [vmem:[%s1 + $0x498] sm:$0xff]
  %v266 = vld [vmem:[%s1 + $0x4a0] sm:$0xff]
  %v267 = vld [vmem:[%s1 + $0x4a8] sm:$0xff]
  %v268 = vld [vmem:[%s1 + $0x4b0] sm:$0xff]
  %v269 = vld [vmem:[%s1 + $0x4b8] sm:$0xff]
  %v270 = vld [vmem:[%s1 + $0x4c0] sm:$0xff]
  %v271 = vld [vmem:[%s1 + $0x4c8] sm:$0xff]
  %v272 = vld [vmem:[%s1 + $0x4d0] sm:$0xff]
  %v273 = vld [vmem:[%s1 + $0x4d8] sm:$0xff]
  %v274 = vld [vmem:[%s1 + $0x4e0] sm:$0xff]
  %v275 = vld [vmem:[%s1 + $0x4e8] sm:$0xff]
  %v276 = vld [vmem:[%s1 + $0x4f0] sm:$0xff]
  %v277 = vld [vmem:[%s1 + $0x4f8] sm:$0xff]
  %v278 = vld [vmem:[%s1 + $0x500] sm:$0xff]
  %v279 = vld [vmem:[%s1 + $0x508] sm:$0xff]
  %v280 = vld [vmem:[%s1 + $0x510] sm:$0xff]
  %v281 = vld [vmem:[%s1 + $0x518] sm:$0xff]
  %v282 = vld [vmem:[%s1 + $0x520] sm:$0xff]
  %v283 = vld [vmem:[%s1 + $0x528] sm:$0xff]
  %v284 = vld [vmem:[%s1 + $0x530] sm:$0xff]
  %v285 = vld [vmem:[%s1 + $0x538] sm:$0xff]
  %v286 = vld [vmem:[%s1 + $0x540] sm:$0xff]
  %v287 = vld [vmem:[%s1 + $0x548] sm:$0xff]
  %v288 = vld [vmem:[%s1 + $0x550] sm:$0xff]
  %v289 = vld [vmem:[%s1 + $0x558] sm:$0xff]
  %v290 = vld [vmem:[%s1 + $0x560] sm:$0xff]
  %v291 = vld [vmem:[%s1 + $0x568] sm:$0xff]
  %v292 = vld [vmem:[%s1 + $0x570] sm:$0xff]
  %v293 = vld [vmem:[%s1 + $0x578] sm:$0xff]
  %v294 = vld [vmem:[%s1 + $0x580] sm:$0xff]
  %v295 = vld [vmem:[%s1 + $0x588] sm:$0xff]
  %v296 = vld [vmem:[%s1 + $0x590] sm:$0xff]
  %v297 = vld [vmem:[%s1 + $0x598] sm:$0xff]
  %v298 = vld [vmem:[%s1 + $0x5a0] sm:$0xff]
  %v299 = vld [vmem:[%s1 + $0x5a8] sm:$0xff]
  %v300 = vld [vmem:[%s1 + $0x5b0] sm:$0xff]
  %v301 = vld [vmem:[%s1 + $0x5b8] sm:$0xff]
  %v302 = vld [vmem:[%s1 + $0x5c0] sm:$0xff]
  %v303 = vld [vmem:[%s1 + $0x5c8] sm:$0xff]
  %v304 = vld [vmem:[%s1 + $0x5d0] sm:$0xff]
  %v305 = vld [vmem:[%s1 + $0x5d8] sm:$0xff]
  %v306 = vld [vmem:[%s1 + $0x5e0] sm:$0xff]
  %v307 = vld [vmem:[%s1 + $0x5e8] sm:$0xff]
  %v308 = vld [vmem:[%s1 + $0x5f0] sm:$0xff]
  %v309 = vld [vmem:[%s1 + $0x5f8] sm:$0xff]
  %v310 = vld [vmem:[%s1 + $0x600] sm:$0xff]
  %v311 = vld [vmem:[%s1 + $0x608] sm:$0xff]
  %v312 = vld [vmem:[%s1 + $0x610] sm:$0xff]
  %v313 = vld [vmem:[%s1 + $0x618] sm:$0xff]
  %v314 = vld [vmem:[%s1 + $0x620] sm:$0xff]
  %v315 = vld [vmem:[%s1 + $0x628] sm:$0xff]
  %v316 = vld [vmem:[%s1 + $0x630] sm:$0xff]
  %v317 = vld [vmem:[%s1 + $0x638] sm:$0xff]
  %v318 = vld [vmem:[%s1 + $0x640] sm:$0xff]
  %v319 = vld [vmem:[%s1 + $0x648] sm:$0xff]
  %v320 = vld [vmem:[%s1 + $0x650] sm:$0xff]
  %v321 = vld [vmem:[%s1 + $0x658] sm:$0xff]
  %v322 = vld [vmem:[%s1 + $0x660] sm:$0xff]
  %v323 = vld [vmem:[%s1 + $0x668] sm:$0xff]
  %v324 = vld [vmem:[%s1 + $0x670] sm:$0xff]
  %v325 = vld [vmem:[%s1 + $0x678] sm:$0xff]
  %v326 = vld [vmem:[%s1 + $0x680] sm:$0xff]
  %v327 = vld [vmem:[%s1 + $0x688] sm:$0xff]
  %v328 = vld [vmem:[%s1 + $0x690] sm:$0xff]
  %v329 = vld [vmem:[%s1 + $0x698] sm:$0xff]
  %v330 = vld [vmem:[%s1 + $0x6a0] sm:$0xff]
  %v331 = vld [vmem:[%s1 + $0x6a8] sm:$0xff]
  %v332 = vld [vmem:[%s1 + $0x6b0] sm:$0xff]
  %v333 = vld [vmem:[%s1 + $0x6b8] sm:$0xff]
  %v334 = vld [vmem:[%s1 + $0x6c0] sm:$0xff]
  %v335 = vld [vmem:[%s1 + $0x6c8] sm:$0xff]
  %v336 = vld [vmem:[%s1 + $0x6d0] sm:$0xff]
  %v337 = vld [vmem:[%s1 + $0x6d8] sm:$0xff]
  %v338 = vld [vmem:[%s1 + $0x6e0] sm:$0xff]
  %v339 = vld [vmem:[%s1 + $0x6e8] sm:$0xff]
  %v340 = vld [vmem:[%s1 + $0x6f0] sm:$0xff]
  %v341 = vld [vmem:[%s1 + $0x6f8] sm:$0xff]
  %v342 = vld [vmem:[%s1 + $0x700] sm:$0xff]
  %v343 = vld [vmem:[%s1 + $0x708] sm:$0xff]
  %v344 = vld [vmem:[%s1 + $0x710] sm:$0xff]
  %v345 = vld [vmem:[%s1 + $0x718] sm:$0xff]
  %v346 = vld [vmem:[%s1 + $0x720] sm:$0xff]
  %v347 = vld [vmem:[%s1 + $0x728] sm:$0xff]
  %v348 = vld [vmem:[%s1 + $0x730] sm:$0xff]
  %v349 = vld [vmem:[%s1 + $0x738] sm:$0xff]
  %v350 = vld [vmem:[%s1 + $0x740] sm:$0xff]
  %v351 = vld [vmem:[%s1 + $0x748] sm:$0xff]
  %v352 = vld [vmem:[%s1 + $0x750] sm:$0xff]
  %v353 = vld [vmem:[%s1 + $0x758] sm:$0xff]
  %v354 = vld [vmem:[%s1 + $0x760] sm:$0xff]
  %v355 = vld [vmem:[%s1 + $0x768] sm:$0xff]
  %v356 = vld [vmem:[%s1 + $0x770] sm:$0xff]
  %v357 = vld [vmem:[%s1 + $0x778] sm:$0xff]
  %v358 = vld [vmem:[%s2] sm:$0xf]
  %v360 = vlaneseq
  %v361 = vshrl.u32 %v360, 7
  %v362 = vsub.s32 0, %v361
  %v363 = vrot.slane %v358, %v362
  %v364 = vlaneseq
  %v365 = vshrl.u32 %v364, 7
  %v366 = vsub.s32 1, %v365
  %v367 = vrot.slane %v358, %v366
  %v368 = vlaneseq
  %v369 = vshrl.u32 %v368, 7
  %v370 = vsub.s32 2, %v369
  %v371 = vrot.slane %v358, %v370
  %v372 = vlaneseq
  %v373 = vshrl.u32 %v372, 7
  %v374 = vsub.s32 3, %v373
  %v375 = vrot.slane %v358, %v374
  %v444 = vunpack.c.l.b16 %v54
  %v445 = vunpack.c.h.b16 %v54
  %v446 = vunpack.c.l.b16 %v55
  %v447 = vunpack.c.h.b16 %v55
  %v448 = vunpack.c.l.b16 %v56
  %v449 = vunpack.c.h.b16 %v56
  %v450 = vunpack.c.l.b16 %v57
  %v451 = vunpack.c.h.b16 %v57
  %v452 = vunpack.c.l.b16 %v58
  %v453 = vunpack.c.h.b16 %v58
  %v454 = vunpack.c.l.b16 %v59
  %v455 = vunpack.c.h.b16 %v59
  %v456 = vunpack.c.l.b16 %v60
  %v457 = vunpack.c.h.b16 %v60
  %v458 = vunpack.c.l.b16 %v61
  %v459 = vunpack.c.h.b16 %v61
  %v460 = vunpack.c.l.b16 %v62
  %v461 = vunpack.c.h.b16 %v62
  %v462 = vunpack.c.l.b16 %v63
  %v463 = vunpack.c.h.b16 %v63
  %v464 = vunpack.c.l.b16 %v64
  %v465 = vunpack.c.h.b16 %v64
  %v466 = vunpack.c.l.b16 %v65
  %v467 = vunpack.c.h.b16 %v65
  %v468 = vunpack.c.l.b16 %v66
  %v469 = vunpack.c.h.b16 %v66
  %v470 = vunpack.c.l.b16 %v67
  %v471 = vunpack.c.h.b16 %v67
  %v472 = vunpack.c.l.b16 %v68
  %v473 = vunpack.c.h.b16 %v68
  %v474 = vunpack.c.l.b16 %v69
  %v475 = vunpack.c.h.b16 %v69
  %v476 = vunpack.c.l.b16 %v70
  %v477 = vunpack.c.h.b16 %v70
  %v478 = vunpack.c.l.b16 %v71
  %v479 = vunpack.c.h.b16 %v71
  %v480 = vunpack.c.l.b16 %v72
  %v481 = vunpack.c.h.b16 %v72
  %v482 = vunpack.c.l.b16 %v73
  %v483 = vunpack.c.h.b16 %v73
  %v484 = vunpack.c.l.b16 %v74
  %v485 = vunpack.c.h.b16 %v74
  %v486 = vunpack.c.l.b16 %v75
  %v487 = vunpack.c.h.b16 %v75
  %v488 = vunpack.c.l.b16 %v76
  %v489 = vunpack.c.h.b16 %v76
  %v490 = vunpack.c.l.b16 %v77
  %v491 = vunpack.c.h.b16 %v77
  %v492 = vunpack.c.l.b16 %v78
  %v493 = vunpack.c.h.b16 %v78
  %v494 = vunpack.c.l.b16 %v79
  %v495 = vunpack.c.h.b16 %v79
  %v496 = vunpack.c.l.b16 %v80
  %v497 = vunpack.c.h.b16 %v80
  %v498 = vunpack.c.l.b16 %v81
  %v499 = vunpack.c.h.b16 %v81
  %v500 = vunpack.c.l.b16 %v82
  %v501 = vunpack.c.h.b16 %v82
  %v502 = vunpack.c.l.b16 %v83
  %v503 = vunpack.c.h.b16 %v83
  %v504 = vunpack.c.l.b16 %v84
  %v505 = vunpack.c.h.b16 %v84
  %v506 = vunpack.c.l.b16 %v85
  %v507 = vunpack.c.h.b16 %v85
  %v508 = vunpack.c.l.b16 %v86
  %v509 = vunpack.c.h.b16 %v86
  %v510 = vunpack.c.l.b16 %v87
  %v511 = vunpack.c.h.b16 %v87
  %v512 = vunpack.c.l.b16 %v88
  %v513 = vunpack.c.h.b16 %v88
  %v514 = vunpack.c.l.b16 %v89
  %v515 = vunpack.c.h.b16 %v89
  %v516 = vunpack.c.l.b16 %v90
  %v517 = vunpack.c.h.b16 %v90
  %v518 = vunpack.c.l.b16 %v91
  %v519 = vunpack.c.h.b16 %v91
  %v520 = vunpack.c.l.b16 %v92
  %v521 = vunpack.c.h.b16 %v92
  %v522 = vunpack.c.l.b16 %v93
  %v523 = vunpack.c.h.b16 %v93
  %v524 = vunpack.c.l.b16 %v94
  %v525 = vunpack.c.h.b16 %v94
  %v526 = vunpack.c.l.b16 %v95
  %v527 = vunpack.c.h.b16 %v95
  %v528 = vunpack.c.l.b16 %v96
  %v529 = vunpack.c.h.b16 %v96
  %v530 = vunpack.c.l.b16 %v97
  %v531 = vunpack.c.h.b16 %v97
  %v532 = vunpack.c.l.b16 %v98
  %v533 = vunpack.c.h.b16 %v98
  %v534 = vunpack.c.l.b16 %v99
  %v535 = vunpack.c.h.b16 %v99
  %v536 = vunpack.c.l.b16 %v100
  %v537 = vunpack.c.h.b16 %v100
  %v538 = vunpack.c.l.b16 %v101
  %v539 = vunpack.c.h.b16 %v101
  %v540 = vunpack.c.l.b16 %v102
  %v541 = vunpack.c.h.b16 %v102
  %v542 = vunpack.c.l.b16 %v103
  %v543 = vunpack.c.h.b16 %v103
  %v544 = vunpack.c.l.b16 %v104
  %v545 = vunpack.c.h.b16 %v104
  %v546 = vunpack.c.l.b16 %v105
  %v547 = vunpack.c.h.b16 %v105
  %v548 = vunpack.c.l.b16 %v106
  %v549 = vunpack.c.h.b16 %v106
  %v550 = vunpack.c.l.b16 %v107
  %v551 = vunpack.c.h.b16 %v107
  %v552 = vunpack.c.l.b16 %v108
  %v553 = vunpack.c.h.b16 %v108
  %v554 = vunpack.c.l.b16 %v109
  %v555 = vunpack.c.h.b16 %v109
  %v556 = vunpack.c.l.b16 %v110
  %v557 = vunpack.c.h.b16 %v110
  %v558 = vunpack.c.l.b16 %v111
  %v559 = vunpack.c.h.b16 %v111
  %v560 = vunpack.c.l.b16 %v112
  %v561 = vunpack.c.h.b16 %v112
  %v562 = vunpack.c.l.b16 %v113
  %v563 = vunpack.c.h.b16 %v113
  %v564 = vunpack.c.l.b16 %v114
  %v565 = vunpack.c.h.b16 %v114
  %v566 = vunpack.c.l.b16 %v115
  %v567 = vunpack.c.h.b16 %v115
  %v568 = vunpack.c.l.b16 %v116
  %v569 = vunpack.c.h.b16 %v116
  %v570 = vunpack.c.l.b16 %v117
  %v571 = vunpack.c.h.b16 %v117
  %v572 = vpack.c.b16 %v452, %v444
  %v573 = vpack.c.b16 %v453, %v445
  %v574 = vpack.c.b16 %v454, %v446
  %v575 = vpack.c.b16 %v455, %v447
  %v576 = vpack.c.b16 %v456, %v448
  %v577 = vpack.c.b16 %v457, %v449
  %v578 = vpack.c.b16 %v458, %v450
  %v579 = vpack.c.b16 %v459, %v451
  %v580 = vpack.c.b16 %v468, %v460
  %v581 = vpack.c.b16 %v469, %v461
  %v582 = vpack.c.b16 %v470, %v462
  %v583 = vpack.c.b16 %v471, %v463
  %v584 = vpack.c.b16 %v472, %v464
  %v585 = vpack.c.b16 %v473, %v465
  %v586 = vpack.c.b16 %v474, %v466
  %v587 = vpack.c.b16 %v475, %v467
  %v588 = vpack.c.b16 %v484, %v476
  %v589 = vpack.c.b16 %v485, %v477
  %v590 = vpack.c.b16 %v486, %v478
  %v591 = vpack.c.b16 %v487, %v479
  %v592 = vpack.c.b16 %v488, %v480
  %v593 = vpack.c.b16 %v489, %v481
  %v594 = vpack.c.b16 %v490, %v482
  %v595 = vpack.c.b16 %v491, %v483
  %v596 = vpack.c.b16 %v500, %v492
  %v597 = vpack.c.b16 %v501, %v493
  %v598 = vpack.c.b16 %v502, %v494
  %v599 = vpack.c.b16 %v503, %v495
  %v600 = vpack.c.b16 %v504, %v496
  %v601 = vpack.c.b16 %v505, %v497
  %v602 = vpack.c.b16 %v506, %v498
  %v603 = vpack.c.b16 %v507, %v499
  %v604 = vpack.c.b16 %v516, %v508
  %v605 = vpack.c.b16 %v517, %v509
  %v606 = vpack.c.b16 %v518, %v510
  %v607 = vpack.c.b16 %v519, %v511
  %v608 = vpack.c.b16 %v520, %v512
  %v609 = vpack.c.b16 %v521, %v513
  %v610 = vpack.c.b16 %v522, %v514
  %v611 = vpack.c.b16 %v523, %v515
  %v612 = vpack.c.b16 %v532, %v524
  %v613 = vpack.c.b16 %v533, %v525
  %v614 = vpack.c.b16 %v534, %v526
  %v615 = vpack.c.b16 %v535, %v527
  %v616 = vpack.c.b16 %v536, %v528
  %v617 = vpack.c.b16 %v537, %v529
  %v618 = vpack.c.b16 %v538, %v530
  %v619 = vpack.c.b16 %v539, %v531
  %v620 = vpack.c.b16 %v548, %v540
  %v621 = vpack.c.b16 %v549, %v541
  %v622 = vpack.c.b16 %v550, %v542
  %v623 = vpack.c.b16 %v551, %v543
  %v624 = vpack.c.b16 %v552, %v544
  %v625 = vpack.c.b16 %v553, %v545
  %v626 = vpack.c.b16 %v554, %v546
  %v627 = vpack.c.b16 %v555, %v547
  %v628 = vpack.c.b16 %v564, %v556
  %v629 = vpack.c.b16 %v565, %v557
  %v630 = vpack.c.b16 %v566, %v558
  %v631 = vpack.c.b16 %v567, %v559
  %v632 = vpack.c.b16 %v568, %v560
  %v633 = vpack.c.b16 %v569, %v561
  %v634 = vpack.c.b16 %v570, %v562
  %v635 = vpack.c.b16 %v571, %v563
  %v932 = vunpack.c.l.b16 %v118
  %v933 = vunpack.c.h.b16 %v118
  %v934 = vunpack.c.l.b16 %v119
  %v935 = vunpack.c.h.b16 %v119
  %v936 = vunpack.c.l.b16 %v120
  %v937 = vunpack.c.h.b16 %v120
  %v938 = vunpack.c.l.b16 %v121
  %v939 = vunpack.c.h.b16 %v121
  %v940 = vunpack.c.l.b16 %v122
  %v941 = vunpack.c.h.b16 %v122
  %v942 = vunpack.c.l.b16 %v123
  %v943 = vunpack.c.h.b16 %v123
  %v944 = vunpack.c.l.b16 %v124
  %v945 = vunpack.c.h.b16 %v124
  %v946 = vunpack.c.l.b16 %v125
  %v947 = vunpack.c.h.b16 %v125
  %v948 = vunpack.c.l.b16 %v126
  %v949 = vunpack.c.h.b16 %v126
  %v950 = vunpack.c.l.b16 %v127
  %v951 = vunpack.c.h.b16 %v127
  %v952 = vunpack.c.l.b16 %v128
  %v953 = vunpack.c.h.b16 %v128
  %v954 = vunpack.c.l.b16 %v129
  %v955 = vunpack.c.h.b16 %v129
  %v956 = vunpack.c.l.b16 %v130
  %v957 = vunpack.c.h.b16 %v130
  %v958 = vunpack.c.l.b16 %v131
  %v959 = vunpack.c.h.b16 %v131
  %v960 = vunpack.c.l.b16 %v132
  %v961 = vunpack.c.h.b16 %v132
  %v962 = vunpack.c.l.b16 %v133
  %v963 = vunpack.c.h.b16 %v133
  %v964 = vunpack.c.l.b16 %v134
  %v965 = vunpack.c.h.b16 %v134
  %v966 = vunpack.c.l.b16 %v135
  %v967 = vunpack.c.h.b16 %v135
  %v968 = vunpack.c.l.b16 %v136
  %v969 = vunpack.c.h.b16 %v136
  %v970 = vunpack.c.l.b16 %v137
  %v971 = vunpack.c.h.b16 %v137
  %v972 = vunpack.c.l.b16 %v138
  %v973 = vunpack.c.h.b16 %v138
  %v974 = vunpack.c.l.b16 %v139
  %v975 = vunpack.c.h.b16 %v139
  %v976 = vunpack.c.l.b16 %v140
  %v977 = vunpack.c.h.b16 %v140
  %v978 = vunpack.c.l.b16 %v141
  %v979 = vunpack.c.h.b16 %v141
  %v980 = vunpack.c.l.b16 %v142
  %v981 = vunpack.c.h.b16 %v142
  %v982 = vunpack.c.l.b16 %v143
  %v983 = vunpack.c.h.b16 %v143
  %v984 = vunpack.c.l.b16 %v144
  %v985 = vunpack.c.h.b16 %v144
  %v986 = vunpack.c.l.b16 %v145
  %v987 = vunpack.c.h.b16 %v145
  %v988 = vunpack.c.l.b16 %v146
  %v989 = vunpack.c.h.b16 %v146
  %v990 = vunpack.c.l.b16 %v147
  %v991 = vunpack.c.h.b16 %v147
  %v992 = vunpack.c.l.b16 %v148
  %v993 = vunpack.c.h.b16 %v148
  %v994 = vunpack.c.l.b16 %v149
  %v995 = vunpack.c.h.b16 %v149
  %v996 = vunpack.c.l.b16 %v150
  %v997 = vunpack.c.h.b16 %v150
  %v998 = vunpack.c.l.b16 %v151
  %v999 = vunpack.c.h.b16 %v151
  %v1000 = vunpack.c.l.b16 %v152
  %v1001 = vunpack.c.h.b16 %v152
  %v1002 = vunpack.c.l.b16 %v153
  %v1003 = vunpack.c.h.b16 %v153
  %v1004 = vunpack.c.l.b16 %v154
  %v1005 = vunpack.c.h.b16 %v154
  %v1006 = vunpack.c.l.b16 %v155
  %v1007 = vunpack.c.h.b16 %v155
  %v1008 = vunpack.c.l.b16 %v156
  %v1009 = vunpack.c.h.b16 %v156
  %v1010 = vunpack.c.l.b16 %v157
  %v1011 = vunpack.c.h.b16 %v157
  %v1012 = vunpack.c.l.b16 %v158
  %v1013 = vunpack.c.h.b16 %v158
  %v1014 = vunpack.c.l.b16 %v159
  %v1015 = vunpack.c.h.b16 %v159
  %v1016 = vunpack.c.l.b16 %v160
  %v1017 = vunpack.c.h.b16 %v160
  %v1018 = vunpack.c.l.b16 %v161
  %v1019 = vunpack.c.h.b16 %v161
  %v1020 = vunpack.c.l.b16 %v162
  %v1021 = vunpack.c.h.b16 %v162
  %v1022 = vunpack.c.l.b16 %v163
  %v1023 = vunpack.c.h.b16 %v163
  %v1024 = vunpack.c.l.b16 %v164
  %v1025 = vunpack.c.h.b16 %v164
  %v1026 = vunpack.c.l.b16 %v165
  %v1027 = vunpack.c.h.b16 %v165
  %v1028 = vunpack.c.l.b16 %v166
  %v1029 = vunpack.c.h.b16 %v166
  %v1030 = vunpack.c.l.b16 %v167
  %v1031 = vunpack.c.h.b16 %v167
  %v1032 = vunpack.c.l.b16 %v168
  %v1033 = vunpack.c.h.b16 %v168
  %v1034 = vunpack.c.l.b16 %v169
  %v1035 = vunpack.c.h.b16 %v169
  %v1036 = vunpack.c.l.b16 %v170
  %v1037 = vunpack.c.h.b16 %v170
  %v1038 = vunpack.c.l.b16 %v171
  %v1039 = vunpack.c.h.b16 %v171
  %v1040 = vunpack.c.l.b16 %v172
  %v1041 = vunpack.c.h.b16 %v172
  %v1042 = vunpack.c.l.b16 %v173
  %v1043 = vunpack.c.h.b16 %v173
  %v1044 = vunpack.c.l.b16 %v174
  %v1045 = vunpack.c.h.b16 %v174
  %v1046 = vunpack.c.l.b16 %v175
  %v1047 = vunpack.c.h.b16 %v175
  %v1048 = vunpack.c.l.b16 %v176
  %v1049 = vunpack.c.h.b16 %v176
  %v1050 = vunpack.c.l.b16 %v177
  %v1051 = vunpack.c.h.b16 %v177
  %v1052 = vunpack.c.l.b16 %v178
  %v1053 = vunpack.c.h.b16 %v178
  %v1054 = vunpack.c.l.b16 %v179
  %v1055 = vunpack.c.h.b16 %v179
  %v1056 = vunpack.c.l.b16 %v180
  %v1057 = vunpack.c.h.b16 %v180
  %v1058 = vunpack.c.l.b16 %v181
  %v1059 = vunpack.c.h.b16 %v181
  %v1060 = vunpack.c.l.b16 %v182
  %v1061 = vunpack.c.h.b16 %v182
  %v1062 = vunpack.c.l.b16 %v183
  %v1063 = vunpack.c.h.b16 %v183
  %v1064 = vunpack.c.l.b16 %v184
  %v1065 = vunpack.c.h.b16 %v184
  %v1066 = vunpack.c.l.b16 %v185
  %v1067 = vunpack.c.h.b16 %v185
  %v1068 = vunpack.c.l.b16 %v186
  %v1069 = vunpack.c.h.b16 %v186
  %v1070 = vunpack.c.l.b16 %v187
  %v1071 = vunpack.c.h.b16 %v187
  %v1072 = vunpack.c.l.b16 %v188
  %v1073 = vunpack.c.h.b16 %v188
  %v1074 = vunpack.c.l.b16 %v189
  %v1075 = vunpack.c.h.b16 %v189
  %v1076 = vunpack.c.l.b16 %v190
  %v1077 = vunpack.c.h.b16 %v190
  %v1078 = vunpack.c.l.b16 %v191
  %v1079 = vunpack.c.h.b16 %v191
  %v1080 = vunpack.c.l.b16 %v192
  %v1081 = vunpack.c.h.b16 %v192
  %v1082 = vunpack.c.l.b16 %v193
  %v1083 = vunpack.c.h.b16 %v193
  %v1084 = vunpack.c.l.b16 %v194
  %v1085 = vunpack.c.h.b16 %v194
  %v1086 = vunpack.c.l.b16 %v195
  %v1087 = vunpack.c.h.b16 %v195
  %v1088 = vunpack.c.l.b16 %v196
  %v1089 = vunpack.c.h.b16 %v196
  %v1090 = vunpack.c.l.b16 %v197
  %v1091 = vunpack.c.h.b16 %v197
  %v1092 = vunpack.c.l.b16 %v198
  %v1093 = vunpack.c.h.b16 %v198
  %v1094 = vunpack.c.l.b16 %v199
  %v1095 = vunpack.c.h.b16 %v199
  %v1096 = vunpack.c.l.b16 %v200
  %v1097 = vunpack.c.h.b16 %v200
  %v1098 = vunpack.c.l.b16 %v201
  %v1099 = vunpack.c.h.b16 %v201
  %v1100 = vunpack.c.l.b16 %v202
  %v1101 = vunpack.c.h.b16 %v202
  %v1102 = vunpack.c.l.b16 %v203
  %v1103 = vunpack.c.h.b16 %v203
  %v1104 = vunpack.c.l.b16 %v204
  %v1105 = vunpack.c.h.b16 %v204
  %v1106 = vunpack.c.l.b16 %v205
  %v1107 = vunpack.c.h.b16 %v205
  %v1108 = vunpack.c.l.b16 %v206
  %v1109 = vunpack.c.h.b16 %v206
  %v1110 = vunpack.c.l.b16 %v207
  %v1111 = vunpack.c.h.b16 %v207
  %v1112 = vunpack.c.l.b16 %v208
  %v1113 = vunpack.c.h.b16 %v208
  %v1114 = vunpack.c.l.b16 %v209
  %v1115 = vunpack.c.h.b16 %v209
  %v1116 = vunpack.c.l.b16 %v210
  %v1117 = vunpack.c.h.b16 %v210
  %v1118 = vunpack.c.l.b16 %v211
  %v1119 = vunpack.c.h.b16 %v211
  %v1120 = vunpack.c.l.b16 %v212
  %v1121 = vunpack.c.h.b16 %v212
  %v1122 = vunpack.c.l.b16 %v213
  %v1123 = vunpack.c.h.b16 %v213
  %v1124 = vunpack.c.l.b16 %v214
  %v1125 = vunpack.c.h.b16 %v214
  %v1126 = vunpack.c.l.b16 %v215
  %v1127 = vunpack.c.h.b16 %v215
  %v1128 = vunpack.c.l.b16 %v216
  %v1129 = vunpack.c.h.b16 %v216
  %v1130 = vunpack.c.l.b16 %v217
  %v1131 = vunpack.c.h.b16 %v217
  %v1132 = vunpack.c.l.b16 %v218
  %v1133 = vunpack.c.h.b16 %v218
  %v1134 = vunpack.c.l.b16 %v219
  %v1135 = vunpack.c.h.b16 %v219
  %v1136 = vunpack.c.l.b16 %v220
  %v1137 = vunpack.c.h.b16 %v220
  %v1138 = vunpack.c.l.b16 %v221
  %v1139 = vunpack.c.h.b16 %v221
  %v1140 = vunpack.c.l.b16 %v222
  %v1141 = vunpack.c.h.b16 %v222
  %v1142 = vunpack.c.l.b16 %v223
  %v1143 = vunpack.c.h.b16 %v223
  %v1144 = vunpack.c.l.b16 %v224
  %v1145 = vunpack.c.h.b16 %v224
  %v1146 = vunpack.c.l.b16 %v225
  %v1147 = vunpack.c.h.b16 %v225
  %v1148 = vunpack.c.l.b16 %v226
  %v1149 = vunpack.c.h.b16 %v226
  %v1150 = vunpack.c.l.b16 %v227
  %v1151 = vunpack.c.h.b16 %v227
  %v1152 = vunpack.c.l.b16 %v228
  %v1153 = vunpack.c.h.b16 %v228
  %v1154 = vunpack.c.l.b16 %v229
  %v1155 = vunpack.c.h.b16 %v229
  %v1156 = vunpack.c.l.b16 %v230
  %v1157 = vunpack.c.h.b16 %v230
  %v1158 = vunpack.c.l.b16 %v231
  %v1159 = vunpack.c.h.b16 %v231
  %v1160 = vunpack.c.l.b16 %v232
  %v1161 = vunpack.c.h.b16 %v232
  %v1162 = vunpack.c.l.b16 %v233
  %v1163 = vunpack.c.h.b16 %v233
  %v1164 = vunpack.c.l.b16 %v234
  %v1165 = vunpack.c.h.b16 %v234
  %v1166 = vunpack.c.l.b16 %v235
  %v1167 = vunpack.c.h.b16 %v235
  %v1168 = vunpack.c.l.b16 %v236
  %v1169 = vunpack.c.h.b16 %v236
  %v1170 = vunpack.c.l.b16 %v237
  %v1171 = vunpack.c.h.b16 %v237
  %v1172 = vunpack.c.l.b16 %v238
  %v1173 = vunpack.c.h.b16 %v238
  %v1174 = vunpack.c.l.b16 %v239
  %v1175 = vunpack.c.h.b16 %v239
  %v1176 = vunpack.c.l.b16 %v240
  %v1177 = vunpack.c.h.b16 %v240
  %v1178 = vunpack.c.l.b16 %v241
  %v1179 = vunpack.c.h.b16 %v241
  %v1180 = vunpack.c.l.b16 %v242
  %v1181 = vunpack.c.h.b16 %v242
  %v1182 = vunpack.c.l.b16 %v243
  %v1183 = vunpack.c.h.b16 %v243
  %v1184 = vunpack.c.l.b16 %v244
  %v1185 = vunpack.c.h.b16 %v244
  %v1186 = vunpack.c.l.b16 %v245
  %v1187 = vunpack.c.h.b16 %v245
  %v1188 = vunpack.c.l.b16 %v246
  %v1189 = vunpack.c.h.b16 %v246
  %v1190 = vunpack.c.l.b16 %v247
  %v1191 = vunpack.c.h.b16 %v247
  %v1192 = vunpack.c.l.b16 %v248
  %v1193 = vunpack.c.h.b16 %v248
  %v1194 = vunpack.c.l.b16 %v249
  %v1195 = vunpack.c.h.b16 %v249
  %v1196 = vunpack.c.l.b16 %v250
  %v1197 = vunpack.c.h.b16 %v250
  %v1198 = vunpack.c.l.b16 %v251
  %v1199 = vunpack.c.h.b16 %v251
  %v1200 = vunpack.c.l.b16 %v252
  %v1201 = vunpack.c.h.b16 %v252
  %v1202 = vunpack.c.l.b16 %v253
  %v1203 = vunpack.c.h.b16 %v253
  %v1204 = vunpack.c.l.b16 %v254
  %v1205 = vunpack.c.h.b16 %v254
  %v1206 = vunpack.c.l.b16 %v255
  %v1207 = vunpack.c.h.b16 %v255
  %v1208 = vunpack.c.l.b16 %v256
  %v1209 = vunpack.c.h.b16 %v256
  %v1210 = vunpack.c.l.b16 %v257
  %v1211 = vunpack.c.h.b16 %v257
  %v1212 = vunpack.c.l.b16 %v258
  %v1213 = vunpack.c.h.b16 %v258
  %v1214 = vunpack.c.l.b16 %v259
  %v1215 = vunpack.c.h.b16 %v259
  %v1216 = vunpack.c.l.b16 %v260
  %v1217 = vunpack.c.h.b16 %v260
  %v1218 = vunpack.c.l.b16 %v261
  %v1219 = vunpack.c.h.b16 %v261
  %v1220 = vunpack.c.l.b16 %v262
  %v1221 = vunpack.c.h.b16 %v262
  %v1222 = vunpack.c.l.b16 %v263
  %v1223 = vunpack.c.h.b16 %v263
  %v1224 = vunpack.c.l.b16 %v264
  %v1225 = vunpack.c.h.b16 %v264
  %v1226 = vunpack.c.l.b16 %v265
  %v1227 = vunpack.c.h.b16 %v265
  %v1228 = vunpack.c.l.b16 %v266
  %v1229 = vunpack.c.h.b16 %v266
  %v1230 = vunpack.c.l.b16 %v267
  %v1231 = vunpack.c.h.b16 %v267
  %v1232 = vunpack.c.l.b16 %v268
  %v1233 = vunpack.c.h.b16 %v268
  %v1234 = vunpack.c.l.b16 %v269
  %v1235 = vunpack.c.h.b16 %v269
  %v1236 = vunpack.c.l.b16 %v270
  %v1237 = vunpack.c.h.b16 %v270
  %v1238 = vunpack.c.l.b16 %v271
  %v1239 = vunpack.c.h.b16 %v271
  %v1240 = vunpack.c.l.b16 %v272
  %v1241 = vunpack.c.h.b16 %v272
  %v1242 = vunpack.c.l.b16 %v273
  %v1243 = vunpack.c.h.b16 %v273
  %v1244 = vunpack.c.l.b16 %v274
  %v1245 = vunpack.c.h.b16 %v274
  %v1246 = vunpack.c.l.b16 %v275
  %v1247 = vunpack.c.h.b16 %v275
  %v1248 = vunpack.c.l.b16 %v276
  %v1249 = vunpack.c.h.b16 %v276
  %v1250 = vunpack.c.l.b16 %v277
  %v1251 = vunpack.c.h.b16 %v277
  %v1252 = vunpack.c.l.b16 %v278
  %v1253 = vunpack.c.h.b16 %v278
  %v1254 = vunpack.c.l.b16 %v279
  %v1255 = vunpack.c.h.b16 %v279
  %v1256 = vunpack.c.l.b16 %v280
  %v1257 = vunpack.c.h.b16 %v280
  %v1258 = vunpack.c.l.b16 %v281
  %v1259 = vunpack.c.h.b16 %v281
  %v1260 = vunpack.c.l.b16 %v282
  %v1261 = vunpack.c.h.b16 %v282
  %v1262 = vunpack.c.l.b16 %v283
  %v1263 = vunpack.c.h.b16 %v283
  %v1264 = vunpack.c.l.b16 %v284
  %v1265 = vunpack.c.h.b16 %v284
  %v1266 = vunpack.c.l.b16 %v285
  %v1267 = vunpack.c.h.b16 %v285
  %v1268 = vunpack.c.l.b16 %v286
  %v1269 = vunpack.c.h.b16 %v286
  %v1270 = vunpack.c.l.b16 %v287
  %v1271 = vunpack.c.h.b16 %v287
  %v1272 = vunpack.c.l.b16 %v288
  %v1273 = vunpack.c.h.b16 %v288
  %v1274 = vunpack.c.l.b16 %v289
  %v1275 = vunpack.c.h.b16 %v289
  %v1276 = vunpack.c.l.b16 %v290
  %v1277 = vunpack.c.h.b16 %v290
  %v1278 = vunpack.c.l.b16 %v291
  %v1279 = vunpack.c.h.b16 %v291
  %v1280 = vunpack.c.l.b16 %v292
  %v1281 = vunpack.c.h.b16 %v292
  %v1282 = vunpack.c.l.b16 %v293
  %v1283 = vunpack.c.h.b16 %v293
  %v1284 = vunpack.c.l.b16 %v294
  %v1285 = vunpack.c.h.b16 %v294
  %v1286 = vunpack.c.l.b16 %v295
  %v1287 = vunpack.c.h.b16 %v295
  %v1288 = vunpack.c.l.b16 %v296
  %v1289 = vunpack.c.h.b16 %v296
  %v1290 = vunpack.c.l.b16 %v297
  %v1291 = vunpack.c.h.b16 %v297
  %v1292 = vunpack.c.l.b16 %v298
  %v1293 = vunpack.c.h.b16 %v298
  %v1294 = vunpack.c.l.b16 %v299
  %v1295 = vunpack.c.h.b16 %v299
  %v1296 = vunpack.c.l.b16 %v300
  %v1297 = vunpack.c.h.b16 %v300
  %v1298 = vunpack.c.l.b16 %v301
  %v1299 = vunpack.c.h.b16 %v301
  %v1300 = vunpack.c.l.b16 %v302
  %v1301 = vunpack.c.h.b16 %v302
  %v1302 = vunpack.c.l.b16 %v303
  %v1303 = vunpack.c.h.b16 %v303
  %v1304 = vunpack.c.l.b16 %v304
  %v1305 = vunpack.c.h.b16 %v304
  %v1306 = vunpack.c.l.b16 %v305
  %v1307 = vunpack.c.h.b16 %v305
  %v1308 = vunpack.c.l.b16 %v306
  %v1309 = vunpack.c.h.b16 %v306
  %v1310 = vunpack.c.l.b16 %v307
  %v1311 = vunpack.c.h.b16 %v307
  %v1312 = vunpack.c.l.b16 %v308
  %v1313 = vunpack.c.h.b16 %v308
  %v1314 = vunpack.c.l.b16 %v309
  %v1315 = vunpack.c.h.b16 %v309
  %v1316 = vunpack.c.l.b16 %v310
  %v1317 = vunpack.c.h.b16 %v310
  %v1318 = vunpack.c.l.b16 %v311
  %v1319 = vunpack.c.h.b16 %v311
  %v1320 = vunpack.c.l.b16 %v312
  %v1321 = vunpack.c.h.b16 %v312
  %v1322 = vunpack.c.l.b16 %v313
  %v1323 = vunpack.c.h.b16 %v313
  %v1324 = vunpack.c.l.b16 %v314
  %v1325 = vunpack.c.h.b16 %v314
  %v1326 = vunpack.c.l.b16 %v315
  %v1327 = vunpack.c.h.b16 %v315
  %v1328 = vunpack.c.l.b16 %v316
  %v1329 = vunpack.c.h.b16 %v316
  %v1330 = vunpack.c.l.b16 %v317
  %v1331 = vunpack.c.h.b16 %v317
  %v1332 = vunpack.c.l.b16 %v318
  %v1333 = vunpack.c.h.b16 %v318
  %v1334 = vunpack.c.l.b16 %v319
  %v1335 = vunpack.c.h.b16 %v319
  %v1336 = vunpack.c.l.b16 %v320
  %v1337 = vunpack.c.h.b16 %v320
  %v1338 = vunpack.c.l.b16 %v321
  %v1339 = vunpack.c.h.b16 %v321
  %v1340 = vunpack.c.l.b16 %v322
  %v1341 = vunpack.c.h.b16 %v322
  %v1342 = vunpack.c.l.b16 %v323
  %v1343 = vunpack.c.h.b16 %v323
  %v1344 = vunpack.c.l.b16 %v324
  %v1345 = vunpack.c.h.b16 %v324
  %v1346 = vunpack.c.l.b16 %v325
  %v1347 = vunpack.c.h.b16 %v325
  %v1348 = vunpack.c.l.b16 %v326
  %v1349 = vunpack.c.h.b16 %v326
  %v1350 = vunpack.c.l.b16 %v327
  %v1351 = vunpack.c.h.b16 %v327
  %v1352 = vunpack.c.l.b16 %v328
  %v1353 = vunpack.c.h.b16 %v328
  %v1354 = vunpack.c.l.b16 %v329
  %v1355 = vunpack.c.h.b16 %v329
  %v1356 = vunpack.c.l.b16 %v330
  %v1357 = vunpack.c.h.b16 %v330
  %v1358 = vunpack.c.l.b16 %v331
  %v1359 = vunpack.c.h.b16 %v331
  %v1360 = vunpack.c.l.b16 %v332
  %v1361 = vunpack.c.h.b16 %v332
  %v1362 = vunpack.c.l.b16 %v333
  %v1363 = vunpack.c.h.b16 %v333
  %v1364 = vunpack.c.l.b16 %v334
  %v1365 = vunpack.c.h.b16 %v334
  %v1366 = vunpack.c.l.b16 %v335
  %v1367 = vunpack.c.h.b16 %v335
  %v1368 = vunpack.c.l.b16 %v336
  %v1369 = vunpack.c.h.b16 %v336
  %v1370 = vunpack.c.l.b16 %v337
  %v1371 = vunpack.c.h.b16 %v337
  %v1372 = vunpack.c.l.b16 %v338
  %v1373 = vunpack.c.h.b16 %v338
  %v1374 = vunpack.c.l.b16 %v339
  %v1375 = vunpack.c.h.b16 %v339
  %v1376 = vunpack.c.l.b16 %v340
  %v1377 = vunpack.c.h.b16 %v340
  %v1378 = vunpack.c.l.b16 %v341
  %v1379 = vunpack.c.h.b16 %v341
  %v1380 = vunpack.c.l.b16 %v342
  %v1381 = vunpack.c.h.b16 %v342
  %v1382 = vunpack.c.l.b16 %v343
  %v1383 = vunpack.c.h.b16 %v343
  %v1384 = vunpack.c.l.b16 %v344
  %v1385 = vunpack.c.h.b16 %v344
  %v1386 = vunpack.c.l.b16 %v345
  %v1387 = vunpack.c.h.b16 %v345
  %v1388 = vunpack.c.l.b16 %v346
  %v1389 = vunpack.c.h.b16 %v346
  %v1390 = vunpack.c.l.b16 %v347
  %v1391 = vunpack.c.h.b16 %v347
  %v1392 = vunpack.c.l.b16 %v348
  %v1393 = vunpack.c.h.b16 %v348
  %v1394 = vunpack.c.l.b16 %v349
  %v1395 = vunpack.c.h.b16 %v349
  %v1396 = vunpack.c.l.b16 %v350
  %v1397 = vunpack.c.h.b16 %v350
  %v1398 = vunpack.c.l.b16 %v351
  %v1399 = vunpack.c.h.b16 %v351
  %v1400 = vunpack.c.l.b16 %v352
  %v1401 = vunpack.c.h.b16 %v352
  %v1402 = vunpack.c.l.b16 %v353
  %v1403 = vunpack.c.h.b16 %v353
  %v1404 = vunpack.c.l.b16 %v354
  %v1405 = vunpack.c.h.b16 %v354
  %v1406 = vunpack.c.l.b16 %v355
  %v1407 = vunpack.c.h.b16 %v355
  %v1408 = vunpack.c.l.b16 %v356
  %v1409 = vunpack.c.h.b16 %v356
  %v1410 = vunpack.c.l.b16 %v357
  %v1411 = vunpack.c.h.b16 %v357
  %v1412 = vpack.c.b16 %v936, %v932
  %v1413 = vpack.c.b16 %v937, %v933
  %v1414 = vpack.c.b16 %v938, %v934
  %v1415 = vpack.c.b16 %v939, %v935
  %v1416 = vpack.c.b16 %v944, %v940
  %v1417 = vpack.c.b16 %v945, %v941
  %v1418 = vpack.c.b16 %v946, %v942
  %v1419 = vpack.c.b16 %v947, %v943
  %v1420 = vpack.c.b16 %v952, %v948
  %v1421 = vpack.c.b16 %v953, %v949
  %v1422 = vpack.c.b16 %v954, %v950
  %v1423 = vpack.c.b16 %v955, %v951
  %v1424 = vpack.c.b16 %v960, %v956
  %v1425 = vpack.c.b16 %v961, %v957
  %v1426 = vpack.c.b16 %v962, %v958
  %v1427 = vpack.c.b16 %v963, %v959
  %v1428 = vpack.c.b16 %v968, %v964
  %v1429 = vpack.c.b16 %v969, %v965
  %v1430 = vpack.c.b16 %v970, %v966
  %v1431 = vpack.c.b16 %v971, %v967
  %v1432 = vpack.c.b16 %v976, %v972
  %v1433 = vpack.c.b16 %v977, %v973
  %v1434 = vpack.c.b16 %v978, %v974
  %v1435 = vpack.c.b16 %v979, %v975
  %v1436 = vpack.c.b16 %v984, %v980
  %v1437 = vpack.c.b16 %v985, %v981
  %v1438 = vpack.c.b16 %v986, %v982
  %v1439 = vpack.c.b16 %v987, %v983
  %v1440 = vpack.c.b16 %v992, %v988
  %v1441 = vpack.c.b16 %v993, %v989
  %v1442 = vpack.c.b16 %v994, %v990
  %v1443 = vpack.c.b16 %v995, %v991
  %v1444 = vpack.c.b16 %v1000, %v996
  %v1445 = vpack.c.b16 %v1001, %v997
  %v1446 = vpack.c.b16 %v1002, %v998
  %v1447 = vpack.c.b16 %v1003, %v999
  %v1448 = vpack.c.b16 %v1008, %v1004
  %v1449 = vpack.c.b16 %v1009, %v1005
  %v1450 = vpack.c.b16 %v1010, %v1006
  %v1451 = vpack.c.b16 %v1011, %v1007
  %v1452 = vpack.c.b16 %v1016, %v1012
  %v1453 = vpack.c.b16 %v1017, %v1013
  %v1454 = vpack.c.b16 %v1018, %v1014
  %v1455 = vpack.c.b16 %v1019, %v1015
  %v1456 = vpack.c.b16 %v1024, %v1020
  %v1457 = vpack.c.b16 %v1025, %v1021
  %v1458 = vpack.c.b16 %v1026, %v1022
  %v1459 = vpack.c.b16 %v1027, %v1023
  %v1460 = vpack.c.b16 %v1032, %v1028
  %v1461 = vpack.c.b16 %v1033, %v1029
  %v1462 = vpack.c.b16 %v1034, %v1030
  %v1463 = vpack.c.b16 %v1035, %v1031
  %v1464 = vpack.c.b16 %v1040, %v1036
  %v1465 = vpack.c.b16 %v1041, %v1037
  %v1466 = vpack.c.b16 %v1042, %v1038
  %v1467 = vpack.c.b16 %v1043, %v1039
  %v1468 = vpack.c.b16 %v1048, %v1044
  %v1469 = vpack.c.b16 %v1049, %v1045
  %v1470 = vpack.c.b16 %v1050, %v1046
  %v1471 = vpack.c.b16 %v1051, %v1047
  %v1472 = vpack.c.b16 %v1056, %v1052
  %v1473 = vpack.c.b16 %v1057, %v1053
  %v1474 = vpack.c.b16 %v1058, %v1054
  %v1475 = vpack.c.b16 %v1059, %v1055
  %v1476 = vpack.c.b16 %v1064, %v1060
  %v1477 = vpack.c.b16 %v1065, %v1061
  %v1478 = vpack.c.b16 %v1066, %v1062
  %v1479 = vpack.c.b16 %v1067, %v1063
  %v1480 = vpack.c.b16 %v1072, %v1068
  %v1481 = vpack.c.b16 %v1073, %v1069
  %v1482 = vpack.c.b16 %v1074, %v1070
  %v1483 = vpack.c.b16 %v1075, %v1071
  %v1484 = vpack.c.b16 %v1080, %v1076
  %v1485 = vpack.c.b16 %v1081, %v1077
  %v1486 = vpack.c.b16 %v1082, %v1078
  %v1487 = vpack.c.b16 %v1083, %v1079
  %v1488 = vpack.c.b16 %v1088, %v1084
  %v1489 = vpack.c.b16 %v1089, %v1085
  %v1490 = vpack.c.b16 %v1090, %v1086
  %v1491 = vpack.c.b16 %v1091, %v1087
  %v1492 = vpack.c.b16 %v1096, %v1092
  %v1493 = vpack.c.b16 %v1097, %v1093
  %v1494 = vpack.c.b16 %v1098, %v1094
  %v1495 = vpack.c.b16 %v1099, %v1095
  %v1496 = vpack.c.b16 %v1104, %v1100
  %v1497 = vpack.c.b16 %v1105, %v1101
  %v1498 = vpack.c.b16 %v1106, %v1102
  %v1499 = vpack.c.b16 %v1107, %v1103
  %v1500 = vpack.c.b16 %v1112, %v1108
  %v1501 = vpack.c.b16 %v1113, %v1109
  %v1502 = vpack.c.b16 %v1114, %v1110
  %v1503 = vpack.c.b16 %v1115, %v1111
  %v1504 = vpack.c.b16 %v1120, %v1116
  %v1505 = vpack.c.b16 %v1121, %v1117
  %v1506 = vpack.c.b16 %v1122, %v1118
  %v1507 = vpack.c.b16 %v1123, %v1119
  %v1508 = vpack.c.b16 %v1128, %v1124
  %v1509 = vpack.c.b16 %v1129, %v1125
  %v1510 = vpack.c.b16 %v1130, %v1126
  %v1511 = vpack.c.b16 %v1131, %v1127
  %v1512 = vpack.c.b16 %v1136, %v1132
  %v1513 = vpack.c.b16 %v1137, %v1133
  %v1514 = vpack.c.b16 %v1138, %v1134
  %v1515 = vpack.c.b16 %v1139, %v1135
  %v1516 = vpack.c.b16 %v1144, %v1140
  %v1517 = vpack.c.b16 %v1145, %v1141
  %v1518 = vpack.c.b16 %v1146, %v1142
  %v1519 = vpack.c.b16 %v1147, %v1143
  %v1520 = vpack.c.b16 %v1152, %v1148
  %v1521 = vpack.c.b16 %v1153, %v1149
  %v1522 = vpack.c.b16 %v1154, %v1150
  %v1523 = vpack.c.b16 %v1155, %v1151
  %v1524 = vpack.c.b16 %v1160, %v1156
  %v1525 = vpack.c.b16 %v1161, %v1157
  %v1526 = vpack.c.b16 %v1162, %v1158
  %v1527 = vpack.c.b16 %v1163, %v1159
  %v1528 = vpack.c.b16 %v1168, %v1164
  %v1529 = vpack.c.b16 %v1169, %v1165
  %v1530 = vpack.c.b16 %v1170, %v1166
  %v1531 = vpack.c.b16 %v1171, %v1167
  %v1532 = vpack.c.b16 %v1176, %v1172
  %v1533 = vpack.c.b16 %v1177, %v1173
  %v1534 = vpack.c.b16 %v1178, %v1174
  %v1535 = vpack.c.b16 %v1179, %v1175
  %v1536 = vpack.c.b16 %v1184, %v1180
  %v1537 = vpack.c.b16 %v1185, %v1181
  %v1538 = vpack.c.b16 %v1186, %v1182
  %v1539 = vpack.c.b16 %v1187, %v1183
  %v1540 = vpack.c.b16 %v1192, %v1188
  %v1541 = vpack.c.b16 %v1193, %v1189
  %v1542 = vpack.c.b16 %v1194, %v1190
  %v1543 = vpack.c.b16 %v1195, %v1191
  %v1544 = vpack.c.b16 %v1200, %v1196
  %v1545 = vpack.c.b16 %v1201, %v1197
  %v1546 = vpack.c.b16 %v1202, %v1198
  %v1547 = vpack.c.b16 %v1203, %v1199
  %v1548 = vpack.c.b16 %v1208, %v1204
  %v1549 = vpack.c.b16 %v1209, %v1205
  %v1550 = vpack.c.b16 %v1210, %v1206
  %v1551 = vpack.c.b16 %v1211, %v1207
  %v1552 = vpack.c.b16 %v1216, %v1212
  %v1553 = vpack.c.b16 %v1217, %v1213
  %v1554 = vpack.c.b16 %v1218, %v1214
  %v1555 = vpack.c.b16 %v1219, %v1215
  %v1556 = vpack.c.b16 %v1224, %v1220
  %v1557 = vpack.c.b16 %v1225, %v1221
  %v1558 = vpack.c.b16 %v1226, %v1222
  %v1559 = vpack.c.b16 %v1227, %v1223
  %v1560 = vpack.c.b16 %v1232, %v1228
  %v1561 = vpack.c.b16 %v1233, %v1229
  %v1562 = vpack.c.b16 %v1234, %v1230
  %v1563 = vpack.c.b16 %v1235, %v1231
  %v1564 = vpack.c.b16 %v1240, %v1236
  %v1565 = vpack.c.b16 %v1241, %v1237
  %v1566 = vpack.c.b16 %v1242, %v1238
  %v1567 = vpack.c.b16 %v1243, %v1239
  %v1568 = vpack.c.b16 %v1248, %v1244
  %v1569 = vpack.c.b16 %v1249, %v1245
  %v1570 = vpack.c.b16 %v1250, %v1246
  %v1571 = vpack.c.b16 %v1251, %v1247
  %v1572 = vpack.c.b16 %v1256, %v1252
  %v1573 = vpack.c.b16 %v1257, %v1253
  %v1574 = vpack.c.b16 %v1258, %v1254
  %v1575 = vpack.c.b16 %v1259, %v1255
  %v1576 = vpack.c.b16 %v1264, %v1260
  %v1577 = vpack.c.b16 %v1265, %v1261
  %v1578 = vpack.c.b16 %v1266, %v1262
  %v1579 = vpack.c.b16 %v1267, %v1263
  %v1580 = vpack.c.b16 %v1272, %v1268
  %v1581 = vpack.c.b16 %v1273, %v1269
  %v1582 = vpack.c.b16 %v1274, %v1270
  %v1583 = vpack.c.b16 %v1275, %v1271
  %v1584 = vpack.c.b16 %v1280, %v1276
  %v1585 = vpack.c.b16 %v1281, %v1277
  %v1586 = vpack.c.b16 %v1282, %v1278
  %v1587 = vpack.c.b16 %v1283, %v1279
  %v1588 = vpack.c.b16 %v1288, %v1284
  %v1589 = vpack.c.b16 %v1289, %v1285
  %v1590 = vpack.c.b16 %v1290, %v1286
  %v1591 = vpack.c.b16 %v1291, %v1287
  %v1592 = vpack.c.b16 %v1296, %v1292
  %v1593 = vpack.c.b16 %v1297, %v1293
  %v1594 = vpack.c.b16 %v1298, %v1294
  %v1595 = vpack.c.b16 %v1299, %v1295
  %v1596 = vpack.c.b16 %v1304, %v1300
  %v1597 = vpack.c.b16 %v1305, %v1301
  %v1598 = vpack.c.b16 %v1306, %v1302
  %v1599 = vpack.c.b16 %v1307, %v1303
  %v1600 = vpack.c.b16 %v1312, %v1308
  %v1601 = vpack.c.b16 %v1313, %v1309
  %v1602 = vpack.c.b16 %v1314, %v1310
  %v1603 = vpack.c.b16 %v1315, %v1311
  %v1604 = vpack.c.b16 %v1320, %v1316
  %v1605 = vpack.c.b16 %v1321, %v1317
  %v1606 = vpack.c.b16 %v1322, %v1318
  %v1607 = vpack.c.b16 %v1323, %v1319
  %v1608 = vpack.c.b16 %v1328, %v1324
  %v1609 = vpack.c.b16 %v1329, %v1325
  %v1610 = vpack.c.b16 %v1330, %v1326
  %v1611 = vpack.c.b16 %v1331, %v1327
  %v1612 = vpack.c.b16 %v1336, %v1332
  %v1613 = vpack.c.b16 %v1337, %v1333
  %v1614 = vpack.c.b16 %v1338, %v1334
  %v1615 = vpack.c.b16 %v1339, %v1335
  %v1616 = vpack.c.b16 %v1344, %v1340
  %v1617 = vpack.c.b16 %v1345, %v1341
  %v1618 = vpack.c.b16 %v1346, %v1342
  %v1619 = vpack.c.b16 %v1347, %v1343
  %v1620 = vpack.c.b16 %v1352, %v1348
  %v1621 = vpack.c.b16 %v1353, %v1349
  %v1622 = vpack.c.b16 %v1354, %v1350
  %v1623 = vpack.c.b16 %v1355, %v1351
  %v1624 = vpack.c.b16 %v1360, %v1356
  %v1625 = vpack.c.b16 %v1361, %v1357
  %v1626 = vpack.c.b16 %v1362, %v1358
  %v1627 = vpack.c.b16 %v1363, %v1359
  %v1628 = vpack.c.b16 %v1368, %v1364
  %v1629 = vpack.c.b16 %v1369, %v1365
  %v1630 = vpack.c.b16 %v1370, %v1366
  %v1631 = vpack.c.b16 %v1371, %v1367
  %v1632 = vpack.c.b16 %v1376, %v1372
  %v1633 = vpack.c.b16 %v1377, %v1373
  %v1634 = vpack.c.b16 %v1378, %v1374
  %v1635 = vpack.c.b16 %v1379, %v1375
  %v1636 = vpack.c.b16 %v1384, %v1380
  %v1637 = vpack.c.b16 %v1385, %v1381
  %v1638 = vpack.c.b16 %v1386, %v1382
  %v1639 = vpack.c.b16 %v1387, %v1383
  %v1640 = vpack.c.b16 %v1392, %v1388
  %v1641 = vpack.c.b16 %v1393, %v1389
  %v1642 = vpack.c.b16 %v1394, %v1390
  %v1643 = vpack.c.b16 %v1395, %v1391
  %v1644 = vpack.c.b16 %v1400, %v1396
  %v1645 = vpack.c.b16 %v1401, %v1397
  %v1646 = vpack.c.b16 %v1402, %v1398
  %v1647 = vpack.c.b16 %v1403, %v1399
  %v1648 = vpack.c.b16 %v1408, %v1404
  %v1649 = vpack.c.b16 %v1409, %v1405
  %v1650 = vpack.c.b16 %v1410, %v1406
  %v1651 = vpack.c.b16 %v1411, %v1407
  %vm1892 = vcmask 523264
  %v1894 = vsel %vm1892, %v579, 0
  %v1897 = vsel %vm1892, %v587, 0
  %v1900 = vsel %vm1892, %v595, 0
  %v1903 = vsel %vm1892, %v603, 0
  %v1906 = vsel %vm1892, %v611, 0
  %v1909 = vsel %vm1892, %v619, 0
  %v1912 = vsel %vm1892, %v627, 0
  %v1915 = vsel %vm1892, %v635, 0
  %1917 = vmatprep.subr.bf16.mxu0 %v1413
  %1918 = vmatpush1.bf16.msra.mxu0 %v1412
  %1919 = vmatprep.subr.bf16.mxu0 %v1417
  %1920 = vmatpush1.bf16.msra.mxu0 %v1416
  %1921 = vmatprep.subr.bf16.mxu0 %v1421
  %1922 = vmatpush1.bf16.msra.mxu0 %v1420
  %1923 = vmatprep.subr.bf16.mxu0 %v1425
  %1924 = vmatpush1.bf16.msra.mxu0 %v1424
  %1925 = vmatprep.subr.bf16.mxu0 %v1429
  %1926 = vmatpush1.bf16.msra.mxu0 %v1428
  %1927 = vmatprep.subr.bf16.mxu0 %v1433
  %1928 = vmatpush1.bf16.msra.mxu0 %v1432
  %1929 = vmatprep.subr.bf16.mxu0 %v1437
  %1930 = vmatpush1.bf16.msra.mxu0 %v1436
  %1931 = vmatprep.subr.bf16.mxu0 %v1441
  %1932 = vmatpush1.bf16.msra.mxu0 %v1440
  %1933 = vmatprep.subr.bf16.mxu0 %v1445
  %1934 = vmatpush1.bf16.msra.mxu0 %v1444
  %1935 = vmatprep.subr.bf16.mxu0 %v1449
  %1936 = vmatpush1.bf16.msra.mxu0 %v1448
  %1937 = vmatprep.subr.bf16.mxu0 %v1453
  %1938 = vmatpush1.bf16.msra.mxu0 %v1452
  %1939 = vmatprep.subr.bf16.mxu0 %v1457
  %1940 = vmatpush1.bf16.msra.mxu0 %v1456
  %1941 = vmatprep.subr.bf16.mxu0 %v1461
  %1942 = vmatpush1.bf16.msra.mxu0 %v1460
  %1943 = vmatprep.subr.bf16.mxu0 %v1465
  %1944 = vmatpush1.bf16.msra.mxu0 %v1464
  %1945 = vmatprep.subr.bf16.mxu0 %v1469
  %1946 = vmatpush1.bf16.msra.mxu0 %v1468
  %1947 = vmatprep.subr.bf16.mxu0 %v1473
  %1948 = vmatpush1.bf16.msra.mxu0 %v1472
  %1949 = vmatprep.mubr.bf16.mxu0 %v573
  %1950 = vmatmul.mubr.bf16.gmra.mrb[0].mxu0 %v572
  %v1951 = vpop.f32.mrb[0].mxu0
  %v1952 = vadd.f32 %v363, %v1951
  %v1953 = vpop.f32.mrb[0].mxu0
  %v1954 = vadd.f32 %v367, %v1953
  %v1955 = vpop.f32.mrb[0].mxu0
  %v1956 = vadd.f32 %v363, %v1955
  %v1957 = vpop.f32.mrb[0].mxu0
  %v1958 = vadd.f32 %v367, %v1957
  %1959 = vmatprep.mubr.bf16.mxu0 %v581
  %1960 = vmatmul.mubr.bf16.gmra.mrb[0].mxu0 %v580
  %v1961 = vpop.f32.mrb[0].mxu0
  %v1962 = vadd.f32 %v363, %v1961
  %v1963 = vpop.f32.mrb[0].mxu0
  %v1964 = vadd.f32 %v367, %v1963
  %v1965 = vpop.f32.mrb[0].mxu0
  %v1966 = vadd.f32 %v363, %v1965
  %v1967 = vpop.f32.mrb[0].mxu0
  %v1968 = vadd.f32 %v367, %v1967
  %1969 = vmatprep.mubr.bf16.mxu0 %v589
  %1970 = vmatmul.mubr.bf16.gmra.mrb[0].mxu0 %v588
  %v1971 = vpop.f32.mrb[0].mxu0
  %v1972 = vadd.f32 %v363, %v1971
  %v1973 = vpop.f32.mrb[0].mxu0
  %v1974 = vadd.f32 %v367, %v1973
  %v1975 = vpop.f32.mrb[0].mxu0
  %v1976 = vadd.f32 %v363, %v1975
  %v1977 = vpop.f32.mrb[0].mxu0
  %v1978 = vadd.f32 %v367, %v1977
  %1979 = vmatprep.mubr.bf16.mxu0 %v597
  %1980 = vmatmul.mubr.bf16.gmra.mrb[0].mxu0 %v596
  %v1981 = vpop.f32.mrb[0].mxu0
  %v1982 = vadd.f32 %v363, %v1981
  %v1983 = vpop.f32.mrb[0].mxu0
  %v1984 = vadd.f32 %v367, %v1983
  %v1985 = vpop.f32.mrb[0].mxu0
  %v1986 = vadd.f32 %v363, %v1985
  %v1987 = vpop.f32.mrb[0].mxu0
  %v1988 = vadd.f32 %v367, %v1987
  %1989 = vmatprep.mubr.bf16.mxu0 %v605
  %1990 = vmatmul.mubr.bf16.gmra.mrb[0].mxu0 %v604
  %v1991 = vpop.f32.mrb[0].mxu0
  %v1992 = vadd.f32 %v363, %v1991
  %v1993 = vpop.f32.mrb[0].mxu0
  %v1994 = vadd.f32 %v367, %v1993
  %v1995 = vpop.f32.mrb[0].mxu0
  %v1996 = vadd.f32 %v363, %v1995
  %v1997 = vpop.f32.mrb[0].mxu0
  %v1998 = vadd.f32 %v367, %v1997
  %1999 = vmatprep.mubr.bf16.mxu0 %v613
  %2000 = vmatmul.mubr.bf16.gmra.mrb[0].mxu0 %v612
  %v2001 = vpop.f32.mrb[0].mxu0
  %v2002 = vadd.f32 %v363, %v2001
  %v2003 = vpop.f32.mrb[0].mxu0
  %v2004 = vadd.f32 %v367, %v2003
  %v2005 = vpop.f32.mrb[0].mxu0
  %v2006 = vadd.f32 %v363, %v2005
  %v2007 = vpop.f32.mrb[0].mxu0
  %v2008 = vadd.f32 %v367, %v2007
  %2009 = vmatprep.mubr.bf16.mxu0 %v621
  %2010 = vmatmul.mubr.bf16.gmra.mrb[0].mxu0 %v620
  %v2011 = vpop.f32.mrb[0].mxu0
  %v2012 = vadd.f32 %v363, %v2011
  %v2013 = vpop.f32.mrb[0].mxu0
  %v2014 = vadd.f32 %v367, %v2013
  %v2015 = vpop.f32.mrb[0].mxu0
  %v2016 = vadd.f32 %v363, %v2015
  %v2017 = vpop.f32.mrb[0].mxu0
  %v2018 = vadd.f32 %v367, %v2017
  %2019 = vmatprep.mubr.bf16.mxu0 %v629
  %2020 = vmatmul.mubr.bf16.gmra.mrb[0].mxu0 %v628
  %v2021 = vpop.f32.mrb[0].mxu0
  %v2022 = vadd.f32 %v363, %v2021
  %v2023 = vpop.f32.mrb[0].mxu0
  %v2024 = vadd.f32 %v367, %v2023
  %v2025 = vpop.f32.mrb[0].mxu0
  %v2026 = vadd.f32 %v363, %v2025
  %v2027 = vpop.f32.mrb[0].mxu0
  %v2028 = vadd.f32 %v367, %v2027
  %2029 = vdwg.mxu0
  %2030 = vmatprep.subr.bf16.mxu0 %v1477
  %2031 = vmatpush1.bf16.msra.mxu0 %v1476
  %2032 = vmatprep.subr.bf16.mxu0 %v1481
  %2033 = vmatpush1.bf16.msra.mxu0 %v1480
  %2034 = vmatprep.subr.bf16.mxu0 %v1485
  %2035 = vmatpush1.bf16.msra.mxu0 %v1484
  %2036 = vmatprep.subr.bf16.mxu0 %v1489
  %2037 = vmatpush1.bf16.msra.mxu0 %v1488
  %2038 = vmatprep.subr.bf16.mxu0 %v1493
  %2039 = vmatpush1.bf16.msra.mxu0 %v1492
  %2040 = vmatprep.subr.bf16.mxu0 %v1497
  %2041 = vmatpush1.bf16.msra.mxu0 %v1496
  %2042 = vmatprep.subr.bf16.mxu0 %v1501
  %2043 = vmatpush1.bf16.msra.mxu0 %v1500
  %2044 = vmatprep.subr.bf16.mxu0 %v1505
  %2045 = vmatpush1.bf16.msra.mxu0 %v1504
  %2046 = vmatprep.subr.bf16.mxu0 %v1509
  %2047 = vmatpush1.bf16.msra.mxu0 %v1508
  %2048 = vmatprep.subr.bf16.mxu0 %v1513
  %2049 = vmatpush1.bf16.msra.mxu0 %v1512
  %2050 = vmatprep.subr.bf16.mxu0 %v1517
  %2051 = vmatpush1.bf16.msra.mxu0 %v1516
  %2052 = vmatprep.subr.bf16.mxu0 %v1521
  %2053 = vmatpush1.bf16.msra.mxu0 %v1520
  %2054 = vmatprep.subr.bf16.mxu0 %v1525
  %2055 = vmatpush1.bf16.msra.mxu0 %v1524
  %2056 = vmatprep.subr.bf16.mxu0 %v1529
  %2057 = vmatpush1.bf16.msra.mxu0 %v1528
  %2058 = vmatprep.subr.bf16.mxu0 %v1533
  %2059 = vmatpush1.bf16.msra.mxu0 %v1532
  %2060 = vmatprep.subr.bf16.mxu0 %v1537
  %2061 = vmatpush1.bf16.msra.mxu0 %v1536
  %2062 = vmatprep.mubr.bf16.mxu0 %v575
  %2063 = vmatmul.mubr.bf16.gmra.mrb[0].mxu0 %v574
  %v2064 = vpop.f32.mrb[0].mxu0
  %v2065 = vadd.f32 %v1952, %v2064
  %v2066 = vpop.f32.mrb[0].mxu0
  %v2067 = vadd.f32 %v1954, %v2066
  %v2068 = vpop.f32.mrb[0].mxu0
  %v2069 = vadd.f32 %v1956, %v2068
  %v2070 = vpop.f32.mrb[0].mxu0
  %v2071 = vadd.f32 %v1958, %v2070
  %2072 = vmatprep.mubr.bf16.mxu0 %v583
  %2073 = vmatmul.mubr.bf16.gmra.mrb[0].mxu0 %v582
  %v2074 = vpop.f32.mrb[0].mxu0
  %v2075 = vadd.f32 %v1962, %v2074
  %v2076 = vpop.f32.mrb[0].mxu0
  %v2077 = vadd.f32 %v1964, %v2076
  %v2078 = vpop.f32.mrb[0].mxu0
  %v2079 = vadd.f32 %v1966, %v2078
  %v2080 = vpop.f32.mrb[0].mxu0
  %v2081 = vadd.f32 %v1968, %v2080
  %2082 = vmatprep.mubr.bf16.mxu0 %v591
  %2083 = vmatmul.mubr.bf16.gmra.mrb[0].mxu0 %v590
  %v2084 = vpop.f32.mrb[0].mxu0
  %v2085 = vadd.f32 %v1972, %v2084
  %v2086 = vpop.f32.mrb[0].mxu0
  %v2087 = vadd.f32 %v1974, %v2086
  %v2088 = vpop.f32.mrb[0].mxu0
  %v2089 = vadd.f32 %v1976, %v2088
  %v2090 = vpop.f32.mrb[0].mxu0
  %v2091 = vadd.f32 %v1978, %v2090
  %2092 = vmatprep.mubr.bf16.mxu0 %v599
  %2093 = vmatmul.mubr.bf16.gmra.mrb[0].mxu0 %v598
  %v2094 = vpop.f32.mrb[0].mxu0
  %v2095 = vadd.f32 %v1982, %v2094
  %v2096 = vpop.f32.mrb[0].mxu0
  %v2097 = vadd.f32 %v1984, %v2096
  %v2098 = vpop.f32.mrb[0].mxu0
  %v2099 = vadd.f32 %v1986, %v2098
  %v2100 = vpop.f32.mrb[0].mxu0
  %v2101 = vadd.f32 %v1988, %v2100
  %2102 = vmatprep.mubr.bf16.mxu0 %v607
  %2103 = vmatmul.mubr.bf16.gmra.mrb[0].mxu0 %v606
  %v2104 = vpop.f32.mrb[0].mxu0
  %v2105 = vadd.f32 %v1992, %v2104
  %v2106 = vpop.f32.mrb[0].mxu0
  %v2107 = vadd.f32 %v1994, %v2106
  %v2108 = vpop.f32.mrb[0].mxu0
  %v2109 = vadd.f32 %v1996, %v2108
  %v2110 = vpop.f32.mrb[0].mxu0
  %v2111 = vadd.f32 %v1998, %v2110
  %2112 = vmatprep.mubr.bf16.mxu0 %v615
  %2113 = vmatmul.mubr.bf16.gmra.mrb[0].mxu0 %v614
  %v2114 = vpop.f32.mrb[0].mxu0
  %v2115 = vadd.f32 %v2002, %v2114
  %v2116 = vpop.f32.mrb[0].mxu0
  %v2117 = vadd.f32 %v2004, %v2116
  %v2118 = vpop.f32.mrb[0].mxu0
  %v2119 = vadd.f32 %v2006, %v2118
  %v2120 = vpop.f32.mrb[0].mxu0
  %v2121 = vadd.f32 %v2008, %v2120
  %2122 = vmatprep.mubr.bf16.mxu0 %v623
  %2123 = vmatmul.mubr.bf16.gmra.mrb[0].mxu0 %v622
  %v2124 = vpop.f32.mrb[0].mxu0
  %v2125 = vadd.f32 %v2012, %v2124
  %v2126 = vpop.f32.mrb[0].mxu0
  %v2127 = vadd.f32 %v2014, %v2126
  %v2128 = vpop.f32.mrb[0].mxu0
  %v2129 = vadd.f32 %v2016, %v2128
  %v2130 = vpop.f32.mrb[0].mxu0
  %v2131 = vadd.f32 %v2018, %v2130
  %2132 = vmatprep.mubr.bf16.mxu0 %v631
  %2133 = vmatmul.mubr.bf16.gmra.mrb[0].mxu0 %v630
  %v2134 = vpop.f32.mrb[0].mxu0
  %v2135 = vadd.f32 %v2022, %v2134
  %v2136 = vpop.f32.mrb[0].mxu0
  %v2137 = vadd.f32 %v2024, %v2136
  %v2138 = vpop.f32.mrb[0].mxu0
  %v2139 = vadd.f32 %v2026, %v2138
  %v2140 = vpop.f32.mrb[0].mxu0
  %v2141 = vadd.f32 %v2028, %v2140
  %2142 = vdwg.mxu0
  %2143 = vmatprep.subr.bf16.mxu0 %v1541
  %2144 = vmatpush1.bf16.msra.mxu0 %v1540
  %2145 = vmatprep.subr.bf16.mxu0 %v1545
  %2146 = vmatpush1.bf16.msra.mxu0 %v1544
  %2147 = vmatprep.subr.bf16.mxu0 %v1549
  %2148 = vmatpush1.bf16.msra.mxu0 %v1548
  %2149 = vmatprep.subr.bf16.mxu0 %v1553
  %2150 = vmatpush1.bf16.msra.mxu0 %v1552
  %2151 = vmatprep.subr.bf16.mxu0 %v1557
  %2152 = vmatpush1.bf16.msra.mxu0 %v1556
  %2153 = vmatprep.subr.bf16.mxu0 %v1561
  %2154 = vmatpush1.bf16.msra.mxu0 %v1560
  %2155 = vmatprep.subr.bf16.mxu0 %v1565
  %2156 = vmatpush1.bf16.msra.mxu0 %v1564
  %2157 = vmatprep.subr.bf16.mxu0 %v1569
  %2158 = vmatpush1.bf16.msra.mxu0 %v1568
  %2159 = vmatprep.subr.bf16.mxu0 %v1573
  %2160 = vmatpush1.bf16.msra.mxu0 %v1572
  %2161 = vmatprep.subr.bf16.mxu0 %v1577
  %2162 = vmatpush1.bf16.msra.mxu0 %v1576
  %2163 = vmatprep.subr.bf16.mxu0 %v1581
  %2164 = vmatpush1.bf16.msra.mxu0 %v1580
  %2165 = vmatprep.subr.bf16.mxu0 %v1585
  %2166 = vmatpush1.bf16.msra.mxu0 %v1584
  %2167 = vmatprep.subr.bf16.mxu0 %v1589
  %2168 = vmatpush1.bf16.msra.mxu0 %v1588
  %2169 = vmatprep.subr.bf16.mxu0 %v1593
  %2170 = vmatpush1.bf16.msra.mxu0 %v1592
  %2171 = vmatprep.subr.bf16.mxu0 %v1597
  %2172 = vmatpush1.bf16.msra.mxu0 %v1596
  %2173 = vmatprep.subr.bf16.mxu0 %v1601
  %2174 = vmatpush1.bf16.msra.mxu0 %v1600
  %2175 = vmatprep.mubr.bf16.mxu0 %v577
  %2176 = vmatmul.mubr.bf16.gmra.mrb[0].mxu0 %v576
  %v2177 = vpop.f32.mrb[0].mxu0
  %v2178 = vadd.f32 %v2065, %v2177
  %v2179 = vpop.f32.mrb[0].mxu0
  %v2180 = vadd.f32 %v2067, %v2179
  %v2181 = vpop.f32.mrb[0].mxu0
  %v2182 = vadd.f32 %v2069, %v2181
  %v2183 = vpop.f32.mrb[0].mxu0
  %v2184 = vadd.f32 %v2071, %v2183
  %2185 = vmatprep.mubr.bf16.mxu0 %v585
  %2186 = vmatmul.mubr.bf16.gmra.mrb[0].mxu0 %v584
  %v2187 = vpop.f32.mrb[0].mxu0
  %v2188 = vadd.f32 %v2075, %v2187
  %v2189 = vpop.f32.mrb[0].mxu0
  %v2190 = vadd.f32 %v2077, %v2189
  %v2191 = vpop.f32.mrb[0].mxu0
  %v2192 = vadd.f32 %v2079, %v2191
  %v2193 = vpop.f32.mrb[0].mxu0
  %v2194 = vadd.f32 %v2081, %v2193
  %2195 = vmatprep.mubr.bf16.mxu0 %v593
  %2196 = vmatmul.mubr.bf16.gmra.mrb[0].mxu0 %v592
  %v2197 = vpop.f32.mrb[0].mxu0
  %v2198 = vadd.f32 %v2085, %v2197
  %v2199 = vpop.f32.mrb[0].mxu0
  %v2200 = vadd.f32 %v2087, %v2199
  %v2201 = vpop.f32.mrb[0].mxu0
  %v2202 = vadd.f32 %v2089, %v2201
  %v2203 = vpop.f32.mrb[0].mxu0
  %v2204 = vadd.f32 %v2091, %v2203
  %2205 = vmatprep.mubr.bf16.mxu0 %v601
  %2206 = vmatmul.mubr.bf16.gmra.mrb[0].mxu0 %v600
  %v2207 = vpop.f32.mrb[0].mxu0
  %v2208 = vadd.f32 %v2095, %v2207
  %v2209 = vpop.f32.mrb[0].mxu0
  %v2210 = vadd.f32 %v2097, %v2209
  %v2211 = vpop.f32.mrb[0].mxu0
  %v2212 = vadd.f32 %v2099, %v2211
  %v2213 = vpop.f32.mrb[0].mxu0
  %v2214 = vadd.f32 %v2101, %v2213
  %2215 = vmatprep.mubr.bf16.mxu0 %v609
  %2216 = vmatmul.mubr.bf16.gmra.mrb[0].mxu0 %v608
  %v2217 = vpop.f32.mrb[0].mxu0
  %v2218 = vadd.f32 %v2105, %v2217
  %v2219 = vpop.f32.mrb[0].mxu0
  %v2220 = vadd.f32 %v2107, %v2219
  %v2221 = vpop.f32.mrb[0].mxu0
  %v2222 = vadd.f32 %v2109, %v2221
  %v2223 = vpop.f32.mrb[0].mxu0
  %v2224 = vadd.f32 %v2111, %v2223
  %2225 = vmatprep.mubr.bf16.mxu0 %v617
  %2226 = vmatmul.mubr.bf16.gmra.mrb[0].mxu0 %v616
  %v2227 = vpop.f32.mrb[0].mxu0
  %v2228 = vadd.f32 %v2115, %v2227
  %v2229 = vpop.f32.mrb[0].mxu0
  %v2230 = vadd.f32 %v2117, %v2229
  %v2231 = vpop.f32.mrb[0].mxu0
  %v2232 = vadd.f32 %v2119, %v2231
  %v2233 = vpop.f32.mrb[0].mxu0
  %v2234 = vadd.f32 %v2121, %v2233
  %2235 = vmatprep.mubr.bf16.mxu0 %v625
  %2236 = vmatmul.mubr.bf16.gmra.mrb[0].mxu0 %v624
  %v2237 = vpop.f32.mrb[0].mxu0
  %v2238 = vadd.f32 %v2125, %v2237
  %v2239 = vpop.f32.mrb[0].mxu0
  %v2240 = vadd.f32 %v2127, %v2239
  %v2241 = vpop.f32.mrb[0].mxu0
  %v2242 = vadd.f32 %v2129, %v2241
  %v2243 = vpop.f32.mrb[0].mxu0
  %v2244 = vadd.f32 %v2131, %v2243
  %2245 = vmatprep.mubr.bf16.mxu0 %v633
  %2246 = vmatmul.mubr.bf16.gmra.mrb[0].mxu0 %v632
  %v2247 = vpop.f32.mrb[0].mxu0
  %v2248 = vadd.f32 %v2135, %v2247
  %v2249 = vpop.f32.mrb[0].mxu0
  %v2250 = vadd.f32 %v2137, %v2249
  %v2251 = vpop.f32.mrb[0].mxu0
  %v2252 = vadd.f32 %v2139, %v2251
  %v2253 = vpop.f32.mrb[0].mxu0
  %v2254 = vadd.f32 %v2141, %v2253
  %2255 = vdwg.mxu0
  %2256 = vmatprep.subr.bf16.mxu0 %v1605
  %2257 = vmatpush1.bf16.msra.mxu0 %v1604
  %2258 = vmatprep.subr.bf16.mxu0 %v1609
  %2259 = vmatpush1.bf16.msra.mxu0 %v1608
  %2260 = vmatprep.subr.bf16.mxu0 %v1613
  %2261 = vmatpush1.bf16.msra.mxu0 %v1612
  %2262 = vmatprep.subr.bf16.mxu0 %v1617
  %2263 = vmatpush1.bf16.msra.mxu0 %v1616
  %2264 = vmatprep.subr.bf16.mxu0 %v1621
  %2265 = vmatpush1.bf16.msra.mxu0 %v1620
  %2266 = vmatprep.subr.bf16.mxu0 %v1625
  %2267 = vmatpush1.bf16.msra.mxu0 %v1624
  %2268 = vmatprep.subr.bf16.mxu0 %v1629
  %2269 = vmatpush1.bf16.msra.mxu0 %v1628
  %2270 = vmatprep.subr.bf16.mxu0 %v1633
  %2271 = vmatpush1.bf16.msra.mxu0 %v1632
  %2272 = vmatprep.subr.bf16.mxu0 %v1637
  %2273 = vmatpush1.bf16.msra.mxu0 %v1636
  %2274 = vmatprep.subr.bf16.mxu0 %v1641
  %2275 = vmatpush1.bf16.msra.mxu0 %v1640
  %2276 = vmatprep.subr.bf16.mxu0 %v1645
  %2277 = vmatpush1.bf16.msra.mxu0 %v1644
  %2278 = vmatprep.subr.bf16.mxu0 %v1649
  %2279 = vmatpush1.bf16.msra.mxu0 %v1648
  %2280 = vmatprep.subr.bf16.mxu0 0
  %2281 = vmatpush1.bf16.msra.mxu0 0
  %2282 = vmatprep.subr.bf16.mxu0 0
  %2283 = vmatpush1.bf16.msra.mxu0 0
  %2284 = vmatprep.subr.bf16.mxu0 0
  %2285 = vmatpush1.bf16.msra.mxu0 0
  %2286 = vmatprep.subr.bf16.mxu0 0
  %2287 = vmatpush1.bf16.msra.mxu0 0
  %2288 = vmatprep.mubr.bf16.mxu0 %v1894
  %2289 = vmatmul.mubr.bf16.gmra.mrb[0].mxu0 %v578
  %v2290 = vpop.f32.mrb[0].mxu0
  %v2291 = vadd.f32 %v2178, %v2290
  %v2292 = vpop.f32.mrb[0].mxu0
  %v2293 = vadd.f32 %v2180, %v2292
  %v2294 = vpop.f32.mrb[0].mxu0
  %v2295 = vadd.f32 %v2182, %v2294
  %v2296 = vpop.f32.mrb[0].mxu0
  %v2297 = vadd.f32 %v2184, %v2296
  %2298 = vmatprep.mubr.bf16.mxu0 %v1897
  %2299 = vmatmul.mubr.bf16.gmra.mrb[0].mxu0 %v586
  %v2300 = vpop.f32.mrb[0].mxu0
  %v2301 = vadd.f32 %v2188, %v2300
  %v2302 = vpop.f32.mrb[0].mxu0
  %v2303 = vadd.f32 %v2190, %v2302
  %v2304 = vpop.f32.mrb[0].mxu0
  %v2305 = vadd.f32 %v2192, %v2304
  %v2306 = vpop.f32.mrb[0].mxu0
  %v2307 = vadd.f32 %v2194, %v2306
  %2308 = vmatprep.mubr.bf16.mxu0 %v1900
  %2309 = vmatmul.mubr.bf16.gmra.mrb[0].mxu0 %v594
  %v2310 = vpop.f32.mrb[0].mxu0
  %v2311 = vadd.f32 %v2198, %v2310
  %v2312 = vpop.f32.mrb[0].mxu0
  %v2313 = vadd.f32 %v2200, %v2312
  %v2314 = vpop.f32.mrb[0].mxu0
  %v2315 = vadd.f32 %v2202, %v2314
  %v2316 = vpop.f32.mrb[0].mxu0
  %v2317 = vadd.f32 %v2204, %v2316
  %2318 = vmatprep.mubr.bf16.mxu0 %v1903
  %2319 = vmatmul.mubr.bf16.gmra.mrb[0].mxu0 %v602
  %v2320 = vpop.f32.mrb[0].mxu0
  %v2321 = vadd.f32 %v2208, %v2320
  %v2322 = vpop.f32.mrb[0].mxu0
  %v2323 = vadd.f32 %v2210, %v2322
  %v2324 = vpop.f32.mrb[0].mxu0
  %v2325 = vadd.f32 %v2212, %v2324
  %v2326 = vpop.f32.mrb[0].mxu0
  %v2327 = vadd.f32 %v2214, %v2326
  %2328 = vmatprep.mubr.bf16.mxu0 %v1906
  %2329 = vmatmul.mubr.bf16.gmra.mrb[0].mxu0 %v610
  %v2330 = vpop.f32.mrb[0].mxu0
  %v2331 = vadd.f32 %v2218, %v2330
  %v2332 = vpop.f32.mrb[0].mxu0
  %v2333 = vadd.f32 %v2220, %v2332
  %v2334 = vpop.f32.mrb[0].mxu0
  %v2335 = vadd.f32 %v2222, %v2334
  %v2336 = vpop.f32.mrb[0].mxu0
  %v2337 = vadd.f32 %v2224, %v2336
  %2338 = vmatprep.mubr.bf16.mxu0 %v1909
  %2339 = vmatmul.mubr.bf16.gmra.mrb[0].mxu0 %v618
  %v2340 = vpop.f32.mrb[0].mxu0
  %v2341 = vadd.f32 %v2228, %v2340
  %v2342 = vpop.f32.mrb[0].mxu0
  %v2343 = vadd.f32 %v2230, %v2342
  %v2344 = vpop.f32.mrb[0].mxu0
  %v2345 = vadd.f32 %v2232, %v2344
  %v2346 = vpop.f32.mrb[0].mxu0
  %v2347 = vadd.f32 %v2234, %v2346
  %2348 = vmatprep.mubr.bf16.mxu0 %v1912
  %2349 = vmatmul.mubr.bf16.gmra.mrb[0].mxu0 %v626
  %v2350 = vpop.f32.mrb[0].mxu0
  %v2351 = vadd.f32 %v2238, %v2350
  %v2352 = vpop.f32.mrb[0].mxu0
  %v2353 = vadd.f32 %v2240, %v2352
  %v2354 = vpop.f32.mrb[0].mxu0
  %v2355 = vadd.f32 %v2242, %v2354
  %v2356 = vpop.f32.mrb[0].mxu0
  %v2357 = vadd.f32 %v2244, %v2356
  %2358 = vmatprep.mubr.bf16.mxu0 %v1915
  %2359 = vmatmul.mubr.bf16.gmra.mrb[0].mxu0 %v634
  %v2360 = vpop.f32.mrb[0].mxu0
  %v2361 = vadd.f32 %v2248, %v2360
  %v2362 = vpop.f32.mrb[0].mxu0
  %v2363 = vadd.f32 %v2250, %v2362
  %v2364 = vpop.f32.mrb[0].mxu0
  %v2365 = vadd.f32 %v2252, %v2364
  %v2366 = vpop.f32.mrb[0].mxu0
  %v2367 = vadd.f32 %v2254, %v2366
  %2368 = vdwg.mxu0
  %2369 = vmatprep.subr.bf16.mxu0 %v1415
  %2370 = vmatpush1.bf16.msra.mxu0 %v1414
  %2371 = vmatprep.subr.bf16.mxu0 %v1419
  %2372 = vmatpush1.bf16.msra.mxu0 %v1418
  %2373 = vmatprep.subr.bf16.mxu0 %v1423
  %2374 = vmatpush1.bf16.msra.mxu0 %v1422
  %2375 = vmatprep.subr.bf16.mxu0 %v1427
  %2376 = vmatpush1.bf16.msra.mxu0 %v1426
  %2377 = vmatprep.subr.bf16.mxu0 %v1431
  %2378 = vmatpush1.bf16.msra.mxu0 %v1430
  %2379 = vmatprep.subr.bf16.mxu0 %v1435
  %2380 = vmatpush1.bf16.msra.mxu0 %v1434
  %2381 = vmatprep.subr.bf16.mxu0 %v1439
  %2382 = vmatpush1.bf16.msra.mxu0 %v1438
  %2383 = vmatprep.subr.bf16.mxu0 %v1443
  %2384 = vmatpush1.bf16.msra.mxu0 %v1442
  %2385 = vmatprep.subr.bf16.mxu0 %v1447
  %2386 = vmatpush1.bf16.msra.mxu0 %v1446
  %2387 = vmatprep.subr.bf16.mxu0 %v1451
  %2388 = vmatpush1.bf16.msra.mxu0 %v1450
  %2389 = vmatprep.subr.bf16.mxu0 %v1455
  %2390 = vmatpush1.bf16.msra.mxu0 %v1454
  %2391 = vmatprep.subr.bf16.mxu0 %v1459
  %2392 = vmatpush1.bf16.msra.mxu0 %v1458
  %2393 = vmatprep.subr.bf16.mxu0 %v1463
  %2394 = vmatpush1.bf16.msra.mxu0 %v1462
  %2395 = vmatprep.subr.bf16.mxu0 %v1467
  %2396 = vmatpush1.bf16.msra.mxu0 %v1466
  %2397 = vmatprep.subr.bf16.mxu0 %v1471
  %2398 = vmatpush1.bf16.msra.mxu0 %v1470
  %2399 = vmatprep.subr.bf16.mxu0 %v1475
  %2400 = vmatpush1.bf16.msra.mxu0 %v1474
  %2401 = vmatprep.mubr.bf16.mxu0 %v573
  %2402 = vmatmul.mubr.bf16.gmra.mrb[0].mxu0 %v572
  %v2403 = vpop.f32.mrb[0].mxu0
  %v2404 = vadd.f32 %v371, %v2403
  %v2405 = vpop.f32.mrb[0].mxu0
  %v2406 = vadd.f32 %v375, %v2405
  %v2407 = vpop.f32.mrb[0].mxu0
  %v2408 = vadd.f32 %v371, %v2407
  %v2409 = vpop.f32.mrb[0].mxu0
  %v2410 = vadd.f32 %v375, %v2409
  %2411 = vmatprep.mubr.bf16.mxu0 %v581
  %2412 = vmatmul.mubr.bf16.gmra.mrb[0].mxu0 %v580
  %v2413 = vpop.f32.mrb[0].mxu0
  %v2414 = vadd.f32 %v371, %v2413
  %v2415 = vpop.f32.mrb[0].mxu0
  %v2416 = vadd.f32 %v375, %v2415
  %v2417 = vpop.f32.mrb[0].mxu0
  %v2418 = vadd.f32 %v371, %v2417
  %v2419 = vpop.f32.mrb[0].mxu0
  %v2420 = vadd.f32 %v375, %v2419
  %2421 = vmatprep.mubr.bf16.mxu0 %v589
  %2422 = vmatmul.mubr.bf16.gmra.mrb[0].mxu0 %v588
  %v2423 = vpop.f32.mrb[0].mxu0
  %v2424 = vadd.f32 %v371, %v2423
  %v2425 = vpop.f32.mrb[0].mxu0
  %v2426 = vadd.f32 %v375, %v2425
  %v2427 = vpop.f32.mrb[0].mxu0
  %v2428 = vadd.f32 %v371, %v2427
  %v2429 = vpop.f32.mrb[0].mxu0
  %v2430 = vadd.f32 %v375, %v2429
  %2431 = vmatprep.mubr.bf16.mxu0 %v597
  %2432 = vmatmul.mubr.bf16.gmra.mrb[0].mxu0 %v596
  %v2433 = vpop.f32.mrb[0].mxu0
  %v2434 = vadd.f32 %v371, %v2433
  %v2435 = vpop.f32.mrb[0].mxu0
  %v2436 = vadd.f32 %v375, %v2435
  %v2437 = vpop.f32.mrb[0].mxu0
  %v2438 = vadd.f32 %v371, %v2437
  %v2439 = vpop.f32.mrb[0].mxu0
  %v2440 = vadd.f32 %v375, %v2439
  %2441 = vmatprep.mubr.bf16.mxu0 %v605
  %2442 = vmatmul.mubr.bf16.gmra.mrb[0].mxu0 %v604
  %v2443 = vpop.f32.mrb[0].mxu0
  %v2444 = vadd.f32 %v371, %v2443
  %v2445 = vpop.f32.mrb[0].mxu0
  %v2446 = vadd.f32 %v375, %v2445
  %v2447 = vpop.f32.mrb[0].mxu0
  %v2448 = vadd.f32 %v371, %v2447
  %v2449 = vpop.f32.mrb[0].mxu0
  %v2450 = vadd.f32 %v375, %v2449
  %2451 = vmatprep.mubr.bf16.mxu0 %v613
  %2452 = vmatmul.mubr.bf16.gmra.mrb[0].mxu0 %v612
  %v2453 = vpop.f32.mrb[0].mxu0
  %v2454 = vadd.f32 %v371, %v2453
  %v2455 = vpop.f32.mrb[0].mxu0
  %v2456 = vadd.f32 %v375, %v2455
  %v2457 = vpop.f32.mrb[0].mxu0
  %v2458 = vadd.f32 %v371, %v2457
  %v2459 = vpop.f32.mrb[0].mxu0
  %v2460 = vadd.f32 %v375, %v2459
  %2461 = vmatprep.mubr.bf16.mxu0 %v621
  %2462 = vmatmul.mubr.bf16.gmra.mrb[0].mxu0 %v620
  %v2463 = vpop.f32.mrb[0].mxu0
  %v2464 = vadd.f32 %v371, %v2463
  %v2465 = vpop.f32.mrb[0].mxu0
  %v2466 = vadd.f32 %v375, %v2465
  %v2467 = vpop.f32.mrb[0].mxu0
  %v2468 = vadd.f32 %v371, %v2467
  %v2469 = vpop.f32.mrb[0].mxu0
  %v2470 = vadd.f32 %v375, %v2469
  %2471 = vmatprep.mubr.bf16.mxu0 %v629
  %2472 = vmatmul.mubr.bf16.gmra.mrb[0].mxu0 %v628
  %v2473 = vpop.f32.mrb[0].mxu0
  %v2474 = vadd.f32 %v371, %v2473
  %v2475 = vpop.f32.mrb[0].mxu0
  %v2476 = vadd.f32 %v375, %v2475
  %v2477 = vpop.f32.mrb[0].mxu0
  %v2478 = vadd.f32 %v371, %v2477
  %v2479 = vpop.f32.mrb[0].mxu0
  %v2480 = vadd.f32 %v375, %v2479
  %2481 = vdwg.mxu0
  %2482 = vmatprep.subr.bf16.mxu0 %v1479
  %2483 = vmatpush1.bf16.msra.mxu0 %v1478
  %2484 = vmatprep.subr.bf16.mxu0 %v1483
  %2485 = vmatpush1.bf16.msra.mxu0 %v1482
  %2486 = vmatprep.subr.bf16.mxu0 %v1487
  %2487 = vmatpush1.bf16.msra.mxu0 %v1486
  %2488 = vmatprep.subr.bf16.mxu0 %v1491
  %2489 = vmatpush1.bf16.msra.mxu0 %v1490
  %2490 = vmatprep.subr.bf16.mxu0 %v1495
  %2491 = vmatpush1.bf16.msra.mxu0 %v1494
  %2492 = vmatprep.subr.bf16.mxu0 %v1499
  %2493 = vmatpush1.bf16.msra.mxu0 %v1498
  %2494 = vmatprep.subr.bf16.mxu0 %v1503
  %2495 = vmatpush1.bf16.msra.mxu0 %v1502
  %2496 = vmatprep.subr.bf16.mxu0 %v1507
  %2497 = vmatpush1.bf16.msra.mxu0 %v1506
  %2498 = vmatprep.subr.bf16.mxu0 %v1511
  %2499 = vmatpush1.bf16.msra.mxu0 %v1510
  %2500 = vmatprep.subr.bf16.mxu0 %v1515
  %2501 = vmatpush1.bf16.msra.mxu0 %v1514
  %2502 = vmatprep.subr.bf16.mxu0 %v1519
  %2503 = vmatpush1.bf16.msra.mxu0 %v1518
  %2504 = vmatprep.subr.bf16.mxu0 %v1523
  %2505 = vmatpush1.bf16.msra.mxu0 %v1522
  %2506 = vmatprep.subr.bf16.mxu0 %v1527
  %2507 = vmatpush1.bf16.msra.mxu0 %v1526
  %2508 = vmatprep.subr.bf16.mxu0 %v1531
  %2509 = vmatpush1.bf16.msra.mxu0 %v1530
  %2510 = vmatprep.subr.bf16.mxu0 %v1535
  %2511 = vmatpush1.bf16.msra.mxu0 %v1534
  %2512 = vmatprep.subr.bf16.mxu0 %v1539
  %2513 = vmatpush1.bf16.msra.mxu0 %v1538
  %2514 = vmatprep.mubr.bf16.mxu0 %v575
  %2515 = vmatmul.mubr.bf16.gmra.mrb[0].mxu0 %v574
  %v2516 = vpop.f32.mrb[0].mxu0
  %v2517 = vadd.f32 %v2404, %v2516
  %v2518 = vpop.f32.mrb[0].mxu0
  %v2519 = vadd.f32 %v2406, %v2518
  %v2520 = vpop.f32.mrb[0].mxu0
  %v2521 = vadd.f32 %v2408, %v2520
  %v2522 = vpop.f32.mrb[0].mxu0
  %v2523 = vadd.f32 %v2410, %v2522
  %2524 = vmatprep.mubr.bf16.mxu0 %v583
  %2525 = vmatmul.mubr.bf16.gmra.mrb[0].mxu0 %v582
  %v2526 = vpop.f32.mrb[0].mxu0
  %v2527 = vadd.f32 %v2414, %v2526
  %v2528 = vpop.f32.mrb[0].mxu0
  %v2529 = vadd.f32 %v2416, %v2528
  %v2530 = vpop.f32.mrb[0].mxu0
  %v2531 = vadd.f32 %v2418, %v2530
  %v2532 = vpop.f32.mrb[0].mxu0
  %v2533 = vadd.f32 %v2420, %v2532
  %2534 = vmatprep.mubr.bf16.mxu0 %v591
  %2535 = vmatmul.mubr.bf16.gmra.mrb[0].mxu0 %v590
  %v2536 = vpop.f32.mrb[0].mxu0
  %v2537 = vadd.f32 %v2424, %v2536
  %v2538 = vpop.f32.mrb[0].mxu0
  %v2539 = vadd.f32 %v2426, %v2538
  %v2540 = vpop.f32.mrb[0].mxu0
  %v2541 = vadd.f32 %v2428, %v2540
  %v2542 = vpop.f32.mrb[0].mxu0
  %v2543 = vadd.f32 %v2430, %v2542
  %2544 = vmatprep.mubr.bf16.mxu0 %v599
  %2545 = vmatmul.mubr.bf16.gmra.mrb[0].mxu0 %v598
  %v2546 = vpop.f32.mrb[0].mxu0
  %v2547 = vadd.f32 %v2434, %v2546
  %v2548 = vpop.f32.mrb[0].mxu0
  %v2549 = vadd.f32 %v2436, %v2548
  %v2550 = vpop.f32.mrb[0].mxu0
  %v2551 = vadd.f32 %v2438, %v2550
  %v2552 = vpop.f32.mrb[0].mxu0
  %v2553 = vadd.f32 %v2440, %v2552
  %2554 = vmatprep.mubr.bf16.mxu0 %v607
  %2555 = vmatmul.mubr.bf16.gmra.mrb[0].mxu0 %v606
  %v2556 = vpop.f32.mrb[0].mxu0
  %v2557 = vadd.f32 %v2444, %v2556
  %v2558 = vpop.f32.mrb[0].mxu0
  %v2559 = vadd.f32 %v2446, %v2558
  %v2560 = vpop.f32.mrb[0].mxu0
  %v2561 = vadd.f32 %v2448, %v2560
  %v2562 = vpop.f32.mrb[0].mxu0
  %v2563 = vadd.f32 %v2450, %v2562
  %2564 = vmatprep.mubr.bf16.mxu0 %v615
  %2565 = vmatmul.mubr.bf16.gmra.mrb[0].mxu0 %v614
  %v2566 = vpop.f32.mrb[0].mxu0
  %v2567 = vadd.f32 %v2454, %v2566
  %v2568 = vpop.f32.mrb[0].mxu0
  %v2569 = vadd.f32 %v2456, %v2568
  %v2570 = vpop.f32.mrb[0].mxu0
  %v2571 = vadd.f32 %v2458, %v2570
  %v2572 = vpop.f32.mrb[0].mxu0
  %v2573 = vadd.f32 %v2460, %v2572
  %2574 = vmatprep.mubr.bf16.mxu0 %v623
  %2575 = vmatmul.mubr.bf16.gmra.mrb[0].mxu0 %v622
  %v2576 = vpop.f32.mrb[0].mxu0
  %v2577 = vadd.f32 %v2464, %v2576
  %v2578 = vpop.f32.mrb[0].mxu0
  %v2579 = vadd.f32 %v2466, %v2578
  %v2580 = vpop.f32.mrb[0].mxu0
  %v2581 = vadd.f32 %v2468, %v2580
  %v2582 = vpop.f32.mrb[0].mxu0
  %v2583 = vadd.f32 %v2470, %v2582
  %2584 = vmatprep.mubr.bf16.mxu0 %v631
  %2585 = vmatmul.mubr.bf16.gmra.mrb[0].mxu0 %v630
  %v2586 = vpop.f32.mrb[0].mxu0
  %v2587 = vadd.f32 %v2474, %v2586
  %v2588 = vpop.f32.mrb[0].mxu0
  %v2589 = vadd.f32 %v2476, %v2588
  %v2590 = vpop.f32.mrb[0].mxu0
  %v2591 = vadd.f32 %v2478, %v2590
  %v2592 = vpop.f32.mrb[0].mxu0
  %v2593 = vadd.f32 %v2480, %v2592
  %2594 = vdwg.mxu0
  %2595 = vmatprep.subr.bf16.mxu0 %v1543
  %2596 = vmatpush1.bf16.msra.mxu0 %v1542
  %2597 = vmatprep.subr.bf16.mxu0 %v1547
  %2598 = vmatpush1.bf16.msra.mxu0 %v1546
  %2599 = vmatprep.subr.bf16.mxu0 %v1551
  %2600 = vmatpush1.bf16.msra.mxu0 %v1550
  %2601 = vmatprep.subr.bf16.mxu0 %v1555
  %2602 = vmatpush1.bf16.msra.mxu0 %v1554
  %2603 = vmatprep.subr.bf16.mxu0 %v1559
  %2604 = vmatpush1.bf16.msra.mxu0 %v1558
  %2605 = vmatprep.subr.bf16.mxu0 %v1563
  %2606 = vmatpush1.bf16.msra.mxu0 %v1562
  %2607 = vmatprep.subr.bf16.mxu0 %v1567
  %2608 = vmatpush1.bf16.msra.mxu0 %v1566
  %2609 = vmatprep.subr.bf16.mxu0 %v1571
  %2610 = vmatpush1.bf16.msra.mxu0 %v1570
  %2611 = vmatprep.subr.bf16.mxu0 %v1575
  %2612 = vmatpush1.bf16.msra.mxu0 %v1574
  %2613 = vmatprep.subr.bf16.mxu0 %v1579
  %2614 = vmatpush1.bf16.msra.mxu0 %v1578
  %2615 = vmatprep.subr.bf16.mxu0 %v1583
  %2616 = vmatpush1.bf16.msra.mxu0 %v1582
  %2617 = vmatprep.subr.bf16.mxu0 %v1587
  %2618 = vmatpush1.bf16.msra.mxu0 %v1586
  %2619 = vmatprep.subr.bf16.mxu0 %v1591
  %2620 = vmatpush1.bf16.msra.mxu0 %v1590
  %2621 = vmatprep.subr.bf16.mxu0 %v1595
  %2622 = vmatpush1.bf16.msra.mxu0 %v1594
  %2623 = vmatprep.subr.bf16.mxu0 %v1599
  %2624 = vmatpush1.bf16.msra.mxu0 %v1598
  %2625 = vmatprep.subr.bf16.mxu0 %v1603
  %2626 = vmatpush1.bf16.msra.mxu0 %v1602
  %2627 = vmatprep.mubr.bf16.mxu0 %v577
  %2628 = vmatmul.mubr.bf16.gmra.mrb[0].mxu0 %v576
  %v2629 = vpop.f32.mrb[0].mxu0
  %v2630 = vadd.f32 %v2517, %v2629
  %v2631 = vpop.f32.mrb[0].mxu0
  %v2632 = vadd.f32 %v2519, %v2631
  %v2633 = vpop.f32.mrb[0].mxu0
  %v2634 = vadd.f32 %v2521, %v2633
  %v2635 = vpop.f32.mrb[0].mxu0
  %v2636 = vadd.f32 %v2523, %v2635
  %2637 = vmatprep.mubr.bf16.mxu0 %v585
  %2638 = vmatmul.mubr.bf16.gmra.mrb[0].mxu0 %v584
  %v2639 = vpop.f32.mrb[0].mxu0
  %v2640 = vadd.f32 %v2527, %v2639
  %v2641 = vpop.f32.mrb[0].mxu0
  %v2642 = vadd.f32 %v2529, %v2641
  %v2643 = vpop.f32.mrb[0].mxu0
  %v2644 = vadd.f32 %v2531, %v2643
  %v2645 = vpop.f32.mrb[0].mxu0
  %v2646 = vadd.f32 %v2533, %v2645
  %2647 = vmatprep.mubr.bf16.mxu0 %v593
  %2648 = vmatmul.mubr.bf16.gmra.mrb[0].mxu0 %v592
  %v2649 = vpop.f32.mrb[0].mxu0
  %v2650 = vadd.f32 %v2537, %v2649
  %v2651 = vpop.f32.mrb[0].mxu0
  %v2652 = vadd.f32 %v2539, %v2651
  %v2653 = vpop.f32.mrb[0].mxu0
  %v2654 = vadd.f32 %v2541, %v2653
  %v2655 = vpop.f32.mrb[0].mxu0
  %v2656 = vadd.f32 %v2543, %v2655
  %2657 = vmatprep.mubr.bf16.mxu0 %v601
  %2658 = vmatmul.mubr.bf16.gmra.mrb[0].mxu0 %v600
  %v2659 = vpop.f32.mrb[0].mxu0
  %v2660 = vadd.f32 %v2547, %v2659
  %v2661 = vpop.f32.mrb[0].mxu0
  %v2662 = vadd.f32 %v2549, %v2661
  %v2663 = vpop.f32.mrb[0].mxu0
  %v2664 = vadd.f32 %v2551, %v2663
  %v2665 = vpop.f32.mrb[0].mxu0
  %v2666 = vadd.f32 %v2553, %v2665
  %2667 = vmatprep.mubr.bf16.mxu0 %v609
  %2668 = vmatmul.mubr.bf16.gmra.mrb[0].mxu0 %v608
  %v2669 = vpop.f32.mrb[0].mxu0
  %v2670 = vadd.f32 %v2557, %v2669
  %v2671 = vpop.f32.mrb[0].mxu0
  %v2672 = vadd.f32 %v2559, %v2671
  %v2673 = vpop.f32.mrb[0].mxu0
  %v2674 = vadd.f32 %v2561, %v2673
  %v2675 = vpop.f32.mrb[0].mxu0
  %v2676 = vadd.f32 %v2563, %v2675
  %2677 = vmatprep.mubr.bf16.mxu0 %v617
  %2678 = vmatmul.mubr.bf16.gmra.mrb[0].mxu0 %v616
  %v2679 = vpop.f32.mrb[0].mxu0
  %v2680 = vadd.f32 %v2567, %v2679
  %v2681 = vpop.f32.mrb[0].mxu0
  %v2682 = vadd.f32 %v2569, %v2681
  %v2683 = vpop.f32.mrb[0].mxu0
  %v2684 = vadd.f32 %v2571, %v2683
  %v2685 = vpop.f32.mrb[0].mxu0
  %v2686 = vadd.f32 %v2573, %v2685
  %2687 = vmatprep.mubr.bf16.mxu0 %v625
  %2688 = vmatmul.mubr.bf16.gmra.mrb[0].mxu0 %v624
  %v2689 = vpop.f32.mrb[0].mxu0
  %v2690 = vadd.f32 %v2577, %v2689
  %v2691 = vpop.f32.mrb[0].mxu0
  %v2692 = vadd.f32 %v2579, %v2691
  %v2693 = vpop.f32.mrb[0].mxu0
  %v2694 = vadd.f32 %v2581, %v2693
  %v2695 = vpop.f32.mrb[0].mxu0
  %v2696 = vadd.f32 %v2583, %v2695
  %2697 = vmatprep.mubr.bf16.mxu0 %v633
  %2698 = vmatmul.mubr.bf16.gmra.mrb[0].mxu0 %v632
  %v2699 = vpop.f32.mrb[0].mxu0
  %v2700 = vadd.f32 %v2587, %v2699
  %v2701 = vpop.f32.mrb[0].mxu0
  %v2702 = vadd.f32 %v2589, %v2701
  %v2703 = vpop.f32.mrb[0].mxu0
  %v2704 = vadd.f32 %v2591, %v2703
  %v2705 = vpop.f32.mrb[0].mxu0
  %v2706 = vadd.f32 %v2593, %v2705
  %2707 = vdwg.mxu0
  %2708 = vmatprep.subr.bf16.mxu0 %v1607
  %2709 = vmatpush1.bf16.msra.mxu0 %v1606
  %2710 = vmatprep.subr.bf16.mxu0 %v1611
  %2711 = vmatpush1.bf16.msra.mxu0 %v1610
  %2712 = vmatprep.subr.bf16.mxu0 %v1615
  %2713 = vmatpush1.bf16.msra.mxu0 %v1614
  %2714 = vmatprep.subr.bf16.mxu0 %v1619
  %2715 = vmatpush1.bf16.msra.mxu0 %v1618
  %2716 = vmatprep.subr.bf16.mxu0 %v1623
  %2717 = vmatpush1.bf16.msra.mxu0 %v1622
  %2718 = vmatprep.subr.bf16.mxu0 %v1627
  %2719 = vmatpush1.bf16.msra.mxu0 %v1626
  %2720 = vmatprep.subr.bf16.mxu0 %v1631
  %2721 = vmatpush1.bf16.msra.mxu0 %v1630
  %2722 = vmatprep.subr.bf16.mxu0 %v1635
  %2723 = vmatpush1.bf16.msra.mxu0 %v1634
  %2724 = vmatprep.subr.bf16.mxu0 %v1639
  %2725 = vmatpush1.bf16.msra.mxu0 %v1638
  %2726 = vmatprep.subr.bf16.mxu0 %v1643
  %2727 = vmatpush1.bf16.msra.mxu0 %v1642
  %2728 = vmatprep.subr.bf16.mxu0 %v1647
  %2729 = vmatpush1.bf16.msra.mxu0 %v1646
  %2730 = vmatprep.subr.bf16.mxu0 %v1651
  %2731 = vmatpush1.bf16.msra.mxu0 %v1650
  %2732 = vmatprep.subr.bf16.mxu0 0
  %2733 = vmatpush1.bf16.msra.mxu0 0
  %2734 = vmatprep.subr.bf16.mxu0 0
  %2735 = vmatpush1.bf16.msra.mxu0 0
  %2736 = vmatprep.subr.bf16.mxu0 0
  %2737 = vmatpush1.bf16.msra.mxu0 0
  %2738 = vmatprep.subr.bf16.mxu0 0
  %2739 = vmatpush1.bf16.msra.mxu0 0
  %2740 = vmatprep.mubr.bf16.mxu0 %v1894
  %2741 = vmatmul.mubr.bf16.gmra.mrb[0].mxu0 %v578
  %v2742 = vpop.f32.mrb[0].mxu0
  %v2743 = vadd.f32 %v2630, %v2742
  %v2744 = vpop.f32.mrb[0].mxu0
  %v2745 = vadd.f32 %v2632, %v2744
  %v2746 = vpop.f32.mrb[0].mxu0
  %v2747 = vadd.f32 %v2634, %v2746
  %v2748 = vpop.f32.mrb[0].mxu0
  %v2749 = vadd.f32 %v2636, %v2748
  %2750 = vmatprep.mubr.bf16.mxu0 %v1897
  %2751 = vmatmul.mubr.bf16.gmra.mrb[0].mxu0 %v586
  %v2752 = vpop.f32.mrb[0].mxu0
  %v2753 = vadd.f32 %v2640, %v2752
  %v2754 = vpop.f32.mrb[0].mxu0
  %v2755 = vadd.f32 %v2642, %v2754
  %v2756 = vpop.f32.mrb[0].mxu0
  %v2757 = vadd.f32 %v2644, %v2756
  %v2758 = vpop.f32.mrb[0].mxu0
  %v2759 = vadd.f32 %v2646, %v2758
  %2760 = vmatprep.mubr.bf16.mxu0 %v1900
  %2761 = vmatmul.mubr.bf16.gmra.mrb[0].mxu0 %v594
  %v2762 = vpop.f32.mrb[0].mxu0
  %v2763 = vadd.f32 %v2650, %v2762
  %v2764 = vpop.f32.mrb[0].mxu0
  %v2765 = vadd.f32 %v2652, %v2764
  %v2766 = vpop.f32.mrb[0].mxu0
  %v2767 = vadd.f32 %v2654, %v2766
  %v2768 = vpop.f32.mrb[0].mxu0
  %v2769 = vadd.f32 %v2656, %v2768
  %2770 = vmatprep.mubr.bf16.mxu0 %v1903
  %2771 = vmatmul.mubr.bf16.gmra.mrb[0].mxu0 %v602
  %v2772 = vpop.f32.mrb[0].mxu0
  %v2773 = vadd.f32 %v2660, %v2772
  %v2774 = vpop.f32.mrb[0].mxu0
  %v2775 = vadd.f32 %v2662, %v2774
  %v2776 = vpop.f32.mrb[0].mxu0
  %v2777 = vadd.f32 %v2664, %v2776
  %v2778 = vpop.f32.mrb[0].mxu0
  %v2779 = vadd.f32 %v2666, %v2778
  %2780 = vmatprep.mubr.bf16.mxu0 %v1906
  %2781 = vmatmul.mubr.bf16.gmra.mrb[0].mxu0 %v610
  %v2782 = vpop.f32.mrb[0].mxu0
  %v2783 = vadd.f32 %v2670, %v2782
  %v2784 = vpop.f32.mrb[0].mxu0
  %v2785 = vadd.f32 %v2672, %v2784
  %v2786 = vpop.f32.mrb[0].mxu0
  %v2787 = vadd.f32 %v2674, %v2786
  %v2788 = vpop.f32.mrb[0].mxu0
  %v2789 = vadd.f32 %v2676, %v2788
  %2790 = vmatprep.mubr.bf16.mxu0 %v1909
  %2791 = vmatmul.mubr.bf16.gmra.mrb[0].mxu0 %v618
  %v2792 = vpop.f32.mrb[0].mxu0
  %v2793 = vadd.f32 %v2680, %v2792
  %v2794 = vpop.f32.mrb[0].mxu0
  %v2795 = vadd.f32 %v2682, %v2794
  %v2796 = vpop.f32.mrb[0].mxu0
  %v2797 = vadd.f32 %v2684, %v2796
  %v2798 = vpop.f32.mrb[0].mxu0
  %v2799 = vadd.f32 %v2686, %v2798
  %2800 = vmatprep.mubr.bf16.mxu0 %v1912
  %2801 = vmatmul.mubr.bf16.gmra.mrb[0].mxu0 %v626
  %v2802 = vpop.f32.mrb[0].mxu0
  %v2803 = vadd.f32 %v2690, %v2802
  %v2804 = vpop.f32.mrb[0].mxu0
  %v2805 = vadd.f32 %v2692, %v2804
  %v2806 = vpop.f32.mrb[0].mxu0
  %v2807 = vadd.f32 %v2694, %v2806
  %v2808 = vpop.f32.mrb[0].mxu0
  %v2809 = vadd.f32 %v2696, %v2808
  %2810 = vmatprep.mubr.bf16.mxu0 %v1915
  %2811 = vmatmul.mubr.bf16.gmra.mrb[0].mxu0 %v634
  %v2812 = vpop.f32.mrb[0].mxu0
  %v2813 = vadd.f32 %v2700, %v2812
  %v2814 = vpop.f32.mrb[0].mxu0
  %v2815 = vadd.f32 %v2702, %v2814
  %v2816 = vpop.f32.mrb[0].mxu0
  %v2817 = vadd.f32 %v2704, %v2816
  %v2818 = vpop.f32.mrb[0].mxu0
  %v2819 = vadd.f32 %v2706, %v2818
  %2820 = vdwg.mxu0
  %v2821 = vld [vmem:[%s3] sm:$0xf]
  %v2823 = vlaneseq
  %v2824 = vshrl.u32 %v2823, 7
  %v2825 = vsub.s32 0, %v2824
  %v2826 = vrot.slane %v2821, %v2825
  %v2827 = vlaneseq
  %v2828 = vshrl.u32 %v2827, 7
  %v2829 = vsub.s32 1, %v2828
  %v2830 = vrot.slane %v2821, %v2829
  %v2831 = vlaneseq
  %v2832 = vshrl.u32 %v2831, 7
  %v2833 = vsub.s32 2, %v2832
  %v2834 = vrot.slane %v2821, %v2833
  %v2835 = vlaneseq
  %v2836 = vshrl.u32 %v2835, 7
  %v2837 = vsub.s32 3, %v2836
  %v2838 = vrot.slane %v2821, %v2837
  %v2843 = vmul.f32 %v2291, %v2826
  %v2844 = vmul.f32 %v2293, %v2830
  %v2845 = vmul.f32 %v2743, %v2834
  %v2846 = vmul.f32 %v2745, %v2838
  %v2847 = vmul.f32 %v2295, %v2826
  %v2848 = vmul.f32 %v2297, %v2830
  %v2849 = vmul.f32 %v2747, %v2834
  %v2850 = vmul.f32 %v2749, %v2838
  %v2851 = vmul.f32 %v2301, %v2826
  %v2852 = vmul.f32 %v2303, %v2830
  %v2853 = vmul.f32 %v2753, %v2834
  %v2854 = vmul.f32 %v2755, %v2838
  %v2855 = vmul.f32 %v2305, %v2826
  %v2856 = vmul.f32 %v2307, %v2830
  %v2857 = vmul.f32 %v2757, %v2834
  %v2858 = vmul.f32 %v2759, %v2838
  %v2859 = vmul.f32 %v2311, %v2826
  %v2860 = vmul.f32 %v2313, %v2830
  %v2861 = vmul.f32 %v2763, %v2834
  %v2862 = vmul.f32 %v2765, %v2838
  %v2863 = vmul.f32 %v2315, %v2826
  %v2864 = vmul.f32 %v2317, %v2830
  %v2865 = vmul.f32 %v2767, %v2834
  %v2866 = vmul.f32 %v2769, %v2838
  %v2867 = vmul.f32 %v2321, %v2826
  %v2868 = vmul.f32 %v2323, %v2830
  %v2869 = vmul.f32 %v2773, %v2834
  %v2870 = vmul.f32 %v2775, %v2838
  %v2871 = vmul.f32 %v2325, %v2826
  %v2872 = vmul.f32 %v2327, %v2830
  %v2873 = vmul.f32 %v2777, %v2834
  %v2874 = vmul.f32 %v2779, %v2838
  %v2875 = vmul.f32 %v2331, %v2826
  %v2876 = vmul.f32 %v2333, %v2830
  %v2877 = vmul.f32 %v2783, %v2834
  %v2878 = vmul.f32 %v2785, %v2838
  %v2879 = vmul.f32 %v2335, %v2826
  %v2880 = vmul.f32 %v2337, %v2830
  %v2881 = vmul.f32 %v2787, %v2834
  %v2882 = vmul.f32 %v2789, %v2838
  %v2883 = vmul.f32 %v2341, %v2826
  %v2884 = vmul.f32 %v2343, %v2830
  %v2885 = vmul.f32 %v2793, %v2834
  %v2886 = vmul.f32 %v2795, %v2838
  %v2887 = vmul.f32 %v2345, %v2826
  %v2888 = vmul.f32 %v2347, %v2830
  %v2889 = vmul.f32 %v2797, %v2834
  %v2890 = vmul.f32 %v2799, %v2838
  %v2891 = vmul.f32 %v2351, %v2826
  %v2892 = vmul.f32 %v2353, %v2830
  %v2893 = vmul.f32 %v2803, %v2834
  %v2894 = vmul.f32 %v2805, %v2838
  %v2895 = vmul.f32 %v2355, %v2826
  %v2896 = vmul.f32 %v2357, %v2830
  %v2897 = vmul.f32 %v2807, %v2834
  %v2898 = vmul.f32 %v2809, %v2838
  %v2899 = vmul.f32 %v2361, %v2826
  %v2900 = vmul.f32 %v2363, %v2830
  %v2901 = vmul.f32 %v2813, %v2834
  %v2902 = vmul.f32 %v2815, %v2838
  %v2903 = vmul.f32 %v2365, %v2826
  %v2904 = vmul.f32 %v2367, %v2830
  %v2905 = vmul.f32 %v2817, %v2834
  %v2906 = vmul.f32 %v2819, %v2838
  %v2907 = vld [vmem:[%s4] sm:$0xf]
  %v2909 = vlaneseq
  %v2910 = vshrl.u32 %v2909, 7
  %v2911 = vsub.s32 0, %v2910
  %v2912 = vrot.slane %v2907, %v2911
  %v2913 = vlaneseq
  %v2914 = vshrl.u32 %v2913, 7
  %v2915 = vsub.s32 1, %v2914
  %v2916 = vrot.slane %v2907, %v2915
  %v2917 = vlaneseq
  %v2918 = vshrl.u32 %v2917, 7
  %v2919 = vsub.s32 2, %v2918
  %v2920 = vrot.slane %v2907, %v2919
  %v2921 = vlaneseq
  %v2922 = vshrl.u32 %v2921, 7
  %v2923 = vsub.s32 3, %v2922
  %v2924 = vrot.slane %v2907, %v2923
  %v2929 = vadd.f32 %v2843, %v2912
  %v2930 = vadd.f32 %v2844, %v2916
  %v2931 = vadd.f32 %v2845, %v2920
  %v2932 = vadd.f32 %v2846, %v2924
  %v2933 = vadd.f32 %v2847, %v2912
  %v2934 = vadd.f32 %v2848, %v2916
  %v2935 = vadd.f32 %v2849, %v2920
  %v2936 = vadd.f32 %v2850, %v2924
  %v2937 = vadd.f32 %v2851, %v2912
  %v2938 = vadd.f32 %v2852, %v2916
  %v2939 = vadd.f32 %v2853, %v2920
  %v2940 = vadd.f32 %v2854, %v2924
  %v2941 = vadd.f32 %v2855, %v2912
  %v2942 = vadd.f32 %v2856, %v2916
  %v2943 = vadd.f32 %v2857, %v2920
  %v2944 = vadd.f32 %v2858, %v2924
  %v2945 = vadd.f32 %v2859, %v2912
  %v2946 = vadd.f32 %v2860, %v2916
  %v2947 = vadd.f32 %v2861, %v2920
  %v2948 = vadd.f32 %v2862, %v2924
  %v2949 = vadd.f32 %v2863, %v2912
  %v2950 = vadd.f32 %v2864, %v2916
  %v2951 = vadd.f32 %v2865, %v2920
  %v2952 = vadd.f32 %v2866, %v2924
  %v2953 = vadd.f32 %v2867, %v2912
  %v2954 = vadd.f32 %v2868, %v2916
  %v2955 = vadd.f32 %v2869, %v2920
  %v2956 = vadd.f32 %v2870, %v2924
  %v2957 = vadd.f32 %v2871, %v2912
  %v2958 = vadd.f32 %v2872, %v2916
  %v2959 = vadd.f32 %v2873, %v2920
  %v2960 = vadd.f32 %v2874, %v2924
  %v2961 = vadd.f32 %v2875, %v2912
  %v2962 = vadd.f32 %v2876, %v2916
  %v2963 = vadd.f32 %v2877, %v2920
  %v2964 = vadd.f32 %v2878, %v2924
  %v2965 = vadd.f32 %v2879, %v2912
  %v2966 = vadd.f32 %v2880, %v2916
  %v2967 = vadd.f32 %v2881, %v2920
  %v2968 = vadd.f32 %v2882, %v2924
  %v2969 = vadd.f32 %v2883, %v2912
  %v2970 = vadd.f32 %v2884, %v2916
  %v2971 = vadd.f32 %v2885, %v2920
  %v2972 = vadd.f32 %v2886, %v2924
  %v2973 = vadd.f32 %v2887, %v2912
  %v2974 = vadd.f32 %v2888, %v2916
  %v2975 = vadd.f32 %v2889, %v2920
  %v2976 = vadd.f32 %v2890, %v2924
  %v2977 = vadd.f32 %v2891, %v2912
  %v2978 = vadd.f32 %v2892, %v2916
  %v2979 = vadd.f32 %v2893, %v2920
  %v2980 = vadd.f32 %v2894, %v2924
  %v2981 = vadd.f32 %v2895, %v2912
  %v2982 = vadd.f32 %v2896, %v2916
  %v2983 = vadd.f32 %v2897, %v2920
  %v2984 = vadd.f32 %v2898, %v2924
  %v2985 = vadd.f32 %v2899, %v2912
  %v2986 = vadd.f32 %v2900, %v2916
  %v2987 = vadd.f32 %v2901, %v2920
  %v2988 = vadd.f32 %v2902, %v2924
  %v2989 = vadd.f32 %v2903, %v2912
  %v2990 = vadd.f32 %v2904, %v2916
  %v2991 = vadd.f32 %v2905, %v2920
  %v2992 = vadd.f32 %v2906, %v2924
  %v2993 = vpack.c.bf16 %v2933, %v2929
  %v2994 = vpack.c.bf16 %v2934, %v2930
  %v2995 = vpack.c.bf16 %v2935, %v2931
  %v2996 = vpack.c.bf16 %v2936, %v2932
  %v2997 = vpack.c.bf16 %v2941, %v2937
  %v2998 = vpack.c.bf16 %v2942, %v2938
  %v2999 = vpack.c.bf16 %v2943, %v2939
  %v3000 = vpack.c.bf16 %v2944, %v2940
  %v3001 = vpack.c.bf16 %v2949, %v2945
  %v3002 = vpack.c.bf16 %v2950, %v2946
  %v3003 = vpack.c.bf16 %v2951, %v2947
  %v3004 = vpack.c.bf16 %v2952, %v2948
  %v3005 = vpack.c.bf16 %v2957, %v2953
  %v3006 = vpack.c.bf16 %v2958, %v2954
  %v3007 = vpack.c.bf16 %v2959, %v2955
  %v3008 = vpack.c.bf16 %v2960, %v2956
  %v3009 = vpack.c.bf16 %v2965, %v2961
  %v3010 = vpack.c.bf16 %v2966, %v2962
  %v3011 = vpack.c.bf16 %v2967, %v2963
  %v3012 = vpack.c.bf16 %v2968, %v2964
  %v3013 = vpack.c.bf16 %v2973, %v2969
  %v3014 = vpack.c.bf16 %v2974, %v2970
  %v3015 = vpack.c.bf16 %v2975, %v2971
  %v3016 = vpack.c.bf16 %v2976, %v2972
  %v3017 = vpack.c.bf16 %v2981, %v2977
  %v3018 = vpack.c.bf16 %v2982, %v2978
  %v3019 = vpack.c.bf16 %v2983, %v2979
  %v3020 = vpack.c.bf16 %v2984, %v2980
  %v3021 = vpack.c.bf16 %v2989, %v2985
  %v3022 = vpack.c.bf16 %v2990, %v2986
  %v3023 = vpack.c.bf16 %v2991, %v2987
  %v3024 = vpack.c.bf16 %v2992, %v2988
  %v3025 = vld [vmem:[%s5] sm:$0xff]
  %v3026 = vld [vmem:[%s5 + $0x8] sm:$0xff]
  %v3027 = vld [vmem:[%s5 + $0x10] sm:$0xff]
  %v3028 = vld [vmem:[%s5 + $0x18] sm:$0xff]
  %v3029 = vld [vmem:[%s5 + $0x20] sm:$0xff]
  %v3030 = vld [vmem:[%s5 + $0x28] sm:$0xff]
  %v3031 = vld [vmem:[%s5 + $0x30] sm:$0xff]
  %v3032 = vld [vmem:[%s5 + $0x38] sm:$0xff]
  %v3033 = vld [vmem:[%s5 + $0x40] sm:$0xff]
  %v3034 = vld [vmem:[%s5 + $0x48] sm:$0xff]
  %v3035 = vld [vmem:[%s5 + $0x50] sm:$0xff]
  %v3036 = vld [vmem:[%s5 + $0x58] sm:$0xff]
  %v3037 = vld [vmem:[%s5 + $0x60] sm:$0xff]
  %v3038 = vld [vmem:[%s5 + $0x68] sm:$0xff]
  %v3039 = vld [vmem:[%s5 + $0x70] sm:$0xff]
  %v3040 = vld [vmem:[%s5 + $0x78] sm:$0xff]
  %v3041 = vld [vmem:[%s5 + $0x80] sm:$0xff]
  %v3042 = vld [vmem:[%s5 + $0x88] sm:$0xff]
  %v3043 = vld [vmem:[%s5 + $0x90] sm:$0xff]
  %v3044 = vld [vmem:[%s5 + $0x98] sm:$0xff]
  %v3045 = vld [vmem:[%s5 + $0xa0] sm:$0xff]
  %v3046 = vld [vmem:[%s5 + $0xa8] sm:$0xff]
  %v3047 = vld [vmem:[%s5 + $0xb0] sm:$0xff]
  %v3048 = vld [vmem:[%s5 + $0xb8] sm:$0xff]
  %v3049 = vld [vmem:[%s5 + $0xc0] sm:$0xff]
  %v3050 = vld [vmem:[%s5 + $0xc8] sm:$0xff]
  %v3051 = vld [vmem:[%s5 + $0xd0] sm:$0xff]
  %v3052 = vld [vmem:[%s5 + $0xd8] sm:$0xff]
  %v3053 = vld [vmem:[%s5 + $0xe0] sm:$0xff]
  %v3054 = vld [vmem:[%s5 + $0xe8] sm:$0xff]
  %v3055 = vld [vmem:[%s5 + $0xf0] sm:$0xff]
  %v3056 = vld [vmem:[%s5 + $0xf8] sm:$0xff]
  %v3057 = vld [vmem:[%s5 + $0x100] sm:$0xff]
  %v3058 = vld [vmem:[%s5 + $0x108] sm:$0xff]
  %v3059 = vld [vmem:[%s5 + $0x110] sm:$0xff]
  %v3060 = vld [vmem:[%s5 + $0x118] sm:$0xff]
  %v3061 = vld [vmem:[%s5 + $0x120] sm:$0xff]
  %v3062 = vld [vmem:[%s5 + $0x128] sm:$0xff]
  %v3063 = vld [vmem:[%s5 + $0x130] sm:$0xff]
  %v3064 = vld [vmem:[%s5 + $0x138] sm:$0xff]
  %v3065 = vld [vmem:[%s5 + $0x140] sm:$0xff]
  %v3066 = vld [vmem:[%s5 + $0x148] sm:$0xff]
  %v3067 = vld [vmem:[%s5 + $0x150] sm:$0xff]
  %v3068 = vld [vmem:[%s5 + $0x158] sm:$0xff]
  %v3069 = vld [vmem:[%s5 + $0x160] sm:$0xff]
  %v3070 = vld [vmem:[%s5 + $0x168] sm:$0xff]
  %v3071 = vld [vmem:[%s5 + $0x170] sm:$0xff]
  %v3072 = vld [vmem:[%s5 + $0x178] sm:$0xff]
  %v3073 = vld [vmem:[%s5 + $0x180] sm:$0xff]
  %v3074 = vld [vmem:[%s5 + $0x188] sm:$0xff]
  %v3075 = vld [vmem:[%s5 + $0x190] sm:$0xff]
  %v3076 = vld [vmem:[%s5 + $0x198] sm:$0xff]
  %v3077 = vld [vmem:[%s5 + $0x1a0] sm:$0xff]
  %v3078 = vld [vmem:[%s5 + $0x1a8] sm:$0xff]
  %v3079 = vld [vmem:[%s5 + $0x1b0] sm:$0xff]
  %v3080 = vld [vmem:[%s5 + $0x1b8] sm:$0xff]
  %v3081 = vld [vmem:[%s5 + $0x1c0] sm:$0xff]
  %v3082 = vld [vmem:[%s5 + $0x1c8] sm:$0xff]
  %v3083 = vld [vmem:[%s5 + $0x1d0] sm:$0xff]
  %v3084 = vld [vmem:[%s5 + $0x1d8] sm:$0xff]
  %v3085 = vld [vmem:[%s5 + $0x1e0] sm:$0xff]
  %v3086 = vld [vmem:[%s5 + $0x1e8] sm:$0xff]
  %v3087 = vld [vmem:[%s5 + $0x1f0] sm:$0xff]
  %v3088 = vld [vmem:[%s5 + $0x1f8] sm:$0xff]
  %v3089 = vld [vmem:[%s5 + $0x200] sm:$0xff]
  %v3090 = vld [vmem:[%s5 + $0x208] sm:$0xff]
  %v3091 = vld [vmem:[%s5 + $0x210] sm:$0xff]
  %v3092 = vld [vmem:[%s5 + $0x218] sm:$0xff]
  %v3093 = vld [vmem:[%s5 + $0x220] sm:$0xff]
  %v3094 = vld [vmem:[%s5 + $0x228] sm:$0xff]
  %v3095 = vld [vmem:[%s5 + $0x230] sm:$0xff]
  %v3096 = vld [vmem:[%s5 + $0x238] sm:$0xff]
  %v3097 = vld [vmem:[%s5 + $0x240] sm:$0xff]
  %v3098 = vld [vmem:[%s5 + $0x248] sm:$0xff]
  %v3099 = vld [vmem:[%s5 + $0x250] sm:$0xff]
  %v3100 = vld [vmem:[%s5 + $0x258] sm:$0xff]
  %v3101 = vld [vmem:[%s5 + $0x260] sm:$0xff]
  %v3102 = vld [vmem:[%s5 + $0x268] sm:$0xff]
  %v3103 = vld [vmem:[%s5 + $0x270] sm:$0xff]
  %v3104 = vld [vmem:[%s5 + $0x278] sm:$0xff]
  %v3105 = vld [vmem:[%s5 + $0x280] sm:$0xff]
  %v3106 = vld [vmem:[%s5 + $0x288] sm:$0xff]
  %v3107 = vld [vmem:[%s5 + $0x290] sm:$0xff]
  %v3108 = vld [vmem:[%s5 + $0x298] sm:$0xff]
  %v3109 = vld [vmem:[%s5 + $0x2a0] sm:$0xff]
  %v3110 = vld [vmem:[%s5 + $0x2a8] sm:$0xff]
  %v3111 = vld [vmem:[%s5 + $0x2b0] sm:$0xff]
  %v3112 = vld [vmem:[%s5 + $0x2b8] sm:$0xff]
  %v3113 = vld [vmem:[%s5 + $0x2c0] sm:$0xff]
  %v3114 = vld [vmem:[%s5 + $0x2c8] sm:$0xff]
  %v3115 = vld [vmem:[%s5 + $0x2d0] sm:$0xff]
  %v3116 = vld [vmem:[%s5 + $0x2d8] sm:$0xff]
  %v3117 = vld [vmem:[%s5 + $0x2e0] sm:$0xff]
  %v3118 = vld [vmem:[%s5 + $0x2e8] sm:$0xff]
  %v3119 = vld [vmem:[%s5 + $0x2f0] sm:$0xff]
  %v3120 = vld [vmem:[%s5 + $0x2f8] sm:$0xff]
  %v3121 = vld [vmem:[%s5 + $0x300] sm:$0xff]
  %v3122 = vld [vmem:[%s5 + $0x308] sm:$0xff]
  %v3123 = vld [vmem:[%s5 + $0x310] sm:$0xff]
  %v3124 = vld [vmem:[%s5 + $0x318] sm:$0xff]
  %v3125 = vld [vmem:[%s5 + $0x320] sm:$0xff]
  %v3126 = vld [vmem:[%s5 + $0x328] sm:$0xff]
  %v3127 = vld [vmem:[%s5 + $0x330] sm:$0xff]
  %v3128 = vld [vmem:[%s5 + $0x338] sm:$0xff]
  %v3129 = vld [vmem:[%s5 + $0x340] sm:$0xff]
  %v3130 = vld [vmem:[%s5 + $0x348] sm:$0xff]
  %v3131 = vld [vmem:[%s5 + $0x350] sm:$0xff]
  %v3132 = vld [vmem:[%s5 + $0x358] sm:$0xff]
  %v3133 = vld [vmem:[%s5 + $0x360] sm:$0xff]
  %v3134 = vld [vmem:[%s5 + $0x368] sm:$0xff]
  %v3135 = vld [vmem:[%s5 + $0x370] sm:$0xff]
  %v3136 = vld [vmem:[%s5 + $0x378] sm:$0xff]
  %v3137 = vld [vmem:[%s5 + $0x380] sm:$0xff]
  %v3138 = vld [vmem:[%s5 + $0x388] sm:$0xff]
  %v3139 = vld [vmem:[%s5 + $0x390] sm:$0xff]
  %v3140 = vld [vmem:[%s5 + $0x398] sm:$0xff]
  %v3141 = vld [vmem:[%s5 + $0x3a0] sm:$0xff]
  %v3142 = vld [vmem:[%s5 + $0x3a8] sm:$0xff]
  %v3143 = vld [vmem:[%s5 + $0x3b0] sm:$0xff]
  %v3144 = vld [vmem:[%s5 + $0x3b8] sm:$0xff]
  %v3145 = vld [vmem:[%s5 + $0x3c0] sm:$0xff]
  %v3146 = vld [vmem:[%s5 + $0x3c8] sm:$0xff]
  %v3147 = vld [vmem:[%s5 + $0x3d0] sm:$0xff]
  %v3148 = vld [vmem:[%s5 + $0x3d8] sm:$0xff]
  %v3149 = vld [vmem:[%s5 + $0x3e0] sm:$0xff]
  %v3150 = vld [vmem:[%s5 + $0x3e8] sm:$0xff]
  %v3151 = vld [vmem:[%s5 + $0x3f0] sm:$0xff]
  %v3152 = vld [vmem:[%s5 + $0x3f8] sm:$0xff]
  %v3153 = vld [vmem:[%s6] sm:$0xf]
  %v3155 = vlaneseq
  %v3156 = vshrl.u32 %v3155, 7
  %v3157 = vsub.s32 0, %v3156
  %v3158 = vrot.slane %v3153, %v3157
  %v3159 = vlaneseq
  %v3160 = vshrl.u32 %v3159, 7
  %v3161 = vsub.s32 1, %v3160
  %v3162 = vrot.slane %v3153, %v3161
  %v3163 = vlaneseq
  %v3164 = vshrl.u32 %v3163, 7
  %v3165 = vsub.s32 2, %v3164
  %v3166 = vrot.slane %v3153, %v3165
  %v3167 = vlaneseq
  %v3168 = vshrl.u32 %v3167, 7
  %v3169 = vsub.s32 3, %v3168
  %v3170 = vrot.slane %v3153, %v3169
  %v3303 = vunpack.c.l.b16 %v3025
  %v3304 = vunpack.c.h.b16 %v3025
  %v3305 = vunpack.c.l.b16 %v3026
  %v3306 = vunpack.c.h.b16 %v3026
  %v3307 = vunpack.c.l.b16 %v3027
  %v3308 = vunpack.c.h.b16 %v3027
  %v3309 = vunpack.c.l.b16 %v3028
  %v3310 = vunpack.c.h.b16 %v3028
  %v3311 = vunpack.c.l.b16 %v3029
  %v3312 = vunpack.c.h.b16 %v3029
  %v3313 = vunpack.c.l.b16 %v3030
  %v3314 = vunpack.c.h.b16 %v3030
  %v3315 = vunpack.c.l.b16 %v3031
  %v3316 = vunpack.c.h.b16 %v3031
  %v3317 = vunpack.c.l.b16 %v3032
  %v3318 = vunpack.c.h.b16 %v3032
  %v3319 = vunpack.c.l.b16 %v3033
  %v3320 = vunpack.c.h.b16 %v3033
  %v3321 = vunpack.c.l.b16 %v3034
  %v3322 = vunpack.c.h.b16 %v3034
  %v3323 = vunpack.c.l.b16 %v3035
  %v3324 = vunpack.c.h.b16 %v3035
  %v3325 = vunpack.c.l.b16 %v3036
  %v3326 = vunpack.c.h.b16 %v3036
  %v3327 = vunpack.c.l.b16 %v3037
  %v3328 = vunpack.c.h.b16 %v3037
  %v3329 = vunpack.c.l.b16 %v3038
  %v3330 = vunpack.c.h.b16 %v3038
  %v3331 = vunpack.c.l.b16 %v3039
  %v3332 = vunpack.c.h.b16 %v3039
  %v3333 = vunpack.c.l.b16 %v3040
  %v3334 = vunpack.c.h.b16 %v3040
  %v3335 = vunpack.c.l.b16 %v3041
  %v3336 = vunpack.c.h.b16 %v3041
  %v3337 = vunpack.c.l.b16 %v3042
  %v3338 = vunpack.c.h.b16 %v3042
  %v3339 = vunpack.c.l.b16 %v3043
  %v3340 = vunpack.c.h.b16 %v3043
  %v3341 = vunpack.c.l.b16 %v3044
  %v3342 = vunpack.c.h.b16 %v3044
  %v3343 = vunpack.c.l.b16 %v3045
  %v3344 = vunpack.c.h.b16 %v3045
  %v3345 = vunpack.c.l.b16 %v3046
  %v3346 = vunpack.c.h.b16 %v3046
  %v3347 = vunpack.c.l.b16 %v3047
  %v3348 = vunpack.c.h.b16 %v3047
  %v3349 = vunpack.c.l.b16 %v3048
  %v3350 = vunpack.c.h.b16 %v3048
  %v3351 = vunpack.c.l.b16 %v3049
  %v3352 = vunpack.c.h.b16 %v3049
  %v3353 = vunpack.c.l.b16 %v3050
  %v3354 = vunpack.c.h.b16 %v3050
  %v3355 = vunpack.c.l.b16 %v3051
  %v3356 = vunpack.c.h.b16 %v3051
  %v3357 = vunpack.c.l.b16 %v3052
  %v3358 = vunpack.c.h.b16 %v3052
  %v3359 = vunpack.c.l.b16 %v3053
  %v3360 = vunpack.c.h.b16 %v3053
  %v3361 = vunpack.c.l.b16 %v3054
  %v3362 = vunpack.c.h.b16 %v3054
  %v3363 = vunpack.c.l.b16 %v3055
  %v3364 = vunpack.c.h.b16 %v3055
  %v3365 = vunpack.c.l.b16 %v3056
  %v3366 = vunpack.c.h.b16 %v3056
  %v3367 = vunpack.c.l.b16 %v3057
  %v3368 = vunpack.c.h.b16 %v3057
  %v3369 = vunpack.c.l.b16 %v3058
  %v3370 = vunpack.c.h.b16 %v3058
  %v3371 = vunpack.c.l.b16 %v3059
  %v3372 = vunpack.c.h.b16 %v3059
  %v3373 = vunpack.c.l.b16 %v3060
  %v3374 = vunpack.c.h.b16 %v3060
  %v3375 = vunpack.c.l.b16 %v3061
  %v3376 = vunpack.c.h.b16 %v3061
  %v3377 = vunpack.c.l.b16 %v3062
  %v3378 = vunpack.c.h.b16 %v3062
  %v3379 = vunpack.c.l.b16 %v3063
  %v3380 = vunpack.c.h.b16 %v3063
  %v3381 = vunpack.c.l.b16 %v3064
  %v3382 = vunpack.c.h.b16 %v3064
  %v3383 = vunpack.c.l.b16 %v3065
  %v3384 = vunpack.c.h.b16 %v3065
  %v3385 = vunpack.c.l.b16 %v3066
  %v3386 = vunpack.c.h.b16 %v3066
  %v3387 = vunpack.c.l.b16 %v3067
  %v3388 = vunpack.c.h.b16 %v3067
  %v3389 = vunpack.c.l.b16 %v3068
  %v3390 = vunpack.c.h.b16 %v3068
  %v3391 = vunpack.c.l.b16 %v3069
  %v3392 = vunpack.c.h.b16 %v3069
  %v3393 = vunpack.c.l.b16 %v3070
  %v3394 = vunpack.c.h.b16 %v3070
  %v3395 = vunpack.c.l.b16 %v3071
  %v3396 = vunpack.c.h.b16 %v3071
  %v3397 = vunpack.c.l.b16 %v3072
  %v3398 = vunpack.c.h.b16 %v3072
  %v3399 = vunpack.c.l.b16 %v3073
  %v3400 = vunpack.c.h.b16 %v3073
  %v3401 = vunpack.c.l.b16 %v3074
  %v3402 = vunpack.c.h.b16 %v3074
  %v3403 = vunpack.c.l.b16 %v3075
  %v3404 = vunpack.c.h.b16 %v3075
  %v3405 = vunpack.c.l.b16 %v3076
  %v3406 = vunpack.c.h.b16 %v3076
  %v3407 = vunpack.c.l.b16 %v3077
  %v3408 = vunpack.c.h.b16 %v3077
  %v3409 = vunpack.c.l.b16 %v3078
  %v3410 = vunpack.c.h.b16 %v3078
  %v3411 = vunpack.c.l.b16 %v3079
  %v3412 = vunpack.c.h.b16 %v3079
  %v3413 = vunpack.c.l.b16 %v3080
  %v3414 = vunpack.c.h.b16 %v3080
  %v3415 = vunpack.c.l.b16 %v3081
  %v3416 = vunpack.c.h.b16 %v3081
  %v3417 = vunpack.c.l.b16 %v3082
  %v3418 = vunpack.c.h.b16 %v3082
  %v3419 = vunpack.c.l.b16 %v3083
  %v3420 = vunpack.c.h.b16 %v3083
  %v3421 = vunpack.c.l.b16 %v3084
  %v3422 = vunpack.c.h.b16 %v3084
  %v3423 = vunpack.c.l.b16 %v3085
  %v3424 = vunpack.c.h.b16 %v3085
  %v3425 = vunpack.c.l.b16 %v3086
  %v3426 = vunpack.c.h.b16 %v3086
  %v3427 = vunpack.c.l.b16 %v3087
  %v3428 = vunpack.c.h.b16 %v3087
  %v3429 = vunpack.c.l.b16 %v3088
  %v3430 = vunpack.c.h.b16 %v3088
  %v3431 = vunpack.c.l.b16 %v3089
  %v3432 = vunpack.c.h.b16 %v3089
  %v3433 = vunpack.c.l.b16 %v3090
  %v3434 = vunpack.c.h.b16 %v3090
  %v3435 = vunpack.c.l.b16 %v3091
  %v3436 = vunpack.c.h.b16 %v3091
  %v3437 = vunpack.c.l.b16 %v3092
  %v3438 = vunpack.c.h.b16 %v3092
  %v3439 = vunpack.c.l.b16 %v3093
  %v3440 = vunpack.c.h.b16 %v3093
  %v3441 = vunpack.c.l.b16 %v3094
  %v3442 = vunpack.c.h.b16 %v3094
  %v3443 = vunpack.c.l.b16 %v3095
  %v3444 = vunpack.c.h.b16 %v3095
  %v3445 = vunpack.c.l.b16 %v3096
  %v3446 = vunpack.c.h.b16 %v3096
  %v3447 = vunpack.c.l.b16 %v3097
  %v3448 = vunpack.c.h.b16 %v3097
  %v3449 = vunpack.c.l.b16 %v3098
  %v3450 = vunpack.c.h.b16 %v3098
  %v3451 = vunpack.c.l.b16 %v3099
  %v3452 = vunpack.c.h.b16 %v3099
  %v3453 = vunpack.c.l.b16 %v3100
  %v3454 = vunpack.c.h.b16 %v3100
  %v3455 = vunpack.c.l.b16 %v3101
  %v3456 = vunpack.c.h.b16 %v3101
  %v3457 = vunpack.c.l.b16 %v3102
  %v3458 = vunpack.c.h.b16 %v3102
  %v3459 = vunpack.c.l.b16 %v3103
  %v3460 = vunpack.c.h.b16 %v3103
  %v3461 = vunpack.c.l.b16 %v3104
  %v3462 = vunpack.c.h.b16 %v3104
  %v3463 = vunpack.c.l.b16 %v3105
  %v3464 = vunpack.c.h.b16 %v3105
  %v3465 = vunpack.c.l.b16 %v3106
  %v3466 = vunpack.c.h.b16 %v3106
  %v3467 = vunpack.c.l.b16 %v3107
  %v3468 = vunpack.c.h.b16 %v3107
  %v3469 = vunpack.c.l.b16 %v3108
  %v3470 = vunpack.c.h.b16 %v3108
  %v3471 = vunpack.c.l.b16 %v3109
  %v3472 = vunpack.c.h.b16 %v3109
  %v3473 = vunpack.c.l.b16 %v3110
  %v3474 = vunpack.c.h.b16 %v3110
  %v3475 = vunpack.c.l.b16 %v3111
  %v3476 = vunpack.c.h.b16 %v3111
  %v3477 = vunpack.c.l.b16 %v3112
  %v3478 = vunpack.c.h.b16 %v3112
  %v3479 = vunpack.c.l.b16 %v3113
  %v3480 = vunpack.c.h.b16 %v3113
  %v3481 = vunpack.c.l.b16 %v3114
  %v3482 = vunpack.c.h.b16 %v3114
  %v3483 = vunpack.c.l.b16 %v3115
  %v3484 = vunpack.c.h.b16 %v3115
  %v3485 = vunpack.c.l.b16 %v3116
  %v3486 = vunpack.c.h.b16 %v3116
  %v3487 = vunpack.c.l.b16 %v3117
  %v3488 = vunpack.c.h.b16 %v3117
  %v3489 = vunpack.c.l.b16 %v3118
  %v3490 = vunpack.c.h.b16 %v3118
  %v3491 = vunpack.c.l.b16 %v3119
  %v3492 = vunpack.c.h.b16 %v3119
  %v3493 = vunpack.c.l.b16 %v3120
  %v3494 = vunpack.c.h.b16 %v3120
  %v3495 = vunpack.c.l.b16 %v3121
  %v3496 = vunpack.c.h.b16 %v3121
  %v3497 = vunpack.c.l.b16 %v3122
  %v3498 = vunpack.c.h.b16 %v3122
  %v3499 = vunpack.c.l.b16 %v3123
  %v3500 = vunpack.c.h.b16 %v3123
  %v3501 = vunpack.c.l.b16 %v3124
  %v3502 = vunpack.c.h.b16 %v3124
  %v3503 = vunpack.c.l.b16 %v3125
  %v3504 = vunpack.c.h.b16 %v3125
  %v3505 = vunpack.c.l.b16 %v3126
  %v3506 = vunpack.c.h.b16 %v3126
  %v3507 = vunpack.c.l.b16 %v3127
  %v3508 = vunpack.c.h.b16 %v3127
  %v3509 = vunpack.c.l.b16 %v3128
  %v3510 = vunpack.c.h.b16 %v3128
  %v3511 = vunpack.c.l.b16 %v3129
  %v3512 = vunpack.c.h.b16 %v3129
  %v3513 = vunpack.c.l.b16 %v3130
  %v3514 = vunpack.c.h.b16 %v3130
  %v3515 = vunpack.c.l.b16 %v3131
  %v3516 = vunpack.c.h.b16 %v3131
  %v3517 = vunpack.c.l.b16 %v3132
  %v3518 = vunpack.c.h.b16 %v3132
  %v3519 = vunpack.c.l.b16 %v3133
  %v3520 = vunpack.c.h.b16 %v3133
  %v3521 = vunpack.c.l.b16 %v3134
  %v3522 = vunpack.c.h.b16 %v3134
  %v3523 = vunpack.c.l.b16 %v3135
  %v3524 = vunpack.c.h.b16 %v3135
  %v3525 = vunpack.c.l.b16 %v3136
  %v3526 = vunpack.c.h.b16 %v3136
  %v3527 = vunpack.c.l.b16 %v3137
  %v3528 = vunpack.c.h.b16 %v3137
  %v3529 = vunpack.c.l.b16 %v3138
  %v3530 = vunpack.c.h.b16 %v3138
  %v3531 = vunpack.c.l.b16 %v3139
  %v3532 = vunpack.c.h.b16 %v3139
  %v3533 = vunpack.c.l.b16 %v3140
  %v3534 = vunpack.c.h.b16 %v3140
  %v3535 = vunpack.c.l.b16 %v3141
  %v3536 = vunpack.c.h.b16 %v3141
  %v3537 = vunpack.c.l.b16 %v3142
  %v3538 = vunpack.c.h.b16 %v3142
  %v3539 = vunpack.c.l.b16 %v3143
  %v3540 = vunpack.c.h.b16 %v3143
  %v3541 = vunpack.c.l.b16 %v3144
  %v3542 = vunpack.c.h.b16 %v3144
  %v3543 = vunpack.c.l.b16 %v3145
  %v3544 = vunpack.c.h.b16 %v3145
  %v3545 = vunpack.c.l.b16 %v3146
  %v3546 = vunpack.c.h.b16 %v3146
  %v3547 = vunpack.c.l.b16 %v3147
  %v3548 = vunpack.c.h.b16 %v3147
  %v3549 = vunpack.c.l.b16 %v3148
  %v3550 = vunpack.c.h.b16 %v3148
  %v3551 = vunpack.c.l.b16 %v3149
  %v3552 = vunpack.c.h.b16 %v3149
  %v3553 = vunpack.c.l.b16 %v3150
  %v3554 = vunpack.c.h.b16 %v3150
  %v3555 = vunpack.c.l.b16 %v3151
  %v3556 = vunpack.c.h.b16 %v3151
  %v3557 = vunpack.c.l.b16 %v3152
  %v3558 = vunpack.c.h.b16 %v3152
  %v3559 = vpack.c.b16 %v3307, %v3303
  %v3560 = vpack.c.b16 %v3308, %v3304
  %v3561 = vpack.c.b16 %v3309, %v3305
  %v3562 = vpack.c.b16 %v3310, %v3306
  %v3563 = vpack.c.b16 %v3315, %v3311
  %v3564 = vpack.c.b16 %v3316, %v3312
  %v3565 = vpack.c.b16 %v3317, %v3313
  %v3566 = vpack.c.b16 %v3318, %v3314
  %v3567 = vpack.c.b16 %v3323, %v3319
  %v3568 = vpack.c.b16 %v3324, %v3320
  %v3569 = vpack.c.b16 %v3325, %v3321
  %v3570 = vpack.c.b16 %v3326, %v3322
  %v3571 = vpack.c.b16 %v3331, %v3327
  %v3572 = vpack.c.b16 %v3332, %v3328
  %v3573 = vpack.c.b16 %v3333, %v3329
  %v3574 = vpack.c.b16 %v3334, %v3330
  %v3575 = vpack.c.b16 %v3339, %v3335
  %v3576 = vpack.c.b16 %v3340, %v3336
  %v3577 = vpack.c.b16 %v3341, %v3337
  %v3578 = vpack.c.b16 %v3342, %v3338
  %v3579 = vpack.c.b16 %v3347, %v3343
  %v3580 = vpack.c.b16 %v3348, %v3344
  %v3581 = vpack.c.b16 %v3349, %v3345
  %v3582 = vpack.c.b16 %v3350, %v3346
  %v3583 = vpack.c.b16 %v3355, %v3351
  %v3584 = vpack.c.b16 %v3356, %v3352
  %v3585 = vpack.c.b16 %v3357, %v3353
  %v3586 = vpack.c.b16 %v3358, %v3354
  %v3587 = vpack.c.b16 %v3363, %v3359
  %v3588 = vpack.c.b16 %v3364, %v3360
  %v3589 = vpack.c.b16 %v3365, %v3361
  %v3590 = vpack.c.b16 %v3366, %v3362
  %v3591 = vpack.c.b16 %v3371, %v3367
  %v3592 = vpack.c.b16 %v3372, %v3368
  %v3593 = vpack.c.b16 %v3373, %v3369
  %v3594 = vpack.c.b16 %v3374, %v3370
  %v3595 = vpack.c.b16 %v3379, %v3375
  %v3596 = vpack.c.b16 %v3380, %v3376
  %v3597 = vpack.c.b16 %v3381, %v3377
  %v3598 = vpack.c.b16 %v3382, %v3378
  %v3599 = vpack.c.b16 %v3387, %v3383
  %v3600 = vpack.c.b16 %v3388, %v3384
  %v3601 = vpack.c.b16 %v3389, %v3385
  %v3602 = vpack.c.b16 %v3390, %v3386
  %v3603 = vpack.c.b16 %v3395, %v3391
  %v3604 = vpack.c.b16 %v3396, %v3392
  %v3605 = vpack.c.b16 %v3397, %v3393
  %v3606 = vpack.c.b16 %v3398, %v3394
  %v3607 = vpack.c.b16 %v3403, %v3399
  %v3608 = vpack.c.b16 %v3404, %v3400
  %v3609 = vpack.c.b16 %v3405, %v3401
  %v3610 = vpack.c.b16 %v3406, %v3402
  %v3611 = vpack.c.b16 %v3411, %v3407
  %v3612 = vpack.c.b16 %v3412, %v3408
  %v3613 = vpack.c.b16 %v3413, %v3409
  %v3614 = vpack.c.b16 %v3414, %v3410
  %v3615 = vpack.c.b16 %v3419, %v3415
  %v3616 = vpack.c.b16 %v3420, %v3416
  %v3617 = vpack.c.b16 %v3421, %v3417
  %v3618 = vpack.c.b16 %v3422, %v3418
  %v3619 = vpack.c.b16 %v3427, %v3423
  %v3620 = vpack.c.b16 %v3428, %v3424
  %v3621 = vpack.c.b16 %v3429, %v3425
  %v3622 = vpack.c.b16 %v3430, %v3426
  %v3623 = vpack.c.b16 %v3435, %v3431
  %v3624 = vpack.c.b16 %v3436, %v3432
  %v3625 = vpack.c.b16 %v3437, %v3433
  %v3626 = vpack.c.b16 %v3438, %v3434
  %v3627 = vpack.c.b16 %v3443, %v3439
  %v3628 = vpack.c.b16 %v3444, %v3440
  %v3629 = vpack.c.b16 %v3445, %v3441
  %v3630 = vpack.c.b16 %v3446, %v3442
  %v3631 = vpack.c.b16 %v3451, %v3447
  %v3632 = vpack.c.b16 %v3452, %v3448
  %v3633 = vpack.c.b16 %v3453, %v3449
  %v3634 = vpack.c.b16 %v3454, %v3450
  %v3635 = vpack.c.b16 %v3459, %v3455
  %v3636 = vpack.c.b16 %v3460, %v3456
  %v3637 = vpack.c.b16 %v3461, %v3457
  %v3638 = vpack.c.b16 %v3462, %v3458
  %v3639 = vpack.c.b16 %v3467, %v3463
  %v3640 = vpack.c.b16 %v3468, %v3464
  %v3641 = vpack.c.b16 %v3469, %v3465
  %v3642 = vpack.c.b16 %v3470, %v3466
  %v3643 = vpack.c.b16 %v3475, %v3471
  %v3644 = vpack.c.b16 %v3476, %v3472
  %v3645 = vpack.c.b16 %v3477, %v3473
  %v3646 = vpack.c.b16 %v3478, %v3474
  %v3647 = vpack.c.b16 %v3483, %v3479
  %v3648 = vpack.c.b16 %v3484, %v3480
  %v3649 = vpack.c.b16 %v3485, %v3481
  %v3650 = vpack.c.b16 %v3486, %v3482
  %v3651 = vpack.c.b16 %v3491, %v3487
  %v3652 = vpack.c.b16 %v3492, %v3488
  %v3653 = vpack.c.b16 %v3493, %v3489
  %v3654 = vpack.c.b16 %v3494, %v3490
  %v3655 = vpack.c.b16 %v3499, %v3495
  %v3656 = vpack.c.b16 %v3500, %v3496
  %v3657 = vpack.c.b16 %v3501, %v3497
  %v3658 = vpack.c.b16 %v3502, %v3498
  %v3659 = vpack.c.b16 %v3507, %v3503
  %v3660 = vpack.c.b16 %v3508, %v3504
  %v3661 = vpack.c.b16 %v3509, %v3505
  %v3662 = vpack.c.b16 %v3510, %v3506
  %v3663 = vpack.c.b16 %v3515, %v3511
  %v3664 = vpack.c.b16 %v3516, %v3512
  %v3665 = vpack.c.b16 %v3517, %v3513
  %v3666 = vpack.c.b16 %v3518, %v3514
  %v3667 = vpack.c.b16 %v3523, %v3519
  %v3668 = vpack.c.b16 %v3524, %v3520
  %v3669 = vpack.c.b16 %v3525, %v3521
  %v3670 = vpack.c.b16 %v3526, %v3522
  %v3671 = vpack.c.b16 %v3531, %v3527
  %v3672 = vpack.c.b16 %v3532, %v3528
  %v3673 = vpack.c.b16 %v3533, %v3529
  %v3674 = vpack.c.b16 %v3534, %v3530
  %v3675 = vpack.c.b16 %v3539, %v3535
  %v3676 = vpack.c.b16 %v3540, %v3536
  %v3677 = vpack.c.b16 %v3541, %v3537
  %v3678 = vpack.c.b16 %v3542, %v3538
  %v3679 = vpack.c.b16 %v3547, %v3543
  %v3680 = vpack.c.b16 %v3548, %v3544
  %v3681 = vpack.c.b16 %v3549, %v3545
  %v3682 = vpack.c.b16 %v3550, %v3546
  %v3683 = vpack.c.b16 %v3555, %v3551
  %v3684 = vpack.c.b16 %v3556, %v3552
  %v3685 = vpack.c.b16 %v3557, %v3553
  %v3686 = vpack.c.b16 %v3558, %v3554
  %3815 = vmatprep.subr.bf16.mxu0 %v3560
  %3816 = vmatpush1.bf16.msra.mxu0 %v3559
  %3817 = vmatprep.subr.bf16.mxu0 %v3564
  %3818 = vmatpush1.bf16.msra.mxu0 %v3563
  %3819 = vmatprep.subr.bf16.mxu0 %v3568
  %3820 = vmatpush1.bf16.msra.mxu0 %v3567
  %3821 = vmatprep.subr.bf16.mxu0 %v3572
  %3822 = vmatpush1.bf16.msra.mxu0 %v3571
  %3823 = vmatprep.subr.bf16.mxu0 %v3576
  %3824 = vmatpush1.bf16.msra.mxu0 %v3575
  %3825 = vmatprep.subr.bf16.mxu0 %v3580
  %3826 = vmatpush1.bf16.msra.mxu0 %v3579
  %3827 = vmatprep.subr.bf16.mxu0 %v3584
  %3828 = vmatpush1.bf16.msra.mxu0 %v3583
  %3829 = vmatprep.subr.bf16.mxu0 %v3588
  %3830 = vmatpush1.bf16.msra.mxu0 %v3587
  %3831 = vmatprep.subr.bf16.mxu0 %v3592
  %3832 = vmatpush1.bf16.msra.mxu0 %v3591
  %3833 = vmatprep.subr.bf16.mxu0 %v3596
  %3834 = vmatpush1.bf16.msra.mxu0 %v3595
  %3835 = vmatprep.subr.bf16.mxu0 %v3600
  %3836 = vmatpush1.bf16.msra.mxu0 %v3599
  %3837 = vmatprep.subr.bf16.mxu0 %v3604
  %3838 = vmatpush1.bf16.msra.mxu0 %v3603
  %3839 = vmatprep.subr.bf16.mxu0 %v3608
  %3840 = vmatpush1.bf16.msra.mxu0 %v3607
  %3841 = vmatprep.subr.bf16.mxu0 %v3612
  %3842 = vmatpush1.bf16.msra.mxu0 %v3611
  %3843 = vmatprep.subr.bf16.mxu0 %v3616
  %3844 = vmatpush1.bf16.msra.mxu0 %v3615
  %3845 = vmatprep.subr.bf16.mxu0 %v3620
  %3846 = vmatpush1.bf16.msra.mxu0 %v3619
  %3847 = vmatprep.mubr.bf16.mxu0 %v2994
  %3848 = vmatmul.mubr.bf16.gmra.mrb[0].mxu0 %v2993
  %v3849 = vpop.f32.mrb[0].mxu0
  %v3850 = vadd.f32 %v3158, %v3849
  %v3851 = vpop.f32.mrb[0].mxu0
  %v3852 = vadd.f32 %v3162, %v3851
  %v3853 = vpop.f32.mrb[0].mxu0
  %v3854 = vadd.f32 %v3158, %v3853
  %v3855 = vpop.f32.mrb[0].mxu0
  %v3856 = vadd.f32 %v3162, %v3855
  %3857 = vmatprep.mubr.bf16.mxu0 %v2998
  %3858 = vmatmul.mubr.bf16.gmra.mrb[0].mxu0 %v2997
  %v3859 = vpop.f32.mrb[0].mxu0
  %v3860 = vadd.f32 %v3158, %v3859
  %v3861 = vpop.f32.mrb[0].mxu0
  %v3862 = vadd.f32 %v3162, %v3861
  %v3863 = vpop.f32.mrb[0].mxu0
  %v3864 = vadd.f32 %v3158, %v3863
  %v3865 = vpop.f32.mrb[0].mxu0
  %v3866 = vadd.f32 %v3162, %v3865
  %3867 = vmatprep.mubr.bf16.mxu0 %v3002
  %3868 = vmatmul.mubr.bf16.gmra.mrb[0].mxu0 %v3001
  %v3869 = vpop.f32.mrb[0].mxu0
  %v3870 = vadd.f32 %v3158, %v3869
  %v3871 = vpop.f32.mrb[0].mxu0
  %v3872 = vadd.f32 %v3162, %v3871
  %v3873 = vpop.f32.mrb[0].mxu0
  %v3874 = vadd.f32 %v3158, %v3873
  %v3875 = vpop.f32.mrb[0].mxu0
  %v3876 = vadd.f32 %v3162, %v3875
  %3877 = vmatprep.mubr.bf16.mxu0 %v3006
  %3878 = vmatmul.mubr.bf16.gmra.mrb[0].mxu0 %v3005
  %v3879 = vpop.f32.mrb[0].mxu0
  %v3880 = vadd.f32 %v3158, %v3879
  %v3881 = vpop.f32.mrb[0].mxu0
  %v3882 = vadd.f32 %v3162, %v3881
  %v3883 = vpop.f32.mrb[0].mxu0
  %v3884 = vadd.f32 %v3158, %v3883
  %v3885 = vpop.f32.mrb[0].mxu0
  %v3886 = vadd.f32 %v3162, %v3885
  %3887 = vmatprep.mubr.bf16.mxu0 %v3010
  %3888 = vmatmul.mubr.bf16.gmra.mrb[0].mxu0 %v3009
  %v3889 = vpop.f32.mrb[0].mxu0
  %v3890 = vadd.f32 %v3158, %v3889
  %v3891 = vpop.f32.mrb[0].mxu0
  %v3892 = vadd.f32 %v3162, %v3891
  %v3893 = vpop.f32.mrb[0].mxu0
  %v3894 = vadd.f32 %v3158, %v3893
  %v3895 = vpop.f32.mrb[0].mxu0
  %v3896 = vadd.f32 %v3162, %v3895
  %3897 = vmatprep.mubr.bf16.mxu0 %v3014
  %3898 = vmatmul.mubr.bf16.gmra.mrb[0].mxu0 %v3013
  %v3899 = vpop.f32.mrb[0].mxu0
  %v3900 = vadd.f32 %v3158, %v3899
  %v3901 = vpop.f32.mrb[0].mxu0
  %v3902 = vadd.f32 %v3162, %v3901
  %v3903 = vpop.f32.mrb[0].mxu0
  %v3904 = vadd.f32 %v3158, %v3903
  %v3905 = vpop.f32.mrb[0].mxu0
  %v3906 = vadd.f32 %v3162, %v3905
  %3907 = vmatprep.mubr.bf16.mxu0 %v3018
  %3908 = vmatmul.mubr.bf16.gmra.mrb[0].mxu0 %v3017
  %v3909 = vpop.f32.mrb[0].mxu0
  %v3910 = vadd.f32 %v3158, %v3909
  %v3911 = vpop.f32.mrb[0].mxu0
  %v3912 = vadd.f32 %v3162, %v3911
  %v3913 = vpop.f32.mrb[0].mxu0
  %v3914 = vadd.f32 %v3158, %v3913
  %v3915 = vpop.f32.mrb[0].mxu0
  %v3916 = vadd.f32 %v3162, %v3915
  %3917 = vmatprep.mubr.bf16.mxu0 %v3022
  %3918 = vmatmul.mubr.bf16.gmra.mrb[0].mxu0 %v3021
  %v3919 = vpop.f32.mrb[0].mxu0
  %v3920 = vadd.f32 %v3158, %v3919
  %v3921 = vpop.f32.mrb[0].mxu0
  %v3922 = vadd.f32 %v3162, %v3921
  %v3923 = vpop.f32.mrb[0].mxu0
  %v3924 = vadd.f32 %v3158, %v3923
  %v3925 = vpop.f32.mrb[0].mxu0
  %v3926 = vadd.f32 %v3162, %v3925
  %3927 = vdwg.mxu0
  %3928 = vmatprep.subr.bf16.mxu0 %v3624
  %3929 = vmatpush1.bf16.msra.mxu0 %v3623
  %3930 = vmatprep.subr.bf16.mxu0 %v3628
  %3931 = vmatpush1.bf16.msra.mxu0 %v3627
  %3932 = vmatprep.subr.bf16.mxu0 %v3632
  %3933 = vmatpush1.bf16.msra.mxu0 %v3631
  %3934 = vmatprep.subr.bf16.mxu0 %v3636
  %3935 = vmatpush1.bf16.msra.mxu0 %v3635
  %3936 = vmatprep.subr.bf16.mxu0 %v3640
  %3937 = vmatpush1.bf16.msra.mxu0 %v3639
  %3938 = vmatprep.subr.bf16.mxu0 %v3644
  %3939 = vmatpush1.bf16.msra.mxu0 %v3643
  %3940 = vmatprep.subr.bf16.mxu0 %v3648
  %3941 = vmatpush1.bf16.msra.mxu0 %v3647
  %3942 = vmatprep.subr.bf16.mxu0 %v3652
  %3943 = vmatpush1.bf16.msra.mxu0 %v3651
  %3944 = vmatprep.subr.bf16.mxu0 %v3656
  %3945 = vmatpush1.bf16.msra.mxu0 %v3655
  %3946 = vmatprep.subr.bf16.mxu0 %v3660
  %3947 = vmatpush1.bf16.msra.mxu0 %v3659
  %3948 = vmatprep.subr.bf16.mxu0 %v3664
  %3949 = vmatpush1.bf16.msra.mxu0 %v3663
  %3950 = vmatprep.subr.bf16.mxu0 %v3668
  %3951 = vmatpush1.bf16.msra.mxu0 %v3667
  %3952 = vmatprep.subr.bf16.mxu0 %v3672
  %3953 = vmatpush1.bf16.msra.mxu0 %v3671
  %3954 = vmatprep.subr.bf16.mxu0 %v3676
  %3955 = vmatpush1.bf16.msra.mxu0 %v3675
  %3956 = vmatprep.subr.bf16.mxu0 %v3680
  %3957 = vmatpush1.bf16.msra.mxu0 %v3679
  %3958 = vmatprep.subr.bf16.mxu0 %v3684
  %3959 = vmatpush1.bf16.msra.mxu0 %v3683
  %3960 = vmatprep.mubr.bf16.mxu0 %v2996
  %3961 = vmatmul.mubr.bf16.gmra.mrb[0].mxu0 %v2995
  %v3962 = vpop.f32.mrb[0].mxu0
  %v3963 = vadd.f32 %v3850, %v3962
  %v3964 = vpop.f32.mrb[0].mxu0
  %v3965 = vadd.f32 %v3852, %v3964
  %v3966 = vpop.f32.mrb[0].mxu0
  %v3967 = vadd.f32 %v3854, %v3966
  %v3968 = vpop.f32.mrb[0].mxu0
  %v3969 = vadd.f32 %v3856, %v3968
  %3970 = vmatprep.mubr.bf16.mxu0 %v3000
  %3971 = vmatmul.mubr.bf16.gmra.mrb[0].mxu0 %v2999
  %v3972 = vpop.f32.mrb[0].mxu0
  %v3973 = vadd.f32 %v3860, %v3972
  %v3974 = vpop.f32.mrb[0].mxu0
  %v3975 = vadd.f32 %v3862, %v3974
  %v3976 = vpop.f32.mrb[0].mxu0
  %v3977 = vadd.f32 %v3864, %v3976
  %v3978 = vpop.f32.mrb[0].mxu0
  %v3979 = vadd.f32 %v3866, %v3978
  %3980 = vmatprep.mubr.bf16.mxu0 %v3004
  %3981 = vmatmul.mubr.bf16.gmra.mrb[0].mxu0 %v3003
  %v3982 = vpop.f32.mrb[0].mxu0
  %v3983 = vadd.f32 %v3870, %v3982
  %v3984 = vpop.f32.mrb[0].mxu0
  %v3985 = vadd.f32 %v3872, %v3984
  %v3986 = vpop.f32.mrb[0].mxu0
  %v3987 = vadd.f32 %v3874, %v3986
  %v3988 = vpop.f32.mrb[0].mxu0
  %v3989 = vadd.f32 %v3876, %v3988
  %3990 = vmatprep.mubr.bf16.mxu0 %v3008
  %3991 = vmatmul.mubr.bf16.gmra.mrb[0].mxu0 %v3007
  %v3992 = vpop.f32.mrb[0].mxu0
  %v3993 = vadd.f32 %v3880, %v3992
  %v3994 = vpop.f32.mrb[0].mxu0
  %v3995 = vadd.f32 %v3882, %v3994
  %v3996 = vpop.f32.mrb[0].mxu0
  %v3997 = vadd.f32 %v3884, %v3996
  %v3998 = vpop.f32.mrb[0].mxu0
  %v3999 = vadd.f32 %v3886, %v3998
  %4000 = vmatprep.mubr.bf16.mxu0 %v3012
  %4001 = vmatmul.mubr.bf16.gmra.mrb[0].mxu0 %v3011
  %v4002 = vpop.f32.mrb[0].mxu0
  %v4003 = vadd.f32 %v3890, %v4002
  %v4004 = vpop.f32.mrb[0].mxu0
  %v4005 = vadd.f32 %v3892, %v4004
  %v4006 = vpop.f32.mrb[0].mxu0
  %v4007 = vadd.f32 %v3894, %v4006
  %v4008 = vpop.f32.mrb[0].mxu0
  %v4009 = vadd.f32 %v3896, %v4008
  %4010 = vmatprep.mubr.bf16.mxu0 %v3016
  %4011 = vmatmul.mubr.bf16.gmra.mrb[0].mxu0 %v3015
  %v4012 = vpop.f32.mrb[0].mxu0
  %v4013 = vadd.f32 %v3900, %v4012
  %v4014 = vpop.f32.mrb[0].mxu0
  %v4015 = vadd.f32 %v3902, %v4014
  %v4016 = vpop.f32.mrb[0].mxu0
  %v4017 = vadd.f32 %v3904, %v4016
  %v4018 = vpop.f32.mrb[0].mxu0
  %v4019 = vadd.f32 %v3906, %v4018
  %4020 = vmatprep.mubr.bf16.mxu0 %v3020
  %4021 = vmatmul.mubr.bf16.gmra.mrb[0].mxu0 %v3019
  %v4022 = vpop.f32.mrb[0].mxu0
  %v4023 = vadd.f32 %v3910, %v4022
  %v4024 = vpop.f32.mrb[0].mxu0
  %v4025 = vadd.f32 %v3912, %v4024
  %v4026 = vpop.f32.mrb[0].mxu0
  %v4027 = vadd.f32 %v3914, %v4026
  %v4028 = vpop.f32.mrb[0].mxu0
  %v4029 = vadd.f32 %v3916, %v4028
  %4030 = vmatprep.mubr.bf16.mxu0 %v3024
  %4031 = vmatmul.mubr.bf16.gmra.mrb[0].mxu0 %v3023
  %v4032 = vpop.f32.mrb[0].mxu0
  %v4033 = vadd.f32 %v3920, %v4032
  %v4034 = vpop.f32.mrb[0].mxu0
  %v4035 = vadd.f32 %v3922, %v4034
  %v4036 = vpop.f32.mrb[0].mxu0
  %v4037 = vadd.f32 %v3924, %v4036
  %v4038 = vpop.f32.mrb[0].mxu0
  %v4039 = vadd.f32 %v3926, %v4038
  %4040 = vdwg.mxu0
  %4041 = vmatprep.subr.bf16.mxu0 %v3562
  %4042 = vmatpush1.bf16.msra.mxu0 %v3561
  %4043 = vmatprep.subr.bf16.mxu0 %v3566
  %4044 = vmatpush1.bf16.msra.mxu0 %v3565
  %4045 = vmatprep.subr.bf16.mxu0 %v3570
  %4046 = vmatpush1.bf16.msra.mxu0 %v3569
  %4047 = vmatprep.subr.bf16.mxu0 %v3574
  %4048 = vmatpush1.bf16.msra.mxu0 %v3573
  %4049 = vmatprep.subr.bf16.mxu0 %v3578
  %4050 = vmatpush1.bf16.msra.mxu0 %v3577
  %4051 = vmatprep.subr.bf16.mxu0 %v3582
  %4052 = vmatpush1.bf16.msra.mxu0 %v3581
  %4053 = vmatprep.subr.bf16.mxu0 %v3586
  %4054 = vmatpush1.bf16.msra.mxu0 %v3585
  %4055 = vmatprep.subr.bf16.mxu0 %v3590
  %4056 = vmatpush1.bf16.msra.mxu0 %v3589
  %4057 = vmatprep.subr.bf16.mxu0 %v3594
  %4058 = vmatpush1.bf16.msra.mxu0 %v3593
  %4059 = vmatprep.subr.bf16.mxu0 %v3598
  %4060 = vmatpush1.bf16.msra.mxu0 %v3597
  %4061 = vmatprep.subr.bf16.mxu0 %v3602
  %4062 = vmatpush1.bf16.msra.mxu0 %v3601
  %4063 = vmatprep.subr.bf16.mxu0 %v3606
  %4064 = vmatpush1.bf16.msra.mxu0 %v3605
  %4065 = vmatprep.subr.bf16.mxu0 %v3610
  %4066 = vmatpush1.bf16.msra.mxu0 %v3609
  %4067 = vmatprep.subr.bf16.mxu0 %v3614
  %4068 = vmatpush1.bf16.msra.mxu0 %v3613
  %4069 = vmatprep.subr.bf16.mxu0 %v3618
  %4070 = vmatpush1.bf16.msra.mxu0 %v3617
  %4071 = vmatprep.subr.bf16.mxu0 %v3622
  %4072 = vmatpush1.bf16.msra.mxu0 %v3621
  %4073 = vmatprep.mubr.bf16.mxu0 %v2994
  %4074 = vmatmul.mubr.bf16.gmra.mrb[0].mxu0 %v2993
  %v4075 = vpop.f32.mrb[0].mxu0
  %v4076 = vadd.f32 %v3166, %v4075
  %v4077 = vpop.f32.mrb[0].mxu0
  %v4078 = vadd.f32 %v3170, %v4077
  %v4079 = vpop.f32.mrb[0].mxu0
  %v4080 = vadd.f32 %v3166, %v4079
  %v4081 = vpop.f32.mrb[0].mxu0
  %v4082 = vadd.f32 %v3170, %v4081
  %4083 = vmatprep.mubr.bf16.mxu0 %v2998
  %4084 = vmatmul.mubr.bf16.gmra.mrb[0].mxu0 %v2997
  %v4085 = vpop.f32.mrb[0].mxu0
  %v4086 = vadd.f32 %v3166, %v4085
  %v4087 = vpop.f32.mrb[0].mxu0
  %v4088 = vadd.f32 %v3170, %v4087
  %v4089 = vpop.f32.mrb[0].mxu0
  %v4090 = vadd.f32 %v3166, %v4089
  %v4091 = vpop.f32.mrb[0].mxu0
  %v4092 = vadd.f32 %v3170, %v4091
  %4093 = vmatprep.mubr.bf16.mxu0 %v3002
  %4094 = vmatmul.mubr.bf16.gmra.mrb[0].mxu0 %v3001
  %v4095 = vpop.f32.mrb[0].mxu0
  %v4096 = vadd.f32 %v3166, %v4095
  %v4097 = vpop.f32.mrb[0].mxu0
  %v4098 = vadd.f32 %v3170, %v4097
  %v4099 = vpop.f32.mrb[0].mxu0
  %v4100 = vadd.f32 %v3166, %v4099
  %v4101 = vpop.f32.mrb[0].mxu0
  %v4102 = vadd.f32 %v3170, %v4101
  %4103 = vmatprep.mubr.bf16.mxu0 %v3006
  %4104 = vmatmul.mubr.bf16.gmra.mrb[0].mxu0 %v3005
  %v4105 = vpop.f32.mrb[0].mxu0
  %v4106 = vadd.f32 %v3166, %v4105
  %v4107 = vpop.f32.mrb[0].mxu0
  %v4108 = vadd.f32 %v3170, %v4107
  %v4109 = vpop.f32.mrb[0].mxu0
  %v4110 = vadd.f32 %v3166, %v4109
  %v4111 = vpop.f32.mrb[0].mxu0
  %v4112 = vadd.f32 %v3170, %v4111
  %4113 = vmatprep.mubr.bf16.mxu0 %v3010
  %4114 = vmatmul.mubr.bf16.gmra.mrb[0].mxu0 %v3009
  %v4115 = vpop.f32.mrb[0].mxu0
  %v4116 = vadd.f32 %v3166, %v4115
  %v4117 = vpop.f32.mrb[0].mxu0
  %v4118 = vadd.f32 %v3170, %v4117
  %v4119 = vpop.f32.mrb[0].mxu0
  %v4120 = vadd.f32 %v3166, %v4119
  %v4121 = vpop.f32.mrb[0].mxu0
  %v4122 = vadd.f32 %v3170, %v4121
  %4123 = vmatprep.mubr.bf16.mxu0 %v3014
  %4124 = vmatmul.mubr.bf16.gmra.mrb[0].mxu0 %v3013
  %v4125 = vpop.f32.mrb[0].mxu0
  %v4126 = vadd.f32 %v3166, %v4125
  %v4127 = vpop.f32.mrb[0].mxu0
  %v4128 = vadd.f32 %v3170, %v4127
  %v4129 = vpop.f32.mrb[0].mxu0
  %v4130 = vadd.f32 %v3166, %v4129
  %v4131 = vpop.f32.mrb[0].mxu0
  %v4132 = vadd.f32 %v3170, %v4131
  %4133 = vmatprep.mubr.bf16.mxu0 %v3018
  %4134 = vmatmul.mubr.bf16.gmra.mrb[0].mxu0 %v3017
  %v4135 = vpop.f32.mrb[0].mxu0
  %v4136 = vadd.f32 %v3166, %v4135
  %v4137 = vpop.f32.mrb[0].mxu0
  %v4138 = vadd.f32 %v3170, %v4137
  %v4139 = vpop.f32.mrb[0].mxu0
  %v4140 = vadd.f32 %v3166, %v4139
  %v4141 = vpop.f32.mrb[0].mxu0
  %v4142 = vadd.f32 %v3170, %v4141
  %4143 = vmatprep.mubr.bf16.mxu0 %v3022
  %4144 = vmatmul.mubr.bf16.gmra.mrb[0].mxu0 %v3021
  %v4145 = vpop.f32.mrb[0].mxu0
  %v4146 = vadd.f32 %v3166, %v4145
  %v4147 = vpop.f32.mrb[0].mxu0
  %v4148 = vadd.f32 %v3170, %v4147
  %v4149 = vpop.f32.mrb[0].mxu0
  %v4150 = vadd.f32 %v3166, %v4149
  %v4151 = vpop.f32.mrb[0].mxu0
  %v4152 = vadd.f32 %v3170, %v4151
  %4153 = vdwg.mxu0
  %4154 = vmatprep.subr.bf16.mxu0 %v3626
  %4155 = vmatpush1.bf16.msra.mxu0 %v3625
  %4156 = vmatprep.subr.bf16.mxu0 %v3630
  %4157 = vmatpush1.bf16.msra.mxu0 %v3629
  %4158 = vmatprep.subr.bf16.mxu0 %v3634
  %4159 = vmatpush1.bf16.msra.mxu0 %v3633
  %4160 = vmatprep.subr.bf16.mxu0 %v3638
  %4161 = vmatpush1.bf16.msra.mxu0 %v3637
  %4162 = vmatprep.subr.bf16.mxu0 %v3642
  %4163 = vmatpush1.bf16.msra.mxu0 %v3641
  %4164 = vmatprep.subr.bf16.mxu0 %v3646
  %4165 = vmatpush1.bf16.msra.mxu0 %v3645
  %4166 = vmatprep.subr.bf16.mxu0 %v3650
  %4167 = vmatpush1.bf16.msra.mxu0 %v3649
  %4168 = vmatprep.subr.bf16.mxu0 %v3654
  %4169 = vmatpush1.bf16.msra.mxu0 %v3653
  %4170 = vmatprep.subr.bf16.mxu0 %v3658
  %4171 = vmatpush1.bf16.msra.mxu0 %v3657
  %4172 = vmatprep.subr.bf16.mxu0 %v3662
  %4173 = vmatpush1.bf16.msra.mxu0 %v3661
  %4174 = vmatprep.subr.bf16.mxu0 %v3666
  %4175 = vmatpush1.bf16.msra.mxu0 %v3665
  %4176 = vmatprep.subr.bf16.mxu0 %v3670
  %4177 = vmatpush1.bf16.msra.mxu0 %v3669
  %4178 = vmatprep.subr.bf16.mxu0 %v3674
  %4179 = vmatpush1.bf16.msra.mxu0 %v3673
  %4180 = vmatprep.subr.bf16.mxu0 %v3678
  %4181 = vmatpush1.bf16.msra.mxu0 %v3677
  %4182 = vmatprep.subr.bf16.mxu0 %v3682
  %4183 = vmatpush1.bf16.msra.mxu0 %v3681
  %4184 = vmatprep.subr.bf16.mxu0 %v3686
  %4185 = vmatpush1.bf16.msra.mxu0 %v3685
  %4186 = vmatprep.mubr.bf16.mxu0 %v2996
  %4187 = vmatmul.mubr.bf16.gmra.mrb[0].mxu0 %v2995
  %v4188 = vpop.f32.mrb[0].mxu0
  %v4189 = vadd.f32 %v4076, %v4188
  %v4190 = vpop.f32.mrb[0].mxu0
  %v4191 = vadd.f32 %v4078, %v4190
  %v4192 = vpop.f32.mrb[0].mxu0
  %v4193 = vadd.f32 %v4080, %v4192
  %v4194 = vpop.f32.mrb[0].mxu0
  %v4195 = vadd.f32 %v4082, %v4194
  %4196 = vmatprep.mubr.bf16.mxu0 %v3000
  %4197 = vmatmul.mubr.bf16.gmra.mrb[0].mxu0 %v2999
  %v4198 = vpop.f32.mrb[0].mxu0
  %v4199 = vadd.f32 %v4086, %v4198
  %v4200 = vpop.f32.mrb[0].mxu0
  %v4201 = vadd.f32 %v4088, %v4200
  %v4202 = vpop.f32.mrb[0].mxu0
  %v4203 = vadd.f32 %v4090, %v4202
  %v4204 = vpop.f32.mrb[0].mxu0
  %v4205 = vadd.f32 %v4092, %v4204
  %4206 = vmatprep.mubr.bf16.mxu0 %v3004
  %4207 = vmatmul.mubr.bf16.gmra.mrb[0].mxu0 %v3003
  %v4208 = vpop.f32.mrb[0].mxu0
  %v4209 = vadd.f32 %v4096, %v4208
  %v4210 = vpop.f32.mrb[0].mxu0
  %v4211 = vadd.f32 %v4098, %v4210
  %v4212 = vpop.f32.mrb[0].mxu0
  %v4213 = vadd.f32 %v4100, %v4212
  %v4214 = vpop.f32.mrb[0].mxu0
  %v4215 = vadd.f32 %v4102, %v4214
  %4216 = vmatprep.mubr.bf16.mxu0 %v3008
  %4217 = vmatmul.mubr.bf16.gmra.mrb[0].mxu0 %v3007
  %v4218 = vpop.f32.mrb[0].mxu0
  %v4219 = vadd.f32 %v4106, %v4218
  %v4220 = vpop.f32.mrb[0].mxu0
  %v4221 = vadd.f32 %v4108, %v4220
  %v4222 = vpop.f32.mrb[0].mxu0
  %v4223 = vadd.f32 %v4110, %v4222
  %v4224 = vpop.f32.mrb[0].mxu0
  %v4225 = vadd.f32 %v4112, %v4224
  %4226 = vmatprep.mubr.bf16.mxu0 %v3012
  %4227 = vmatmul.mubr.bf16.gmra.mrb[0].mxu0 %v3011
  %v4228 = vpop.f32.mrb[0].mxu0
  %v4229 = vadd.f32 %v4116, %v4228
  %v4230 = vpop.f32.mrb[0].mxu0
  %v4231 = vadd.f32 %v4118, %v4230
  %v4232 = vpop.f32.mrb[0].mxu0
  %v4233 = vadd.f32 %v4120, %v4232
  %v4234 = vpop.f32.mrb[0].mxu0
  %v4235 = vadd.f32 %v4122, %v4234
  %4236 = vmatprep.mubr.bf16.mxu0 %v3016
  %4237 = vmatmul.mubr.bf16.gmra.mrb[0].mxu0 %v3015
  %v4238 = vpop.f32.mrb[0].mxu0
  %v4239 = vadd.f32 %v4126, %v4238
  %v4240 = vpop.f32.mrb[0].mxu0
  %v4241 = vadd.f32 %v4128, %v4240
  %v4242 = vpop.f32.mrb[0].mxu0
  %v4243 = vadd.f32 %v4130, %v4242
  %v4244 = vpop.f32.mrb[0].mxu0
  %v4245 = vadd.f32 %v4132, %v4244
  %4246 = vmatprep.mubr.bf16.mxu0 %v3020
  %4247 = vmatmul.mubr.bf16.gmra.mrb[0].mxu0 %v3019
  %v4248 = vpop.f32.mrb[0].mxu0
  %v4249 = vadd.f32 %v4136, %v4248
  %v4250 = vpop.f32.mrb[0].mxu0
  %v4251 = vadd.f32 %v4138, %v4250
  %v4252 = vpop.f32.mrb[0].mxu0
  %v4253 = vadd.f32 %v4140, %v4252
  %v4254 = vpop.f32.mrb[0].mxu0
  %v4255 = vadd.f32 %v4142, %v4254
  %4256 = vmatprep.mubr.bf16.mxu0 %v3024
  %4257 = vmatmul.mubr.bf16.gmra.mrb[0].mxu0 %v3023
  %v4258 = vpop.f32.mrb[0].mxu0
  %v4259 = vadd.f32 %v4146, %v4258
  %v4260 = vpop.f32.mrb[0].mxu0
  %v4261 = vadd.f32 %v4148, %v4260
  %v4262 = vpop.f32.mrb[0].mxu0
  %v4263 = vadd.f32 %v4150, %v4262
  %v4264 = vpop.f32.mrb[0].mxu0
  %v4265 = vadd.f32 %v4152, %v4264
  %4266 = vdwg.mxu0
  %v4267 = vld [vmem:[%s7] sm:$0xf]
  %v4269 = vlaneseq
  %v4270 = vshrl.u32 %v4269, 7
  %v4271 = vsub.s32 0, %v4270
  %v4272 = vrot.slane %v4267, %v4271
  %v4273 = vlaneseq
  %v4274 = vshrl.u32 %v4273, 7
  %v4275 = vsub.s32 1, %v4274
  %v4276 = vrot.slane %v4267, %v4275
  %v4277 = vlaneseq
  %v4278 = vshrl.u32 %v4277, 7
  %v4279 = vsub.s32 2, %v4278
  %v4280 = vrot.slane %v4267, %v4279
  %v4281 = vlaneseq
  %v4282 = vshrl.u32 %v4281, 7
  %v4283 = vsub.s32 3, %v4282
  %v4284 = vrot.slane %v4267, %v4283
  %v4289 = vmul.f32 %v3963, %v4272
  %v4290 = vmul.f32 %v3965, %v4276
  %v4291 = vmul.f32 %v4189, %v4280
  %v4292 = vmul.f32 %v4191, %v4284
  %v4293 = vmul.f32 %v3967, %v4272
  %v4294 = vmul.f32 %v3969, %v4276
  %v4295 = vmul.f32 %v4193, %v4280
  %v4296 = vmul.f32 %v4195, %v4284
  %v4297 = vmul.f32 %v3973, %v4272
  %v4298 = vmul.f32 %v3975, %v4276
  %v4299 = vmul.f32 %v4199, %v4280
  %v4300 = vmul.f32 %v4201, %v4284
  %v4301 = vmul.f32 %v3977, %v4272
  %v4302 = vmul.f32 %v3979, %v4276
  %v4303 = vmul.f32 %v4203, %v4280
  %v4304 = vmul.f32 %v4205, %v4284
  %v4305 = vmul.f32 %v3983, %v4272
  %v4306 = vmul.f32 %v3985, %v4276
  %v4307 = vmul.f32 %v4209, %v4280
  %v4308 = vmul.f32 %v4211, %v4284
  %v4309 = vmul.f32 %v3987, %v4272
  %v4310 = vmul.f32 %v3989, %v4276
  %v4311 = vmul.f32 %v4213, %v4280
  %v4312 = vmul.f32 %v4215, %v4284
  %v4313 = vmul.f32 %v3993, %v4272
  %v4314 = vmul.f32 %v3995, %v4276
  %v4315 = vmul.f32 %v4219, %v4280
  %v4316 = vmul.f32 %v4221, %v4284
  %v4317 = vmul.f32 %v3997, %v4272
  %v4318 = vmul.f32 %v3999, %v4276
  %v4319 = vmul.f32 %v4223, %v4280
  %v4320 = vmul.f32 %v4225, %v4284
  %v4321 = vmul.f32 %v4003, %v4272
  %v4322 = vmul.f32 %v4005, %v4276
  %v4323 = vmul.f32 %v4229, %v4280
  %v4324 = vmul.f32 %v4231, %v4284
  %v4325 = vmul.f32 %v4007, %v4272
  %v4326 = vmul.f32 %v4009, %v4276
  %v4327 = vmul.f32 %v4233, %v4280
  %v4328 = vmul.f32 %v4235, %v4284
  %v4329 = vmul.f32 %v4013, %v4272
  %v4330 = vmul.f32 %v4015, %v4276
  %v4331 = vmul.f32 %v4239, %v4280
  %v4332 = vmul.f32 %v4241, %v4284
  %v4333 = vmul.f32 %v4017, %v4272
  %v4334 = vmul.f32 %v4019, %v4276
  %v4335 = vmul.f32 %v4243, %v4280
  %v4336 = vmul.f32 %v4245, %v4284
  %v4337 = vmul.f32 %v4023, %v4272
  %v4338 = vmul.f32 %v4025, %v4276
  %v4339 = vmul.f32 %v4249, %v4280
  %v4340 = vmul.f32 %v4251, %v4284
  %v4341 = vmul.f32 %v4027, %v4272
  %v4342 = vmul.f32 %v4029, %v4276
  %v4343 = vmul.f32 %v4253, %v4280
  %v4344 = vmul.f32 %v4255, %v4284
  %v4345 = vmul.f32 %v4033, %v4272
  %v4346 = vmul.f32 %v4035, %v4276
  %v4347 = vmul.f32 %v4259, %v4280
  %v4348 = vmul.f32 %v4261, %v4284
  %v4349 = vmul.f32 %v4037, %v4272
  %v4350 = vmul.f32 %v4039, %v4276
  %v4351 = vmul.f32 %v4263, %v4280
  %v4352 = vmul.f32 %v4265, %v4284
  %v4353 = vld [vmem:[%s8] sm:$0xf]
  %v4355 = vlaneseq
  %v4356 = vshrl.u32 %v4355, 7
  %v4357 = vsub.s32 0, %v4356
  %v4358 = vrot.slane %v4353, %v4357
  %v4359 = vlaneseq
  %v4360 = vshrl.u32 %v4359, 7
  %v4361 = vsub.s32 1, %v4360
  %v4362 = vrot.slane %v4353, %v4361
  %v4363 = vlaneseq
  %v4364 = vshrl.u32 %v4363, 7
  %v4365 = vsub.s32 2, %v4364
  %v4366 = vrot.slane %v4353, %v4365
  %v4367 = vlaneseq
  %v4368 = vshrl.u32 %v4367, 7
  %v4369 = vsub.s32 3, %v4368
  %v4370 = vrot.slane %v4353, %v4369
  %v4375 = vadd.f32 %v4289, %v4358
  %v4376 = vadd.f32 %v4290, %v4362
  %v4377 = vadd.f32 %v4291, %v4366
  %v4378 = vadd.f32 %v4292, %v4370
  %v4379 = vadd.f32 %v4293, %v4358
  %v4380 = vadd.f32 %v4294, %v4362
  %v4381 = vadd.f32 %v4295, %v4366
  %v4382 = vadd.f32 %v4296, %v4370
  %v4383 = vadd.f32 %v4297, %v4358
  %v4384 = vadd.f32 %v4298, %v4362
  %v4385 = vadd.f32 %v4299, %v4366
  %v4386 = vadd.f32 %v4300, %v4370
  %v4387 = vadd.f32 %v4301, %v4358
  %v4388 = vadd.f32 %v4302, %v4362
  %v4389 = vadd.f32 %v4303, %v4366
  %v4390 = vadd.f32 %v4304, %v4370
  %v4391 = vadd.f32 %v4305, %v4358
  %v4392 = vadd.f32 %v4306, %v4362
  %v4393 = vadd.f32 %v4307, %v4366
  %v4394 = vadd.f32 %v4308, %v4370
  %v4395 = vadd.f32 %v4309, %v4358
  %v4396 = vadd.f32 %v4310, %v4362
  %v4397 = vadd.f32 %v4311, %v4366
  %v4398 = vadd.f32 %v4312, %v4370
  %v4399 = vadd.f32 %v4313, %v4358
  %v4400 = vadd.f32 %v4314, %v4362
  %v4401 = vadd.f32 %v4315, %v4366
  %v4402 = vadd.f32 %v4316, %v4370
  %v4403 = vadd.f32 %v4317, %v4358
  %v4404 = vadd.f32 %v4318, %v4362
  %v4405 = vadd.f32 %v4319, %v4366
  %v4406 = vadd.f32 %v4320, %v4370
  %v4407 = vadd.f32 %v4321, %v4358
  %v4408 = vadd.f32 %v4322, %v4362
  %v4409 = vadd.f32 %v4323, %v4366
  %v4410 = vadd.f32 %v4324, %v4370
  %v4411 = vadd.f32 %v4325, %v4358
  %v4412 = vadd.f32 %v4326, %v4362
  %v4413 = vadd.f32 %v4327, %v4366
  %v4414 = vadd.f32 %v4328, %v4370
  %v4415 = vadd.f32 %v4329, %v4358
  %v4416 = vadd.f32 %v4330, %v4362
  %v4417 = vadd.f32 %v4331, %v4366
  %v4418 = vadd.f32 %v4332, %v4370
  %v4419 = vadd.f32 %v4333, %v4358
  %v4420 = vadd.f32 %v4334, %v4362
  %v4421 = vadd.f32 %v4335, %v4366
  %v4422 = vadd.f32 %v4336, %v4370
  %v4423 = vadd.f32 %v4337, %v4358
  %v4424 = vadd.f32 %v4338, %v4362
  %v4425 = vadd.f32 %v4339, %v4366
  %v4426 = vadd.f32 %v4340, %v4370
  %v4427 = vadd.f32 %v4341, %v4358
  %v4428 = vadd.f32 %v4342, %v4362
  %v4429 = vadd.f32 %v4343, %v4366
  %v4430 = vadd.f32 %v4344, %v4370
  %v4431 = vadd.f32 %v4345, %v4358
  %v4432 = vadd.f32 %v4346, %v4362
  %v4433 = vadd.f32 %v4347, %v4366
  %v4434 = vadd.f32 %v4348, %v4370
  %v4435 = vadd.f32 %v4349, %v4358
  %v4436 = vadd.f32 %v4350, %v4362
  %v4437 = vadd.f32 %v4351, %v4366
  %v4438 = vadd.f32 %v4352, %v4370
  %v4439 = vmax.f32 %v4375, 0.0
  %v4440 = vmax.f32 %v4376, 0.0
  %v4441 = vmax.f32 %v4377, 0.0
  %v4442 = vmax.f32 %v4378, 0.0
  %v4443 = vmax.f32 %v4379, 0.0
  %v4444 = vmax.f32 %v4380, 0.0
  %v4445 = vmax.f32 %v4381, 0.0
  %v4446 = vmax.f32 %v4382, 0.0
  %v4447 = vmax.f32 %v4383, 0.0
  %v4448 = vmax.f32 %v4384, 0.0
  %v4449 = vmax.f32 %v4385, 0.0
  %v4450 = vmax.f32 %v4386, 0.0
  %v4451 = vmax.f32 %v4387, 0.0
  %v4452 = vmax.f32 %v4388, 0.0
  %v4453 = vmax.f32 %v4389, 0.0
  %v4454 = vmax.f32 %v4390, 0.0
  %v4455 = vmax.f32 %v4391, 0.0
  %v4456 = vmax.f32 %v4392, 0.0
  %v4457 = vmax.f32 %v4393, 0.0
  %v4458 = vmax.f32 %v4394, 0.0
  %v4459 = vmax.f32 %v4395, 0.0
  %v4460 = vmax.f32 %v4396, 0.0
  %v4461 = vmax.f32 %v4397, 0.0
  %v4462 = vmax.f32 %v4398, 0.0
  %v4463 = vmax.f32 %v4399, 0.0
  %v4464 = vmax.f32 %v4400, 0.0
  %v4465 = vmax.f32 %v4401, 0.0
  %v4466 = vmax.f32 %v4402, 0.0
  %v4467 = vmax.f32 %v4403, 0.0
  %v4468 = vmax.f32 %v4404, 0.0
  %v4469 = vmax.f32 %v4405, 0.0
  %v4470 = vmax.f32 %v4406, 0.0
  %v4471 = vmax.f32 %v4407, 0.0
  %v4472 = vmax.f32 %v4408, 0.0
  %v4473 = vmax.f32 %v4409, 0.0
  %v4474 = vmax.f32 %v4410, 0.0
  %v4475 = vmax.f32 %v4411, 0.0
  %v4476 = vmax.f32 %v4412, 0.0
  %v4477 = vmax.f32 %v4413, 0.0
  %v4478 = vmax.f32 %v4414, 0.0
  %v4479 = vmax.f32 %v4415, 0.0
  %v4480 = vmax.f32 %v4416, 0.0
  %v4481 = vmax.f32 %v4417, 0.0
  %v4482 = vmax.f32 %v4418, 0.0
  %v4483 = vmax.f32 %v4419, 0.0
  %v4484 = vmax.f32 %v4420, 0.0
  %v4485 = vmax.f32 %v4421, 0.0
  %v4486 = vmax.f32 %v4422, 0.0
  %v4487 = vmax.f32 %v4423, 0.0
  %v4488 = vmax.f32 %v4424, 0.0
  %v4489 = vmax.f32 %v4425, 0.0
  %v4490 = vmax.f32 %v4426, 0.0
  %v4491 = vmax.f32 %v4427, 0.0
  %v4492 = vmax.f32 %v4428, 0.0
  %v4493 = vmax.f32 %v4429, 0.0
  %v4494 = vmax.f32 %v4430, 0.0
  %v4495 = vmax.f32 %v4431, 0.0
  %v4496 = vmax.f32 %v4432, 0.0
  %v4497 = vmax.f32 %v4433, 0.0
  %v4498 = vmax.f32 %v4434, 0.0
  %v4499 = vmax.f32 %v4435, 0.0
  %v4500 = vmax.f32 %v4436, 0.0
  %v4501 = vmax.f32 %v4437, 0.0
  %v4502 = vmax.f32 %v4438, 0.0
  %v4503 = vpack.c.bf16 %v4443, %v4439
  %v4504 = vpack.c.bf16 %v4444, %v4440
  %v4505 = vpack.c.bf16 %v4445, %v4441
  %v4506 = vpack.c.bf16 %v4446, %v4442
  %v4507 = vpack.c.bf16 %v4451, %v4447
  %v4508 = vpack.c.bf16 %v4452, %v4448
  %v4509 = vpack.c.bf16 %v4453, %v4449
  %v4510 = vpack.c.bf16 %v4454, %v4450
  %v4511 = vpack.c.bf16 %v4459, %v4455
  %v4512 = vpack.c.bf16 %v4460, %v4456
  %v4513 = vpack.c.bf16 %v4461, %v4457
  %v4514 = vpack.c.bf16 %v4462, %v4458
  %v4515 = vpack.c.bf16 %v4467, %v4463
  %v4516 = vpack.c.bf16 %v4468, %v4464
  %v4517 = vpack.c.bf16 %v4469, %v4465
  %v4518 = vpack.c.bf16 %v4470, %v4466
  %v4519 = vpack.c.bf16 %v4475, %v4471
  %v4520 = vpack.c.bf16 %v4476, %v4472
  %v4521 = vpack.c.bf16 %v4477, %v4473
  %v4522 = vpack.c.bf16 %v4478, %v4474
  %v4523 = vpack.c.bf16 %v4483, %v4479
  %v4524 = vpack.c.bf16 %v4484, %v4480
  %v4525 = vpack.c.bf16 %v4485, %v4481
  %v4526 = vpack.c.bf16 %v4486, %v4482
  %v4527 = vpack.c.bf16 %v4491, %v4487
  %v4528 = vpack.c.bf16 %v4492, %v4488
  %v4529 = vpack.c.bf16 %v4493, %v4489
  %v4530 = vpack.c.bf16 %v4494, %v4490
  %v4531 = vpack.c.bf16 %v4499, %v4495
  %v4532 = vpack.c.bf16 %v4500, %v4496
  %v4533 = vpack.c.bf16 %v4501, %v4497
  %v4534 = vpack.c.bf16 %v4502, %v4498
  %v4535 = vld [vmem:[%s9] sm:$0xff]
  %v4536 = vld [vmem:[%s9 + $0x8] sm:$0xff]
  %v4537 = vld [vmem:[%s9 + $0x10] sm:$0xff]
  %v4538 = vld [vmem:[%s9 + $0x18] sm:$0xff]
  %v4539 = vld [vmem:[%s9 + $0x20] sm:$0xff]
  %v4540 = vld [vmem:[%s9 + $0x28] sm:$0xff]
  %v4541 = vld [vmem:[%s9 + $0x30] sm:$0xff]
  %v4542 = vld [vmem:[%s9 + $0x38] sm:$0xff]
  %v4543 = vld [vmem:[%s9 + $0x40] sm:$0xff]
  %v4544 = vld [vmem:[%s9 + $0x48] sm:$0xff]
  %v4545 = vld [vmem:[%s9 + $0x50] sm:$0xff]
  %v4546 = vld [vmem:[%s9 + $0x58] sm:$0xff]
  %v4547 = vld [vmem:[%s9 + $0x60] sm:$0xff]
  %v4548 = vld [vmem:[%s9 + $0x68] sm:$0xff]
  %v4549 = vld [vmem:[%s9 + $0x70] sm:$0xff]
  %v4550 = vld [vmem:[%s9 + $0x78] sm:$0xff]
  %v4551 = vld [vmem:[%s9 + $0x80] sm:$0xff]
  %v4552 = vld [vmem:[%s9 + $0x88] sm:$0xff]
  %v4553 = vld [vmem:[%s9 + $0x90] sm:$0xff]
  %v4554 = vld [vmem:[%s9 + $0x98] sm:$0xff]
  %v4555 = vld [vmem:[%s9 + $0xa0] sm:$0xff]
  %v4556 = vld [vmem:[%s9 + $0xa8] sm:$0xff]
  %v4557 = vld [vmem:[%s9 + $0xb0] sm:$0xff]
  %v4558 = vld [vmem:[%s9 + $0xb8] sm:$0xff]
  %v4559 = vld [vmem:[%s9 + $0xc0] sm:$0xff]
  %v4560 = vld [vmem:[%s9 + $0xc8] sm:$0xff]
  %v4561 = vld [vmem:[%s9 + $0xd0] sm:$0xff]
  %v4562 = vld [vmem:[%s9 + $0xd8] sm:$0xff]
  %v4563 = vld [vmem:[%s9 + $0xe0] sm:$0xff]
  %v4564 = vld [vmem:[%s9 + $0xe8] sm:$0xff]
  %v4565 = vld [vmem:[%s9 + $0xf0] sm:$0xff]
  %v4566 = vld [vmem:[%s9 + $0xf8] sm:$0xff]
  %v4567 = vld [vmem:[%s9 + $0x100] sm:$0xff]
  %v4568 = vld [vmem:[%s9 + $0x108] sm:$0xff]
  %v4569 = vld [vmem:[%s9 + $0x110] sm:$0xff]
  %v4570 = vld [vmem:[%s9 + $0x118] sm:$0xff]
  %v4571 = vld [vmem:[%s9 + $0x120] sm:$0xff]
  %v4572 = vld [vmem:[%s9 + $0x128] sm:$0xff]
  %v4573 = vld [vmem:[%s9 + $0x130] sm:$0xff]
  %v4574 = vld [vmem:[%s9 + $0x138] sm:$0xff]
  %v4575 = vld [vmem:[%s9 + $0x140] sm:$0xff]
  %v4576 = vld [vmem:[%s9 + $0x148] sm:$0xff]
  %v4577 = vld [vmem:[%s9 + $0x150] sm:$0xff]
  %v4578 = vld [vmem:[%s9 + $0x158] sm:$0xff]
  %v4579 = vld [vmem:[%s9 + $0x160] sm:$0xff]
  %v4580 = vld [vmem:[%s9 + $0x168] sm:$0xff]
  %v4581 = vld [vmem:[%s9 + $0x170] sm:$0xff]
  %v4582 = vld [vmem:[%s9 + $0x178] sm:$0xff]
  %v4583 = vld [vmem:[%s9 + $0x180] sm:$0xff]
  %v4584 = vld [vmem:[%s9 + $0x188] sm:$0xff]
  %v4585 = vld [vmem:[%s9 + $0x190] sm:$0xff]
  %v4586 = vld [vmem:[%s9 + $0x198] sm:$0xff]
  %v4587 = vld [vmem:[%s9 + $0x1a0] sm:$0xff]
  %v4588 = vld [vmem:[%s9 + $0x1a8] sm:$0xff]
  %v4589 = vld [vmem:[%s9 + $0x1b0] sm:$0xff]
  %v4590 = vld [vmem:[%s9 + $0x1b8] sm:$0xff]
  %v4591 = vld [vmem:[%s9 + $0x1c0] sm:$0xff]
  %v4592 = vld [vmem:[%s9 + $0x1c8] sm:$0xff]
  %v4593 = vld [vmem:[%s9 + $0x1d0] sm:$0xff]
  %v4594 = vld [vmem:[%s9 + $0x1d8] sm:$0xff]
  %v4595 = vld [vmem:[%s9 + $0x1e0] sm:$0xff]
  %v4596 = vld [vmem:[%s9 + $0x1e8] sm:$0xff]
  %v4597 = vld [vmem:[%s9 + $0x1f0] sm:$0xff]
  %v4598 = vld [vmem:[%s9 + $0x1f8] sm:$0xff]
  %v4599 = vld [vmem:[%s9 + $0x200] sm:$0xff]
  %v4600 = vld [vmem:[%s9 + $0x208] sm:$0xff]
  %v4601 = vld [vmem:[%s9 + $0x210] sm:$0xff]
  %v4602 = vld [vmem:[%s9 + $0x218] sm:$0xff]
  %v4603 = vld [vmem:[%s9 + $0x220] sm:$0xff]
  %v4604 = vld [vmem:[%s9 + $0x228] sm:$0xff]
  %v4605 = vld [vmem:[%s9 + $0x230] sm:$0xff]
  %v4606 = vld [vmem:[%s9 + $0x238] sm:$0xff]
  %v4607 = vld [vmem:[%s9 + $0x240] sm:$0xff]
  %v4608 = vld [vmem:[%s9 + $0x248] sm:$0xff]
  %v4609 = vld [vmem:[%s9 + $0x250] sm:$0xff]
  %v4610 = vld [vmem:[%s9 + $0x258] sm:$0xff]
  %v4611 = vld [vmem:[%s9 + $0x260] sm:$0xff]
  %v4612 = vld [vmem:[%s9 + $0x268] sm:$0xff]
  %v4613 = vld [vmem:[%s9 + $0x270] sm:$0xff]
  %v4614 = vld [vmem:[%s9 + $0x278] sm:$0xff]
  %v4615 = vld [vmem:[%s9 + $0x280] sm:$0xff]
  %v4616 = vld [vmem:[%s9 + $0x288] sm:$0xff]
  %v4617 = vld [vmem:[%s9 + $0x290] sm:$0xff]
  %v4618 = vld [vmem:[%s9 + $0x298] sm:$0xff]
  %v4619 = vld [vmem:[%s9 + $0x2a0] sm:$0xff]
  %v4620 = vld [vmem:[%s9 + $0x2a8] sm:$0xff]
  %v4621 = vld [vmem:[%s9 + $0x2b0] sm:$0xff]
  %v4622 = vld [vmem:[%s9 + $0x2b8] sm:$0xff]
  %v4623 = vld [vmem:[%s9 + $0x2c0] sm:$0xff]
  %v4624 = vld [vmem:[%s9 + $0x2c8] sm:$0xff]
  %v4625 = vld [vmem:[%s9 + $0x2d0] sm:$0xff]
  %v4626 = vld [vmem:[%s9 + $0x2d8] sm:$0xff]
  %v4627 = vld [vmem:[%s9 + $0x2e0] sm:$0xff]
  %v4628 = vld [vmem:[%s9 + $0x2e8] sm:$0xff]
  %v4629 = vld [vmem:[%s9 + $0x2f0] sm:$0xff]
  %v4630 = vld [vmem:[%s9 + $0x2f8] sm:$0xff]
  %v4631 = vld [vmem:[%s9 + $0x300] sm:$0xff]
  %v4632 = vld [vmem:[%s9 + $0x308] sm:$0xff]
  %v4633 = vld [vmem:[%s9 + $0x310] sm:$0xff]
  %v4634 = vld [vmem:[%s9 + $0x318] sm:$0xff]
  %v4635 = vld [vmem:[%s9 + $0x320] sm:$0xff]
  %v4636 = vld [vmem:[%s9 + $0x328] sm:$0xff]
  %v4637 = vld [vmem:[%s9 + $0x330] sm:$0xff]
  %v4638 = vld [vmem:[%s9 + $0x338] sm:$0xff]
  %v4639 = vld [vmem:[%s9 + $0x340] sm:$0xff]
  %v4640 = vld [vmem:[%s9 + $0x348] sm:$0xff]
  %v4641 = vld [vmem:[%s9 + $0x350] sm:$0xff]
  %v4642 = vld [vmem:[%s9 + $0x358] sm:$0xff]
  %v4643 = vld [vmem:[%s9 + $0x360] sm:$0xff]
  %v4644 = vld [vmem:[%s9 + $0x368] sm:$0xff]
  %v4645 = vld [vmem:[%s9 + $0x370] sm:$0xff]
  %v4646 = vld [vmem:[%s9 + $0x378] sm:$0xff]
  %v4647 = vld [vmem:[%s9 + $0x380] sm:$0xff]
  %v4648 = vld [vmem:[%s9 + $0x388] sm:$0xff]
  %v4649 = vld [vmem:[%s9 + $0x390] sm:$0xff]
  %v4650 = vld [vmem:[%s9 + $0x398] sm:$0xff]
  %v4651 = vld [vmem:[%s9 + $0x3a0] sm:$0xff]
  %v4652 = vld [vmem:[%s9 + $0x3a8] sm:$0xff]
  %v4653 = vld [vmem:[%s9 + $0x3b0] sm:$0xff]
  %v4654 = vld [vmem:[%s9 + $0x3b8] sm:$0xff]
  %v4655 = vld [vmem:[%s9 + $0x3c0] sm:$0xff]
  %v4656 = vld [vmem:[%s9 + $0x3c8] sm:$0xff]
  %v4657 = vld [vmem:[%s9 + $0x3d0] sm:$0xff]
  %v4658 = vld [vmem:[%s9 + $0x3d8] sm:$0xff]
  %v4659 = vld [vmem:[%s9 + $0x3e0] sm:$0xff]
  %v4660 = vld [vmem:[%s9 + $0x3e8] sm:$0xff]
  %v4661 = vld [vmem:[%s9 + $0x3f0] sm:$0xff]
  %v4662 = vld [vmem:[%s9 + $0x3f8] sm:$0xff]
  %v4663 = vld [vmem:[%s10] sm:$0xf]
  %v4665 = vlaneseq
  %v4666 = vshrl.u32 %v4665, 7
  %v4667 = vsub.s32 0, %v4666
  %v4668 = vrot.slane %v4663, %v4667
  %v4669 = vlaneseq
  %v4670 = vshrl.u32 %v4669, 7
  %v4671 = vsub.s32 1, %v4670
  %v4672 = vrot.slane %v4663, %v4671
  %v4673 = vlaneseq
  %v4674 = vshrl.u32 %v4673, 7
  %v4675 = vsub.s32 2, %v4674
  %v4676 = vrot.slane %v4663, %v4675
  %v4677 = vlaneseq
  %v4678 = vshrl.u32 %v4677, 7
  %v4679 = vsub.s32 3, %v4678
  %v4680 = vrot.slane %v4663, %v4679
  %v4813 = vunpack.c.l.b16 %v4535
  %v4814 = vunpack.c.h.b16 %v4535
  %v4815 = vunpack.c.l.b16 %v4536
  %v4816 = vunpack.c.h.b16 %v4536
  %v4817 = vunpack.c.l.b16 %v4537
  %v4818 = vunpack.c.h.b16 %v4537
  %v4819 = vunpack.c.l.b16 %v4538
  %v4820 = vunpack.c.h.b16 %v4538
  %v4821 = vunpack.c.l.b16 %v4539
  %v4822 = vunpack.c.h.b16 %v4539
  %v4823 = vunpack.c.l.b16 %v4540
  %v4824 = vunpack.c.h.b16 %v4540
  %v4825 = vunpack.c.l.b16 %v4541
  %v4826 = vunpack.c.h.b16 %v4541
  %v4827 = vunpack.c.l.b16 %v4542
  %v4828 = vunpack.c.h.b16 %v4542
  %v4829 = vunpack.c.l.b16 %v4543
  %v4830 = vunpack.c.h.b16 %v4543
  %v4831 = vunpack.c.l.b16 %v4544
  %v4832 = vunpack.c.h.b16 %v4544
  %v4833 = vunpack.c.l.b16 %v4545
  %v4834 = vunpack.c.h.b16 %v4545
  %v4835 = vunpack.c.l.b16 %v4546
  %v4836 = vunpack.c.h.b16 %v4546
  %v4837 = vunpack.c.l.b16 %v4547
  %v4838 = vunpack.c.h.b16 %v4547
  %v4839 = vunpack.c.l.b16 %v4548
  %v4840 = vunpack.c.h.b16 %v4548
  %v4841 = vunpack.c.l.b16 %v4549
  %v4842 = vunpack.c.h.b16 %v4549
  %v4843 = vunpack.c.l.b16 %v4550
  %v4844 = vunpack.c.h.b16 %v4550
  %v4845 = vunpack.c.l.b16 %v4551
  %v4846 = vunpack.c.h.b16 %v4551
  %v4847 = vunpack.c.l.b16 %v4552
  %v4848 = vunpack.c.h.b16 %v4552
  %v4849 = vunpack.c.l.b16 %v4553
  %v4850 = vunpack.c.h.b16 %v4553
  %v4851 = vunpack.c.l.b16 %v4554
  %v4852 = vunpack.c.h.b16 %v4554
  %v4853 = vunpack.c.l.b16 %v4555
  %v4854 = vunpack.c.h.b16 %v4555
  %v4855 = vunpack.c.l.b16 %v4556
  %v4856 = vunpack.c.h.b16 %v4556
  %v4857 = vunpack.c.l.b16 %v4557
  %v4858 = vunpack.c.h.b16 %v4557
  %v4859 = vunpack.c.l.b16 %v4558
  %v4860 = vunpack.c.h.b16 %v4558
  %v4861 = vunpack.c.l.b16 %v4559
  %v4862 = vunpack.c.h.b16 %v4559
  %v4863 = vunpack.c.l.b16 %v4560
  %v4864 = vunpack.c.h.b16 %v4560
  %v4865 = vunpack.c.l.b16 %v4561
  %v4866 = vunpack.c.h.b16 %v4561
  %v4867 = vunpack.c.l.b16 %v4562
  %v4868 = vunpack.c.h.b16 %v4562
  %v4869 = vunpack.c.l.b16 %v4563
  %v4870 = vunpack.c.h.b16 %v4563
  %v4871 = vunpack.c.l.b16 %v4564
  %v4872 = vunpack.c.h.b16 %v4564
  %v4873 = vunpack.c.l.b16 %v4565
  %v4874 = vunpack.c.h.b16 %v4565
  %v4875 = vunpack.c.l.b16 %v4566
  %v4876 = vunpack.c.h.b16 %v4566
  %v4877 = vunpack.c.l.b16 %v4567
  %v4878 = vunpack.c.h.b16 %v4567
  %v4879 = vunpack.c.l.b16 %v4568
  %v4880 = vunpack.c.h.b16 %v4568
  %v4881 = vunpack.c.l.b16 %v4569
  %v4882 = vunpack.c.h.b16 %v4569
  %v4883 = vunpack.c.l.b16 %v4570
  %v4884 = vunpack.c.h.b16 %v4570
  %v4885 = vunpack.c.l.b16 %v4571
  %v4886 = vunpack.c.h.b16 %v4571
  %v4887 = vunpack.c.l.b16 %v4572
  %v4888 = vunpack.c.h.b16 %v4572
  %v4889 = vunpack.c.l.b16 %v4573
  %v4890 = vunpack.c.h.b16 %v4573
  %v4891 = vunpack.c.l.b16 %v4574
  %v4892 = vunpack.c.h.b16 %v4574
  %v4893 = vunpack.c.l.b16 %v4575
  %v4894 = vunpack.c.h.b16 %v4575
  %v4895 = vunpack.c.l.b16 %v4576
  %v4896 = vunpack.c.h.b16 %v4576
  %v4897 = vunpack.c.l.b16 %v4577
  %v4898 = vunpack.c.h.b16 %v4577
  %v4899 = vunpack.c.l.b16 %v4578
  %v4900 = vunpack.c.h.b16 %v4578
  %v4901 = vunpack.c.l.b16 %v4579
  %v4902 = vunpack.c.h.b16 %v4579
  %v4903 = vunpack.c.l.b16 %v4580
  %v4904 = vunpack.c.h.b16 %v4580
  %v4905 = vunpack.c.l.b16 %v4581
  %v4906 = vunpack.c.h.b16 %v4581
  %v4907 = vunpack.c.l.b16 %v4582
  %v4908 = vunpack.c.h.b16 %v4582
  %v4909 = vunpack.c.l.b16 %v4583
  %v4910 = vunpack.c.h.b16 %v4583
  %v4911 = vunpack.c.l.b16 %v4584
  %v4912 = vunpack.c.h.b16 %v4584
  %v4913 = vunpack.c.l.b16 %v4585
  %v4914 = vunpack.c.h.b16 %v4585
  %v4915 = vunpack.c.l.b16 %v4586
  %v4916 = vunpack.c.h.b16 %v4586
  %v4917 = vunpack.c.l.b16 %v4587
  %v4918 = vunpack.c.h.b16 %v4587
  %v4919 = vunpack.c.l.b16 %v4588
  %v4920 = vunpack.c.h.b16 %v4588
  %v4921 = vunpack.c.l.b16 %v4589
  %v4922 = vunpack.c.h.b16 %v4589
  %v4923 = vunpack.c.l.b16 %v4590
  %v4924 = vunpack.c.h.b16 %v4590
  %v4925 = vunpack.c.l.b16 %v4591
  %v4926 = vunpack.c.h.b16 %v4591
  %v4927 = vunpack.c.l.b16 %v4592
  %v4928 = vunpack.c.h.b16 %v4592
  %v4929 = vunpack.c.l.b16 %v4593
  %v4930 = vunpack.c.h.b16 %v4593
  %v4931 = vunpack.c.l.b16 %v4594
  %v4932 = vunpack.c.h.b16 %v4594
  %v4933 = vunpack.c.l.b16 %v4595
  %v4934 = vunpack.c.h.b16 %v4595
  %v4935 = vunpack.c.l.b16 %v4596
  %v4936 = vunpack.c.h.b16 %v4596
  %v4937 = vunpack.c.l.b16 %v4597
  %v4938 = vunpack.c.h.b16 %v4597
  %v4939 = vunpack.c.l.b16 %v4598
  %v4940 = vunpack.c.h.b16 %v4598
  %v4941 = vunpack.c.l.b16 %v4599
  %v4942 = vunpack.c.h.b16 %v4599
  %v4943 = vunpack.c.l.b16 %v4600
  %v4944 = vunpack.c.h.b16 %v4600
  %v4945 = vunpack.c.l.b16 %v4601
  %v4946 = vunpack.c.h.b16 %v4601
  %v4947 = vunpack.c.l.b16 %v4602
  %v4948 = vunpack.c.h.b16 %v4602
  %v4949 = vunpack.c.l.b16 %v4603
  %v4950 = vunpack.c.h.b16 %v4603
  %v4951 = vunpack.c.l.b16 %v4604
  %v4952 = vunpack.c.h.b16 %v4604
  %v4953 = vunpack.c.l.b16 %v4605
  %v4954 = vunpack.c.h.b16 %v4605
  %v4955 = vunpack.c.l.b16 %v4606
  %v4956 = vunpack.c.h.b16 %v4606
  %v4957 = vunpack.c.l.b16 %v4607
  %v4958 = vunpack.c.h.b16 %v4607
  %v4959 = vunpack.c.l.b16 %v4608
  %v4960 = vunpack.c.h.b16 %v4608
  %v4961 = vunpack.c.l.b16 %v4609
  %v4962 = vunpack.c.h.b16 %v4609
  %v4963 = vunpack.c.l.b16 %v4610
  %v4964 = vunpack.c.h.b16 %v4610
  %v4965 = vunpack.c.l.b16 %v4611
  %v4966 = vunpack.c.h.b16 %v4611
  %v4967 = vunpack.c.l.b16 %v4612
  %v4968 = vunpack.c.h.b16 %v4612
  %v4969 = vunpack.c.l.b16 %v4613
  %v4970 = vunpack.c.h.b16 %v4613
  %v4971 = vunpack.c.l.b16 %v4614
  %v4972 = vunpack.c.h.b16 %v4614
  %v4973 = vunpack.c.l.b16 %v4615
  %v4974 = vunpack.c.h.b16 %v4615
  %v4975 = vunpack.c.l.b16 %v4616
  %v4976 = vunpack.c.h.b16 %v4616
  %v4977 = vunpack.c.l.b16 %v4617
  %v4978 = vunpack.c.h.b16 %v4617
  %v4979 = vunpack.c.l.b16 %v4618
  %v4980 = vunpack.c.h.b16 %v4618
  %v4981 = vunpack.c.l.b16 %v4619
  %v4982 = vunpack.c.h.b16 %v4619
  %v4983 = vunpack.c.l.b16 %v4620
  %v4984 = vunpack.c.h.b16 %v4620
  %v4985 = vunpack.c.l.b16 %v4621
  %v4986 = vunpack.c.h.b16 %v4621
  %v4987 = vunpack.c.l.b16 %v4622
  %v4988 = vunpack.c.h.b16 %v4622
  %v4989 = vunpack.c.l.b16 %v4623
  %v4990 = vunpack.c.h.b16 %v4623
  %v4991 = vunpack.c.l.b16 %v4624
  %v4992 = vunpack.c.h.b16 %v4624
  %v4993 = vunpack.c.l.b16 %v4625
  %v4994 = vunpack.c.h.b16 %v4625
  %v4995 = vunpack.c.l.b16 %v4626
  %v4996 = vunpack.c.h.b16 %v4626
  %v4997 = vunpack.c.l.b16 %v4627
  %v4998 = vunpack.c.h.b16 %v4627
  %v4999 = vunpack.c.l.b16 %v4628
  %v5000 = vunpack.c.h.b16 %v4628
  %v5001 = vunpack.c.l.b16 %v4629
  %v5002 = vunpack.c.h.b16 %v4629
  %v5003 = vunpack.c.l.b16 %v4630
  %v5004 = vunpack.c.h.b16 %v4630
  %v5005 = vunpack.c.l.b16 %v4631
  %v5006 = vunpack.c.h.b16 %v4631
  %v5007 = vunpack.c.l.b16 %v4632
  %v5008 = vunpack.c.h.b16 %v4632
  %v5009 = vunpack.c.l.b16 %v4633
  %v5010 = vunpack.c.h.b16 %v4633
  %v5011 = vunpack.c.l.b16 %v4634
  %v5012 = vunpack.c.h.b16 %v4634
  %v5013 = vunpack.c.l.b16 %v4635
  %v5014 = vunpack.c.h.b16 %v4635
  %v5015 = vunpack.c.l.b16 %v4636
  %v5016 = vunpack.c.h.b16 %v4636
  %v5017 = vunpack.c.l.b16 %v4637
  %v5018 = vunpack.c.h.b16 %v4637
  %v5019 = vunpack.c.l.b16 %v4638
  %v5020 = vunpack.c.h.b16 %v4638
  %v5021 = vunpack.c.l.b16 %v4639
  %v5022 = vunpack.c.h.b16 %v4639
  %v5023 = vunpack.c.l.b16 %v4640
  %v5024 = vunpack.c.h.b16 %v4640
  %v5025 = vunpack.c.l.b16 %v4641
  %v5026 = vunpack.c.h.b16 %v4641
  %v5027 = vunpack.c.l.b16 %v4642
  %v5028 = vunpack.c.h.b16 %v4642
  %v5029 = vunpack.c.l.b16 %v4643
  %v5030 = vunpack.c.h.b16 %v4643
  %v5031 = vunpack.c.l.b16 %v4644
  %v5032 = vunpack.c.h.b16 %v4644
  %v5033 = vunpack.c.l.b16 %v4645
  %v5034 = vunpack.c.h.b16 %v4645
  %v5035 = vunpack.c.l.b16 %v4646
  %v5036 = vunpack.c.h.b16 %v4646
  %v5037 = vunpack.c.l.b16 %v4647
  %v5038 = vunpack.c.h.b16 %v4647
  %v5039 = vunpack.c.l.b16 %v4648
  %v5040 = vunpack.c.h.b16 %v4648
  %v5041 = vunpack.c.l.b16 %v4649
  %v5042 = vunpack.c.h.b16 %v4649
  %v5043 = vunpack.c.l.b16 %v4650
  %v5044 = vunpack.c.h.b16 %v4650
  %v5045 = vunpack.c.l.b16 %v4651
  %v5046 = vunpack.c.h.b16 %v4651
  %v5047 = vunpack.c.l.b16 %v4652
  %v5048 = vunpack.c.h.b16 %v4652
  %v5049 = vunpack.c.l.b16 %v4653
  %v5050 = vunpack.c.h.b16 %v4653
  %v5051 = vunpack.c.l.b16 %v4654
  %v5052 = vunpack.c.h.b16 %v4654
  %v5053 = vunpack.c.l.b16 %v4655
  %v5054 = vunpack.c.h.b16 %v4655
  %v5055 = vunpack.c.l.b16 %v4656
  %v5056 = vunpack.c.h.b16 %v4656
  %v5057 = vunpack.c.l.b16 %v4657
  %v5058 = vunpack.c.h.b16 %v4657
  %v5059 = vunpack.c.l.b16 %v4658
  %v5060 = vunpack.c.h.b16 %v4658
  %v5061 = vunpack.c.l.b16 %v4659
  %v5062 = vunpack.c.h.b16 %v4659
  %v5063 = vunpack.c.l.b16 %v4660
  %v5064 = vunpack.c.h.b16 %v4660
  %v5065 = vunpack.c.l.b16 %v4661
  %v5066 = vunpack.c.h.b16 %v4661
  %v5067 = vunpack.c.l.b16 %v4662
  %v5068 = vunpack.c.h.b16 %v4662
  %v5069 = vpack.c.b16 %v4817, %v4813
  %v5070 = vpack.c.b16 %v4818, %v4814
  %v5071 = vpack.c.b16 %v4819, %v4815
  %v5072 = vpack.c.b16 %v4820, %v4816
  %v5073 = vpack.c.b16 %v4825, %v4821
  %v5074 = vpack.c.b16 %v4826, %v4822
  %v5075 = vpack.c.b16 %v4827, %v4823
  %v5076 = vpack.c.b16 %v4828, %v4824
  %v5077 = vpack.c.b16 %v4833, %v4829
  %v5078 = vpack.c.b16 %v4834, %v4830
  %v5079 = vpack.c.b16 %v4835, %v4831
  %v5080 = vpack.c.b16 %v4836, %v4832
  %v5081 = vpack.c.b16 %v4841, %v4837
  %v5082 = vpack.c.b16 %v4842, %v4838
  %v5083 = vpack.c.b16 %v4843, %v4839
  %v5084 = vpack.c.b16 %v4844, %v4840
  %v5085 = vpack.c.b16 %v4849, %v4845
  %v5086 = vpack.c.b16 %v4850, %v4846
  %v5087 = vpack.c.b16 %v4851, %v4847
  %v5088 = vpack.c.b16 %v4852, %v4848
  %v5089 = vpack.c.b16 %v4857, %v4853
  %v5090 = vpack.c.b16 %v4858, %v4854
  %v5091 = vpack.c.b16 %v4859, %v4855
  %v5092 = vpack.c.b16 %v4860, %v4856
  %v5093 = vpack.c.b16 %v4865, %v4861
  %v5094 = vpack.c.b16 %v4866, %v4862
  %v5095 = vpack.c.b16 %v4867, %v4863
  %v5096 = vpack.c.b16 %v4868, %v4864
  %v5097 = vpack.c.b16 %v4873, %v4869
  %v5098 = vpack.c.b16 %v4874, %v4870
  %v5099 = vpack.c.b16 %v4875, %v4871
  %v5100 = vpack.c.b16 %v4876, %v4872
  %v5101 = vpack.c.b16 %v4881, %v4877
  %v5102 = vpack.c.b16 %v4882, %v4878
  %v5103 = vpack.c.b16 %v4883, %v4879
  %v5104 = vpack.c.b16 %v4884, %v4880
  %v5105 = vpack.c.b16 %v4889, %v4885
  %v5106 = vpack.c.b16 %v4890, %v4886
  %v5107 = vpack.c.b16 %v4891, %v4887
  %v5108 = vpack.c.b16 %v4892, %v4888
  %v5109 = vpack.c.b16 %v4897, %v4893
  %v5110 = vpack.c.b16 %v4898, %v4894
  %v5111 = vpack.c.b16 %v4899, %v4895
  %v5112 = vpack.c.b16 %v4900, %v4896
  %v5113 = vpack.c.b16 %v4905, %v4901
  %v5114 = vpack.c.b16 %v4906, %v4902
  %v5115 = vpack.c.b16 %v4907, %v4903
  %v5116 = vpack.c.b16 %v4908, %v4904
  %v5117 = vpack.c.b16 %v4913, %v4909
  %v5118 = vpack.c.b16 %v4914, %v4910
  %v5119 = vpack.c.b16 %v4915, %v4911
  %v5120 = vpack.c.b16 %v4916, %v4912
  %v5121 = vpack.c.b16 %v4921, %v4917
  %v5122 = vpack.c.b16 %v4922, %v4918
  %v5123 = vpack.c.b16 %v4923, %v4919
  %v5124 = vpack.c.b16 %v4924, %v4920
  %v5125 = vpack.c.b16 %v4929, %v4925
  %v5126 = vpack.c.b16 %v4930, %v4926
  %v5127 = vpack.c.b16 %v4931, %v4927
  %v5128 = vpack.c.b16 %v4932, %v4928
  %v5129 = vpack.c.b16 %v4937, %v4933
  %v5130 = vpack.c.b16 %v4938, %v4934
  %v5131 = vpack.c.b16 %v4939, %v4935
  %v5132 = vpack.c.b16 %v4940, %v4936
  %v5133 = vpack.c.b16 %v4945, %v4941
  %v5134 = vpack.c.b16 %v4946, %v4942
  %v5135 = vpack.c.b16 %v4947, %v4943
  %v5136 = vpack.c.b16 %v4948, %v4944
  %v5137 = vpack.c.b16 %v4953, %v4949
  %v5138 = vpack.c.b16 %v4954, %v4950
  %v5139 = vpack.c.b16 %v4955, %v4951
  %v5140 = vpack.c.b16 %v4956, %v4952
  %v5141 = vpack.c.b16 %v4961, %v4957
  %v5142 = vpack.c.b16 %v4962, %v4958
  %v5143 = vpack.c.b16 %v4963, %v4959
  %v5144 = vpack.c.b16 %v4964, %v4960
  %v5145 = vpack.c.b16 %v4969, %v4965
  %v5146 = vpack.c.b16 %v4970, %v4966
  %v5147 = vpack.c.b16 %v4971, %v4967
  %v5148 = vpack.c.b16 %v4972, %v4968
  %v5149 = vpack.c.b16 %v4977, %v4973
  %v5150 = vpack.c.b16 %v4978, %v4974
  %v5151 = vpack.c.b16 %v4979, %v4975
  %v5152 = vpack.c.b16 %v4980, %v4976
  %v5153 = vpack.c.b16 %v4985, %v4981
  %v5154 = vpack.c.b16 %v4986, %v4982
  %v5155 = vpack.c.b16 %v4987, %v4983
  %v5156 = vpack.c.b16 %v4988, %v4984
  %v5157 = vpack.c.b16 %v4993, %v4989
  %v5158 = vpack.c.b16 %v4994, %v4990
  %v5159 = vpack.c.b16 %v4995, %v4991
  %v5160 = vpack.c.b16 %v4996, %v4992
  %v5161 = vpack.c.b16 %v5001, %v4997
  %v5162 = vpack.c.b16 %v5002, %v4998
  %v5163 = vpack.c.b16 %v5003, %v4999
  %v5164 = vpack.c.b16 %v5004, %v5000
  %v5165 = vpack.c.b16 %v5009, %v5005
  %v5166 = vpack.c.b16 %v5010, %v5006
  %v5167 = vpack.c.b16 %v5011, %v5007
  %v5168 = vpack.c.b16 %v5012, %v5008
  %v5169 = vpack.c.b16 %v5017, %v5013
  %v5170 = vpack.c.b16 %v5018, %v5014
  %v5171 = vpack.c.b16 %v5019, %v5015
  %v5172 = vpack.c.b16 %v5020, %v5016
  %v5173 = vpack.c.b16 %v5025, %v5021
  %v5174 = vpack.c.b16 %v5026, %v5022
  %v5175 = vpack.c.b16 %v5027, %v5023
  %v5176 = vpack.c.b16 %v5028, %v5024
  %v5177 = vpack.c.b16 %v5033, %v5029
  %v5178 = vpack.c.b16 %v5034, %v5030
  %v5179 = vpack.c.b16 %v5035, %v5031
  %v5180 = vpack.c.b16 %v5036, %v5032
  %v5181 = vpack.c.b16 %v5041, %v5037
  %v5182 = vpack.c.b16 %v5042, %v5038
  %v5183 = vpack.c.b16 %v5043, %v5039
  %v5184 = vpack.c.b16 %v5044, %v5040
  %v5185 = vpack.c.b16 %v5049, %v5045
  %v5186 = vpack.c.b16 %v5050, %v5046
  %v5187 = vpack.c.b16 %v5051, %v5047
  %v5188 = vpack.c.b16 %v5052, %v5048
  %v5189 = vpack.c.b16 %v5057, %v5053
  %v5190 = vpack.c.b16 %v5058, %v5054
  %v5191 = vpack.c.b16 %v5059, %v5055
  %v5192 = vpack.c.b16 %v5060, %v5056
  %v5193 = vpack.c.b16 %v5065, %v5061
  %v5194 = vpack.c.b16 %v5066, %v5062
  %v5195 = vpack.c.b16 %v5067, %v5063
  %v5196 = vpack.c.b16 %v5068, %v5064
  %5325 = vmatprep.subr.bf16.mxu0 %v5070
  %5326 = vmatpush1.bf16.msra.mxu0 %v5069
  %5327 = vmatprep.subr.bf16.mxu0 %v5074
  %5328 = vmatpush1.bf16.msra.mxu0 %v5073
  %5329 = vmatprep.subr.bf16.mxu0 %v5078
  %5330 = vmatpush1.bf16.msra.mxu0 %v5077
  %5331 = vmatprep.subr.bf16.mxu0 %v5082
  %5332 = vmatpush1.bf16.msra.mxu0 %v5081
  %5333 = vmatprep.subr.bf16.mxu0 %v5086
  %5334 = vmatpush1.bf16.msra.mxu0 %v5085
  %5335 = vmatprep.subr.bf16.mxu0 %v5090
  %5336 = vmatpush1.bf16.msra.mxu0 %v5089
  %5337 = vmatprep.subr.bf16.mxu0 %v5094
  %5338 = vmatpush1.bf16.msra.mxu0 %v5093
  %5339 = vmatprep.subr.bf16.mxu0 %v5098
  %5340 = vmatpush1.bf16.msra.mxu0 %v5097
  %5341 = vmatprep.subr.bf16.mxu0 %v5102
  %5342 = vmatpush1.bf16.msra.mxu0 %v5101
  %5343 = vmatprep.subr.bf16.mxu0 %v5106
  %5344 = vmatpush1.bf16.msra.mxu0 %v5105
  %5345 = vmatprep.subr.bf16.mxu0 %v5110
  %5346 = vmatpush1.bf16.msra.mxu0 %v5109
  %5347 = vmatprep.subr.bf16.mxu0 %v5114
  %5348 = vmatpush1.bf16.msra.mxu0 %v5113
  %5349 = vmatprep.subr.bf16.mxu0 %v5118
  %5350 = vmatpush1.bf16.msra.mxu0 %v5117
  %5351 = vmatprep.subr.bf16.mxu0 %v5122
  %5352 = vmatpush1.bf16.msra.mxu0 %v5121
  %5353 = vmatprep.subr.bf16.mxu0 %v5126
  %5354 = vmatpush1.bf16.msra.mxu0 %v5125
  %5355 = vmatprep.subr.bf16.mxu0 %v5130
  %5356 = vmatpush1.bf16.msra.mxu0 %v5129
  %5357 = vmatprep.mubr.bf16.mxu0 %v4504
  %5358 = vmatmul.mubr.bf16.gmra.mrb[0].mxu0 %v4503
  %v5359 = vpop.f32.mrb[0].mxu0
  %v5360 = vadd.f32 %v4668, %v5359
  %v5361 = vpop.f32.mrb[0].mxu0
  %v5362 = vadd.f32 %v4672, %v5361
  %v5363 = vpop.f32.mrb[0].mxu0
  %v5364 = vadd.f32 %v4668, %v5363
  %v5365 = vpop.f32.mrb[0].mxu0
  %v5366 = vadd.f32 %v4672, %v5365
  %5367 = vmatprep.mubr.bf16.mxu0 %v4508
  %5368 = vmatmul.mubr.bf16.gmra.mrb[0].mxu0 %v4507
  %v5369 = vpop.f32.mrb[0].mxu0
  %v5370 = vadd.f32 %v4668, %v5369
  %v5371 = vpop.f32.mrb[0].mxu0
  %v5372 = vadd.f32 %v4672, %v5371
  %v5373 = vpop.f32.mrb[0].mxu0
  %v5374 = vadd.f32 %v4668, %v5373
  %v5375 = vpop.f32.mrb[0].mxu0
  %v5376 = vadd.f32 %v4672, %v5375
  %5377 = vmatprep.mubr.bf16.mxu0 %v4512
  %5378 = vmatmul.mubr.bf16.gmra.mrb[0].mxu0 %v4511
  %v5379 = vpop.f32.mrb[0].mxu0
  %v5380 = vadd.f32 %v4668, %v5379
  %v5381 = vpop.f32.mrb[0].mxu0
  %v5382 = vadd.f32 %v4672, %v5381
  %v5383 = vpop.f32.mrb[0].mxu0
  %v5384 = vadd.f32 %v4668, %v5383
  %v5385 = vpop.f32.mrb[0].mxu0
  %v5386 = vadd.f32 %v4672, %v5385
  %5387 = vmatprep.mubr.bf16.mxu0 %v4516
  %5388 = vmatmul.mubr.bf16.gmra.mrb[0].mxu0 %v4515
  %v5389 = vpop.f32.mrb[0].mxu0
  %v5390 = vadd.f32 %v4668, %v5389
  %v5391 = vpop.f32.mrb[0].mxu0
  %v5392 = vadd.f32 %v4672, %v5391
  %v5393 = vpop.f32.mrb[0].mxu0
  %v5394 = vadd.f32 %v4668, %v5393
  %v5395 = vpop.f32.mrb[0].mxu0
  %v5396 = vadd.f32 %v4672, %v5395
  %5397 = vmatprep.mubr.bf16.mxu0 %v4520
  %5398 = vmatmul.mubr.bf16.gmra.mrb[0].mxu0 %v4519
  %v5399 = vpop.f32.mrb[0].mxu0
  %v5400 = vadd.f32 %v4668, %v5399
  %v5401 = vpop.f32.mrb[0].mxu0
  %v5402 = vadd.f32 %v4672, %v5401
  %v5403 = vpop.f32.mrb[0].mxu0
  %v5404 = vadd.f32 %v4668, %v5403
  %v5405 = vpop.f32.mrb[0].mxu0
  %v5406 = vadd.f32 %v4672, %v5405
  %5407 = vmatprep.mubr.bf16.mxu0 %v4524
  %5408 = vmatmul.mubr.bf16.gmra.mrb[0].mxu0 %v4523
  %v5409 = vpop.f32.mrb[0].mxu0
  %v5410 = vadd.f32 %v4668, %v5409
  %v5411 = vpop.f32.mrb[0].mxu0
  %v5412 = vadd.f32 %v4672, %v5411
  %v5413 = vpop.f32.mrb[0].mxu0
  %v5414 = vadd.f32 %v4668, %v5413
  %v5415 = vpop.f32.mrb[0].mxu0
  %v5416 = vadd.f32 %v4672, %v5415
  %5417 = vmatprep.mubr.bf16.mxu0 %v4528
  %5418 = vmatmul.mubr.bf16.gmra.mrb[0].mxu0 %v4527
  %v5419 = vpop.f32.mrb[0].mxu0
  %v5420 = vadd.f32 %v4668, %v5419
  %v5421 = vpop.f32.mrb[0].mxu0
  %v5422 = vadd.f32 %v4672, %v5421
  %v5423 = vpop.f32.mrb[0].mxu0
  %v5424 = vadd.f32 %v4668, %v5423
  %v5425 = vpop.f32.mrb[0].mxu0
  %v5426 = vadd.f32 %v4672, %v5425
  %5427 = vmatprep.mubr.bf16.mxu0 %v4532
  %5428 = vmatmul.mubr.bf16.gmra.mrb[0].mxu0 %v4531
  %v5429 = vpop.f32.mrb[0].mxu0
  %v5430 = vadd.f32 %v4668, %v5429
  %v5431 = vpop.f32.mrb[0].mxu0
  %v5432 = vadd.f32 %v4672, %v5431
  %v5433 = vpop.f32.mrb[0].mxu0
  %v5434 = vadd.f32 %v4668, %v5433
  %v5435 = vpop.f32.mrb[0].mxu0
  %v5436 = vadd.f32 %v4672, %v5435
  %5437 = vdwg.mxu0
  %5438 = vmatprep.subr.bf16.mxu0 %v5134
  %5439 = vmatpush1.bf16.msra.mxu0 %v5133
  %5440 = vmatprep.subr.bf16.mxu0 %v5138
  %5441 = vmatpush1.bf16.msra.mxu0 %v5137
  %5442 = vmatprep.subr.bf16.mxu0 %v5142
  %5443 = vmatpush1.bf16.msra.mxu0 %v5141
  %5444 = vmatprep.subr.bf16.mxu0 %v5146
  %5445 = vmatpush1.bf16.msra.mxu0 %v5145
  %5446 = vmatprep.subr.bf16.mxu0 %v5150
  %5447 = vmatpush1.bf16.msra.mxu0 %v5149
  %5448 = vmatprep.subr.bf16.mxu0 %v5154
  %5449 = vmatpush1.bf16.msra.mxu0 %v5153
  %5450 = vmatprep.subr.bf16.mxu0 %v5158
  %5451 = vmatpush1.bf16.msra.mxu0 %v5157
  %5452 = vmatprep.subr.bf16.mxu0 %v5162
  %5453 = vmatpush1.bf16.msra.mxu0 %v5161
  %5454 = vmatprep.subr.bf16.mxu0 %v5166
  %5455 = vmatpush1.bf16.msra.mxu0 %v5165
  %5456 = vmatprep.subr.bf16.mxu0 %v5170
  %5457 = vmatpush1.bf16.msra.mxu0 %v5169
  %5458 = vmatprep.subr.bf16.mxu0 %v5174
  %5459 = vmatpush1.bf16.msra.mxu0 %v5173
  %5460 = vmatprep.subr.bf16.mxu0 %v5178
  %5461 = vmatpush1.bf16.msra.mxu0 %v5177
  %5462 = vmatprep.subr.bf16.mxu0 %v5182
  %5463 = vmatpush1.bf16.msra.mxu0 %v5181
  %5464 = vmatprep.subr.bf16.mxu0 %v5186
  %5465 = vmatpush1.bf16.msra.mxu0 %v5185
  %5466 = vmatprep.subr.bf16.mxu0 %v5190
  %5467 = vmatpush1.bf16.msra.mxu0 %v5189
  %5468 = vmatprep.subr.bf16.mxu0 %v5194
  %5469 = vmatpush1.bf16.msra.mxu0 %v5193
  %5470 = vmatprep.mubr.bf16.mxu0 %v4506
  %5471 = vmatmul.mubr.bf16.gmra.mrb[0].mxu0 %v4505
  %v5472 = vpop.f32.mrb[0].mxu0
  %v5473 = vadd.f32 %v5360, %v5472
  %v5474 = vpop.f32.mrb[0].mxu0
  %v5475 = vadd.f32 %v5362, %v5474
  %v5476 = vpop.f32.mrb[0].mxu0
  %v5477 = vadd.f32 %v5364, %v5476
  %v5478 = vpop.f32.mrb[0].mxu0
  %v5479 = vadd.f32 %v5366, %v5478
  %5480 = vmatprep.mubr.bf16.mxu0 %v4510
  %5481 = vmatmul.mubr.bf16.gmra.mrb[0].mxu0 %v4509
  %v5482 = vpop.f32.mrb[0].mxu0
  %v5483 = vadd.f32 %v5370, %v5482
  %v5484 = vpop.f32.mrb[0].mxu0
  %v5485 = vadd.f32 %v5372, %v5484
  %v5486 = vpop.f32.mrb[0].mxu0
  %v5487 = vadd.f32 %v5374, %v5486
  %v5488 = vpop.f32.mrb[0].mxu0
  %v5489 = vadd.f32 %v5376, %v5488
  %5490 = vmatprep.mubr.bf16.mxu0 %v4514
  %5491 = vmatmul.mubr.bf16.gmra.mrb[0].mxu0 %v4513
  %v5492 = vpop.f32.mrb[0].mxu0
  %v5493 = vadd.f32 %v5380, %v5492
  %v5494 = vpop.f32.mrb[0].mxu0
  %v5495 = vadd.f32 %v5382, %v5494
  %v5496 = vpop.f32.mrb[0].mxu0
  %v5497 = vadd.f32 %v5384, %v5496
  %v5498 = vpop.f32.mrb[0].mxu0
  %v5499 = vadd.f32 %v5386, %v5498
  %5500 = vmatprep.mubr.bf16.mxu0 %v4518
  %5501 = vmatmul.mubr.bf16.gmra.mrb[0].mxu0 %v4517
  %v5502 = vpop.f32.mrb[0].mxu0
  %v5503 = vadd.f32 %v5390, %v5502
  %v5504 = vpop.f32.mrb[0].mxu0
  %v5505 = vadd.f32 %v5392, %v5504
  %v5506 = vpop.f32.mrb[0].mxu0
  %v5507 = vadd.f32 %v5394, %v5506
  %v5508 = vpop.f32.mrb[0].mxu0
  %v5509 = vadd.f32 %v5396, %v5508
  %5510 = vmatprep.mubr.bf16.mxu0 %v4522
  %5511 = vmatmul.mubr.bf16.gmra.mrb[0].mxu0 %v4521
  %v5512 = vpop.f32.mrb[0].mxu0
  %v5513 = vadd.f32 %v5400, %v5512
  %v5514 = vpop.f32.mrb[0].mxu0
  %v5515 = vadd.f32 %v5402, %v5514
  %v5516 = vpop.f32.mrb[0].mxu0
  %v5517 = vadd.f32 %v5404, %v5516
  %v5518 = vpop.f32.mrb[0].mxu0
  %v5519 = vadd.f32 %v5406, %v5518
  %5520 = vmatprep.mubr.bf16.mxu0 %v4526
  %5521 = vmatmul.mubr.bf16.gmra.mrb[0].mxu0 %v4525
  %v5522 = vpop.f32.mrb[0].mxu0
  %v5523 = vadd.f32 %v5410, %v5522
  %v5524 = vpop.f32.mrb[0].mxu0
  %v5525 = vadd.f32 %v5412, %v5524
  %v5526 = vpop.f32.mrb[0].mxu0
  %v5527 = vadd.f32 %v5414, %v5526
  %v5528 = vpop.f32.mrb[0].mxu0
  %v5529 = vadd.f32 %v5416, %v5528
  %5530 = vmatprep.mubr.bf16.mxu0 %v4530
  %5531 = vmatmul.mubr.bf16.gmra.mrb[0].mxu0 %v4529
  %v5532 = vpop.f32.mrb[0].mxu0
  %v5533 = vadd.f32 %v5420, %v5532
  %v5534 = vpop.f32.mrb[0].mxu0
  %v5535 = vadd.f32 %v5422, %v5534
  %v5536 = vpop.f32.mrb[0].mxu0
  %v5537 = vadd.f32 %v5424, %v5536
  %v5538 = vpop.f32.mrb[0].mxu0
  %v5539 = vadd.f32 %v5426, %v5538
  %5540 = vmatprep.mubr.bf16.mxu0 %v4534
  %5541 = vmatmul.mubr.bf16.gmra.mrb[0].mxu0 %v4533
  %v5542 = vpop.f32.mrb[0].mxu0
  %v5543 = vadd.f32 %v5430, %v5542
  %v5544 = vpop.f32.mrb[0].mxu0
  %v5545 = vadd.f32 %v5432, %v5544
  %v5546 = vpop.f32.mrb[0].mxu0
  %v5547 = vadd.f32 %v5434, %v5546
  %v5548 = vpop.f32.mrb[0].mxu0
  %v5549 = vadd.f32 %v5436, %v5548
  %5550 = vdwg.mxu0
  %5551 = vmatprep.subr.bf16.mxu0 %v5072
  %5552 = vmatpush1.bf16.msra.mxu0 %v5071
  %5553 = vmatprep.subr.bf16.mxu0 %v5076
  %5554 = vmatpush1.bf16.msra.mxu0 %v5075
  %5555 = vmatprep.subr.bf16.mxu0 %v5080
  %5556 = vmatpush1.bf16.msra.mxu0 %v5079
  %5557 = vmatprep.subr.bf16.mxu0 %v5084
  %5558 = vmatpush1.bf16.msra.mxu0 %v5083
  %5559 = vmatprep.subr.bf16.mxu0 %v5088
  %5560 = vmatpush1.bf16.msra.mxu0 %v5087
  %5561 = vmatprep.subr.bf16.mxu0 %v5092
  %5562 = vmatpush1.bf16.msra.mxu0 %v5091
  %5563 = vmatprep.subr.bf16.mxu0 %v5096
  %5564 = vmatpush1.bf16.msra.mxu0 %v5095
  %5565 = vmatprep.subr.bf16.mxu0 %v5100
  %5566 = vmatpush1.bf16.msra.mxu0 %v5099
  %5567 = vmatprep.subr.bf16.mxu0 %v5104
  %5568 = vmatpush1.bf16.msra.mxu0 %v5103
  %5569 = vmatprep.subr.bf16.mxu0 %v5108
  %5570 = vmatpush1.bf16.msra.mxu0 %v5107
  %5571 = vmatprep.subr.bf16.mxu0 %v5112
  %5572 = vmatpush1.bf16.msra.mxu0 %v5111
  %5573 = vmatprep.subr.bf16.mxu0 %v5116
  %5574 = vmatpush1.bf16.msra.mxu0 %v5115
  %5575 = vmatprep.subr.bf16.mxu0 %v5120
  %5576 = vmatpush1.bf16.msra.mxu0 %v5119
  %5577 = vmatprep.subr.bf16.mxu0 %v5124
  %5578 = vmatpush1.bf16.msra.mxu0 %v5123
  %5579 = vmatprep.subr.bf16.mxu0 %v5128
  %5580 = vmatpush1.bf16.msra.mxu0 %v5127
  %5581 = vmatprep.subr.bf16.mxu0 %v5132
  %5582 = vmatpush1.bf16.msra.mxu0 %v5131
  %5583 = vmatprep.mubr.bf16.mxu0 %v4504
  %5584 = vmatmul.mubr.bf16.gmra.mrb[0].mxu0 %v4503
  %v5585 = vpop.f32.mrb[0].mxu0
  %v5586 = vadd.f32 %v4676, %v5585
  %v5587 = vpop.f32.mrb[0].mxu0
  %v5588 = vadd.f32 %v4680, %v5587
  %v5589 = vpop.f32.mrb[0].mxu0
  %v5590 = vadd.f32 %v4676, %v5589
  %v5591 = vpop.f32.mrb[0].mxu0
  %v5592 = vadd.f32 %v4680, %v5591
  %5593 = vmatprep.mubr.bf16.mxu0 %v4508
  %5594 = vmatmul.mubr.bf16.gmra.mrb[0].mxu0 %v4507
  %v5595 = vpop.f32.mrb[0].mxu0
  %v5596 = vadd.f32 %v4676, %v5595
  %v5597 = vpop.f32.mrb[0].mxu0
  %v5598 = vadd.f32 %v4680, %v5597
  %v5599 = vpop.f32.mrb[0].mxu0
  %v5600 = vadd.f32 %v4676, %v5599
  %v5601 = vpop.f32.mrb[0].mxu0
  %v5602 = vadd.f32 %v4680, %v5601
  %5603 = vmatprep.mubr.bf16.mxu0 %v4512
  %5604 = vmatmul.mubr.bf16.gmra.mrb[0].mxu0 %v4511
  %v5605 = vpop.f32.mrb[0].mxu0
  %v5606 = vadd.f32 %v4676, %v5605
  %v5607 = vpop.f32.mrb[0].mxu0
  %v5608 = vadd.f32 %v4680, %v5607
  %v5609 = vpop.f32.mrb[0].mxu0
  %v5610 = vadd.f32 %v4676, %v5609
  %v5611 = vpop.f32.mrb[0].mxu0
  %v5612 = vadd.f32 %v4680, %v5611
  %5613 = vmatprep.mubr.bf16.mxu0 %v4516
  %5614 = vmatmul.mubr.bf16.gmra.mrb[0].mxu0 %v4515
  %v5615 = vpop.f32.mrb[0].mxu0
  %v5616 = vadd.f32 %v4676, %v5615
  %v5617 = vpop.f32.mrb[0].mxu0
  %v5618 = vadd.f32 %v4680, %v5617
  %v5619 = vpop.f32.mrb[0].mxu0
  %v5620 = vadd.f32 %v4676, %v5619
  %v5621 = vpop.f32.mrb[0].mxu0
  %v5622 = vadd.f32 %v4680, %v5621
  %5623 = vmatprep.mubr.bf16.mxu0 %v4520
  %5624 = vmatmul.mubr.bf16.gmra.mrb[0].mxu0 %v4519
  %v5625 = vpop.f32.mrb[0].mxu0
  %v5626 = vadd.f32 %v4676, %v5625
  %v5627 = vpop.f32.mrb[0].mxu0
  %v5628 = vadd.f32 %v4680, %v5627
  %v5629 = vpop.f32.mrb[0].mxu0
  %v5630 = vadd.f32 %v4676, %v5629
  %v5631 = vpop.f32.mrb[0].mxu0
  %v5632 = vadd.f32 %v4680, %v5631
  %5633 = vmatprep.mubr.bf16.mxu0 %v4524
  %5634 = vmatmul.mubr.bf16.gmra.mrb[0].mxu0 %v4523
  %v5635 = vpop.f32.mrb[0].mxu0
  %v5636 = vadd.f32 %v4676, %v5635
  %v5637 = vpop.f32.mrb[0].mxu0
  %v5638 = vadd.f32 %v4680, %v5637
  %v5639 = vpop.f32.mrb[0].mxu0
  %v5640 = vadd.f32 %v4676, %v5639
  %v5641 = vpop.f32.mrb[0].mxu0
  %v5642 = vadd.f32 %v4680, %v5641
  %5643 = vmatprep.mubr.bf16.mxu0 %v4528
  %5644 = vmatmul.mubr.bf16.gmra.mrb[0].mxu0 %v4527
  %v5645 = vpop.f32.mrb[0].mxu0
  %v5646 = vadd.f32 %v4676, %v5645
  %v5647 = vpop.f32.mrb[0].mxu0
  %v5648 = vadd.f32 %v4680, %v5647
  %v5649 = vpop.f32.mrb[0].mxu0
  %v5650 = vadd.f32 %v4676, %v5649
  %v5651 = vpop.f32.mrb[0].mxu0
  %v5652 = vadd.f32 %v4680, %v5651
  %5653 = vmatprep.mubr.bf16.mxu0 %v4532
  %5654 = vmatmul.mubr.bf16.gmra.mrb[0].mxu0 %v4531
  %v5655 = vpop.f32.mrb[0].mxu0
  %v5656 = vadd.f32 %v4676, %v5655
  %v5657 = vpop.f32.mrb[0].mxu0
  %v5658 = vadd.f32 %v4680, %v5657
  %v5659 = vpop.f32.mrb[0].mxu0
  %v5660 = vadd.f32 %v4676, %v5659
  %v5661 = vpop.f32.mrb[0].mxu0
  %v5662 = vadd.f32 %v4680, %v5661
  %5663 = vdwg.mxu0
  %5664 = vmatprep.subr.bf16.mxu0 %v5136
  %5665 = vmatpush1.bf16.msra.mxu0 %v5135
  %5666 = vmatprep.subr.bf16.mxu0 %v5140
  %5667 = vmatpush1.bf16.msra.mxu0 %v5139
  %5668 = vmatprep.subr.bf16.mxu0 %v5144
  %5669 = vmatpush1.bf16.msra.mxu0 %v5143
  %5670 = vmatprep.subr.bf16.mxu0 %v5148
  %5671 = vmatpush1.bf16.msra.mxu0 %v5147
  %5672 = vmatprep.subr.bf16.mxu0 %v5152
  %5673 = vmatpush1.bf16.msra.mxu0 %v5151
  %5674 = vmatprep.subr.bf16.mxu0 %v5156
  %5675 = vmatpush1.bf16.msra.mxu0 %v5155
  %5676 = vmatprep.subr.bf16.mxu0 %v5160
  %5677 = vmatpush1.bf16.msra.mxu0 %v5159
  %5678 = vmatprep.subr.bf16.mxu0 %v5164
  %5679 = vmatpush1.bf16.msra.mxu0 %v5163
  %5680 = vmatprep.subr.bf16.mxu0 %v5168
  %5681 = vmatpush1.bf16.msra.mxu0 %v5167
  %5682 = vmatprep.subr.bf16.mxu0 %v5172
  %5683 = vmatpush1.bf16.msra.mxu0 %v5171
  %5684 = vmatprep.subr.bf16.mxu0 %v5176
  %5685 = vmatpush1.bf16.msra.mxu0 %v5175
  %5686 = vmatprep.subr.bf16.mxu0 %v5180
  %5687 = vmatpush1.bf16.msra.mxu0 %v5179
  %5688 = vmatprep.subr.bf16.mxu0 %v5184
  %5689 = vmatpush1.bf16.msra.mxu0 %v5183
  %5690 = vmatprep.subr.bf16.mxu0 %v5188
  %5691 = vmatpush1.bf16.msra.mxu0 %v5187
  %5692 = vmatprep.subr.bf16.mxu0 %v5192
  %5693 = vmatpush1.bf16.msra.mxu0 %v5191
  %5694 = vmatprep.subr.bf16.mxu0 %v5196
  %5695 = vmatpush1.bf16.msra.mxu0 %v5195
  %5696 = vmatprep.mubr.bf16.mxu0 %v4506
  %5697 = vmatmul.mubr.bf16.gmra.mrb[0].mxu0 %v4505
  %v5698 = vpop.f32.mrb[0].mxu0
  %v5699 = vadd.f32 %v5586, %v5698
  %v5700 = vpop.f32.mrb[0].mxu0
  %v5701 = vadd.f32 %v5588, %v5700
  %v5702 = vpop.f32.mrb[0].mxu0
  %v5703 = vadd.f32 %v5590, %v5702
  %v5704 = vpop.f32.mrb[0].mxu0
  %v5705 = vadd.f32 %v5592, %v5704
  %5706 = vmatprep.mubr.bf16.mxu0 %v4510
  %5707 = vmatmul.mubr.bf16.gmra.mrb[0].mxu0 %v4509
  %v5708 = vpop.f32.mrb[0].mxu0
  %v5709 = vadd.f32 %v5596, %v5708
  %v5710 = vpop.f32.mrb[0].mxu0
  %v5711 = vadd.f32 %v5598, %v5710
  %v5712 = vpop.f32.mrb[0].mxu0
  %v5713 = vadd.f32 %v5600, %v5712
  %v5714 = vpop.f32.mrb[0].mxu0
  %v5715 = vadd.f32 %v5602, %v5714
  %5716 = vmatprep.mubr.bf16.mxu0 %v4514
  %5717 = vmatmul.mubr.bf16.gmra.mrb[0].mxu0 %v4513
  %v5718 = vpop.f32.mrb[0].mxu0
  %v5719 = vadd.f32 %v5606, %v5718
  %v5720 = vpop.f32.mrb[0].mxu0
  %v5721 = vadd.f32 %v5608, %v5720
  %v5722 = vpop.f32.mrb[0].mxu0
  %v5723 = vadd.f32 %v5610, %v5722
  %v5724 = vpop.f32.mrb[0].mxu0
  %v5725 = vadd.f32 %v5612, %v5724
  %5726 = vmatprep.mubr.bf16.mxu0 %v4518
  %5727 = vmatmul.mubr.bf16.gmra.mrb[0].mxu0 %v4517
  %v5728 = vpop.f32.mrb[0].mxu0
  %v5729 = vadd.f32 %v5616, %v5728
  %v5730 = vpop.f32.mrb[0].mxu0
  %v5731 = vadd.f32 %v5618, %v5730
  %v5732 = vpop.f32.mrb[0].mxu0
  %v5733 = vadd.f32 %v5620, %v5732
  %v5734 = vpop.f32.mrb[0].mxu0
  %v5735 = vadd.f32 %v5622, %v5734
  %5736 = vmatprep.mubr.bf16.mxu0 %v4522
  %5737 = vmatmul.mubr.bf16.gmra.mrb[0].mxu0 %v4521
  %v5738 = vpop.f32.mrb[0].mxu0
  %v5739 = vadd.f32 %v5626, %v5738
  %v5740 = vpop.f32.mrb[0].mxu0
  %v5741 = vadd.f32 %v5628, %v5740
  %v5742 = vpop.f32.mrb[0].mxu0
  %v5743 = vadd.f32 %v5630, %v5742
  %v5744 = vpop.f32.mrb[0].mxu0
  %v5745 = vadd.f32 %v5632, %v5744
  %5746 = vmatprep.mubr.bf16.mxu0 %v4526
  %5747 = vmatmul.mubr.bf16.gmra.mrb[0].mxu0 %v4525
  %v5748 = vpop.f32.mrb[0].mxu0
  %v5749 = vadd.f32 %v5636, %v5748
  %v5750 = vpop.f32.mrb[0].mxu0
  %v5751 = vadd.f32 %v5638, %v5750
  %v5752 = vpop.f32.mrb[0].mxu0
  %v5753 = vadd.f32 %v5640, %v5752
  %v5754 = vpop.f32.mrb[0].mxu0
  %v5755 = vadd.f32 %v5642, %v5754
  %5756 = vmatprep.mubr.bf16.mxu0 %v4530
  %5757 = vmatmul.mubr.bf16.gmra.mrb[0].mxu0 %v4529
  %v5758 = vpop.f32.mrb[0].mxu0
  %v5759 = vadd.f32 %v5646, %v5758
  %v5760 = vpop.f32.mrb[0].mxu0
  %v5761 = vadd.f32 %v5648, %v5760
  %v5762 = vpop.f32.mrb[0].mxu0
  %v5763 = vadd.f32 %v5650, %v5762
  %v5764 = vpop.f32.mrb[0].mxu0
  %v5765 = vadd.f32 %v5652, %v5764
  %5766 = vmatprep.mubr.bf16.mxu0 %v4534
  %5767 = vmatmul.mubr.bf16.gmra.mrb[0].mxu0 %v4533
  %v5768 = vpop.f32.mrb[0].mxu0
  %v5769 = vadd.f32 %v5656, %v5768
  %v5770 = vpop.f32.mrb[0].mxu0
  %v5771 = vadd.f32 %v5658, %v5770
  %v5772 = vpop.f32.mrb[0].mxu0
  %v5773 = vadd.f32 %v5660, %v5772
  %v5774 = vpop.f32.mrb[0].mxu0
  %v5775 = vadd.f32 %v5662, %v5774
  %5776 = vdwg.mxu0
  %v5777 = vadd.f32 %v5473, %v5475
  %v5778 = vadd.f32 %v5777, %v5699
  %v5779 = vadd.f32 %v5778, %v5701
  %5780 = vadd.xlane.f32.xlu0 %v5779
  %v5781 = vpop.xlane.xlu0 %5780
  %v5782 = vadd.f32 %v5477, %v5479
  %v5783 = vadd.f32 %v5782, %v5703
  %v5784 = vadd.f32 %v5783, %v5705
  %5785 = vadd.xlane.f32.xlu0 %v5784
  %v5786 = vpop.xlane.xlu0 %5785
  %v5787 = vadd.f32 %v5483, %v5485
  %v5788 = vadd.f32 %v5787, %v5709
  %v5789 = vadd.f32 %v5788, %v5711
  %5790 = vadd.xlane.f32.xlu0 %v5789
  %v5791 = vpop.xlane.xlu0 %5790
  %v5792 = vadd.f32 %v5487, %v5489
  %v5793 = vadd.f32 %v5792, %v5713
  %v5794 = vadd.f32 %v5793, %v5715
  %5795 = vadd.xlane.f32.xlu0 %v5794
  %v5796 = vpop.xlane.xlu0 %5795
  %v5797 = vadd.f32 %v5493, %v5495
  %v5798 = vadd.f32 %v5797, %v5719
  %v5799 = vadd.f32 %v5798, %v5721
  %5800 = vadd.xlane.f32.xlu0 %v5799
  %v5801 = vpop.xlane.xlu0 %5800
  %v5802 = vadd.f32 %v5497, %v5499
  %v5803 = vadd.f32 %v5802, %v5723
  %v5804 = vadd.f32 %v5803, %v5725
  %5805 = vadd.xlane.f32.xlu0 %v5804
  %v5806 = vpop.xlane.xlu0 %5805
  %v5807 = vadd.f32 %v5503, %v5505
  %v5808 = vadd.f32 %v5807, %v5729
  %v5809 = vadd.f32 %v5808, %v5731
  %5810 = vadd.xlane.f32.xlu0 %v5809
  %v5811 = vpop.xlane.xlu0 %5810
  %v5812 = vadd.f32 %v5507, %v5509
  %v5813 = vadd.f32 %v5812, %v5733
  %v5814 = vadd.f32 %v5813, %v5735
  %5815 = vadd.xlane.f32.xlu0 %v5814
  %v5816 = vpop.xlane.xlu0 %5815
  %v5817 = vadd.f32 %v5513, %v5515
  %v5818 = vadd.f32 %v5817, %v5739
  %v5819 = vadd.f32 %v5818, %v5741
  %5820 = vadd.xlane.f32.xlu0 %v5819
  %v5821 = vpop.xlane.xlu0 %5820
  %v5822 = vadd.f32 %v5517, %v5519
  %v5823 = vadd.f32 %v5822, %v5743
  %v5824 = vadd.f32 %v5823, %v5745
  %5825 = vadd.xlane.f32.xlu0 %v5824
  %v5826 = vpop.xlane.xlu0 %5825
  %v5827 = vadd.f32 %v5523, %v5525
  %v5828 = vadd.f32 %v5827, %v5749
  %v5829 = vadd.f32 %v5828, %v5751
  %5830 = vadd.xlane.f32.xlu0 %v5829
  %v5831 = vpop.xlane.xlu0 %5830
  %v5832 = vadd.f32 %v5527, %v5529
  %v5833 = vadd.f32 %v5832, %v5753
  %v5834 = vadd.f32 %v5833, %v5755
  %5835 = vadd.xlane.f32.xlu0 %v5834
  %v5836 = vpop.xlane.xlu0 %5835
  %v5837 = vadd.f32 %v5533, %v5535
  %v5838 = vadd.f32 %v5837, %v5759
  %v5839 = vadd.f32 %v5838, %v5761
  %5840 = vadd.xlane.f32.xlu0 %v5839
  %v5841 = vpop.xlane.xlu0 %5840
  %v5842 = vadd.f32 %v5537, %v5539
  %v5843 = vadd.f32 %v5842, %v5763
  %v5844 = vadd.f32 %v5843, %v5765
  %5845 = vadd.xlane.f32.xlu0 %v5844
  %v5846 = vpop.xlane.xlu0 %5845
  %v5847 = vadd.f32 %v5543, %v5545
  %v5848 = vadd.f32 %v5847, %v5769
  %v5849 = vadd.f32 %v5848, %v5771
  %5850 = vadd.xlane.f32.xlu0 %v5849
  %v5851 = vpop.xlane.xlu0 %5850
  %v5852 = vadd.f32 %v5547, %v5549
  %v5853 = vadd.f32 %v5852, %v5773
  %v5854 = vadd.f32 %v5853, %v5775
  %5855 = vadd.xlane.f32.xlu0 %v5854
  %v5856 = vpop.xlane.xlu0 %5855
  %v5857 = vrcp.pop 512.0
  %v5858 = vmul.f32 %v5781, %v5857
  %v5859 = vmul.f32 %v5786, %v5857
  %v5860 = vmul.f32 %v5791, %v5857
  %v5861 = vmul.f32 %v5796, %v5857
  %v5862 = vmul.f32 %v5801, %v5857
  %v5863 = vmul.f32 %v5806, %v5857
  %v5864 = vmul.f32 %v5811, %v5857
  %v5865 = vmul.f32 %v5816, %v5857
  %v5866 = vmul.f32 %v5821, %v5857
  %v5867 = vmul.f32 %v5826, %v5857
  %v5868 = vmul.f32 %v5831, %v5857
  %v5869 = vmul.f32 %v5836, %v5857
  %v5870 = vmul.f32 %v5841, %v5857
  %v5871 = vmul.f32 %v5846, %v5857
  %v5872 = vmul.f32 %v5851, %v5857
  %v5873 = vmul.f32 %v5856, %v5857
  %v5874 = vsub.f32 %v5473, %v5858
  %v5875 = vsub.f32 %v5475, %v5858
  %v5876 = vsub.f32 %v5699, %v5858
  %v5877 = vsub.f32 %v5701, %v5858
  %v5878 = vsub.f32 %v5477, %v5859
  %v5879 = vsub.f32 %v5479, %v5859
  %v5880 = vsub.f32 %v5703, %v5859
  %v5881 = vsub.f32 %v5705, %v5859
  %v5882 = vsub.f32 %v5483, %v5860
  %v5883 = vsub.f32 %v5485, %v5860
  %v5884 = vsub.f32 %v5709, %v5860
  %v5885 = vsub.f32 %v5711, %v5860
  %v5886 = vsub.f32 %v5487, %v5861
  %v5887 = vsub.f32 %v5489, %v5861
  %v5888 = vsub.f32 %v5713, %v5861
  %v5889 = vsub.f32 %v5715, %v5861
  %v5890 = vsub.f32 %v5493, %v5862
  %v5891 = vsub.f32 %v5495, %v5862
  %v5892 = vsub.f32 %v5719, %v5862
  %v5893 = vsub.f32 %v5721, %v5862
  %v5894 = vsub.f32 %v5497, %v5863
  %v5895 = vsub.f32 %v5499, %v5863
  %v5896 = vsub.f32 %v5723, %v5863
  %v5897 = vsub.f32 %v5725, %v5863
  %v5898 = vsub.f32 %v5503, %v5864
  %v5899 = vsub.f32 %v5505, %v5864
  %v5900 = vsub.f32 %v5729, %v5864
  %v5901 = vsub.f32 %v5731, %v5864
  %v5902 = vsub.f32 %v5507, %v5865
  %v5903 = vsub.f32 %v5509, %v5865
  %v5904 = vsub.f32 %v5733, %v5865
  %v5905 = vsub.f32 %v5735, %v5865
  %v5906 = vsub.f32 %v5513, %v5866
  %v5907 = vsub.f32 %v5515, %v5866
  %v5908 = vsub.f32 %v5739, %v5866
  %v5909 = vsub.f32 %v5741, %v5866
  %v5910 = vsub.f32 %v5517, %v5867
  %v5911 = vsub.f32 %v5519, %v5867
  %v5912 = vsub.f32 %v5743, %v5867
  %v5913 = vsub.f32 %v5745, %v5867
  %v5914 = vsub.f32 %v5523, %v5868
  %v5915 = vsub.f32 %v5525, %v5868
  %v5916 = vsub.f32 %v5749, %v5868
  %v5917 = vsub.f32 %v5751, %v5868
  %v5918 = vsub.f32 %v5527, %v5869
  %v5919 = vsub.f32 %v5529, %v5869
  %v5920 = vsub.f32 %v5753, %v5869
  %v5921 = vsub.f32 %v5755, %v5869
  %v5922 = vsub.f32 %v5533, %v5870
  %v5923 = vsub.f32 %v5535, %v5870
  %v5924 = vsub.f32 %v5759, %v5870
  %v5925 = vsub.f32 %v5761, %v5870
  %v5926 = vsub.f32 %v5537, %v5871
  %v5927 = vsub.f32 %v5539, %v5871
  %v5928 = vsub.f32 %v5763, %v5871
  %v5929 = vsub.f32 %v5765, %v5871
  %v5930 = vsub.f32 %v5543, %v5872
  %v5931 = vsub.f32 %v5545, %v5872
  %v5932 = vsub.f32 %v5769, %v5872
  %v5933 = vsub.f32 %v5771, %v5872
  %v5934 = vsub.f32 %v5547, %v5873
  %v5935 = vsub.f32 %v5549, %v5873
  %v5936 = vsub.f32 %v5773, %v5873
  %v5937 = vsub.f32 %v5775, %v5873
  %v5938 = vmul.f32 %v5874, %v5874
  %v5939 = vmul.f32 %v5875, %v5875
  %v5940 = vmul.f32 %v5876, %v5876
  %v5941 = vmul.f32 %v5877, %v5877
  %v5942 = vmul.f32 %v5878, %v5878
  %v5943 = vmul.f32 %v5879, %v5879
  %v5944 = vmul.f32 %v5880, %v5880
  %v5945 = vmul.f32 %v5881, %v5881
  %v5946 = vmul.f32 %v5882, %v5882
  %v5947 = vmul.f32 %v5883, %v5883
  %v5948 = vmul.f32 %v5884, %v5884
  %v5949 = vmul.f32 %v5885, %v5885
  %v5950 = vmul.f32 %v5886, %v5886
  %v5951 = vmul.f32 %v5887, %v5887
  %v5952 = vmul.f32 %v5888, %v5888
  %v5953 = vmul.f32 %v5889, %v5889
  %v5954 = vmul.f32 %v5890, %v5890
  %v5955 = vmul.f32 %v5891, %v5891
  %v5956 = vmul.f32 %v5892, %v5892
  %v5957 = vmul.f32 %v5893, %v5893
  %v5958 = vmul.f32 %v5894, %v5894
  %v5959 = vmul.f32 %v5895, %v5895
  %v5960 = vmul.f32 %v5896, %v5896
  %v5961 = vmul.f32 %v5897, %v5897
  %v5962 = vmul.f32 %v5898, %v5898
  %v5963 = vmul.f32 %v5899, %v5899
  %v5964 = vmul.f32 %v5900, %v5900
  %v5965 = vmul.f32 %v5901, %v5901
  %v5966 = vmul.f32 %v5902, %v5902
  %v5967 = vmul.f32 %v5903, %v5903
  %v5968 = vmul.f32 %v5904, %v5904
  %v5969 = vmul.f32 %v5905, %v5905
  %v5970 = vmul.f32 %v5906, %v5906
  %v5971 = vmul.f32 %v5907, %v5907
  %v5972 = vmul.f32 %v5908, %v5908
  %v5973 = vmul.f32 %v5909, %v5909
  %v5974 = vmul.f32 %v5910, %v5910
  %v5975 = vmul.f32 %v5911, %v5911
  %v5976 = vmul.f32 %v5912, %v5912
  %v5977 = vmul.f32 %v5913, %v5913
  %v5978 = vmul.f32 %v5914, %v5914
  %v5979 = vmul.f32 %v5915, %v5915
  %v5980 = vmul.f32 %v5916, %v5916
  %v5981 = vmul.f32 %v5917, %v5917
  %v5982 = vmul.f32 %v5918, %v5918
  %v5983 = vmul.f32 %v5919, %v5919
  %v5984 = vmul.f32 %v5920, %v5920
  %v5985 = vmul.f32 %v5921, %v5921
  %v5986 = vmul.f32 %v5922, %v5922
  %v5987 = vmul.f32 %v5923, %v5923
  %v5988 = vmul.f32 %v5924, %v5924
  %v5989 = vmul.f32 %v5925, %v5925
  %v5990 = vmul.f32 %v5926, %v5926
  %v5991 = vmul.f32 %v5927, %v5927
  %v5992 = vmul.f32 %v5928, %v5928
  %v5993 = vmul.f32 %v5929, %v5929
  %v5994 = vmul.f32 %v5930, %v5930
  %v5995 = vmul.f32 %v5931, %v5931
  %v5996 = vmul.f32 %v5932, %v5932
  %v5997 = vmul.f32 %v5933, %v5933
  %v5998 = vmul.f32 %v5934, %v5934
  %v5999 = vmul.f32 %v5935, %v5935
  %v6000 = vmul.f32 %v5936, %v5936
  %v6001 = vmul.f32 %v5937, %v5937
  %v6002 = vadd.f32 %v5938, %v5939
  %v6003 = vadd.f32 %v6002, %v5940
  %v6004 = vadd.f32 %v6003, %v5941
  %6005 = vadd.xlane.f32.xlu0 %v6004
  %v6006 = vpop.xlane.xlu0 %6005
  %v6007 = vadd.f32 %v5942, %v5943
  %v6008 = vadd.f32 %v6007, %v5944
  %v6009 = vadd.f32 %v6008, %v5945
  %6010 = vadd.xlane.f32.xlu0 %v6009
  %v6011 = vpop.xlane.xlu0 %6010
  %v6012 = vadd.f32 %v5946, %v5947
  %v6013 = vadd.f32 %v6012, %v5948
  %v6014 = vadd.f32 %v6013, %v5949
  %6015 = vadd.xlane.f32.xlu0 %v6014
  %v6016 = vpop.xlane.xlu0 %6015
  %v6017 = vadd.f32 %v5950, %v5951
  %v6018 = vadd.f32 %v6017, %v5952
  %v6019 = vadd.f32 %v6018, %v5953
  %6020 = vadd.xlane.f32.xlu0 %v6019
  %v6021 = vpop.xlane.xlu0 %6020
  %v6022 = vadd.f32 %v5954, %v5955
  %v6023 = vadd.f32 %v6022, %v5956
  %v6024 = vadd.f32 %v6023, %v5957
  %6025 = vadd.xlane.f32.xlu0 %v6024
  %v6026 = vpop.xlane.xlu0 %6025
  %v6027 = vadd.f32 %v5958, %v5959
  %v6028 = vadd.f32 %v6027, %v5960
  %v6029 = vadd.f32 %v6028, %v5961
  %6030 = vadd.xlane.f32.xlu0 %v6029
  %v6031 = vpop.xlane.xlu0 %6030
  %v6032 = vadd.f32 %v5962, %v5963
  %v6033 = vadd.f32 %v6032, %v5964
  %v6034 = vadd.f32 %v6033, %v5965
  %6035 = vadd.xlane.f32.xlu0 %v6034
  %v6036 = vpop.xlane.xlu0 %6035
  %v6037 = vadd.f32 %v5966, %v5967
  %v6038 = vadd.f32 %v6037, %v5968
  %v6039 = vadd.f32 %v6038, %v5969
  %6040 = vadd.xlane.f32.xlu0 %v6039
  %v6041 = vpop.xlane.xlu0 %6040
  %v6042 = vadd.f32 %v5970, %v5971
  %v6043 = vadd.f32 %v6042, %v5972
  %v6044 = vadd.f32 %v6043, %v5973
  %6045 = vadd.xlane.f32.xlu0 %v6044
  %v6046 = vpop.xlane.xlu0 %6045
  %v6047 = vadd.f32 %v5974, %v5975
  %v6048 = vadd.f32 %v6047, %v5976
  %v6049 = vadd.f32 %v6048, %v5977
  %6050 = vadd.xlane.f32.xlu0 %v6049
  %v6051 = vpop.xlane.xlu0 %6050
  %v6052 = vadd.f32 %v5978, %v5979
  %v6053 = vadd.f32 %v6052, %v5980
  %v6054 = vadd.f32 %v6053, %v5981
  %6055 = vadd.xlane.f32.xlu0 %v6054
  %v6056 = vpop.xlane.xlu0 %6055
  %v6057 = vadd.f32 %v5982, %v5983
  %v6058 = vadd.f32 %v6057, %v5984
  %v6059 = vadd.f32 %v6058, %v5985
  %6060 = vadd.xlane.f32.xlu0 %v6059
  %v6061 = vpop.xlane.xlu0 %6060
  %v6062 = vadd.f32 %v5986, %v5987
  %v6063 = vadd.f32 %v6062, %v5988
  %v6064 = vadd.f32 %v6063, %v5989
  %6065 = vadd.xlane.f32.xlu0 %v6064
  %v6066 = vpop.xlane.xlu0 %6065
  %v6067 = vadd.f32 %v5990, %v5991
  %v6068 = vadd.f32 %v6067, %v5992
  %v6069 = vadd.f32 %v6068, %v5993
  %6070 = vadd.xlane.f32.xlu0 %v6069
  %v6071 = vpop.xlane.xlu0 %6070
  %v6072 = vadd.f32 %v5994, %v5995
  %v6073 = vadd.f32 %v6072, %v5996
  %v6074 = vadd.f32 %v6073, %v5997
  %6075 = vadd.xlane.f32.xlu0 %v6074
  %v6076 = vpop.xlane.xlu0 %6075
  %v6077 = vadd.f32 %v5998, %v5999
  %v6078 = vadd.f32 %v6077, %v6000
  %v6079 = vadd.f32 %v6078, %v6001
  %6080 = vadd.xlane.f32.xlu0 %v6079
  %v6081 = vpop.xlane.xlu0 %6080
  %v6082 = vmul.f32 %v6006, %v5857
  %v6083 = vmul.f32 %v6011, %v5857
  %v6084 = vmul.f32 %v6016, %v5857
  %v6085 = vmul.f32 %v6021, %v5857
  %v6086 = vmul.f32 %v6026, %v5857
  %v6087 = vmul.f32 %v6031, %v5857
  %v6088 = vmul.f32 %v6036, %v5857
  %v6089 = vmul.f32 %v6041, %v5857
  %v6090 = vmul.f32 %v6046, %v5857
  %v6091 = vmul.f32 %v6051, %v5857
  %v6092 = vmul.f32 %v6056, %v5857
  %v6093 = vmul.f32 %v6061, %v5857
  %v6094 = vmul.f32 %v6066, %v5857
  %v6095 = vmul.f32 %v6071, %v5857
  %v6096 = vmul.f32 %v6076, %v5857
  %v6097 = vmul.f32 %v6081, %v5857
  %v6098 = vadd.f32 %v6082, 1e-05
  %v6099 = vadd.f32 %v6083, 1e-05
  %v6100 = vadd.f32 %v6084, 1e-05
  %v6101 = vadd.f32 %v6085, 1e-05
  %v6102 = vadd.f32 %v6086, 1e-05
  %v6103 = vadd.f32 %v6087, 1e-05
  %v6104 = vadd.f32 %v6088, 1e-05
  %v6105 = vadd.f32 %v6089, 1e-05
  %v6106 = vadd.f32 %v6090, 1e-05
  %v6107 = vadd.f32 %v6091, 1e-05
  %v6108 = vadd.f32 %v6092, 1e-05
  %v6109 = vadd.f32 %v6093, 1e-05
  %v6110 = vadd.f32 %v6094, 1e-05
  %v6111 = vadd.f32 %v6095, 1e-05
  %v6112 = vadd.f32 %v6096, 1e-05
  %v6113 = vadd.f32 %v6097, 1e-05
  %v6114 = vrsqrt.pop %v6098
  %v6115 = vrsqrt.pop %v6099
  %v6116 = vrsqrt.pop %v6100
  %v6117 = vrsqrt.pop %v6101
  %v6118 = vrsqrt.pop %v6102
  %v6119 = vrsqrt.pop %v6103
  %v6120 = vrsqrt.pop %v6104
  %v6121 = vrsqrt.pop %v6105
  %v6122 = vrsqrt.pop %v6106
  %v6123 = vrsqrt.pop %v6107
  %v6124 = vrsqrt.pop %v6108
  %v6125 = vrsqrt.pop %v6109
  %v6126 = vrsqrt.pop %v6110
  %v6127 = vrsqrt.pop %v6111
  %v6128 = vrsqrt.pop %v6112
  %v6129 = vrsqrt.pop %v6113
  %v6130 = vmul.f32 %v5874, %v6114
  %v6131 = vmul.f32 %v5875, %v6114
  %v6132 = vmul.f32 %v5876, %v6114
  %v6133 = vmul.f32 %v5877, %v6114
  %v6134 = vmul.f32 %v5878, %v6115
  %v6135 = vmul.f32 %v5879, %v6115
  %v6136 = vmul.f32 %v5880, %v6115
  %v6137 = vmul.f32 %v5881, %v6115
  %v6138 = vmul.f32 %v5882, %v6116
  %v6139 = vmul.f32 %v5883, %v6116
  %v6140 = vmul.f32 %v5884, %v6116
  %v6141 = vmul.f32 %v5885, %v6116
  %v6142 = vmul.f32 %v5886, %v6117
  %v6143 = vmul.f32 %v5887, %v6117
  %v6144 = vmul.f32 %v5888, %v6117
  %v6145 = vmul.f32 %v5889, %v6117
  %v6146 = vmul.f32 %v5890, %v6118
  %v6147 = vmul.f32 %v5891, %v6118
  %v6148 = vmul.f32 %v5892, %v6118
  %v6149 = vmul.f32 %v5893, %v6118
  %v6150 = vmul.f32 %v5894, %v6119
  %v6151 = vmul.f32 %v5895, %v6119
  %v6152 = vmul.f32 %v5896, %v6119
  %v6153 = vmul.f32 %v5897, %v6119
  %v6154 = vmul.f32 %v5898, %v6120
  %v6155 = vmul.f32 %v5899, %v6120
  %v6156 = vmul.f32 %v5900, %v6120
  %v6157 = vmul.f32 %v5901, %v6120
  %v6158 = vmul.f32 %v5902, %v6121
  %v6159 = vmul.f32 %v5903, %v6121
  %v6160 = vmul.f32 %v5904, %v6121
  %v6161 = vmul.f32 %v5905, %v6121
  %v6162 = vmul.f32 %v5906, %v6122
  %v6163 = vmul.f32 %v5907, %v6122
  %v6164 = vmul.f32 %v5908, %v6122
  %v6165 = vmul.f32 %v5909, %v6122
  %v6166 = vmul.f32 %v5910, %v6123
  %v6167 = vmul.f32 %v5911, %v6123
  %v6168 = vmul.f32 %v5912, %v6123
  %v6169 = vmul.f32 %v5913, %v6123
  %v6170 = vmul.f32 %v5914, %v6124
  %v6171 = vmul.f32 %v5915, %v6124
  %v6172 = vmul.f32 %v5916, %v6124
  %v6173 = vmul.f32 %v5917, %v6124
  %v6174 = vmul.f32 %v5918, %v6125
  %v6175 = vmul.f32 %v5919, %v6125
  %v6176 = vmul.f32 %v5920, %v6125
  %v6177 = vmul.f32 %v5921, %v6125
  %v6178 = vmul.f32 %v5922, %v6126
  %v6179 = vmul.f32 %v5923, %v6126
  %v6180 = vmul.f32 %v5924, %v6126
  %v6181 = vmul.f32 %v5925, %v6126
  %v6182 = vmul.f32 %v5926, %v6127
  %v6183 = vmul.f32 %v5927, %v6127
  %v6184 = vmul.f32 %v5928, %v6127
  %v6185 = vmul.f32 %v5929, %v6127
  %v6186 = vmul.f32 %v5930, %v6128
  %v6187 = vmul.f32 %v5931, %v6128
  %v6188 = vmul.f32 %v5932, %v6128
  %v6189 = vmul.f32 %v5933, %v6128
  %v6190 = vmul.f32 %v5934, %v6129
  %v6191 = vmul.f32 %v5935, %v6129
  %v6192 = vmul.f32 %v5936, %v6129
  %v6193 = vmul.f32 %v5937, %v6129
  %v6194 = vld [vmem:[%s11] sm:$0xf]
  %v6196 = vlaneseq
  %v6197 = vshrl.u32 %v6196, 7
  %v6198 = vsub.s32 0, %v6197
  %v6199 = vrot.slane %v6194, %v6198
  %v6200 = vlaneseq
  %v6201 = vshrl.u32 %v6200, 7
  %v6202 = vsub.s32 1, %v6201
  %v6203 = vrot.slane %v6194, %v6202
  %v6204 = vlaneseq
  %v6205 = vshrl.u32 %v6204, 7
  %v6206 = vsub.s32 2, %v6205
  %v6207 = vrot.slane %v6194, %v6206
  %v6208 = vlaneseq
  %v6209 = vshrl.u32 %v6208, 7
  %v6210 = vsub.s32 3, %v6209
  %v6211 = vrot.slane %v6194, %v6210
  %v6216 = vmul.f32 %v6130, %v6199
  %v6217 = vmul.f32 %v6131, %v6203
  %v6218 = vmul.f32 %v6132, %v6207
  %v6219 = vmul.f32 %v6133, %v6211
  %v6220 = vmul.f32 %v6134, %v6199
  %v6221 = vmul.f32 %v6135, %v6203
  %v6222 = vmul.f32 %v6136, %v6207
  %v6223 = vmul.f32 %v6137, %v6211
  %v6224 = vmul.f32 %v6138, %v6199
  %v6225 = vmul.f32 %v6139, %v6203
  %v6226 = vmul.f32 %v6140, %v6207
  %v6227 = vmul.f32 %v6141, %v6211
  %v6228 = vmul.f32 %v6142, %v6199
  %v6229 = vmul.f32 %v6143, %v6203
  %v6230 = vmul.f32 %v6144, %v6207
  %v6231 = vmul.f32 %v6145, %v6211
  %v6232 = vmul.f32 %v6146, %v6199
  %v6233 = vmul.f32 %v6147, %v6203
  %v6234 = vmul.f32 %v6148, %v6207
  %v6235 = vmul.f32 %v6149, %v6211
  %v6236 = vmul.f32 %v6150, %v6199
  %v6237 = vmul.f32 %v6151, %v6203
  %v6238 = vmul.f32 %v6152, %v6207
  %v6239 = vmul.f32 %v6153, %v6211
  %v6240 = vmul.f32 %v6154, %v6199
  %v6241 = vmul.f32 %v6155, %v6203
  %v6242 = vmul.f32 %v6156, %v6207
  %v6243 = vmul.f32 %v6157, %v6211
  %v6244 = vmul.f32 %v6158, %v6199
  %v6245 = vmul.f32 %v6159, %v6203
  %v6246 = vmul.f32 %v6160, %v6207
  %v6247 = vmul.f32 %v6161, %v6211
  %v6248 = vmul.f32 %v6162, %v6199
  %v6249 = vmul.f32 %v6163, %v6203
  %v6250 = vmul.f32 %v6164, %v6207
  %v6251 = vmul.f32 %v6165, %v6211
  %v6252 = vmul.f32 %v6166, %v6199
  %v6253 = vmul.f32 %v6167, %v6203
  %v6254 = vmul.f32 %v6168, %v6207
  %v6255 = vmul.f32 %v6169, %v6211
  %v6256 = vmul.f32 %v6170, %v6199
  %v6257 = vmul.f32 %v6171, %v6203
  %v6258 = vmul.f32 %v6172, %v6207
  %v6259 = vmul.f32 %v6173, %v6211
  %v6260 = vmul.f32 %v6174, %v6199
  %v6261 = vmul.f32 %v6175, %v6203
  %v6262 = vmul.f32 %v6176, %v6207
  %v6263 = vmul.f32 %v6177, %v6211
  %v6264 = vmul.f32 %v6178, %v6199
  %v6265 = vmul.f32 %v6179, %v6203
  %v6266 = vmul.f32 %v6180, %v6207
  %v6267 = vmul.f32 %v6181, %v6211
  %v6268 = vmul.f32 %v6182, %v6199
  %v6269 = vmul.f32 %v6183, %v6203
  %v6270 = vmul.f32 %v6184, %v6207
  %v6271 = vmul.f32 %v6185, %v6211
  %v6272 = vmul.f32 %v6186, %v6199
  %v6273 = vmul.f32 %v6187, %v6203
  %v6274 = vmul.f32 %v6188, %v6207
  %v6275 = vmul.f32 %v6189, %v6211
  %v6276 = vmul.f32 %v6190, %v6199
  %v6277 = vmul.f32 %v6191, %v6203
  %v6278 = vmul.f32 %v6192, %v6207
  %v6279 = vmul.f32 %v6193, %v6211
  %v6280 = vld [vmem:[%s12] sm:$0xf]
  %v6282 = vlaneseq
  %v6283 = vshrl.u32 %v6282, 7
  %v6284 = vsub.s32 0, %v6283
  %v6285 = vrot.slane %v6280, %v6284
  %v6286 = vlaneseq
  %v6287 = vshrl.u32 %v6286, 7
  %v6288 = vsub.s32 1, %v6287
  %v6289 = vrot.slane %v6280, %v6288
  %v6290 = vlaneseq
  %v6291 = vshrl.u32 %v6290, 7
  %v6292 = vsub.s32 2, %v6291
  %v6293 = vrot.slane %v6280, %v6292
  %v6294 = vlaneseq
  %v6295 = vshrl.u32 %v6294, 7
  %v6296 = vsub.s32 3, %v6295
  %v6297 = vrot.slane %v6280, %v6296
  %v6302 = vadd.f32 %v6216, %v6285
  %v6303 = vadd.f32 %v6217, %v6289
  %v6304 = vadd.f32 %v6218, %v6293
  %v6305 = vadd.f32 %v6219, %v6297
  %v6306 = vadd.f32 %v6220, %v6285
  %v6307 = vadd.f32 %v6221, %v6289
  %v6308 = vadd.f32 %v6222, %v6293
  %v6309 = vadd.f32 %v6223, %v6297
  %v6310 = vadd.f32 %v6224, %v6285
  %v6311 = vadd.f32 %v6225, %v6289
  %v6312 = vadd.f32 %v6226, %v6293
  %v6313 = vadd.f32 %v6227, %v6297
  %v6314 = vadd.f32 %v6228, %v6285
  %v6315 = vadd.f32 %v6229, %v6289
  %v6316 = vadd.f32 %v6230, %v6293
  %v6317 = vadd.f32 %v6231, %v6297
  %v6318 = vadd.f32 %v6232, %v6285
  %v6319 = vadd.f32 %v6233, %v6289
  %v6320 = vadd.f32 %v6234, %v6293
  %v6321 = vadd.f32 %v6235, %v6297
  %v6322 = vadd.f32 %v6236, %v6285
  %v6323 = vadd.f32 %v6237, %v6289
  %v6324 = vadd.f32 %v6238, %v6293
  %v6325 = vadd.f32 %v6239, %v6297
  %v6326 = vadd.f32 %v6240, %v6285
  %v6327 = vadd.f32 %v6241, %v6289
  %v6328 = vadd.f32 %v6242, %v6293
  %v6329 = vadd.f32 %v6243, %v6297
  %v6330 = vadd.f32 %v6244, %v6285
  %v6331 = vadd.f32 %v6245, %v6289
  %v6332 = vadd.f32 %v6246, %v6293
  %v6333 = vadd.f32 %v6247, %v6297
  %v6334 = vadd.f32 %v6248, %v6285
  %v6335 = vadd.f32 %v6249, %v6289
  %v6336 = vadd.f32 %v6250, %v6293
  %v6337 = vadd.f32 %v6251, %v6297
  %v6338 = vadd.f32 %v6252, %v6285
  %v6339 = vadd.f32 %v6253, %v6289
  %v6340 = vadd.f32 %v6254, %v6293
  %v6341 = vadd.f32 %v6255, %v6297
  %v6342 = vadd.f32 %v6256, %v6285
  %v6343 = vadd.f32 %v6257, %v6289
  %v6344 = vadd.f32 %v6258, %v6293
  %v6345 = vadd.f32 %v6259, %v6297
  %v6346 = vadd.f32 %v6260, %v6285
  %v6347 = vadd.f32 %v6261, %v6289
  %v6348 = vadd.f32 %v6262, %v6293
  %v6349 = vadd.f32 %v6263, %v6297
  %v6350 = vadd.f32 %v6264, %v6285
  %v6351 = vadd.f32 %v6265, %v6289
  %v6352 = vadd.f32 %v6266, %v6293
  %v6353 = vadd.f32 %v6267, %v6297
  %v6354 = vadd.f32 %v6268, %v6285
  %v6355 = vadd.f32 %v6269, %v6289
  %v6356 = vadd.f32 %v6270, %v6293
  %v6357 = vadd.f32 %v6271, %v6297
  %v6358 = vadd.f32 %v6272, %v6285
  %v6359 = vadd.f32 %v6273, %v6289
  %v6360 = vadd.f32 %v6274, %v6293
  %v6361 = vadd.f32 %v6275, %v6297
  %v6362 = vadd.f32 %v6276, %v6285
  %v6363 = vadd.f32 %v6277, %v6289
  %v6364 = vadd.f32 %v6278, %v6293
  %v6365 = vadd.f32 %v6279, %v6297
  %v6366 = vmul.f32 %v6302, %v6302
  %v6367 = vmul.f32 %v6303, %v6303
  %v6368 = vmul.f32 %v6304, %v6304
  %v6369 = vmul.f32 %v6305, %v6305
  %v6370 = vmul.f32 %v6306, %v6306
  %v6371 = vmul.f32 %v6307, %v6307
  %v6372 = vmul.f32 %v6308, %v6308
  %v6373 = vmul.f32 %v6309, %v6309
  %v6374 = vmul.f32 %v6310, %v6310
  %v6375 = vmul.f32 %v6311, %v6311
  %v6376 = vmul.f32 %v6312, %v6312
  %v6377 = vmul.f32 %v6313, %v6313
  %v6378 = vmul.f32 %v6314, %v6314
  %v6379 = vmul.f32 %v6315, %v6315
  %v6380 = vmul.f32 %v6316, %v6316
  %v6381 = vmul.f32 %v6317, %v6317
  %v6382 = vmul.f32 %v6318, %v6318
  %v6383 = vmul.f32 %v6319, %v6319
  %v6384 = vmul.f32 %v6320, %v6320
  %v6385 = vmul.f32 %v6321, %v6321
  %v6386 = vmul.f32 %v6322, %v6322
  %v6387 = vmul.f32 %v6323, %v6323
  %v6388 = vmul.f32 %v6324, %v6324
  %v6389 = vmul.f32 %v6325, %v6325
  %v6390 = vmul.f32 %v6326, %v6326
  %v6391 = vmul.f32 %v6327, %v6327
  %v6392 = vmul.f32 %v6328, %v6328
  %v6393 = vmul.f32 %v6329, %v6329
  %v6394 = vmul.f32 %v6330, %v6330
  %v6395 = vmul.f32 %v6331, %v6331
  %v6396 = vmul.f32 %v6332, %v6332
  %v6397 = vmul.f32 %v6333, %v6333
  %v6398 = vmul.f32 %v6334, %v6334
  %v6399 = vmul.f32 %v6335, %v6335
  %v6400 = vmul.f32 %v6336, %v6336
  %v6401 = vmul.f32 %v6337, %v6337
  %v6402 = vmul.f32 %v6338, %v6338
  %v6403 = vmul.f32 %v6339, %v6339
  %v6404 = vmul.f32 %v6340, %v6340
  %v6405 = vmul.f32 %v6341, %v6341
  %v6406 = vmul.f32 %v6342, %v6342
  %v6407 = vmul.f32 %v6343, %v6343
  %v6408 = vmul.f32 %v6344, %v6344
  %v6409 = vmul.f32 %v6345, %v6345
  %v6410 = vmul.f32 %v6346, %v6346
  %v6411 = vmul.f32 %v6347, %v6347
  %v6412 = vmul.f32 %v6348, %v6348
  %v6413 = vmul.f32 %v6349, %v6349
  %v6414 = vmul.f32 %v6350, %v6350
  %v6415 = vmul.f32 %v6351, %v6351
  %v6416 = vmul.f32 %v6352, %v6352
  %v6417 = vmul.f32 %v6353, %v6353
  %v6418 = vmul.f32 %v6354, %v6354
  %v6419 = vmul.f32 %v6355, %v6355
  %v6420 = vmul.f32 %v6356, %v6356
  %v6421 = vmul.f32 %v6357, %v6357
  %v6422 = vmul.f32 %v6358, %v6358
  %v6423 = vmul.f32 %v6359, %v6359
  %v6424 = vmul.f32 %v6360, %v6360
  %v6425 = vmul.f32 %v6361, %v6361
  %v6426 = vmul.f32 %v6362, %v6362
  %v6427 = vmul.f32 %v6363, %v6363
  %v6428 = vmul.f32 %v6364, %v6364
  %v6429 = vmul.f32 %v6365, %v6365
  %v6430 = vadd.f32 %v6366, %v6367
  %v6431 = vadd.f32 %v6430, %v6368
  %v6432 = vadd.f32 %v6431, %v6369
  %6433 = vadd.xlane.f32.xlu0 %v6432
  %v6434 = vpop.xlane.xlu0 %6433
  %v6435 = vadd.f32 %v6370, %v6371
  %v6436 = vadd.f32 %v6435, %v6372
  %v6437 = vadd.f32 %v6436, %v6373
  %6438 = vadd.xlane.f32.xlu0 %v6437
  %v6439 = vpop.xlane.xlu0 %6438
  %v6440 = vadd.f32 %v6374, %v6375
  %v6441 = vadd.f32 %v6440, %v6376
  %v6442 = vadd.f32 %v6441, %v6377
  %6443 = vadd.xlane.f32.xlu0 %v6442
  %v6444 = vpop.xlane.xlu0 %6443
  %v6445 = vadd.f32 %v6378, %v6379
  %v6446 = vadd.f32 %v6445, %v6380
  %v6447 = vadd.f32 %v6446, %v6381
  %6448 = vadd.xlane.f32.xlu0 %v6447
  %v6449 = vpop.xlane.xlu0 %6448
  %v6450 = vadd.f32 %v6382, %v6383
  %v6451 = vadd.f32 %v6450, %v6384
  %v6452 = vadd.f32 %v6451, %v6385
  %6453 = vadd.xlane.f32.xlu0 %v6452
  %v6454 = vpop.xlane.xlu0 %6453
  %v6455 = vadd.f32 %v6386, %v6387
  %v6456 = vadd.f32 %v6455, %v6388
  %v6457 = vadd.f32 %v6456, %v6389
  %6458 = vadd.xlane.f32.xlu0 %v6457
  %v6459 = vpop.xlane.xlu0 %6458
  %v6460 = vadd.f32 %v6390, %v6391
  %v6461 = vadd.f32 %v6460, %v6392
  %v6462 = vadd.f32 %v6461, %v6393
  %6463 = vadd.xlane.f32.xlu0 %v6462
  %v6464 = vpop.xlane.xlu0 %6463
  %v6465 = vadd.f32 %v6394, %v6395
  %v6466 = vadd.f32 %v6465, %v6396
  %v6467 = vadd.f32 %v6466, %v6397
  %6468 = vadd.xlane.f32.xlu0 %v6467
  %v6469 = vpop.xlane.xlu0 %6468
  %v6470 = vadd.f32 %v6398, %v6399
  %v6471 = vadd.f32 %v6470, %v6400
  %v6472 = vadd.f32 %v6471, %v6401
  %6473 = vadd.xlane.f32.xlu0 %v6472
  %v6474 = vpop.xlane.xlu0 %6473
  %v6475 = vadd.f32 %v6402, %v6403
  %v6476 = vadd.f32 %v6475, %v6404
  %v6477 = vadd.f32 %v6476, %v6405
  %6478 = vadd.xlane.f32.xlu0 %v6477
  %v6479 = vpop.xlane.xlu0 %6478
  %v6480 = vadd.f32 %v6406, %v6407
  %v6481 = vadd.f32 %v6480, %v6408
  %v6482 = vadd.f32 %v6481, %v6409
  %6483 = vadd.xlane.f32.xlu0 %v6482
  %v6484 = vpop.xlane.xlu0 %6483
  %v6485 = vadd.f32 %v6410, %v6411
  %v6486 = vadd.f32 %v6485, %v6412
  %v6487 = vadd.f32 %v6486, %v6413
  %6488 = vadd.xlane.f32.xlu0 %v6487
  %v6489 = vpop.xlane.xlu0 %6488
  %v6490 = vadd.f32 %v6414, %v6415
  %v6491 = vadd.f32 %v6490, %v6416
  %v6492 = vadd.f32 %v6491, %v6417
  %6493 = vadd.xlane.f32.xlu0 %v6492
  %v6494 = vpop.xlane.xlu0 %6493
  %v6495 = vadd.f32 %v6418, %v6419
  %v6496 = vadd.f32 %v6495, %v6420
  %v6497 = vadd.f32 %v6496, %v6421
  %6498 = vadd.xlane.f32.xlu0 %v6497
  %v6499 = vpop.xlane.xlu0 %6498
  %v6500 = vadd.f32 %v6422, %v6423
  %v6501 = vadd.f32 %v6500, %v6424
  %v6502 = vadd.f32 %v6501, %v6425
  %6503 = vadd.xlane.f32.xlu0 %v6502
  %v6504 = vpop.xlane.xlu0 %6503
  %v6505 = vadd.f32 %v6426, %v6427
  %v6506 = vadd.f32 %v6505, %v6428
  %v6507 = vadd.f32 %v6506, %v6429
  %6508 = vadd.xlane.f32.xlu0 %v6507
  %v6509 = vpop.xlane.xlu0 %6508
  %v6510 = vrsqrt.pop %v6434
  %v6511 = vmul.f32 %v6434, %v6510
  %vm6512 = vcmp.eq.f32.partialorder %v6434, inf
  %v6513 = vsel %vm6512, %v6434, %v6511
  %vm6514 = vcmp.eq.f32.partialorder %v6434, 0.0
  %v6515 = vand.u32 %v6434, 2147483648
  %v6516 = vsel %vm6514, %v6515, %v6513
  %v6517 = vrsqrt.pop %v6439
  %v6518 = vmul.f32 %v6439, %v6517
  %vm6519 = vcmp.eq.f32.partialorder %v6439, inf
  %v6520 = vsel %vm6519, %v6439, %v6518
  %vm6521 = vcmp.eq.f32.partialorder %v6439, 0.0
  %v6522 = vand.u32 %v6439, 2147483648
  %v6523 = vsel %vm6521, %v6522, %v6520
  %v6524 = vrsqrt.pop %v6444
  %v6525 = vmul.f32 %v6444, %v6524
  %vm6526 = vcmp.eq.f32.partialorder %v6444, inf
  %v6527 = vsel %vm6526, %v6444, %v6525
  %vm6528 = vcmp.eq.f32.partialorder %v6444, 0.0
  %v6529 = vand.u32 %v6444, 2147483648
  %v6530 = vsel %vm6528, %v6529, %v6527
  %v6531 = vrsqrt.pop %v6449
  %v6532 = vmul.f32 %v6449, %v6531
  %vm6533 = vcmp.eq.f32.partialorder %v6449, inf
  %v6534 = vsel %vm6533, %v6449, %v6532
  %vm6535 = vcmp.eq.f32.partialorder %v6449, 0.0
  %v6536 = vand.u32 %v6449, 2147483648
  %v6537 = vsel %vm6535, %v6536, %v6534
  %v6538 = vrsqrt.pop %v6454
  %v6539 = vmul.f32 %v6454, %v6538
  %vm6540 = vcmp.eq.f32.partialorder %v6454, inf
  %v6541 = vsel %vm6540, %v6454, %v6539
  %vm6542 = vcmp.eq.f32.partialorder %v6454, 0.0
  %v6543 = vand.u32 %v6454, 2147483648
  %v6544 = vsel %vm6542, %v6543, %v6541
  %v6545 = vrsqrt.pop %v6459
  %v6546 = vmul.f32 %v6459, %v6545
  %vm6547 = vcmp.eq.f32.partialorder %v6459, inf
  %v6548 = vsel %vm6547, %v6459, %v6546
  %vm6549 = vcmp.eq.f32.partialorder %v6459, 0.0
  %v6550 = vand.u32 %v6459, 2147483648
  %v6551 = vsel %vm6549, %v6550, %v6548
  %v6552 = vrsqrt.pop %v6464
  %v6553 = vmul.f32 %v6464, %v6552
  %vm6554 = vcmp.eq.f32.partialorder %v6464, inf
  %v6555 = vsel %vm6554, %v6464, %v6553
  %vm6556 = vcmp.eq.f32.partialorder %v6464, 0.0
  %v6557 = vand.u32 %v6464, 2147483648
  %v6558 = vsel %vm6556, %v6557, %v6555
  %v6559 = vrsqrt.pop %v6469
  %v6560 = vmul.f32 %v6469, %v6559
  %vm6561 = vcmp.eq.f32.partialorder %v6469, inf
  %v6562 = vsel %vm6561, %v6469, %v6560
  %vm6563 = vcmp.eq.f32.partialorder %v6469, 0.0
  %v6564 = vand.u32 %v6469, 2147483648
  %v6565 = vsel %vm6563, %v6564, %v6562
  %v6566 = vrsqrt.pop %v6474
  %v6567 = vmul.f32 %v6474, %v6566
  %vm6568 = vcmp.eq.f32.partialorder %v6474, inf
  %v6569 = vsel %vm6568, %v6474, %v6567
  %vm6570 = vcmp.eq.f32.partialorder %v6474, 0.0
  %v6571 = vand.u32 %v6474, 2147483648
  %v6572 = vsel %vm6570, %v6571, %v6569
  %v6573 = vrsqrt.pop %v6479
  %v6574 = vmul.f32 %v6479, %v6573
  %vm6575 = vcmp.eq.f32.partialorder %v6479, inf
  %v6576 = vsel %vm6575, %v6479, %v6574
  %vm6577 = vcmp.eq.f32.partialorder %v6479, 0.0
  %v6578 = vand.u32 %v6479, 2147483648
  %v6579 = vsel %vm6577, %v6578, %v6576
  %v6580 = vrsqrt.pop %v6484
  %v6581 = vmul.f32 %v6484, %v6580
  %vm6582 = vcmp.eq.f32.partialorder %v6484, inf
  %v6583 = vsel %vm6582, %v6484, %v6581
  %vm6584 = vcmp.eq.f32.partialorder %v6484, 0.0
  %v6585 = vand.u32 %v6484, 2147483648
  %v6586 = vsel %vm6584, %v6585, %v6583
  %v6587 = vrsqrt.pop %v6489
  %v6588 = vmul.f32 %v6489, %v6587
  %vm6589 = vcmp.eq.f32.partialorder %v6489, inf
  %v6590 = vsel %vm6589, %v6489, %v6588
  %vm6591 = vcmp.eq.f32.partialorder %v6489, 0.0
  %v6592 = vand.u32 %v6489, 2147483648
  %v6593 = vsel %vm6591, %v6592, %v6590
  %v6594 = vrsqrt.pop %v6494
  %v6595 = vmul.f32 %v6494, %v6594
  %vm6596 = vcmp.eq.f32.partialorder %v6494, inf
  %v6597 = vsel %vm6596, %v6494, %v6595
  %vm6598 = vcmp.eq.f32.partialorder %v6494, 0.0
  %v6599 = vand.u32 %v6494, 2147483648
  %v6600 = vsel %vm6598, %v6599, %v6597
  %v6601 = vrsqrt.pop %v6499
  %v6602 = vmul.f32 %v6499, %v6601
  %vm6603 = vcmp.eq.f32.partialorder %v6499, inf
  %v6604 = vsel %vm6603, %v6499, %v6602
  %vm6605 = vcmp.eq.f32.partialorder %v6499, 0.0
  %v6606 = vand.u32 %v6499, 2147483648
  %v6607 = vsel %vm6605, %v6606, %v6604
  %v6608 = vrsqrt.pop %v6504
  %v6609 = vmul.f32 %v6504, %v6608
  %vm6610 = vcmp.eq.f32.partialorder %v6504, inf
  %v6611 = vsel %vm6610, %v6504, %v6609
  %vm6612 = vcmp.eq.f32.partialorder %v6504, 0.0
  %v6613 = vand.u32 %v6504, 2147483648
  %v6614 = vsel %vm6612, %v6613, %v6611
  %v6615 = vrsqrt.pop %v6509
  %v6616 = vmul.f32 %v6509, %v6615
  %vm6617 = vcmp.eq.f32.partialorder %v6509, inf
  %v6618 = vsel %vm6617, %v6509, %v6616
  %vm6619 = vcmp.eq.f32.partialorder %v6509, 0.0
  %v6620 = vand.u32 %v6509, 2147483648
  %v6621 = vsel %vm6619, %v6620, %v6618
  %v6622 = vmax.f32 %v6516, 1e-12
  %v6623 = vmax.f32 %v6523, 1e-12
  %v6624 = vmax.f32 %v6530, 1e-12
  %v6625 = vmax.f32 %v6537, 1e-12
  %v6626 = vmax.f32 %v6544, 1e-12
  %v6627 = vmax.f32 %v6551, 1e-12
  %v6628 = vmax.f32 %v6558, 1e-12
  %v6629 = vmax.f32 %v6565, 1e-12
  %v6630 = vmax.f32 %v6572, 1e-12
  %v6631 = vmax.f32 %v6579, 1e-12
  %v6632 = vmax.f32 %v6586, 1e-12
  %v6633 = vmax.f32 %v6593, 1e-12
  %v6634 = vmax.f32 %v6600, 1e-12
  %v6635 = vmax.f32 %v6607, 1e-12
  %v6636 = vmax.f32 %v6614, 1e-12
  %v6637 = vmax.f32 %v6621, 1e-12
  %v6638 = vrcp.pop %v6622
  %v6639 = vmul.f32 %v6302, %v6638
  %v6640 = vmul.f32 %v6303, %v6638
  %v6641 = vmul.f32 %v6304, %v6638
  %v6642 = vmul.f32 %v6305, %v6638
  %v6643 = vrcp.pop %v6623
  %v6644 = vmul.f32 %v6306, %v6643
  %v6645 = vmul.f32 %v6307, %v6643
  %v6646 = vmul.f32 %v6308, %v6643
  %v6647 = vmul.f32 %v6309, %v6643
  %v6648 = vrcp.pop %v6624
  %v6649 = vmul.f32 %v6310, %v6648
  %v6650 = vmul.f32 %v6311, %v6648
  %v6651 = vmul.f32 %v6312, %v6648
  %v6652 = vmul.f32 %v6313, %v6648
  %v6653 = vrcp.pop %v6625
  %v6654 = vmul.f32 %v6314, %v6653
  %v6655 = vmul.f32 %v6315, %v6653
  %v6656 = vmul.f32 %v6316, %v6653
  %v6657 = vmul.f32 %v6317, %v6653
  %v6658 = vrcp.pop %v6626
  %v6659 = vmul.f32 %v6318, %v6658
  %v6660 = vmul.f32 %v6319, %v6658
  %v6661 = vmul.f32 %v6320, %v6658
  %v6662 = vmul.f32 %v6321, %v6658
  %v6663 = vrcp.pop %v6627
  %v6664 = vmul.f32 %v6322, %v6663
  %v6665 = vmul.f32 %v6323, %v6663
  %v6666 = vmul.f32 %v6324, %v6663
  %v6667 = vmul.f32 %v6325, %v6663
  %v6668 = vrcp.pop %v6628
  %v6669 = vmul.f32 %v6326, %v6668
  %v6670 = vmul.f32 %v6327, %v6668
  %v6671 = vmul.f32 %v6328, %v6668
  %v6672 = vmul.f32 %v6329, %v6668
  %v6673 = vrcp.pop %v6629
  %v6674 = vmul.f32 %v6330, %v6673
  %v6675 = vmul.f32 %v6331, %v6673
  %v6676 = vmul.f32 %v6332, %v6673
  %v6677 = vmul.f32 %v6333, %v6673
  %v6678 = vrcp.pop %v6630
  %v6679 = vmul.f32 %v6334, %v6678
  %v6680 = vmul.f32 %v6335, %v6678
  %v6681 = vmul.f32 %v6336, %v6678
  %v6682 = vmul.f32 %v6337, %v6678
  %v6683 = vrcp.pop %v6631
  %v6684 = vmul.f32 %v6338, %v6683
  %v6685 = vmul.f32 %v6339, %v6683
  %v6686 = vmul.f32 %v6340, %v6683
  %v6687 = vmul.f32 %v6341, %v6683
  %v6688 = vrcp.pop %v6632
  %v6689 = vmul.f32 %v6342, %v6688
  %v6690 = vmul.f32 %v6343, %v6688
  %v6691 = vmul.f32 %v6344, %v6688
  %v6692 = vmul.f32 %v6345, %v6688
  %v6693 = vrcp.pop %v6633
  %v6694 = vmul.f32 %v6346, %v6693
  %v6695 = vmul.f32 %v6347, %v6693
  %v6696 = vmul.f32 %v6348, %v6693
  %v6697 = vmul.f32 %v6349, %v6693
  %v6698 = vrcp.pop %v6634
  %v6699 = vmul.f32 %v6350, %v6698
  %v6700 = vmul.f32 %v6351, %v6698
  %v6701 = vmul.f32 %v6352, %v6698
  %v6702 = vmul.f32 %v6353, %v6698
  %v6703 = vrcp.pop %v6635
  %v6704 = vmul.f32 %v6354, %v6703
  %v6705 = vmul.f32 %v6355, %v6703
  %v6706 = vmul.f32 %v6356, %v6703
  %v6707 = vmul.f32 %v6357, %v6703
  %v6708 = vrcp.pop %v6636
  %v6709 = vmul.f32 %v6358, %v6708
  %v6710 = vmul.f32 %v6359, %v6708
  %v6711 = vmul.f32 %v6360, %v6708
  %v6712 = vmul.f32 %v6361, %v6708
  %v6713 = vrcp.pop %v6637
  %v6714 = vmul.f32 %v6362, %v6713
  %v6715 = vmul.f32 %v6363, %v6713
  %v6716 = vmul.f32 %v6364, %v6713
  %v6717 = vmul.f32 %v6365, %v6713
  %v6718 = vpack.c.bf16 %v6644, %v6639
  %v6719 = vpack.c.bf16 %v6645, %v6640
  %v6720 = vpack.c.bf16 %v6646, %v6641
  %v6721 = vpack.c.bf16 %v6647, %v6642
  %v6722 = vpack.c.bf16 %v6654, %v6649
  %v6723 = vpack.c.bf16 %v6655, %v6650
  %v6724 = vpack.c.bf16 %v6656, %v6651
  %v6725 = vpack.c.bf16 %v6657, %v6652
  %v6726 = vpack.c.bf16 %v6664, %v6659
  %v6727 = vpack.c.bf16 %v6665, %v6660
  %v6728 = vpack.c.bf16 %v6666, %v6661
  %v6729 = vpack.c.bf16 %v6667, %v6662
  %v6730 = vpack.c.bf16 %v6674, %v6669
  %v6731 = vpack.c.bf16 %v6675, %v6670
  %v6732 = vpack.c.bf16 %v6676, %v6671
  %v6733 = vpack.c.bf16 %v6677, %v6672
  %v6734 = vpack.c.bf16 %v6684, %v6679
  %v6735 = vpack.c.bf16 %v6685, %v6680
  %v6736 = vpack.c.bf16 %v6686, %v6681
  %v6737 = vpack.c.bf16 %v6687, %v6682
  %v6738 = vpack.c.bf16 %v6694, %v6689
  %v6739 = vpack.c.bf16 %v6695, %v6690
  %v6740 = vpack.c.bf16 %v6696, %v6691
  %v6741 = vpack.c.bf16 %v6697, %v6692
  %v6742 = vpack.c.bf16 %v6704, %v6699
  %v6743 = vpack.c.bf16 %v6705, %v6700
  %v6744 = vpack.c.bf16 %v6706, %v6701
  %v6745 = vpack.c.bf16 %v6707, %v6702
  %v6746 = vpack.c.bf16 %v6714, %v6709
  %v6747 = vpack.c.bf16 %v6715, %v6710
  %v6748 = vpack.c.bf16 %v6716, %v6711
  %v6749 = vpack.c.bf16 %v6717, %v6712
  %v6750 = vld [vmem:[%s13] sm:$0xf]
  %v6751 = vld [vmem:[%s13 + $0x4] sm:$0xf]
  %v6752 = vld [vmem:[%s13 + $0x8] sm:$0xf]
  %v6753 = vld [vmem:[%s13 + $0xc] sm:$0xf]
  %v6754 = vld [vmem:[%s13 + $0x10] sm:$0xf]
  %v6755 = vld [vmem:[%s13 + $0x14] sm:$0xf]
  %v6756 = vld [vmem:[%s13 + $0x18] sm:$0xf]
  %v6757 = vld [vmem:[%s13 + $0x1c] sm:$0xf]
  %v6758 = vld [vmem:[%s13 + $0x20] sm:$0xf]
  %v6759 = vld [vmem:[%s13 + $0x24] sm:$0xf]
  %v6760 = vld [vmem:[%s13 + $0x28] sm:$0xf]
  %v6761 = vld [vmem:[%s13 + $0x2c] sm:$0xf]
  %v6762 = vld [vmem:[%s13 + $0x30] sm:$0xf]
  %v6763 = vld [vmem:[%s13 + $0x34] sm:$0xf]
  %v6764 = vld [vmem:[%s13 + $0x38] sm:$0xf]
  %v6765 = vld [vmem:[%s13 + $0x3c] sm:$0xf]
  %v6766 = vld [vmem:[%s13 + $0x40] sm:$0xf]
  %v6767 = vld [vmem:[%s13 + $0x44] sm:$0xf]
  %v6768 = vld [vmem:[%s13 + $0x48] sm:$0xf]
  %v6769 = vld [vmem:[%s13 + $0x4c] sm:$0xf]
  %v6770 = vld [vmem:[%s13 + $0x50] sm:$0xf]
  %v6771 = vld [vmem:[%s13 + $0x54] sm:$0xf]
  %v6772 = vld [vmem:[%s13 + $0x58] sm:$0xf]
  %v6773 = vld [vmem:[%s13 + $0x5c] sm:$0xf]
  %v6774 = vld [vmem:[%s13 + $0x60] sm:$0xf]
  %v6775 = vld [vmem:[%s13 + $0x64] sm:$0xf]
  %v6776 = vld [vmem:[%s13 + $0x68] sm:$0xf]
  %v6777 = vld [vmem:[%s13 + $0x6c] sm:$0xf]
  %v6778 = vld [vmem:[%s13 + $0x70] sm:$0xf]
  %v6779 = vld [vmem:[%s13 + $0x74] sm:$0xf]
  %v6780 = vld [vmem:[%s13 + $0x78] sm:$0xf]
  %v6781 = vld [vmem:[%s13 + $0x7c] sm:$0xf]
  %v6782 = vld [vmem:[%s13 + $0x80] sm:$0xf]
  %v6783 = vld [vmem:[%s13 + $0x84] sm:$0xf]
  %v6784 = vld [vmem:[%s13 + $0x88] sm:$0xf]
  %v6785 = vld [vmem:[%s13 + $0x8c] sm:$0xf]
  %v6786 = vld [vmem:[%s13 + $0x90] sm:$0xf]
  %v6787 = vld [vmem:[%s13 + $0x94] sm:$0xf]
  %v6788 = vld [vmem:[%s13 + $0x98] sm:$0xf]
  %v6789 = vld [vmem:[%s13 + $0x9c] sm:$0xf]
  %v6790 = vld [vmem:[%s13 + $0xa0] sm:$0xf]
  %v6791 = vld [vmem:[%s13 + $0xa4] sm:$0xf]
  %v6792 = vld [vmem:[%s13 + $0xa8] sm:$0xf]
  %v6793 = vld [vmem:[%s13 + $0xac] sm:$0xf]
  %v6794 = vld [vmem:[%s13 + $0xb0] sm:$0xf]
  %v6795 = vld [vmem:[%s13 + $0xb4] sm:$0xf]
  %v6796 = vld [vmem:[%s13 + $0xb8] sm:$0xf]
  %v6797 = vld [vmem:[%s13 + $0xbc] sm:$0xf]
  %v6798 = vld [vmem:[%s13 + $0xc0] sm:$0xf]
  %v6799 = vld [vmem:[%s13 + $0xc4] sm:$0xf]
  %v6800 = vld [vmem:[%s13 + $0xc8] sm:$0xf]
  %v6801 = vld [vmem:[%s13 + $0xcc] sm:$0xf]
  %v6802 = vld [vmem:[%s13 + $0xd0] sm:$0xf]
  %v6803 = vld [vmem:[%s13 + $0xd4] sm:$0xf]
  %v6804 = vld [vmem:[%s13 + $0xd8] sm:$0xf]
  %v6805 = vld [vmem:[%s13 + $0xdc] sm:$0xf]
  %v6806 = vld [vmem:[%s13 + $0xe0] sm:$0xf]
  %v6807 = vld [vmem:[%s13 + $0xe4] sm:$0xf]
  %v6808 = vld [vmem:[%s13 + $0xe8] sm:$0xf]
  %v6809 = vld [vmem:[%s13 + $0xec] sm:$0xf]
  %v6810 = vld [vmem:[%s13 + $0xf0] sm:$0xf]
  %v6811 = vld [vmem:[%s13 + $0xf4] sm:$0xf]
  %v6812 = vld [vmem:[%s13 + $0xf8] sm:$0xf]
  %v6813 = vld [vmem:[%s13 + $0xfc] sm:$0xf]
  %v6878 = vunpack.c.l.b16 %v6750
  %v6879 = vunpack.c.l.b16 %v6751
  %v6880 = vunpack.c.l.b16 %v6752
  %v6881 = vunpack.c.l.b16 %v6753
  %v6882 = vunpack.c.l.b16 %v6754
  %v6883 = vunpack.c.l.b16 %v6755
  %v6884 = vunpack.c.l.b16 %v6756
  %v6885 = vunpack.c.l.b16 %v6757
  %v6886 = vunpack.c.l.b16 %v6758
  %v6887 = vunpack.c.l.b16 %v6759
  %v6888 = vunpack.c.l.b16 %v6760
  %v6889 = vunpack.c.l.b16 %v6761
  %v6890 = vunpack.c.l.b16 %v6762
  %v6891 = vunpack.c.l.b16 %v6763
  %v6892 = vunpack.c.l.b16 %v6764
  %v6893 = vunpack.c.l.b16 %v6765
  %v6894 = vunpack.c.l.b16 %v6766
  %v6895 = vunpack.c.l.b16 %v6767
  %v6896 = vunpack.c.l.b16 %v6768
  %v6897 = vunpack.c.l.b16 %v6769
  %v6898 = vunpack.c.l.b16 %v6770
  %v6899 = vunpack.c.l.b16 %v6771
  %v6900 = vunpack.c.l.b16 %v6772
  %v6901 = vunpack.c.l.b16 %v6773
  %v6902 = vunpack.c.l.b16 %v6774
  %v6903 = vunpack.c.l.b16 %v6775
  %v6904 = vunpack.c.l.b16 %v6776
  %v6905 = vunpack.c.l.b16 %v6777
  %v6906 = vunpack.c.l.b16 %v6778
  %v6907 = vunpack.c.l.b16 %v6779
  %v6908 = vunpack.c.l.b16 %v6780
  %v6909 = vunpack.c.l.b16 %v6781
  %v6910 = vunpack.c.l.b16 %v6782
  %v6911 = vunpack.c.l.b16 %v6783
  %v6912 = vunpack.c.l.b16 %v6784
  %v6913 = vunpack.c.l.b16 %v6785
  %v6914 = vunpack.c.l.b16 %v6786
  %v6915 = vunpack.c.l.b16 %v6787
  %v6916 = vunpack.c.l.b16 %v6788
  %v6917 = vunpack.c.l.b16 %v6789
  %v6918 = vunpack.c.l.b16 %v6790
  %v6919 = vunpack.c.l.b16 %v6791
  %v6920 = vunpack.c.l.b16 %v6792
  %v6921 = vunpack.c.l.b16 %v6793
  %v6922 = vunpack.c.l.b16 %v6794
  %v6923 = vunpack.c.l.b16 %v6795
  %v6924 = vunpack.c.l.b16 %v6796
  %v6925 = vunpack.c.l.b16 %v6797
  %v6926 = vunpack.c.l.b16 %v6798
  %v6927 = vunpack.c.l.b16 %v6799
  %v6928 = vunpack.c.l.b16 %v6800
  %v6929 = vunpack.c.l.b16 %v6801
  %v6930 = vunpack.c.l.b16 %v6802
  %v6931 = vunpack.c.l.b16 %v6803
  %v6932 = vunpack.c.l.b16 %v6804
  %v6933 = vunpack.c.l.b16 %v6805
  %v6934 = vunpack.c.l.b16 %v6806
  %v6935 = vunpack.c.l.b16 %v6807
  %v6936 = vunpack.c.l.b16 %v6808
  %v6937 = vunpack.c.l.b16 %v6809
  %v6938 = vunpack.c.l.b16 %v6810
  %v6939 = vunpack.c.l.b16 %v6811
  %v6940 = vunpack.c.l.b16 %v6812
  %v6941 = vunpack.c.l.b16 %v6813
  %v6942 = vpack.c.b16 %v6879, %v6878
  %v6943 = vpack.c.b16 %v6881, %v6880
  %v6944 = vpack.c.b16 %v6883, %v6882
  %v6945 = vpack.c.b16 %v6885, %v6884
  %v6946 = vpack.c.b16 %v6887, %v6886
  %v6947 = vpack.c.b16 %v6889, %v6888
  %v6948 = vpack.c.b16 %v6891, %v6890
  %v6949 = vpack.c.b16 %v6893, %v6892
  %v6950 = vpack.c.b16 %v6895, %v6894
  %v6951 = vpack.c.b16 %v6897, %v6896
  %v6952 = vpack.c.b16 %v6899, %v6898
  %v6953 = vpack.c.b16 %v6901, %v6900
  %v6954 = vpack.c.b16 %v6903, %v6902
  %v6955 = vpack.c.b16 %v6905, %v6904
  %v6956 = vpack.c.b16 %v6907, %v6906
  %v6957 = vpack.c.b16 %v6909, %v6908
  %v6958 = vpack.c.b16 %v6911, %v6910
  %v6959 = vpack.c.b16 %v6913, %v6912
  %v6960 = vpack.c.b16 %v6915, %v6914
  %v6961 = vpack.c.b16 %v6917, %v6916
  %v6962 = vpack.c.b16 %v6919, %v6918
  %v6963 = vpack.c.b16 %v6921, %v6920
  %v6964 = vpack.c.b16 %v6923, %v6922
  %v6965 = vpack.c.b16 %v6925, %v6924
  %v6966 = vpack.c.b16 %v6927, %v6926
  %v6967 = vpack.c.b16 %v6929, %v6928
  %v6968 = vpack.c.b16 %v6931, %v6930
  %v6969 = vpack.c.b16 %v6933, %v6932
  %v6970 = vpack.c.b16 %v6935, %v6934
  %v6971 = vpack.c.b16 %v6937, %v6936
  %v6972 = vpack.c.b16 %v6939, %v6938
  %v6973 = vpack.c.b16 %v6941, %v6940
  %7006 = vmatprep.subr.bf16.mxu0 0
  %7007 = vmatpush1.bf16.msra.mxu0 %v6942
  %7008 = vmatprep.subr.bf16.mxu0 0
  %7009 = vmatpush1.bf16.msra.mxu0 %v6943
  %7010 = vmatprep.subr.bf16.mxu0 0
  %7011 = vmatpush1.bf16.msra.mxu0 %v6944
  %7012 = vmatprep.subr.bf16.mxu0 0
  %7013 = vmatpush1.bf16.msra.mxu0 %v6945
  %7014 = vmatprep.subr.bf16.mxu0 0
  %7015 = vmatpush1.bf16.msra.mxu0 %v6946
  %7016 = vmatprep.subr.bf16.mxu0 0
  %7017 = vmatpush1.bf16.msra.mxu0 %v6947
  %7018 = vmatprep.subr.bf16.mxu0 0
  %7019 = vmatpush1.bf16.msra.mxu0 %v6948
  %7020 = vmatprep.subr.bf16.mxu0 0
  %7021 = vmatpush1.bf16.msra.mxu0 %v6949
  %7022 = vmatprep.subr.bf16.mxu0 0
  %7023 = vmatpush1.bf16.msra.mxu0 %v6950
  %7024 = vmatprep.subr.bf16.mxu0 0
  %7025 = vmatpush1.bf16.msra.mxu0 %v6951
  %7026 = vmatprep.subr.bf16.mxu0 0
  %7027 = vmatpush1.bf16.msra.mxu0 %v6952
  %7028 = vmatprep.subr.bf16.mxu0 0
  %7029 = vmatpush1.bf16.msra.mxu0 %v6953
  %7030 = vmatprep.subr.bf16.mxu0 0
  %7031 = vmatpush1.bf16.msra.mxu0 %v6954
  %7032 = vmatprep.subr.bf16.mxu0 0
  %7033 = vmatpush1.bf16.msra.mxu0 %v6955
  %7034 = vmatprep.subr.bf16.mxu0 0
  %7035 = vmatpush1.bf16.msra.mxu0 %v6956
  %7036 = vmatprep.subr.bf16.mxu0 0
  %7037 = vmatpush1.bf16.msra.mxu0 %v6957
  %7038 = vmatprep.mubr.bf16.mxu0 %v6719
  %7039 = vmatmul.mubr.bf16.gmra.mrb[0].mxu0 %v6718
  %v7040 = vpop.f32.mrb[0].mxu0
  %v7041 = vadd.f32 0.0, %v7040
  %v7042 = vpop.f32.mrb[0].mxu0
  %v7043 = vpop.f32.mrb[0].mxu0
  %v7044 = vadd.f32 0.0, %v7043
  %v7045 = vpop.f32.mrb[0].mxu0
  %7046 = vmatprep.mubr.bf16.mxu0 %v6723
  %7047 = vmatmul.mubr.bf16.gmra.mrb[0].mxu0 %v6722
  %v7048 = vpop.f32.mrb[0].mxu0
  %v7049 = vadd.f32 0.0, %v7048
  %v7050 = vpop.f32.mrb[0].mxu0
  %v7051 = vpop.f32.mrb[0].mxu0
  %v7052 = vadd.f32 0.0, %v7051
  %v7053 = vpop.f32.mrb[0].mxu0
  %7054 = vmatprep.mubr.bf16.mxu0 %v6727
  %7055 = vmatmul.mubr.bf16.gmra.mrb[0].mxu0 %v6726
  %v7056 = vpop.f32.mrb[0].mxu0
  %v7057 = vadd.f32 0.0, %v7056
  %v7058 = vpop.f32.mrb[0].mxu0
  %v7059 = vpop.f32.mrb[0].mxu0
  %v7060 = vadd.f32 0.0, %v7059
  %v7061 = vpop.f32.mrb[0].mxu0
  %7062 = vmatprep.mubr.bf16.mxu0 %v6731
  %7063 = vmatmul.mubr.bf16.gmra.mrb[0].mxu0 %v6730
  %v7064 = vpop.f32.mrb[0].mxu0
  %v7065 = vadd.f32 0.0, %v7064
  %v7066 = vpop.f32.mrb[0].mxu0
  %v7067 = vpop.f32.mrb[0].mxu0
  %v7068 = vadd.f32 0.0, %v7067
  %v7069 = vpop.f32.mrb[0].mxu0
  %7070 = vmatprep.mubr.bf16.mxu0 %v6735
  %7071 = vmatmul.mubr.bf16.gmra.mrb[0].mxu0 %v6734
  %v7072 = vpop.f32.mrb[0].mxu0
  %v7073 = vadd.f32 0.0, %v7072
  %v7074 = vpop.f32.mrb[0].mxu0
  %v7075 = vpop.f32.mrb[0].mxu0
  %v7076 = vadd.f32 0.0, %v7075
  %v7077 = vpop.f32.mrb[0].mxu0
  %7078 = vmatprep.mubr.bf16.mxu0 %v6739
  %7079 = vmatmul.mubr.bf16.gmra.mrb[0].mxu0 %v6738
  %v7080 = vpop.f32.mrb[0].mxu0
  %v7081 = vadd.f32 0.0, %v7080
  %v7082 = vpop.f32.mrb[0].mxu0
  %v7083 = vpop.f32.mrb[0].mxu0
  %v7084 = vadd.f32 0.0, %v7083
  %v7085 = vpop.f32.mrb[0].mxu0
  %7086 = vmatprep.mubr.bf16.mxu0 %v6743
  %7087 = vmatmul.mubr.bf16.gmra.mrb[0].mxu0 %v6742
  %v7088 = vpop.f32.mrb[0].mxu0
  %v7089 = vadd.f32 0.0, %v7088
  %v7090 = vpop.f32.mrb[0].mxu0
  %v7091 = vpop.f32.mrb[0].mxu0
  %v7092 = vadd.f32 0.0, %v7091
  %v7093 = vpop.f32.mrb[0].mxu0
  %7094 = vmatprep.mubr.bf16.mxu0 %v6747
  %7095 = vmatmul.mubr.bf16.gmra.mrb[0].mxu0 %v6746
  %v7096 = vpop.f32.mrb[0].mxu0
  %v7097 = vadd.f32 0.0, %v7096
  %v7098 = vpop.f32.mrb[0].mxu0
  %v7099 = vpop.f32.mrb[0].mxu0
  %v7100 = vadd.f32 0.0, %v7099
  %v7101 = vpop.f32.mrb[0].mxu0
  %7102 = vdwg.mxu0
  %7103 = vmatprep.subr.bf16.mxu0 0
  %7104 = vmatpush1.bf16.msra.mxu0 %v6958
  %7105 = vmatprep.subr.bf16.mxu0 0
  %7106 = vmatpush1.bf16.msra.mxu0 %v6959
  %7107 = vmatprep.subr.bf16.mxu0 0
  %7108 = vmatpush1.bf16.msra.mxu0 %v6960
  %7109 = vmatprep.subr.bf16.mxu0 0
  %7110 = vmatpush1.bf16.msra.mxu0 %v6961
  %7111 = vmatprep.subr.bf16.mxu0 0
  %7112 = vmatpush1.bf16.msra.mxu0 %v6962
  %7113 = vmatprep.subr.bf16.mxu0 0
  %7114 = vmatpush1.bf16.msra.mxu0 %v6963
  %7115 = vmatprep.subr.bf16.mxu0 0
  %7116 = vmatpush1.bf16.msra.mxu0 %v6964
  %7117 = vmatprep.subr.bf16.mxu0 0
  %7118 = vmatpush1.bf16.msra.mxu0 %v6965
  %7119 = vmatprep.subr.bf16.mxu0 0
  %7120 = vmatpush1.bf16.msra.mxu0 %v6966
  %7121 = vmatprep.subr.bf16.mxu0 0
  %7122 = vmatpush1.bf16.msra.mxu0 %v6967
  %7123 = vmatprep.subr.bf16.mxu0 0
  %7124 = vmatpush1.bf16.msra.mxu0 %v6968
  %7125 = vmatprep.subr.bf16.mxu0 0
  %7126 = vmatpush1.bf16.msra.mxu0 %v6969
  %7127 = vmatprep.subr.bf16.mxu0 0
  %7128 = vmatpush1.bf16.msra.mxu0 %v6970
  %7129 = vmatprep.subr.bf16.mxu0 0
  %7130 = vmatpush1.bf16.msra.mxu0 %v6971
  %7131 = vmatprep.subr.bf16.mxu0 0
  %7132 = vmatpush1.bf16.msra.mxu0 %v6972
  %7133 = vmatprep.subr.bf16.mxu0 0
  %7134 = vmatpush1.bf16.msra.mxu0 %v6973
  %7135 = vmatprep.mubr.bf16.mxu0 %v6721
  %7136 = vmatmul.mubr.bf16.gmra.mrb[0].mxu0 %v6720
  %v7137 = vpop.f32.mrb[0].mxu0
  %v7138 = vadd.f32 %v7041, %v7137
  %v7139 = vpop.f32.mrb[0].mxu0
  %v7140 = vpop.f32.mrb[0].mxu0
  %v7141 = vadd.f32 %v7044, %v7140
  %v7142 = vpop.f32.mrb[0].mxu0
  %7143 = vmatprep.mubr.bf16.mxu0 %v6725
  %7144 = vmatmul.mubr.bf16.gmra.mrb[0].mxu0 %v6724
  %v7145 = vpop.f32.mrb[0].mxu0
  %v7146 = vadd.f32 %v7049, %v7145
  %v7147 = vpop.f32.mrb[0].mxu0
  %v7148 = vpop.f32.mrb[0].mxu0
  %v7149 = vadd.f32 %v7052, %v7148
  %v7150 = vpop.f32.mrb[0].mxu0
  %7151 = vmatprep.mubr.bf16.mxu0 %v6729
  %7152 = vmatmul.mubr.bf16.gmra.mrb[0].mxu0 %v6728
  %v7153 = vpop.f32.mrb[0].mxu0
  %v7154 = vadd.f32 %v7057, %v7153
  %v7155 = vpop.f32.mrb[0].mxu0
  %v7156 = vpop.f32.mrb[0].mxu0
  %v7157 = vadd.f32 %v7060, %v7156
  %v7158 = vpop.f32.mrb[0].mxu0
  %7159 = vmatprep.mubr.bf16.mxu0 %v6733
  %7160 = vmatmul.mubr.bf16.gmra.mrb[0].mxu0 %v6732
  %v7161 = vpop.f32.mrb[0].mxu0
  %v7162 = vadd.f32 %v7065, %v7161
  %v7163 = vpop.f32.mrb[0].mxu0
  %v7164 = vpop.f32.mrb[0].mxu0
  %v7165 = vadd.f32 %v7068, %v7164
  %v7166 = vpop.f32.mrb[0].mxu0
  %7167 = vmatprep.mubr.bf16.mxu0 %v6737
  %7168 = vmatmul.mubr.bf16.gmra.mrb[0].mxu0 %v6736
  %v7169 = vpop.f32.mrb[0].mxu0
  %v7170 = vadd.f32 %v7073, %v7169
  %v7171 = vpop.f32.mrb[0].mxu0
  %v7172 = vpop.f32.mrb[0].mxu0
  %v7173 = vadd.f32 %v7076, %v7172
  %v7174 = vpop.f32.mrb[0].mxu0
  %7175 = vmatprep.mubr.bf16.mxu0 %v6741
  %7176 = vmatmul.mubr.bf16.gmra.mrb[0].mxu0 %v6740
  %v7177 = vpop.f32.mrb[0].mxu0
  %v7178 = vadd.f32 %v7081, %v7177
  %v7179 = vpop.f32.mrb[0].mxu0
  %v7180 = vpop.f32.mrb[0].mxu0
  %v7181 = vadd.f32 %v7084, %v7180
  %v7182 = vpop.f32.mrb[0].mxu0
  %7183 = vmatprep.mubr.bf16.mxu0 %v6745
  %7184 = vmatmul.mubr.bf16.gmra.mrb[0].mxu0 %v6744
  %v7185 = vpop.f32.mrb[0].mxu0
  %v7186 = vadd.f32 %v7089, %v7185
  %v7187 = vpop.f32.mrb[0].mxu0
  %v7188 = vpop.f32.mrb[0].mxu0
  %v7189 = vadd.f32 %v7092, %v7188
  %v7190 = vpop.f32.mrb[0].mxu0
  %7191 = vmatprep.mubr.bf16.mxu0 %v6749
  %7192 = vmatmul.mubr.bf16.gmra.mrb[0].mxu0 %v6748
  %v7193 = vpop.f32.mrb[0].mxu0
  %v7194 = vadd.f32 %v7097, %v7193
  %v7195 = vpop.f32.mrb[0].mxu0
  %v7196 = vpop.f32.mrb[0].mxu0
  %v7197 = vadd.f32 %v7100, %v7196
  %v7198 = vpop.f32.mrb[0].mxu0
  %7199 = vdwg.mxu0
  %vm7200 = vcmask 80896
  %v7201 = vsel %vm7200, %v7138, -inf
  %7202 = vmax.xlane.f32.xlu0 %v7201
  %v7203 = vpop.xlane.xlu0 %7202
  %v7204 = vsel %vm7200, %v7141, -inf
  %7205 = vmax.xlane.f32.xlu0 %v7204
  %v7206 = vpop.xlane.xlu0 %7205
  %v7207 = vsel %vm7200, %v7146, -inf
  %7208 = vmax.xlane.f32.xlu0 %v7207
  %v7209 = vpop.xlane.xlu0 %7208
  %v7210 = vsel %vm7200, %v7149, -inf
  %7211 = vmax.xlane.f32.xlu0 %v7210
  %v7212 = vpop.xlane.xlu0 %7211
  %v7213 = vsel %vm7200, %v7154, -inf
  %7214 = vmax.xlane.f32.xlu0 %v7213
  %v7215 = vpop.xlane.xlu0 %7214
  %v7216 = vsel %vm7200, %v7157, -inf
  %7217 = vmax.xlane.f32.xlu0 %v7216
  %v7218 = vpop.xlane.xlu0 %7217
  %v7219 = vsel %vm7200, %v7162, -inf
  %7220 = vmax.xlane.f32.xlu0 %v7219
  %v7221 = vpop.xlane.xlu0 %7220
  %v7222 = vsel %vm7200, %v7165, -inf
  %7223 = vmax.xlane.f32.xlu0 %v7222
  %v7224 = vpop.xlane.xlu0 %7223
  %v7225 = vsel %vm7200, %v7170, -inf
  %7226 = vmax.xlane.f32.xlu0 %v7225
  %v7227 = vpop.xlane.xlu0 %7226
  %v7228 = vsel %vm7200, %v7173, -inf
  %7229 = vmax.xlane.f32.xlu0 %v7228
  %v7230 = vpop.xlane.xlu0 %7229
  %v7231 = vsel %vm7200, %v7178, -inf
  %7232 = vmax.xlane.f32.xlu0 %v7231
  %v7233 = vpop.xlane.xlu0 %7232
  %v7234 = vsel %vm7200, %v7181, -inf
  %7235 = vmax.xlane.f32.xlu0 %v7234
  %v7236 = vpop.xlane.xlu0 %7235
  %v7237 = vsel %vm7200, %v7186, -inf
  %7238 = vmax.xlane.f32.xlu0 %v7237
  %v7239 = vpop.xlane.xlu0 %7238
  %v7240 = vsel %vm7200, %v7189, -inf
  %7241 = vmax.xlane.f32.xlu0 %v7240
  %v7242 = vpop.xlane.xlu0 %7241
  %v7243 = vsel %vm7200, %v7194, -inf
  %7244 = vmax.xlane.f32.xlu0 %v7243
  %v7245 = vpop.xlane.xlu0 %7244
  %v7246 = vsel %vm7200, %v7197, -inf
  %7247 = vmax.xlane.f32.xlu0 %v7246
  %v7248 = vpop.xlane.xlu0 %7247
  %vm7249 = vcmask 162896
  %v7250 = vsel %vm7249, %v7138, -inf
  %7251 = vmax.xlane.f32.xlu0 %v7250
  %v7252 = vpop.xlane.xlu0 %7251
  %v7253 = vsel %vm7249, %v7141, -inf
  %7254 = vmax.xlane.f32.xlu0 %v7253
  %v7255 = vpop.xlane.xlu0 %7254
  %v7256 = vsel %vm7249, %v7146, -inf
  %7257 = vmax.xlane.f32.xlu0 %v7256
  %v7258 = vpop.xlane.xlu0 %7257
  %v7259 = vsel %vm7249, %v7149, -inf
  %7260 = vmax.xlane.f32.xlu0 %v7259
  %v7261 = vpop.xlane.xlu0 %7260
  %v7262 = vsel %vm7249, %v7154, -inf
  %7263 = vmax.xlane.f32.xlu0 %v7262
  %v7264 = vpop.xlane.xlu0 %7263
  %v7265 = vsel %vm7249, %v7157, -inf
  %7266 = vmax.xlane.f32.xlu0 %v7265
  %v7267 = vpop.xlane.xlu0 %7266
  %v7268 = vsel %vm7249, %v7162, -inf
  %7269 = vmax.xlane.f32.xlu0 %v7268
  %v7270 = vpop.xlane.xlu0 %7269
  %v7271 = vsel %vm7249, %v7165, -inf
  %7272 = vmax.xlane.f32.xlu0 %v7271
  %v7273 = vpop.xlane.xlu0 %7272
  %v7274 = vsel %vm7249, %v7170, -inf
  %7275 = vmax.xlane.f32.xlu0 %v7274
  %v7276 = vpop.xlane.xlu0 %7275
  %v7277 = vsel %vm7249, %v7173, -inf
  %7278 = vmax.xlane.f32.xlu0 %v7277
  %v7279 = vpop.xlane.xlu0 %7278
  %v7280 = vsel %vm7249, %v7178, -inf
  %7281 = vmax.xlane.f32.xlu0 %v7280
  %v7282 = vpop.xlane.xlu0 %7281
  %v7283 = vsel %vm7249, %v7181, -inf
  %7284 = vmax.xlane.f32.xlu0 %v7283
  %v7285 = vpop.xlane.xlu0 %7284
  %v7286 = vsel %vm7249, %v7186, -inf
  %7287 = vmax.xlane.f32.xlu0 %v7286
  %v7288 = vpop.xlane.xlu0 %7287
  %v7289 = vsel %vm7249, %v7189, -inf
  %7290 = vmax.xlane.f32.xlu0 %v7289
  %v7291 = vpop.xlane.xlu0 %7290
  %v7292 = vsel %vm7249, %v7194, -inf
  %7293 = vmax.xlane.f32.xlu0 %v7292
  %v7294 = vpop.xlane.xlu0 %7293
  %v7295 = vsel %vm7249, %v7197, -inf
  %7296 = vmax.xlane.f32.xlu0 %v7295
  %v7297 = vpop.xlane.xlu0 %7296
  %vm7298 = vcmask 7168
  %v7299 = vsel %vm7298, %v7203, %v7252
  %v7300 = vsel %vm7298, %v7206, %v7255
  %v7301 = vsel %vm7298, %v7209, %v7258
  %v7302 = vsel %vm7298, %v7212, %v7261
  %v7303 = vsel %vm7298, %v7215, %v7264
  %v7304 = vsel %vm7298, %v7218, %v7267
  %v7305 = vsel %vm7298, %v7221, %v7270
  %v7306 = vsel %vm7298, %v7224, %v7273
  %v7307 = vsel %vm7298, %v7227, %v7276
  %v7308 = vsel %vm7298, %v7230, %v7279
  %v7309 = vsel %vm7298, %v7233, %v7282
  %v7310 = vsel %vm7298, %v7236, %v7285
  %v7311 = vsel %vm7298, %v7239, %v7288
  %v7312 = vsel %vm7298, %v7242, %v7291
  %v7313 = vsel %vm7298, %v7245, %v7294
  %v7314 = vsel %vm7298, %v7248, %v7297
  %vm7315 = vcmask 15360
  %v7316 = vsel %vm7315, %v7299, 0.0
  %7317 = vadd.xlane.f32.xlu0 %v7316
  %v7318 = vpop.xlane.xlu0 %7317
  %v7319 = vsel %vm7315, %v7300, 0.0
  %7320 = vadd.xlane.f32.xlu0 %v7319
  %v7321 = vpop.xlane.xlu0 %7320
  %v7322 = vsel %vm7315, %v7301, 0.0
  %7323 = vadd.xlane.f32.xlu0 %v7322
  %v7324 = vpop.xlane.xlu0 %7323
  %v7325 = vsel %vm7315, %v7302, 0.0
  %7326 = vadd.xlane.f32.xlu0 %v7325
  %v7327 = vpop.xlane.xlu0 %7326
  %v7328 = vsel %vm7315, %v7303, 0.0
  %7329 = vadd.xlane.f32.xlu0 %v7328
  %v7330 = vpop.xlane.xlu0 %7329
  %v7331 = vsel %vm7315, %v7304, 0.0
  %7332 = vadd.xlane.f32.xlu0 %v7331
  %v7333 = vpop.xlane.xlu0 %7332
  %v7334 = vsel %vm7315, %v7305, 0.0
  %7335 = vadd.xlane.f32.xlu0 %v7334
  %v7336 = vpop.xlane.xlu0 %7335
  %v7337 = vsel %vm7315, %v7306, 0.0
  %7338 = vadd.xlane.f32.xlu0 %v7337
  %v7339 = vpop.xlane.xlu0 %7338
  %v7340 = vsel %vm7315, %v7307, 0.0
  %7341 = vadd.xlane.f32.xlu0 %v7340
  %v7342 = vpop.xlane.xlu0 %7341
  %v7343 = vsel %vm7315, %v7308, 0.0
  %7344 = vadd.xlane.f32.xlu0 %v7343
  %v7345 = vpop.xlane.xlu0 %7344
  %v7346 = vsel %vm7315, %v7309, 0.0
  %7347 = vadd.xlane.f32.xlu0 %v7346
  %v7348 = vpop.xlane.xlu0 %7347
  %v7349 = vsel %vm7315, %v7310, 0.0
  %7350 = vadd.xlane.f32.xlu0 %v7349
  %v7351 = vpop.xlane.xlu0 %7350
  %v7352 = vsel %vm7315, %v7311, 0.0
  %7353 = vadd.xlane.f32.xlu0 %v7352
  %v7354 = vpop.xlane.xlu0 %7353
  %v7355 = vsel %vm7315, %v7312, 0.0
  %7356 = vadd.xlane.f32.xlu0 %v7355
  %v7357 = vpop.xlane.xlu0 %7356
  %v7358 = vsel %vm7315, %v7313, 0.0
  %7359 = vadd.xlane.f32.xlu0 %v7358
  %v7360 = vpop.xlane.xlu0 %7359
  %v7361 = vsel %vm7315, %v7314, 0.0
  %7362 = vadd.xlane.f32.xlu0 %v7361
  %v7363 = vpop.xlane.xlu0 %7362
  %v7364 = vrcp.pop 2.0
  %v7365 = vmul.f32 %v7318, %v7364
  %v7366 = vmul.f32 %v7321, %v7364
  %v7367 = vmul.f32 %v7324, %v7364
  %v7368 = vmul.f32 %v7327, %v7364
  %v7369 = vmul.f32 %v7330, %v7364
  %v7370 = vmul.f32 %v7333, %v7364
  %v7371 = vmul.f32 %v7336, %v7364
  %v7372 = vmul.f32 %v7339, %v7364
  %v7373 = vmul.f32 %v7342, %v7364
  %v7374 = vmul.f32 %v7345, %v7364
  %v7375 = vmul.f32 %v7348, %v7364
  %v7376 = vmul.f32 %v7351, %v7364
  %v7377 = vmul.f32 %v7354, %v7364
  %v7378 = vmul.f32 %v7357, %v7364
  %v7379 = vmul.f32 %v7360, %v7364
  %v7380 = vmul.f32 %v7363, %v7364
  %v7381 = vsub.f32 %v7299, %v7365
  %v7382 = vsub.f32 %v7300, %v7366
  %v7383 = vsub.f32 %v7301, %v7367
  %v7384 = vsub.f32 %v7302, %v7368
  %v7385 = vsub.f32 %v7303, %v7369
  %v7386 = vsub.f32 %v7304, %v7370
  %v7387 = vsub.f32 %v7305, %v7371
  %v7388 = vsub.f32 %v7306, %v7372
  %v7389 = vsub.f32 %v7307, %v7373
  %v7390 = vsub.f32 %v7308, %v7374
  %v7391 = vsub.f32 %v7309, %v7375
  %v7392 = vsub.f32 %v7310, %v7376
  %v7393 = vsub.f32 %v7311, %v7377
  %v7394 = vsub.f32 %v7312, %v7378
  %v7395 = vsub.f32 %v7313, %v7379
  %v7396 = vsub.f32 %v7314, %v7380
  %v7397 = vmul.f32 %v7381, %v7381
  %v7398 = vmul.f32 %v7382, %v7382
  %v7399 = vmul.f32 %v7383, %v7383
  %v7400 = vmul.f32 %v7384, %v7384
  %v7401 = vmul.f32 %v7385, %v7385
  %v7402 = vmul.f32 %v7386, %v7386
  %v7403 = vmul.f32 %v7387, %v7387
  %v7404 = vmul.f32 %v7388, %v7388
  %v7405 = vmul.f32 %v7389, %v7389
  %v7406 = vmul.f32 %v7390, %v7390
  %v7407 = vmul.f32 %v7391, %v7391
  %v7408 = vmul.f32 %v7392, %v7392
  %v7409 = vmul.f32 %v7393, %v7393
  %v7410 = vmul.f32 %v7394, %v7394
  %v7411 = vmul.f32 %v7395, %v7395
  %v7412 = vmul.f32 %v7396, %v7396
  %v7413 = vsel %vm7315, %v7397, 0.0
  %7414 = vadd.xlane.f32.xlu0 %v7413
  %v7415 = vpop.xlane.xlu0 %7414
  %v7416 = vsel %vm7315, %v7398, 0.0
  %7417 = vadd.xlane.f32.xlu0 %v7416
  %v7418 = vpop.xlane.xlu0 %7417
  %v7419 = vsel %vm7315, %v7399, 0.0
  %7420 = vadd.xlane.f32.xlu0 %v7419
  %v7421 = vpop.xlane.xlu0 %7420
  %v7422 = vsel %vm7315, %v7400, 0.0
  %7423 = vadd.xlane.f32.xlu0 %v7422
  %v7424 = vpop.xlane.xlu0 %7423
  %v7425 = vsel %vm7315, %v7401, 0.0
  %7426 = vadd.xlane.f32.xlu0 %v7425
  %v7427 = vpop.xlane.xlu0 %7426
  %v7428 = vsel %vm7315, %v7402, 0.0
  %7429 = vadd.xlane.f32.xlu0 %v7428
  %v7430 = vpop.xlane.xlu0 %7429
  %v7431 = vsel %vm7315, %v7403, 0.0
  %7432 = vadd.xlane.f32.xlu0 %v7431
  %v7433 = vpop.xlane.xlu0 %7432
  %v7434 = vsel %vm7315, %v7404, 0.0
  %7435 = vadd.xlane.f32.xlu0 %v7434
  %v7436 = vpop.xlane.xlu0 %7435
  %v7437 = vsel %vm7315, %v7405, 0.0
  %7438 = vadd.xlane.f32.xlu0 %v7437
  %v7439 = vpop.xlane.xlu0 %7438
  %v7440 = vsel %vm7315, %v7406, 0.0
  %7441 = vadd.xlane.f32.xlu0 %v7440
  %v7442 = vpop.xlane.xlu0 %7441
  %v7443 = vsel %vm7315, %v7407, 0.0
  %7444 = vadd.xlane.f32.xlu0 %v7443
  %v7445 = vpop.xlane.xlu0 %7444
  %v7446 = vsel %vm7315, %v7408, 0.0
  %7447 = vadd.xlane.f32.xlu0 %v7446
  %v7448 = vpop.xlane.xlu0 %7447
  %v7449 = vsel %vm7315, %v7409, 0.0
  %7450 = vadd.xlane.f32.xlu0 %v7449
  %v7451 = vpop.xlane.xlu0 %7450
  %v7452 = vsel %vm7315, %v7410, 0.0
  %7453 = vadd.xlane.f32.xlu0 %v7452
  %v7454 = vpop.xlane.xlu0 %7453
  %v7455 = vsel %vm7315, %v7411, 0.0
  %7456 = vadd.xlane.f32.xlu0 %v7455
  %v7457 = vpop.xlane.xlu0 %7456
  %v7458 = vsel %vm7315, %v7412, 0.0
  %7459 = vadd.xlane.f32.xlu0 %v7458
  %v7460 = vpop.xlane.xlu0 %7459
  %v7461 = vmul.f32 %v7415, %v7364
  %v7462 = vmul.f32 %v7418, %v7364
  %v7463 = vmul.f32 %v7421, %v7364
  %v7464 = vmul.f32 %v7424, %v7364
  %v7465 = vmul.f32 %v7427, %v7364
  %v7466 = vmul.f32 %v7430, %v7364
  %v7467 = vmul.f32 %v7433, %v7364
  %v7468 = vmul.f32 %v7436, %v7364
  %v7469 = vmul.f32 %v7439, %v7364
  %v7470 = vmul.f32 %v7442, %v7364
  %v7471 = vmul.f32 %v7445, %v7364
  %v7472 = vmul.f32 %v7448, %v7364
  %v7473 = vmul.f32 %v7451, %v7364
  %v7474 = vmul.f32 %v7454, %v7364
  %v7475 = vmul.f32 %v7457, %v7364
  %v7476 = vmul.f32 %v7460, %v7364
  %v7477 = vadd.f32 %v7461, 1e-05
  %v7478 = vadd.f32 %v7462, 1e-05
  %v7479 = vadd.f32 %v7463, 1e-05
  %v7480 = vadd.f32 %v7464, 1e-05
  %v7481 = vadd.f32 %v7465, 1e-05
  %v7482 = vadd.f32 %v7466, 1e-05
  %v7483 = vadd.f32 %v7467, 1e-05
  %v7484 = vadd.f32 %v7468, 1e-05
  %v7485 = vadd.f32 %v7469, 1e-05
  %v7486 = vadd.f32 %v7470, 1e-05
  %v7487 = vadd.f32 %v7471, 1e-05
  %v7488 = vadd.f32 %v7472, 1e-05
  %v7489 = vadd.f32 %v7473, 1e-05
  %v7490 = vadd.f32 %v7474, 1e-05
  %v7491 = vadd.f32 %v7475, 1e-05
  %v7492 = vadd.f32 %v7476, 1e-05
  %v7493 = vrsqrt.pop %v7477
  %v7494 = vrsqrt.pop %v7478
  %v7495 = vrsqrt.pop %v7479
  %v7496 = vrsqrt.pop %v7480
  %v7497 = vrsqrt.pop %v7481
  %v7498 = vrsqrt.pop %v7482
  %v7499 = vrsqrt.pop %v7483
  %v7500 = vrsqrt.pop %v7484
  %v7501 = vrsqrt.pop %v7485
  %v7502 = vrsqrt.pop %v7486
  %v7503 = vrsqrt.pop %v7487
  %v7504 = vrsqrt.pop %v7488
  %v7505 = vrsqrt.pop %v7489
  %v7506 = vrsqrt.pop %v7490
  %v7507 = vrsqrt.pop %v7491
  %v7508 = vrsqrt.pop %v7492
  %v7509 = vmul.f32 %v7381, %v7493
  %v7510 = vmul.f32 %v7382, %v7494
  %v7511 = vmul.f32 %v7383, %v7495
  %v7512 = vmul.f32 %v7384, %v7496
  %v7513 = vmul.f32 %v7385, %v7497
  %v7514 = vmul.f32 %v7386, %v7498
  %v7515 = vmul.f32 %v7387, %v7499
  %v7516 = vmul.f32 %v7388, %v7500
  %v7517 = vmul.f32 %v7389, %v7501
  %v7518 = vmul.f32 %v7390, %v7502
  %v7519 = vmul.f32 %v7391, %v7503
  %v7520 = vmul.f32 %v7392, %v7504
  %v7521 = vmul.f32 %v7393, %v7505
  %v7522 = vmul.f32 %v7394, %v7506
  %v7523 = vmul.f32 %v7395, %v7507
  %v7524 = vmul.f32 %v7396, %v7508
  %v7525 = vld [vmem:[%s14] sm:$0x1]
  %v7527 = vlaneseq
  %v7528 = vshrl.u32 %v7527, 7
  %v7529 = vsub.s32 0, %v7528
  %v7530 = vrot.slane %v7525, %v7529
  %v7532 = vmul.f32 %v7509, %v7530
  %v7533 = vmul.f32 %v7510, %v7530
  %v7534 = vmul.f32 %v7511, %v7530
  %v7535 = vmul.f32 %v7512, %v7530
  %v7536 = vmul.f32 %v7513, %v7530
  %v7537 = vmul.f32 %v7514, %v7530
  %v7538 = vmul.f32 %v7515, %v7530
  %v7539 = vmul.f32 %v7516, %v7530
  %v7540 = vmul.f32 %v7517, %v7530
  %v7541 = vmul.f32 %v7518, %v7530
  %v7542 = vmul.f32 %v7519, %v7530
  %v7543 = vmul.f32 %v7520, %v7530
  %v7544 = vmul.f32 %v7521, %v7530
  %v7545 = vmul.f32 %v7522, %v7530
  %v7546 = vmul.f32 %v7523, %v7530
  %v7547 = vmul.f32 %v7524, %v7530
  %v7548 = vld [vmem:[%s15] sm:$0x1]
  %v7550 = vlaneseq
  %v7551 = vshrl.u32 %v7550, 7
  %v7552 = vsub.s32 0, %v7551
  %v7553 = vrot.slane %v7548, %v7552
  %v7555 = vadd.f32 %v7532, %v7553
  %v7556 = vadd.f32 %v7533, %v7553
  %v7557 = vadd.f32 %v7534, %v7553
  %v7558 = vadd.f32 %v7535, %v7553
  %v7559 = vadd.f32 %v7536, %v7553
  %v7560 = vadd.f32 %v7537, %v7553
  %v7561 = vadd.f32 %v7538, %v7553
  %v7562 = vadd.f32 %v7539, %v7553
  %v7563 = vadd.f32 %v7540, %v7553
  %v7564 = vadd.f32 %v7541, %v7553
  %v7565 = vadd.f32 %v7542, %v7553
  %v7566 = vadd.f32 %v7543, %v7553
  %v7567 = vadd.f32 %v7544, %v7553
  %v7568 = vadd.f32 %v7545, %v7553
  %v7569 = vadd.f32 %v7546, %v7553
  %v7570 = vadd.f32 %v7547, %v7553
  %7571 = vxpose.xlu0.b32.start [1/16] %v7555, 128
  %7572 = vxpose.xlu0.b32.cont [2/16] %v7556, 128
  %7573 = vxpose.xlu0.b32.cont [3/16] %v7557, 128
  %7574 = vxpose.xlu0.b32.cont [4/16] %v7558, 128
  %7575 = vxpose.xlu0.b32.cont [5/16] %v7559, 128
  %7576 = vxpose.xlu0.b32.cont [6/16] %v7560, 128
  %7577 = vxpose.xlu0.b32.cont [7/16] %v7561, 128
  %7578 = vxpose.xlu0.b32.cont [8/16] %v7562, 128
  %7579 = vxpose.xlu0.b32.cont [9/16] %v7563, 128
  %7580 = vxpose.xlu0.b32.cont [10/16] %v7564, 128
  %7581 = vxpose.xlu0.b32.cont [11/16] %v7565, 128
  %7582 = vxpose.xlu0.b32.cont [12/16] %v7566, 128
  %7583 = vxpose.xlu0.b32.cont [13/16] %v7567, 128
  %7584 = vxpose.xlu0.b32.cont [14/16] %v7568, 128
  %7585 = vxpose.xlu0.b32.cont [15/16] %v7569, 128
  %7586 = vxpose.xlu0.b32.end [16/16] %v7570, 128
  %v7587 = vpop.trf.xlu0
  %v7588 = vpop.trf.xlu0
  %v7589 = vpop.trf.xlu0
  %v7590 = vpop.trf.xlu0
  %v7591 = vpop.trf.xlu0
  %v7592 = vpop.trf.xlu0
  %v7593 = vpop.trf.xlu0
  %v7594 = vpop.trf.xlu0
  %v7595 = vpop.trf.xlu0
  %v7596 = vpop.trf.xlu0
  %v7597 = vpop.trf.xlu0
  %v7598 = vpop.trf.xlu0
  %v7599 = vpop.trf.xlu0
  %v7600 = vpop.trf.xlu0
  %v7601 = vpop.trf.xlu0
  %v7602 = vpop.trf.xlu0
  %7603 = vst [vmem:[%s16] sm:$0x3] %v7587
  // Predicated region
  $region66: #{pretrain_prev_forward.1} parent=0 // pred_check
    _
  $region67: #{pretrain_prev_forward.1} parent=0 // pred_check_branch
    %7605 = sbr.rel (0) target = $region69
  $region68: #{pretrain_prev_forward.1} parent=0 // pred_region
    _
  $region69: #{pretrain_prev_forward.1} parent=0 // pred_fallthru
    _
  // Predicated region
  $region70: #{pretrain_prev_forward.1} parent=0 // pred_check
    _
  $region71: #{pretrain_prev_forward.1} parent=0 // pred_check_branch
    %7607 = sbr.rel (0) target = $region73
  $region72: #{pretrain_prev_forward.1} parent=0 // pred_region
    _
  $region73: #{pretrain_prev_forward.1} parent=0 // pred_fallthru
    _

</llo_original>
